<compile_context>
chip_gen: v7x
topology: tpu7x:2x2x1
jax: 0.10.0
libtpu: 0.0.40
codegen_flags: <defaults>
</compile_context>

<pallas_src>
import jax
import jax.numpy as jnp
from jax.experimental import pallas as pl
from jax.experimental.pallas import tpu as pltpu


# ---------------------------------------------------------------------------
# Fused kernel: two interleaved recurrences -> VMEM table -> in-kernel one-hot
# gather -> single readout matmul -> sigmoid.
# ---------------------------------------------------------------------------
def _make_fused_kernel(depth: int, t_max: int, hidden_dim: int, batch: int):
    H = hidden_dim

    def kernel(idx_ref, emb_ref, w_ref, b_ref, wr_ref, br_ref,
               out_ref, table_scr):
        # idx_ref   : (B, 2) int32            (Z, N) per sample
        # emb_ref   : (2, 1, H)               [proton_emb ; neutron_emb]
        # w_ref     : (2, depth, H, H)        [proton weights ; neutron weights]
        # b_ref     : (2, depth, 1, H)
        # wr_ref    : (2H, O),  br_ref : (1, O)
        # out_ref   : (B, O)
        # table_scr : (T, 2H) VMEM scratch    cols [:H] proton, [H:] neutron

        # Hoist weights/biases out of the recurrence loop (keep them in vregs).
        wps = [w_ref[0, d] for d in range(depth)]
        wns = [w_ref[1, d] for d in range(depth)]
        bps = [b_ref[0, d] for d in range(depth)]
        bns = [b_ref[1, d] for d in range(depth)]

        p = emb_ref[0]          # (1, H)
        n = emb_ref[1]          # (1, H)

        # TODO(synk): parking the per-depth weights in the MXU via
        # pltpu.matmul_push_rhs / matmul_acc_lhs / matmul_pop would amortize
        # the RHS stream over all t_max steps; kept as jnp.dot for robustness.
        # (If t_max*depth grows past ~128, move the t loop to lax.fori_loop.)
        for t in range(t_max):                 # static unroll, small trip count
            for d in range(depth):
                # Two independent chains: issue both matmuls before consuming
                # either result so their MXU/EUP latencies overlap.
                hp = jnp.dot(p, wps[d], preferred_element_type=jnp.float32)
                hn = jnp.dot(n, wns[d], preferred_element_type=jnp.float32)
                p = p + jax.nn.silu(hp + bps[d])      # residual block (proton)
                n = n + jax.nn.silu(hn + bns[d])      # residual block (neutron)
            table_scr[pl.ds(t, 1), pl.ds(0, H)] = p
            table_scr[pl.ds(t, 1), pl.ds(H, H)] = n

        # Gather + readout.  One-hot masks built in-kernel from int32 indices
        # (an index >= t_max selects nothing -> never reads out of bounds).
        idx = idx_ref[...]                                           # (B, 2)
        iota_t = jax.lax.broadcasted_iota(jnp.int32, (batch, t_max), 1)
        oh_p = (iota_t == idx[:, 0:1]).astype(jnp.float32)           # (B, T)
        oh_n = (iota_t == idx[:, 1:2]).astype(jnp.float32)           # (B, T)

        table = table_scr[...]                                       # (T, 2H)
        gp = jnp.dot(oh_p, table, preferred_element_type=jnp.float32)  # (B, 2H)
        gn = jnp.dot(oh_n, table, preferred_element_type=jnp.float32)  # (B, 2H)
        lane = jax.lax.broadcasted_iota(jnp.int32, (batch, 2 * H), 1)
        g = jnp.where(lane < H, gp, gn)     # [tp[z] | tn[n]]  (free VPU select)

        logits = jnp.dot(g, wr_ref[...],
                         preferred_element_type=jnp.float32) + br_ref[...]
        out_ref[...] = jax.nn.sigmoid(logits)

    return kernel


def rnn_forward(x, params, *, t_max):
    """Fused Pallas forward.  `t_max` is a static bound > max Z and > max N."""
    H = params["proton_emb"].shape[1]
    O = params["readout_w"].shape[1]
    depth = len(params["proto_w"])
    B = x.shape[0]

    idx = x[:, :2].astype(jnp.int32)                                   # (B, 2)
    emb = jnp.stack([params["proton_emb"], params["neutron_emb"]])     # (2,1,H)
    w_all = jnp.stack([jnp.stack(params["proto_w"]),
                       jnp.stack(params["neutro_w"])])                 # (2,depth,H,H)
    b_all = jnp.stack([jnp.stack(params["proto_b"]),
                       jnp.stack(params["neutro_b"])])                 # (2,depth,1,H)

    # Single invocation (grid=()); every operand is a full-array VMEM block.
    return pl.pallas_call(
        _make_fused_kernel(depth, t_max, H, B),
        out_shape=jax.ShapeDtypeStruct((B, O), jnp.float32),
        scratch_shapes=[pltpu.VMEM((t_max, 2 * H), jnp.float32)],
    )(idx, emb, w_all, b_all, params["readout_w"], params["readout_b"])


# ---------------------------------------------------------------------------
# Parameter init (PyTorch-default-like, deterministic).
# ---------------------------------------------------------------------------
def init_params(key, hidden_dim, output_dim, depth):
    def uniform(k, shape, bound):
        return jax.random.uniform(k, shape, jnp.float32, -bound, bound)

    emb_bound = (6.0 / hidden_dim) ** 0.5        # kaiming_uniform_(a=0)
    lin_bound = (1.0 / hidden_dim) ** 0.5        # nn.Linear default (a=sqrt(5))
    ro_bound = (1.0 / (2 * hidden_dim)) ** 0.5

    keys = jax.random.split(key, 4 + 4 * depth)
    params = {
        "proton_emb": uniform(keys[0], (1, hidden_dim), emb_bound),
        "neutron_emb": uniform(keys[1], (1, hidden_dim), emb_bound),
        "readout_w": uniform(keys[2], (2 * hidden_dim, output_dim), ro_bound),
        "readout_b": uniform(keys[3], (1, output_dim), ro_bound),
        "proto_w": [], "proto_b": [], "neutro_w": [], "neutro_b": [],
    }
    for d in range(depth):
        k0, k1, k2, k3 = keys[4 + 4 * d: 8 + 4 * d]
        params["proto_w"].append(uniform(k0, (hidden_dim, hidden_dim), lin_bound))
        params["proto_b"].append(uniform(k1, (1, hidden_dim), lin_bound))
        params["neutro_w"].append(uniform(k2, (hidden_dim, hidden_dim), lin_bound))
        params["neutro_b"].append(uniform(k3, (1, hidden_dim), lin_bound))
    return params


# Pure-JAX reference (faithful to the torch forward) for verification.
def ref_forward(x, params):
    def resnet(p, ws, bs):
        for w, b in zip(ws, bs):
            p = p + jax.nn.silu(p @ w + b)
        return p

    def make_table(emb, ws, bs, T):
        p = emb
        rows = []
        for _ in range(T):
            p = resnet(p, ws, bs)
            rows.append(p)
        return jnp.concatenate(rows, axis=0)

    p_max = int(jnp.max(x[:, 0]))
    n_max = int(jnp.max(x[:, 1]))
    tp = make_table(params["proton_emb"], params["proto_w"],
                    params["proto_b"], p_max + 1)
    tn = make_table(params["neutron_emb"], params["neutro_w"],
                    params["neutro_b"], n_max + 1)
    out = jnp.concatenate([tp[x[:, 0]], tn[x[:, 1]]], axis=1)
    return jax.nn.sigmoid(out @ params["readout_w"] + params["readout_b"])


if __name__ == "__main__":
    B, hidden_dim, output_dim, depth = 8, 32, 8, 2
    T_MAX = 16    # static bound: covers Z in [0,13) and N in [0,16) below

    key = jax.random.PRNGKey(0)
    k_params, k_z, k_n, k_task = jax.random.split(key, 4)
    params = init_params(k_params, hidden_dim, output_dim, depth)

    z = jax.random.randint(k_z, (B, 1), 0, 13, dtype=jnp.int32)
    n = jax.random.randint(k_n, (B, 1), 0, 16, dtype=jnp.int32)
    task = jax.random.randint(k_task, (B, 1), 0, 5, dtype=jnp.int32)
    x = jnp.concatenate([z, n, task], axis=1)   # [B, 3] int32 (Z, N, task)

    # Indices >= T_MAX would silently gather zeros; guard against it here.
    assert int(jnp.max(x[:, :2])) < T_MAX, "increase T_MAX"

    fwd = jax.jit(rnn_forward, static_argnames=("t_max",))
    out = jax.block_until_ready(fwd(x, params, t_max=T_MAX))

    expected = ref_forward(x, params)
    assert out.shape == (B, output_dim)
    err = float(jnp.max(jnp.abs(out - expected)))
    assert err < 1e-4, f"max err {err}"

    # TODO(synk): task_emb / self.nonlinear are dead params in forward(); omitted.
    print("KERNEL_OK")
</pallas_src>

<mosaic_0001>
module attributes {stable_mosaic.version = 11 : i64} {
  func.func @kernel(%arg0: memref<8x2xi32, #tpu.memory_space<vmem>>, %arg1: memref<2x1x32xf32, #tpu.memory_space<vmem>>, %arg2: memref<2x2x32x32xf32, #tpu.memory_space<vmem>>, %arg3: memref<2x2x1x32xf32, #tpu.memory_space<vmem>>, %arg4: memref<64x8xf32, #tpu.memory_space<vmem>>, %arg5: memref<1x8xf32, #tpu.memory_space<vmem>>, %arg6: memref<8x8xf32, #tpu.memory_space<vmem>>, %arg7: memref<16x64xf32, #tpu.memory_space<vmem>>) attributes {dimension_semantics = [], scalar_prefetch = 0 : i64, scratch_operands = 1 : i64, tpu.core_type = #tpu.core_type<tc>} {
    %c0 = arith.constant 0 : index
    %c0_0 = arith.constant 0 : index
    %c0_1 = arith.constant 0 : index
    %c0_2 = arith.constant 0 : index
    %0 = vector.load %arg2[%c0, %c0_0, %c0_1, %c0_2] : memref<2x2x32x32xf32, #tpu.memory_space<vmem>>, vector<1x1x32x32xf32>
    %1 = vector.shape_cast %0 : vector<1x1x32x32xf32> to vector<32x32xf32>
    %c0_3 = arith.constant 0 : index
    %c1 = arith.constant 1 : index
    %c0_4 = arith.constant 0 : index
    %c0_5 = arith.constant 0 : index
    %2 = vector.load %arg2[%c0_3, %c1, %c0_4, %c0_5] : memref<2x2x32x32xf32, #tpu.memory_space<vmem>>, vector<1x1x32x32xf32>
    %3 = vector.shape_cast %2 : vector<1x1x32x32xf32> to vector<32x32xf32>
    %c1_6 = arith.constant 1 : index
    %c0_7 = arith.constant 0 : index
    %c0_8 = arith.constant 0 : index
    %c0_9 = arith.constant 0 : index
    %4 = vector.load %arg2[%c1_6, %c0_7, %c0_8, %c0_9] : memref<2x2x32x32xf32, #tpu.memory_space<vmem>>, vector<1x1x32x32xf32>
    %5 = vector.shape_cast %4 : vector<1x1x32x32xf32> to vector<32x32xf32>
    %c1_10 = arith.constant 1 : index
    %c1_11 = arith.constant 1 : index
    %c0_12 = arith.constant 0 : index
    %c0_13 = arith.constant 0 : index
    %6 = vector.load %arg2[%c1_10, %c1_11, %c0_12, %c0_13] : memref<2x2x32x32xf32, #tpu.memory_space<vmem>>, vector<1x1x32x32xf32>
    %7 = vector.shape_cast %6 : vector<1x1x32x32xf32> to vector<32x32xf32>
    %c0_14 = arith.constant 0 : index
    %c0_15 = arith.constant 0 : index
    %c0_16 = arith.constant 0 : index
    %c0_17 = arith.constant 0 : index
    %8 = vector.load %arg3[%c0_14, %c0_15, %c0_16, %c0_17] : memref<2x2x1x32xf32, #tpu.memory_space<vmem>>, vector<1x1x1x32xf32>
    %9 = vector.shape_cast %8 : vector<1x1x1x32xf32> to vector<1x32xf32>
    %c0_18 = arith.constant 0 : index
    %c1_19 = arith.constant 1 : index
    %c0_20 = arith.constant 0 : index
    %c0_21 = arith.constant 0 : index
    %10 = vector.load %arg3[%c0_18, %c1_19, %c0_20, %c0_21] : memref<2x2x1x32xf32, #tpu.memory_space<vmem>>, vector<1x1x1x32xf32>
    %11 = vector.shape_cast %10 : vector<1x1x1x32xf32> to vector<1x32xf32>
    %c1_22 = arith.constant 1 : index
    %c0_23 = arith.constant 0 : index
    %c0_24 = arith.constant 0 : index
    %c0_25 = arith.constant 0 : index
    %12 = vector.load %arg3[%c1_22, %c0_23, %c0_24, %c0_25] : memref<2x2x1x32xf32, #tpu.memory_space<vmem>>, vector<1x1x1x32xf32>
    %13 = vector.shape_cast %12 : vector<1x1x1x32xf32> to vector<1x32xf32>
    %c1_26 = arith.constant 1 : index
    %c1_27 = arith.constant 1 : index
    %c0_28 = arith.constant 0 : index
    %c0_29 = arith.constant 0 : index
    %14 = vector.load %arg3[%c1_26, %c1_27, %c0_28, %c0_29] : memref<2x2x1x32xf32, #tpu.memory_space<vmem>>, vector<1x1x1x32xf32>
    %15 = vector.shape_cast %14 : vector<1x1x1x32xf32> to vector<1x32xf32>
    %c0_30 = arith.constant 0 : index
    %c0_31 = arith.constant 0 : index
    %c0_32 = arith.constant 0 : index
    %16 = vector.load %arg1[%c0_30, %c0_31, %c0_32] : memref<2x1x32xf32, #tpu.memory_space<vmem>>, vector<1x1x32xf32>
    %17 = vector.shape_cast %16 : vector<1x1x32xf32> to vector<1x32xf32>
    %c1_33 = arith.constant 1 : index
    %c0_34 = arith.constant 0 : index
    %c0_35 = arith.constant 0 : index
    %18 = vector.load %arg1[%c1_33, %c0_34, %c0_35] : memref<2x1x32xf32, #tpu.memory_space<vmem>>, vector<1x1x32xf32>
    %19 = vector.shape_cast %18 : vector<1x1x32xf32> to vector<1x32xf32>
    %cst = arith.constant dense<0.000000e+00> : vector<1x32xf32>
    %20 = tpu.matmul %17, %1, %cst {dimension_numbers = #tpu.dot_dimension_numbers<[1], [0], [0], [1], [0, 0, 1, 1], [], []>} : vector<1x32xf32>, vector<32x32xf32>, vector<1x32xf32> -> vector<1x32xf32>
    %cst_36 = arith.constant dense<0.000000e+00> : vector<1x32xf32>
    %21 = tpu.matmul %19, %5, %cst_36 {dimension_numbers = #tpu.dot_dimension_numbers<[1], [0], [0], [1], [0, 0, 1, 1], [], []>} : vector<1x32xf32>, vector<32x32xf32>, vector<1x32xf32> -> vector<1x32xf32>
    %22 = arith.addf %20, %9 : vector<1x32xf32>
    %23 = arith.negf %22 : vector<1x32xf32>
    %24 = math.exp %23 : vector<1x32xf32>
    %cst_37 = arith.constant 1.000000e+00 : f32
    %25 = vector.broadcast %cst_37 : f32 to vector<1x32xf32>
    %26 = arith.addf %25, %24 : vector<1x32xf32>
    %27 = arith.divf %25, %26 : vector<1x32xf32>
    %28 = arith.mulf %22, %27 : vector<1x32xf32>
    %29 = arith.addf %17, %28 : vector<1x32xf32>
    %30 = arith.addf %21, %13 : vector<1x32xf32>
    %31 = arith.negf %30 : vector<1x32xf32>
    %32 = math.exp %31 : vector<1x32xf32>
    %cst_38 = arith.constant 1.000000e+00 : f32
    %33 = vector.broadcast %cst_38 : f32 to vector<1x32xf32>
    %34 = arith.addf %33, %32 : vector<1x32xf32>
    %35 = arith.divf %33, %34 : vector<1x32xf32>
    %36 = arith.mulf %30, %35 : vector<1x32xf32>
    %37 = arith.addf %19, %36 : vector<1x32xf32>
    %cst_39 = arith.constant dense<0.000000e+00> : vector<1x32xf32>
    %38 = tpu.matmul %29, %3, %cst_39 {dimension_numbers = #tpu.dot_dimension_numbers<[1], [0], [0], [1], [0, 0, 1, 1], [], []>} : vector<1x32xf32>, vector<32x32xf32>, vector<1x32xf32> -> vector<1x32xf32>
    %cst_40 = arith.constant dense<0.000000e+00> : vector<1x32xf32>
    %39 = tpu.matmul %37, %7, %cst_40 {dimension_numbers = #tpu.dot_dimension_numbers<[1], [0], [0], [1], [0, 0, 1, 1], [], []>} : vector<1x32xf32>, vector<32x32xf32>, vector<1x32xf32> -> vector<1x32xf32>
    %40 = arith.addf %38, %11 : vector<1x32xf32>
    %41 = arith.negf %40 : vector<1x32xf32>
    %42 = math.exp %41 : vector<1x32xf32>
    %cst_41 = arith.constant 1.000000e+00 : f32
    %43 = vector.broadcast %cst_41 : f32 to vector<1x32xf32>
    %44 = arith.addf %43, %42 : vector<1x32xf32>
    %45 = arith.divf %43, %44 : vector<1x32xf32>
    %46 = arith.mulf %40, %45 : vector<1x32xf32>
    %47 = arith.addf %29, %46 : vector<1x32xf32>
    %48 = arith.addf %39, %15 : vector<1x32xf32>
    %49 = arith.negf %48 : vector<1x32xf32>
    %50 = math.exp %49 : vector<1x32xf32>
    %cst_42 = arith.constant 1.000000e+00 : f32
    %51 = vector.broadcast %cst_42 : f32 to vector<1x32xf32>
    %52 = arith.addf %51, %50 : vector<1x32xf32>
    %53 = arith.divf %51, %52 : vector<1x32xf32>
    %54 = arith.mulf %48, %53 : vector<1x32xf32>
    %55 = arith.addf %37, %54 : vector<1x32xf32>
    %c0_43 = arith.constant 0 : index
    %c0_44 = arith.constant 0 : index
    %56 = vector.load %arg7[%c0_43, %c0_44] : memref<16x64xf32, #tpu.memory_space<vmem>>, vector<1x32xf32>
    tpu.vector_store %arg7[%c0_43, %c0_44], %47 {strides = array<i32>} : memref<16x64xf32, #tpu.memory_space<vmem>>, vector<1x32xf32>,
    %c0_45 = arith.constant 0 : index
    %c32 = arith.constant 32 : index
    %57 = vector.load %arg7[%c0_45, %c32] : memref<16x64xf32, #tpu.memory_space<vmem>>, vector<1x32xf32>
    tpu.vector_store %arg7[%c0_45, %c32], %55 {strides = array<i32>} : memref<16x64xf32, #tpu.memory_space<vmem>>, vector<1x32xf32>,
    %cst_46 = arith.constant dense<0.000000e+00> : vector<1x32xf32>
    %58 = tpu.matmul %47, %1, %cst_46 {dimension_numbers = #tpu.dot_dimension_numbers<[1], [0], [0], [1], [0, 0, 1, 1], [], []>} : vector<1x32xf32>, vector<32x32xf32>, vector<1x32xf32> -> vector<1x32xf32>
    %cst_47 = arith.constant dense<0.000000e+00> : vector<1x32xf32>
    %59 = tpu.matmul %55, %5, %cst_47 {dimension_numbers = #tpu.dot_dimension_numbers<[1], [0], [0], [1], [0, 0, 1, 1], [], []>} : vector<1x32xf32>, vector<32x32xf32>, vector<1x32xf32> -> vector<1x32xf32>
    %60 = arith.addf %58, %9 : vector<1x32xf32>
    %61 = arith.negf %60 : vector<1x32xf32>
    %62 = math.exp %61 : vector<1x32xf32>
    %cst_48 = arith.constant 1.000000e+00 : f32
    %63 = vector.broadcast %cst_48 : f32 to vector<1x32xf32>
    %64 = arith.addf %63, %62 : vector<1x32xf32>
    %65 = arith.divf %63, %64 : vector<1x32xf32>
    %66 = arith.mulf %60, %65 : vector<1x32xf32>
    %67 = arith.addf %47, %66 : vector<1x32xf32>
    %68 = arith.addf %59, %13 : vector<1x32xf32>
    %69 = arith.negf %68 : vector<1x32xf32>
    %70 = math.exp %69 : vector<1x32xf32>
    %cst_49 = arith.constant 1.000000e+00 : f32
    %71 = vector.broadcast %cst_49 : f32 to vector<1x32xf32>
    %72 = arith.addf %71, %70 : vector<1x32xf32>
    %73 = arith.divf %71, %72 : vector<1x32xf32>
    %74 = arith.mulf %68, %73 : vector<1x32xf32>
    %75 = arith.addf %55, %74 : vector<1x32xf32>
    %cst_50 = arith.constant dense<0.000000e+00> : vector<1x32xf32>
    %76 = tpu.matmul %67, %3, %cst_50 {dimension_numbers = #tpu.dot_dimension_numbers<[1], [0], [0], [1], [0, 0, 1, 1], [], []>} : vector<1x32xf32>, vector<32x32xf32>, vector<1x32xf32> -> vector<1x32xf32>
    %cst_51 = arith.constant dense<0.000000e+00> : vector<1x32xf32>
    %77 = tpu.matmul %75, %7, %cst_51 {dimension_numbers = #tpu.dot_dimension_numbers<[1], [0], [0], [1], [0, 0, 1, 1], [], []>} : vector<1x32xf32>, vector<32x32xf32>, vector<1x32xf32> -> vector<1x32xf32>
    %78 = arith.addf %76, %11 : vector<1x32xf32>
    %79 = arith.negf %78 : vector<1x32xf32>
    %80 = math.exp %79 : vector<1x32xf32>
    %cst_52 = arith.constant 1.000000e+00 : f32
    %81 = vector.broadcast %cst_52 : f32 to vector<1x32xf32>
    %82 = arith.addf %81, %80 : vector<1x32xf32>
    %83 = arith.divf %81, %82 : vector<1x32xf32>
    %84 = arith.mulf %78, %83 : vector<1x32xf32>
    %85 = arith.addf %67, %84 : vector<1x32xf32>
    %86 = arith.addf %77, %15 : vector<1x32xf32>
    %87 = arith.negf %86 : vector<1x32xf32>
    %88 = math.exp %87 : vector<1x32xf32>
    %cst_53 = arith.constant 1.000000e+00 : f32
    %89 = vector.broadcast %cst_53 : f32 to vector<1x32xf32>
    %90 = arith.addf %89, %88 : vector<1x32xf32>
    %91 = arith.divf %89, %90 : vector<1x32xf32>
    %92 = arith.mulf %86, %91 : vector<1x32xf32>
    %93 = arith.addf %75, %92 : vector<1x32xf32>
    %c1_54 = arith.constant 1 : index
    %c0_55 = arith.constant 0 : index
    %94 = vector.load %arg7[%c1_54, %c0_55] : memref<16x64xf32, #tpu.memory_space<vmem>>, vector<1x32xf32>
    tpu.vector_store %arg7[%c1_54, %c0_55], %85 {strides = array<i32>} : memref<16x64xf32, #tpu.memory_space<vmem>>, vector<1x32xf32>,
    %c1_56 = arith.constant 1 : index
    %c32_57 = arith.constant 32 : index
    %95 = vector.load %arg7[%c1_56, %c32_57] : memref<16x64xf32, #tpu.memory_space<vmem>>, vector<1x32xf32>
    tpu.vector_store %arg7[%c1_56, %c32_57], %93 {strides = array<i32>} : memref<16x64xf32, #tpu.memory_space<vmem>>, vector<1x32xf32>,
    %cst_58 = arith.constant dense<0.000000e+00> : vector<1x32xf32>
    %96 = tpu.matmul %85, %1, %cst_58 {dimension_numbers = #tpu.dot_dimension_numbers<[1], [0], [0], [1], [0, 0, 1, 1], [], []>} : vector<1x32xf32>, vector<32x32xf32>, vector<1x32xf32> -> vector<1x32xf32>
    %cst_59 = arith.constant dense<0.000000e+00> : vector<1x32xf32>
    %97 = tpu.matmul %93, %5, %cst_59 {dimension_numbers = #tpu.dot_dimension_numbers<[1], [0], [0], [1], [0, 0, 1, 1], [], []>} : vector<1x32xf32>, vector<32x32xf32>, vector<1x32xf32> -> vector<1x32xf32>
    %98 = arith.addf %96, %9 : vector<1x32xf32>
    %99 = arith.negf %98 : vector<1x32xf32>
    %100 = math.exp %99 : vector<1x32xf32>
    %cst_60 = arith.constant 1.000000e+00 : f32
    %101 = vector.broadcast %cst_60 : f32 to vector<1x32xf32>
    %102 = arith.addf %101, %100 : vector<1x32xf32>
    %103 = arith.divf %101, %102 : vector<1x32xf32>
    %104 = arith.mulf %98, %103 : vector<1x32xf32>
    %105 = arith.addf %85, %104 : vector<1x32xf32>
    %106 = arith.addf %97, %13 : vector<1x32xf32>
    %107 = arith.negf %106 : vector<1x32xf32>
    %108 = math.exp %107 : vector<1x32xf32>
    %cst_61 = arith.constant 1.000000e+00 : f32
    %109 = vector.broadcast %cst_61 : f32 to vector<1x32xf32>
    %110 = arith.addf %109, %108 : vector<1x32xf32>
    %111 = arith.divf %109, %110 : vector<1x32xf32>
    %112 = arith.mulf %106, %111 : vector<1x32xf32>
    %113 = arith.addf %93, %112 : vector<1x32xf32>
    %cst_62 = arith.constant dense<0.000000e+00> : vector<1x32xf32>
    %114 = tpu.matmul %105, %3, %cst_62 {dimension_numbers = #tpu.dot_dimension_numbers<[1], [0], [0], [1], [0, 0, 1, 1], [], []>} : vector<1x32xf32>, vector<32x32xf32>, vector<1x32xf32> -> vector<1x32xf32>
    %cst_63 = arith.constant dense<0.000000e+00> : vector<1x32xf32>
    %115 = tpu.matmul %113, %7, %cst_63 {dimension_numbers = #tpu.dot_dimension_numbers<[1], [0], [0], [1], [0, 0, 1, 1], [], []>} : vector<1x32xf32>, vector<32x32xf32>, vector<1x32xf32> -> vector<1x32xf32>
    %116 = arith.addf %114, %11 : vector<1x32xf32>
    %117 = arith.negf %116 : vector<1x32xf32>
    %118 = math.exp %117 : vector<1x32xf32>
    %cst_64 = arith.constant 1.000000e+00 : f32
    %119 = vector.broadcast %cst_64 : f32 to vector<1x32xf32>
    %120 = arith.addf %119, %118 : vector<1x32xf32>
    %121 = arith.divf %119, %120 : vector<1x32xf32>
    %122 = arith.mulf %116, %121 : vector<1x32xf32>
    %123 = arith.addf %105, %122 : vector<1x32xf32>
    %124 = arith.addf %115, %15 : vector<1x32xf32>
    %125 = arith.negf %124 : vector<1x32xf32>
    %126 = math.exp %125 : vector<1x32xf32>
    %cst_65 = arith.constant 1.000000e+00 : f32
    %127 = vector.broadcast %cst_65 : f32 to vector<1x32xf32>
    %128 = arith.addf %127, %126 : vector<1x32xf32>
    %129 = arith.divf %127, %128 : vector<1x32xf32>
    %130 = arith.mulf %124, %129 : vector<1x32xf32>
    %131 = arith.addf %113, %130 : vector<1x32xf32>
    %c2 = arith.constant 2 : index
    %c0_66 = arith.constant 0 : index
    %132 = vector.load %arg7[%c2, %c0_66] : memref<16x64xf32, #tpu.memory_space<vmem>>, vector<1x32xf32>
    tpu.vector_store %arg7[%c2, %c0_66], %123 {strides = array<i32>} : memref<16x64xf32, #tpu.memory_space<vmem>>, vector<1x32xf32>,
    %c2_67 = arith.constant 2 : index
    %c32_68 = arith.constant 32 : index
    %133 = vector.load %arg7[%c2_67, %c32_68] : memref<16x64xf32, #tpu.memory_space<vmem>>, vector<1x32xf32>
    tpu.vector_store %arg7[%c2_67, %c32_68], %131 {strides = array<i32>} : memref<16x64xf32, #tpu.memory_space<vmem>>, vector<1x32xf32>,
    %cst_69 = arith.constant dense<0.000000e+00> : vector<1x32xf32>
    %134 = tpu.matmul %123, %1, %cst_69 {dimension_numbers = #tpu.dot_dimension_numbers<[1], [0], [0], [1], [0, 0, 1, 1], [], []>} : vector<1x32xf32>, vector<32x32xf32>, vector<1x32xf32> -> vector<1x32xf32>
    %cst_70 = arith.constant dense<0.000000e+00> : vector<1x32xf32>
    %135 = tpu.matmul %131, %5, %cst_70 {dimension_numbers = #tpu.dot_dimension_numbers<[1], [0], [0], [1], [0, 0, 1, 1], [], []>} : vector<1x32xf32>, vector<32x32xf32>, vector<1x32xf32> -> vector<1x32xf32>
    %136 = arith.addf %134, %9 : vector<1x32xf32>
    %137 = arith.negf %136 : vector<1x32xf32>
    %138 = math.exp %137 : vector<1x32xf32>
    %cst_71 = arith.constant 1.000000e+00 : f32
    %139 = vector.broadcast %cst_71 : f32 to vector<1x32xf32>
    %140 = arith.addf %139, %138 : vector<1x32xf32>
    %141 = arith.divf %139, %140 : vector<1x32xf32>
    %142 = arith.mulf %136, %141 : vector<1x32xf32>
    %143 = arith.addf %123, %142 : vector<1x32xf32>
    %144 = arith.addf %135, %13 : vector<1x32xf32>
    %145 = arith.negf %144 : vector<1x32xf32>
    %146 = math.exp %145 : vector<1x32xf32>
    %cst_72 = arith.constant 1.000000e+00 : f32
    %147 = vector.broadcast %cst_72 : f32 to vector<1x32xf32>
    %148 = arith.addf %147, %146 : vector<1x32xf32>
    %149 = arith.divf %147, %148 : vector<1x32xf32>
    %150 = arith.mulf %144, %149 : vector<1x32xf32>
    %151 = arith.addf %131, %150 : vector<1x32xf32>
    %cst_73 = arith.constant dense<0.000000e+00> : vector<1x32xf32>
    %152 = tpu.matmul %143, %3, %cst_73 {dimension_numbers = #tpu.dot_dimension_numbers<[1], [0], [0], [1], [0, 0, 1, 1], [], []>} : vector<1x32xf32>, vector<32x32xf32>, vector<1x32xf32> -> vector<1x32xf32>
    %cst_74 = arith.constant dense<0.000000e+00> : vector<1x32xf32>
    %153 = tpu.matmul %151, %7, %cst_74 {dimension_numbers = #tpu.dot_dimension_numbers<[1], [0], [0], [1], [0, 0, 1, 1], [], []>} : vector<1x32xf32>, vector<32x32xf32>, vector<1x32xf32> -> vector<1x32xf32>
    %154 = arith.addf %152, %11 : vector<1x32xf32>
    %155 = arith.negf %154 : vector<1x32xf32>
    %156 = math.exp %155 : vector<1x32xf32>
    %cst_75 = arith.constant 1.000000e+00 : f32
    %157 = vector.broadcast %cst_75 : f32 to vector<1x32xf32>
    %158 = arith.addf %157, %156 : vector<1x32xf32>
    %159 = arith.divf %157, %158 : vector<1x32xf32>
    %160 = arith.mulf %154, %159 : vector<1x32xf32>
    %161 = arith.addf %143, %160 : vector<1x32xf32>
    %162 = arith.addf %153, %15 : vector<1x32xf32>
    %163 = arith.negf %162 : vector<1x32xf32>
    %164 = math.exp %163 : vector<1x32xf32>
    %cst_76 = arith.constant 1.000000e+00 : f32
    %165 = vector.broadcast %cst_76 : f32 to vector<1x32xf32>
    %166 = arith.addf %165, %164 : vector<1x32xf32>
    %167 = arith.divf %165, %166 : vector<1x32xf32>
    %168 = arith.mulf %162, %167 : vector<1x32xf32>
    %169 = arith.addf %151, %168 : vector<1x32xf32>
    %c3 = arith.constant 3 : index
    %c0_77 = arith.constant 0 : index
    %170 = vector.load %arg7[%c3, %c0_77] : memref<16x64xf32, #tpu.memory_space<vmem>>, vector<1x32xf32>
    tpu.vector_store %arg7[%c3, %c0_77], %161 {strides = array<i32>} : memref<16x64xf32, #tpu.memory_space<vmem>>, vector<1x32xf32>,
    %c3_78 = arith.constant 3 : index
    %c32_79 = arith.constant 32 : index
    %171 = vector.load %arg7[%c3_78, %c32_79] : memref<16x64xf32, #tpu.memory_space<vmem>>, vector<1x32xf32>
    tpu.vector_store %arg7[%c3_78, %c32_79], %169 {strides = array<i32>} : memref<16x64xf32, #tpu.memory_space<vmem>>, vector<1x32xf32>,
    %cst_80 = arith.constant dense<0.000000e+00> : vector<1x32xf32>
    %172 = tpu.matmul %161, %1, %cst_80 {dimension_numbers = #tpu.dot_dimension_numbers<[1], [0], [0], [1], [0, 0, 1, 1], [], []>} : vector<1x32xf32>, vector<32x32xf32>, vector<1x32xf32> -> vector<1x32xf32>
    %cst_81 = arith.constant dense<0.000000e+00> : vector<1x32xf32>
    %173 = tpu.matmul %169, %5, %cst_81 {dimension_numbers = #tpu.dot_dimension_numbers<[1], [0], [0], [1], [0, 0, 1, 1], [], []>} : vector<1x32xf32>, vector<32x32xf32>, vector<1x32xf32> -> vector<1x32xf32>
    %174 = arith.addf %172, %9 : vector<1x32xf32>
    %175 = arith.negf %174 : vector<1x32xf32>
    %176 = math.exp %175 : vector<1x32xf32>
    %cst_82 = arith.constant 1.000000e+00 : f32
    %177 = vector.broadcast %cst_82 : f32 to vector<1x32xf32>
    %178 = arith.addf %177, %176 : vector<1x32xf32>
    %179 = arith.divf %177, %178 : vector<1x32xf32>
    %180 = arith.mulf %174, %179 : vector<1x32xf32>
    %181 = arith.addf %161, %180 : vector<1x32xf32>
    %182 = arith.addf %173, %13 : vector<1x32xf32>
    %183 = arith.negf %182 : vector<1x32xf32>
    %184 = math.exp %183 : vector<1x32xf32>
    %cst_83 = arith.constant 1.000000e+00 : f32
    %185 = vector.broadcast %cst_83 : f32 to vector<1x32xf32>
    %186 = arith.addf %185, %184 : vector<1x32xf32>
    %187 = arith.divf %185, %186 : vector<1x32xf32>
    %188 = arith.mulf %182, %187 : vector<1x32xf32>
    %189 = arith.addf %169, %188 : vector<1x32xf32>
    %cst_84 = arith.constant dense<0.000000e+00> : vector<1x32xf32>
    %190 = tpu.matmul %181, %3, %cst_84 {dimension_numbers = #tpu.dot_dimension_numbers<[1], [0], [0], [1], [0, 0, 1, 1], [], []>} : vector<1x32xf32>, vector<32x32xf32>, vector<1x32xf32> -> vector<1x32xf32>
    %cst_85 = arith.constant dense<0.000000e+00> : vector<1x32xf32>
    %191 = tpu.matmul %189, %7, %cst_85 {dimension_numbers = #tpu.dot_dimension_numbers<[1], [0], [0], [1], [0, 0, 1, 1], [], []>} : vector<1x32xf32>, vector<32x32xf32>, vector<1x32xf32> -> vector<1x32xf32>
    %192 = arith.addf %190, %11 : vector<1x32xf32>
    %193 = arith.negf %192 : vector<1x32xf32>
    %194 = math.exp %193 : vector<1x32xf32>
    %cst_86 = arith.constant 1.000000e+00 : f32
    %195 = vector.broadcast %cst_86 : f32 to vector<1x32xf32>
    %196 = arith.addf %195, %194 : vector<1x32xf32>
    %197 = arith.divf %195, %196 : vector<1x32xf32>
    %198 = arith.mulf %192, %197 : vector<1x32xf32>
    %199 = arith.addf %181, %198 : vector<1x32xf32>
    %200 = arith.addf %191, %15 : vector<1x32xf32>
    %201 = arith.negf %200 : vector<1x32xf32>
    %202 = math.exp %201 : vector<1x32xf32>
    %cst_87 = arith.constant 1.000000e+00 : f32
    %203 = vector.broadcast %cst_87 : f32 to vector<1x32xf32>
    %204 = arith.addf %203, %202 : vector<1x32xf32>
    %205 = arith.divf %203, %204 : vector<1x32xf32>
    %206 = arith.mulf %200, %205 : vector<1x32xf32>
    %207 = arith.addf %189, %206 : vector<1x32xf32>
    %c4 = arith.constant 4 : index
    %c0_88 = arith.constant 0 : index
    %208 = vector.load %arg7[%c4, %c0_88] : memref<16x64xf32, #tpu.memory_space<vmem>>, vector<1x32xf32>
    tpu.vector_store %arg7[%c4, %c0_88], %199 {strides = array<i32>} : memref<16x64xf32, #tpu.memory_space<vmem>>, vector<1x32xf32>,
    %c4_89 = arith.constant 4 : index
    %c32_90 = arith.constant 32 : index
    %209 = vector.load %arg7[%c4_89, %c32_90] : memref<16x64xf32, #tpu.memory_space<vmem>>, vector<1x32xf32>
    tpu.vector_store %arg7[%c4_89, %c32_90], %207 {strides = array<i32>} : memref<16x64xf32, #tpu.memory_space<vmem>>, vector<1x32xf32>,
    %cst_91 = arith.constant dense<0.000000e+00> : vector<1x32xf32>
    %210 = tpu.matmul %199, %1, %cst_91 {dimension_numbers = #tpu.dot_dimension_numbers<[1], [0], [0], [1], [0, 0, 1, 1], [], []>} : vector<1x32xf32>, vector<32x32xf32>, vector<1x32xf32> -> vector<1x32xf32>
    %cst_92 = arith.constant dense<0.000000e+00> : vector<1x32xf32>
    %211 = tpu.matmul %207, %5, %cst_92 {dimension_numbers = #tpu.dot_dimension_numbers<[1], [0], [0], [1], [0, 0, 1, 1], [], []>} : vector<1x32xf32>, vector<32x32xf32>, vector<1x32xf32> -> vector<1x32xf32>
    %212 = arith.addf %210, %9 : vector<1x32xf32>
    %213 = arith.negf %212 : vector<1x32xf32>
    %214 = math.exp %213 : vector<1x32xf32>
    %cst_93 = arith.constant 1.000000e+00 : f32
    %215 = vector.broadcast %cst_93 : f32 to vector<1x32xf32>
    %216 = arith.addf %215, %214 : vector<1x32xf32>
    %217 = arith.divf %215, %216 : vector<1x32xf32>
    %218 = arith.mulf %212, %217 : vector<1x32xf32>
    %219 = arith.addf %199, %218 : vector<1x32xf32>
    %220 = arith.addf %211, %13 : vector<1x32xf32>
    %221 = arith.negf %220 : vector<1x32xf32>
    %222 = math.exp %221 : vector<1x32xf32>
    %cst_94 = arith.constant 1.000000e+00 : f32
    %223 = vector.broadcast %cst_94 : f32 to vector<1x32xf32>
    %224 = arith.addf %223, %222 : vector<1x32xf32>
    %225 = arith.divf %223, %224 : vector<1x32xf32>
    %226 = arith.mulf %220, %225 : vector<1x32xf32>
    %227 = arith.addf %207, %226 : vector<1x32xf32>
    %cst_95 = arith.constant dense<0.000000e+00> : vector<1x32xf32>
    %228 = tpu.matmul %219, %3, %cst_95 {dimension_numbers = #tpu.dot_dimension_numbers<[1], [0], [0], [1], [0, 0, 1, 1], [], []>} : vector<1x32xf32>, vector<32x32xf32>, vector<1x32xf32> -> vector<1x32xf32>
    %cst_96 = arith.constant dense<0.000000e+00> : vector<1x32xf32>
    %229 = tpu.matmul %227, %7, %cst_96 {dimension_numbers = #tpu.dot_dimension_numbers<[1], [0], [0], [1], [0, 0, 1, 1], [], []>} : vector<1x32xf32>, vector<32x32xf32>, vector<1x32xf32> -> vector<1x32xf32>
    %230 = arith.addf %228, %11 : vector<1x32xf32>
    %231 = arith.negf %230 : vector<1x32xf32>
    %232 = math.exp %231 : vector<1x32xf32>
    %cst_97 = arith.constant 1.000000e+00 : f32
    %233 = vector.broadcast %cst_97 : f32 to vector<1x32xf32>
    %234 = arith.addf %233, %232 : vector<1x32xf32>
    %235 = arith.divf %233, %234 : vector<1x32xf32>
    %236 = arith.mulf %230, %235 : vector<1x32xf32>
    %237 = arith.addf %219, %236 : vector<1x32xf32>
    %238 = arith.addf %229, %15 : vector<1x32xf32>
    %239 = arith.negf %238 : vector<1x32xf32>
    %240 = math.exp %239 : vector<1x32xf32>
    %cst_98 = arith.constant 1.000000e+00 : f32
    %241 = vector.broadcast %cst_98 : f32 to vector<1x32xf32>
    %242 = arith.addf %241, %240 : vector<1x32xf32>
    %243 = arith.divf %241, %242 : vector<1x32xf32>
    %244 = arith.mulf %238, %243 : vector<1x32xf32>
    %245 = arith.addf %227, %244 : vector<1x32xf32>
    %c5 = arith.constant 5 : index
    %c0_99 = arith.constant 0 : index
    %246 = vector.load %arg7[%c5, %c0_99] : memref<16x64xf32, #tpu.memory_space<vmem>>, vector<1x32xf32>
    tpu.vector_store %arg7[%c5, %c0_99], %237 {strides = array<i32>} : memref<16x64xf32, #tpu.memory_space<vmem>>, vector<1x32xf32>,
    %c5_100 = arith.constant 5 : index
    %c32_101 = arith.constant 32 : index
    %247 = vector.load %arg7[%c5_100, %c32_101] : memref<16x64xf32, #tpu.memory_space<vmem>>, vector<1x32xf32>
    tpu.vector_store %arg7[%c5_100, %c32_101], %245 {strides = array<i32>} : memref<16x64xf32, #tpu.memory_space<vmem>>, vector<1x32xf32>,
    %cst_102 = arith.constant dense<0.000000e+00> : vector<1x32xf32>
    %248 = tpu.matmul %237, %1, %cst_102 {dimension_numbers = #tpu.dot_dimension_numbers<[1], [0], [0], [1], [0, 0, 1, 1], [], []>} : vector<1x32xf32>, vector<32x32xf32>, vector<1x32xf32> -> vector<1x32xf32>
    %cst_103 = arith.constant dense<0.000000e+00> : vector<1x32xf32>
    %249 = tpu.matmul %245, %5, %cst_103 {dimension_numbers = #tpu.dot_dimension_numbers<[1], [0], [0], [1], [0, 0, 1, 1], [], []>} : vector<1x32xf32>, vector<32x32xf32>, vector<1x32xf32> -> vector<1x32xf32>
    %250 = arith.addf %248, %9 : vector<1x32xf32>
    %251 = arith.negf %250 : vector<1x32xf32>
    %252 = math.exp %251 : vector<1x32xf32>
    %cst_104 = arith.constant 1.000000e+00 : f32
    %253 = vector.broadcast %cst_104 : f32 to vector<1x32xf32>
    %254 = arith.addf %253, %252 : vector<1x32xf32>
    %255 = arith.divf %253, %254 : vector<1x32xf32>
    %256 = arith.mulf %250, %255 : vector<1x32xf32>
    %257 = arith.addf %237, %256 : vector<1x32xf32>
    %258 = arith.addf %249, %13 : vector<1x32xf32>
    %259 = arith.negf %258 : vector<1x32xf32>
    %260 = math.exp %259 : vector<1x32xf32>
    %cst_105 = arith.constant 1.000000e+00 : f32
    %261 = vector.broadcast %cst_105 : f32 to vector<1x32xf32>
    %262 = arith.addf %261, %260 : vector<1x32xf32>
    %263 = arith.divf %261, %262 : vector<1x32xf32>
    %264 = arith.mulf %258, %263 : vector<1x32xf32>
    %265 = arith.addf %245, %264 : vector<1x32xf32>
    %cst_106 = arith.constant dense<0.000000e+00> : vector<1x32xf32>
    %266 = tpu.matmul %257, %3, %cst_106 {dimension_numbers = #tpu.dot_dimension_numbers<[1], [0], [0], [1], [0, 0, 1, 1], [], []>} : vector<1x32xf32>, vector<32x32xf32>, vector<1x32xf32> -> vector<1x32xf32>
    %cst_107 = arith.constant dense<0.000000e+00> : vector<1x32xf32>
    %267 = tpu.matmul %265, %7, %cst_107 {dimension_numbers = #tpu.dot_dimension_numbers<[1], [0], [0], [1], [0, 0, 1, 1], [], []>} : vector<1x32xf32>, vector<32x32xf32>, vector<1x32xf32> -> vector<1x32xf32>
    %268 = arith.addf %266, %11 : vector<1x32xf32>
    %269 = arith.negf %268 : vector<1x32xf32>
    %270 = math.exp %269 : vector<1x32xf32>
    %cst_108 = arith.constant 1.000000e+00 : f32
    %271 = vector.broadcast %cst_108 : f32 to vector<1x32xf32>
    %272 = arith.addf %271, %270 : vector<1x32xf32>
    %273 = arith.divf %271, %272 : vector<1x32xf32>
    %274 = arith.mulf %268, %273 : vector<1x32xf32>
    %275 = arith.addf %257, %274 : vector<1x32xf32>
    %276 = arith.addf %267, %15 : vector<1x32xf32>
    %277 = arith.negf %276 : vector<1x32xf32>
    %278 = math.exp %277 : vector<1x32xf32>
    %cst_109 = arith.constant 1.000000e+00 : f32
    %279 = vector.broadcast %cst_109 : f32 to vector<1x32xf32>
    %280 = arith.addf %279, %278 : vector<1x32xf32>
    %281 = arith.divf %279, %280 : vector<1x32xf32>
    %282 = arith.mulf %276, %281 : vector<1x32xf32>
    %283 = arith.addf %265, %282 : vector<1x32xf32>
    %c6 = arith.constant 6 : index
    %c0_110 = arith.constant 0 : index
    %284 = vector.load %arg7[%c6, %c0_110] : memref<16x64xf32, #tpu.memory_space<vmem>>, vector<1x32xf32>
    tpu.vector_store %arg7[%c6, %c0_110], %275 {strides = array<i32>} : memref<16x64xf32, #tpu.memory_space<vmem>>, vector<1x32xf32>,
    %c6_111 = arith.constant 6 : index
    %c32_112 = arith.constant 32 : index
    %285 = vector.load %arg7[%c6_111, %c32_112] : memref<16x64xf32, #tpu.memory_space<vmem>>, vector<1x32xf32>
    tpu.vector_store %arg7[%c6_111, %c32_112], %283 {strides = array<i32>} : memref<16x64xf32, #tpu.memory_space<vmem>>, vector<1x32xf32>,
    %cst_113 = arith.constant dense<0.000000e+00> : vector<1x32xf32>
    %286 = tpu.matmul %275, %1, %cst_113 {dimension_numbers = #tpu.dot_dimension_numbers<[1], [0], [0], [1], [0, 0, 1, 1], [], []>} : vector<1x32xf32>, vector<32x32xf32>, vector<1x32xf32> -> vector<1x32xf32>
    %cst_114 = arith.constant dense<0.000000e+00> : vector<1x32xf32>
    %287 = tpu.matmul %283, %5, %cst_114 {dimension_numbers = #tpu.dot_dimension_numbers<[1], [0], [0], [1], [0, 0, 1, 1], [], []>} : vector<1x32xf32>, vector<32x32xf32>, vector<1x32xf32> -> vector<1x32xf32>
    %288 = arith.addf %286, %9 : vector<1x32xf32>
    %289 = arith.negf %288 : vector<1x32xf32>
    %290 = math.exp %289 : vector<1x32xf32>
    %cst_115 = arith.constant 1.000000e+00 : f32
    %291 = vector.broadcast %cst_115 : f32 to vector<1x32xf32>
    %292 = arith.addf %291, %290 : vector<1x32xf32>
    %293 = arith.divf %291, %292 : vector<1x32xf32>
    %294 = arith.mulf %288, %293 : vector<1x32xf32>
    %295 = arith.addf %275, %294 : vector<1x32xf32>
    %296 = arith.addf %287, %13 : vector<1x32xf32>
    %297 = arith.negf %296 : vector<1x32xf32>
    %298 = math.exp %297 : vector<1x32xf32>
    %cst_116 = arith.constant 1.000000e+00 : f32
    %299 = vector.broadcast %cst_116 : f32 to vector<1x32xf32>
    %300 = arith.addf %299, %298 : vector<1x32xf32>
    %301 = arith.divf %299, %300 : vector<1x32xf32>
    %302 = arith.mulf %296, %301 : vector<1x32xf32>
    %303 = arith.addf %283, %302 : vector<1x32xf32>
    %cst_117 = arith.constant dense<0.000000e+00> : vector<1x32xf32>
    %304 = tpu.matmul %295, %3, %cst_117 {dimension_numbers = #tpu.dot_dimension_numbers<[1], [0], [0], [1], [0, 0, 1, 1], [], []>} : vector<1x32xf32>, vector<32x32xf32>, vector<1x32xf32> -> vector<1x32xf32>
    %cst_118 = arith.constant dense<0.000000e+00> : vector<1x32xf32>
    %305 = tpu.matmul %303, %7, %cst_118 {dimension_numbers = #tpu.dot_dimension_numbers<[1], [0], [0], [1], [0, 0, 1, 1], [], []>} : vector<1x32xf32>, vector<32x32xf32>, vector<1x32xf32> -> vector<1x32xf32>
    %306 = arith.addf %304, %11 : vector<1x32xf32>
    %307 = arith.negf %306 : vector<1x32xf32>
    %308 = math.exp %307 : vector<1x32xf32>
    %cst_119 = arith.constant 1.000000e+00 : f32
    %309 = vector.broadcast %cst_119 : f32 to vector<1x32xf32>
    %310 = arith.addf %309, %308 : vector<1x32xf32>
    %311 = arith.divf %309, %310 : vector<1x32xf32>
    %312 = arith.mulf %306, %311 : vector<1x32xf32>
    %313 = arith.addf %295, %312 : vector<1x32xf32>
    %314 = arith.addf %305, %15 : vector<1x32xf32>
    %315 = arith.negf %314 : vector<1x32xf32>
    %316 = math.exp %315 : vector<1x32xf32>
    %cst_120 = arith.constant 1.000000e+00 : f32
    %317 = vector.broadcast %cst_120 : f32 to vector<1x32xf32>
    %318 = arith.addf %317, %316 : vector<1x32xf32>
    %319 = arith.divf %317, %318 : vector<1x32xf32>
    %320 = arith.mulf %314, %319 : vector<1x32xf32>
    %321 = arith.addf %303, %320 : vector<1x32xf32>
    %c7 = arith.constant 7 : index
    %c0_121 = arith.constant 0 : index
    %322 = vector.load %arg7[%c7, %c0_121] : memref<16x64xf32, #tpu.memory_space<vmem>>, vector<1x32xf32>
    tpu.vector_store %arg7[%c7, %c0_121], %313 {strides = array<i32>} : memref<16x64xf32, #tpu.memory_space<vmem>>, vector<1x32xf32>,
    %c7_122 = arith.constant 7 : index
    %c32_123 = arith.constant 32 : index
    %323 = vector.load %arg7[%c7_122, %c32_123] : memref<16x64xf32, #tpu.memory_space<vmem>>, vector<1x32xf32>
    tpu.vector_store %arg7[%c7_122, %c32_123], %321 {strides = array<i32>} : memref<16x64xf32, #tpu.memory_space<vmem>>, vector<1x32xf32>,
    %cst_124 = arith.constant dense<0.000000e+00> : vector<1x32xf32>
    %324 = tpu.matmul %313, %1, %cst_124 {dimension_numbers = #tpu.dot_dimension_numbers<[1], [0], [0], [1], [0, 0, 1, 1], [], []>} : vector<1x32xf32>, vector<32x32xf32>, vector<1x32xf32> -> vector<1x32xf32>
    %cst_125 = arith.constant dense<0.000000e+00> : vector<1x32xf32>
    %325 = tpu.matmul %321, %5, %cst_125 {dimension_numbers = #tpu.dot_dimension_numbers<[1], [0], [0], [1], [0, 0, 1, 1], [], []>} : vector<1x32xf32>, vector<32x32xf32>, vector<1x32xf32> -> vector<1x32xf32>
    %326 = arith.addf %324, %9 : vector<1x32xf32>
    %327 = arith.negf %326 : vector<1x32xf32>
    %328 = math.exp %327 : vector<1x32xf32>
    %cst_126 = arith.constant 1.000000e+00 : f32
    %329 = vector.broadcast %cst_126 : f32 to vector<1x32xf32>
    %330 = arith.addf %329, %328 : vector<1x32xf32>
    %331 = arith.divf %329, %330 : vector<1x32xf32>
    %332 = arith.mulf %326, %331 : vector<1x32xf32>
    %333 = arith.addf %313, %332 : vector<1x32xf32>
    %334 = arith.addf %325, %13 : vector<1x32xf32>
    %335 = arith.negf %334 : vector<1x32xf32>
    %336 = math.exp %335 : vector<1x32xf32>
    %cst_127 = arith.constant 1.000000e+00 : f32
    %337 = vector.broadcast %cst_127 : f32 to vector<1x32xf32>
    %338 = arith.addf %337, %336 : vector<1x32xf32>
    %339 = arith.divf %337, %338 : vector<1x32xf32>
    %340 = arith.mulf %334, %339 : vector<1x32xf32>
    %341 = arith.addf %321, %340 : vector<1x32xf32>
    %cst_128 = arith.constant dense<0.000000e+00> : vector<1x32xf32>
    %342 = tpu.matmul %333, %3, %cst_128 {dimension_numbers = #tpu.dot_dimension_numbers<[1], [0], [0], [1], [0, 0, 1, 1], [], []>} : vector<1x32xf32>, vector<32x32xf32>, vector<1x32xf32> -> vector<1x32xf32>
    %cst_129 = arith.constant dense<0.000000e+00> : vector<1x32xf32>
    %343 = tpu.matmul %341, %7, %cst_129 {dimension_numbers = #tpu.dot_dimension_numbers<[1], [0], [0], [1], [0, 0, 1, 1], [], []>} : vector<1x32xf32>, vector<32x32xf32>, vector<1x32xf32> -> vector<1x32xf32>
    %344 = arith.addf %342, %11 : vector<1x32xf32>
    %345 = arith.negf %344 : vector<1x32xf32>
    %346 = math.exp %345 : vector<1x32xf32>
    %cst_130 = arith.constant 1.000000e+00 : f32
    %347 = vector.broadcast %cst_130 : f32 to vector<1x32xf32>
    %348 = arith.addf %347, %346 : vector<1x32xf32>
    %349 = arith.divf %347, %348 : vector<1x32xf32>
    %350 = arith.mulf %344, %349 : vector<1x32xf32>
    %351 = arith.addf %333, %350 : vector<1x32xf32>
    %352 = arith.addf %343, %15 : vector<1x32xf32>
    %353 = arith.negf %352 : vector<1x32xf32>
    %354 = math.exp %353 : vector<1x32xf32>
    %cst_131 = arith.constant 1.000000e+00 : f32
    %355 = vector.broadcast %cst_131 : f32 to vector<1x32xf32>
    %356 = arith.addf %355, %354 : vector<1x32xf32>
    %357 = arith.divf %355, %356 : vector<1x32xf32>
    %358 = arith.mulf %352, %357 : vector<1x32xf32>
    %359 = arith.addf %341, %358 : vector<1x32xf32>
    %c8 = arith.constant 8 : index
    %c0_132 = arith.constant 0 : index
    %360 = vector.load %arg7[%c8, %c0_132] : memref<16x64xf32, #tpu.memory_space<vmem>>, vector<1x32xf32>
    tpu.vector_store %arg7[%c8, %c0_132], %351 {strides = array<i32>} : memref<16x64xf32, #tpu.memory_space<vmem>>, vector<1x32xf32>,
    %c8_133 = arith.constant 8 : index
    %c32_134 = arith.constant 32 : index
    %361 = vector.load %arg7[%c8_133, %c32_134] : memref<16x64xf32, #tpu.memory_space<vmem>>, vector<1x32xf32>
    tpu.vector_store %arg7[%c8_133, %c32_134], %359 {strides = array<i32>} : memref<16x64xf32, #tpu.memory_space<vmem>>, vector<1x32xf32>,
    %cst_135 = arith.constant dense<0.000000e+00> : vector<1x32xf32>
    %362 = tpu.matmul %351, %1, %cst_135 {dimension_numbers = #tpu.dot_dimension_numbers<[1], [0], [0], [1], [0, 0, 1, 1], [], []>} : vector<1x32xf32>, vector<32x32xf32>, vector<1x32xf32> -> vector<1x32xf32>
    %cst_136 = arith.constant dense<0.000000e+00> : vector<1x32xf32>
    %363 = tpu.matmul %359, %5, %cst_136 {dimension_numbers = #tpu.dot_dimension_numbers<[1], [0], [0], [1], [0, 0, 1, 1], [], []>} : vector<1x32xf32>, vector<32x32xf32>, vector<1x32xf32> -> vector<1x32xf32>
    %364 = arith.addf %362, %9 : vector<1x32xf32>
    %365 = arith.negf %364 : vector<1x32xf32>
    %366 = math.exp %365 : vector<1x32xf32>
    %cst_137 = arith.constant 1.000000e+00 : f32
    %367 = vector.broadcast %cst_137 : f32 to vector<1x32xf32>
    %368 = arith.addf %367, %366 : vector<1x32xf32>
    %369 = arith.divf %367, %368 : vector<1x32xf32>
    %370 = arith.mulf %364, %369 : vector<1x32xf32>
    %371 = arith.addf %351, %370 : vector<1x32xf32>
    %372 = arith.addf %363, %13 : vector<1x32xf32>
    %373 = arith.negf %372 : vector<1x32xf32>
    %374 = math.exp %373 : vector<1x32xf32>
    %cst_138 = arith.constant 1.000000e+00 : f32
    %375 = vector.broadcast %cst_138 : f32 to vector<1x32xf32>
    %376 = arith.addf %375, %374 : vector<1x32xf32>
    %377 = arith.divf %375, %376 : vector<1x32xf32>
    %378 = arith.mulf %372, %377 : vector<1x32xf32>
    %379 = arith.addf %359, %378 : vector<1x32xf32>
    %cst_139 = arith.constant dense<0.000000e+00> : vector<1x32xf32>
    %380 = tpu.matmul %371, %3, %cst_139 {dimension_numbers = #tpu.dot_dimension_numbers<[1], [0], [0], [1], [0, 0, 1, 1], [], []>} : vector<1x32xf32>, vector<32x32xf32>, vector<1x32xf32> -> vector<1x32xf32>
    %cst_140 = arith.constant dense<0.000000e+00> : vector<1x32xf32>
    %381 = tpu.matmul %379, %7, %cst_140 {dimension_numbers = #tpu.dot_dimension_numbers<[1], [0], [0], [1], [0, 0, 1, 1], [], []>} : vector<1x32xf32>, vector<32x32xf32>, vector<1x32xf32> -> vector<1x32xf32>
    %382 = arith.addf %380, %11 : vector<1x32xf32>
    %383 = arith.negf %382 : vector<1x32xf32>
    %384 = math.exp %383 : vector<1x32xf32>
    %cst_141 = arith.constant 1.000000e+00 : f32
    %385 = vector.broadcast %cst_141 : f32 to vector<1x32xf32>
    %386 = arith.addf %385, %384 : vector<1x32xf32>
    %387 = arith.divf %385, %386 : vector<1x32xf32>
    %388 = arith.mulf %382, %387 : vector<1x32xf32>
    %389 = arith.addf %371, %388 : vector<1x32xf32>
    %390 = arith.addf %381, %15 : vector<1x32xf32>
    %391 = arith.negf %390 : vector<1x32xf32>
    %392 = math.exp %391 : vector<1x32xf32>
    %cst_142 = arith.constant 1.000000e+00 : f32
    %393 = vector.broadcast %cst_142 : f32 to vector<1x32xf32>
    %394 = arith.addf %393, %392 : vector<1x32xf32>
    %395 = arith.divf %393, %394 : vector<1x32xf32>
    %396 = arith.mulf %390, %395 : vector<1x32xf32>
    %397 = arith.addf %379, %396 : vector<1x32xf32>
    %c9 = arith.constant 9 : index
    %c0_143 = arith.constant 0 : index
    %398 = vector.load %arg7[%c9, %c0_143] : memref<16x64xf32, #tpu.memory_space<vmem>>, vector<1x32xf32>
    tpu.vector_store %arg7[%c9, %c0_143], %389 {strides = array<i32>} : memref<16x64xf32, #tpu.memory_space<vmem>>, vector<1x32xf32>,
    %c9_144 = arith.constant 9 : index
    %c32_145 = arith.constant 32 : index
    %399 = vector.load %arg7[%c9_144, %c32_145] : memref<16x64xf32, #tpu.memory_space<vmem>>, vector<1x32xf32>
    tpu.vector_store %arg7[%c9_144, %c32_145], %397 {strides = array<i32>} : memref<16x64xf32, #tpu.memory_space<vmem>>, vector<1x32xf32>,
    %cst_146 = arith.constant dense<0.000000e+00> : vector<1x32xf32>
    %400 = tpu.matmul %389, %1, %cst_146 {dimension_numbers = #tpu.dot_dimension_numbers<[1], [0], [0], [1], [0, 0, 1, 1], [], []>} : vector<1x32xf32>, vector<32x32xf32>, vector<1x32xf32> -> vector<1x32xf32>
    %cst_147 = arith.constant dense<0.000000e+00> : vector<1x32xf32>
    %401 = tpu.matmul %397, %5, %cst_147 {dimension_numbers = #tpu.dot_dimension_numbers<[1], [0], [0], [1], [0, 0, 1, 1], [], []>} : vector<1x32xf32>, vector<32x32xf32>, vector<1x32xf32> -> vector<1x32xf32>
    %402 = arith.addf %400, %9 : vector<1x32xf32>
    %403 = arith.negf %402 : vector<1x32xf32>
    %404 = math.exp %403 : vector<1x32xf32>
    %cst_148 = arith.constant 1.000000e+00 : f32
    %405 = vector.broadcast %cst_148 : f32 to vector<1x32xf32>
    %406 = arith.addf %405, %404 : vector<1x32xf32>
    %407 = arith.divf %405, %406 : vector<1x32xf32>
    %408 = arith.mulf %402, %407 : vector<1x32xf32>
    %409 = arith.addf %389, %408 : vector<1x32xf32>
    %410 = arith.addf %401, %13 : vector<1x32xf32>
    %411 = arith.negf %410 : vector<1x32xf32>
    %412 = math.exp %411 : vector<1x32xf32>
    %cst_149 = arith.constant 1.000000e+00 : f32
    %413 = vector.broadcast %cst_149 : f32 to vector<1x32xf32>
    %414 = arith.addf %413, %412 : vector<1x32xf32>
    %415 = arith.divf %413, %414 : vector<1x32xf32>
    %416 = arith.mulf %410, %415 : vector<1x32xf32>
    %417 = arith.addf %397, %416 : vector<1x32xf32>
    %cst_150 = arith.constant dense<0.000000e+00> : vector<1x32xf32>
    %418 = tpu.matmul %409, %3, %cst_150 {dimension_numbers = #tpu.dot_dimension_numbers<[1], [0], [0], [1], [0, 0, 1, 1], [], []>} : vector<1x32xf32>, vector<32x32xf32>, vector<1x32xf32> -> vector<1x32xf32>
    %cst_151 = arith.constant dense<0.000000e+00> : vector<1x32xf32>
    %419 = tpu.matmul %417, %7, %cst_151 {dimension_numbers = #tpu.dot_dimension_numbers<[1], [0], [0], [1], [0, 0, 1, 1], [], []>} : vector<1x32xf32>, vector<32x32xf32>, vector<1x32xf32> -> vector<1x32xf32>
    %420 = arith.addf %418, %11 : vector<1x32xf32>
    %421 = arith.negf %420 : vector<1x32xf32>
    %422 = math.exp %421 : vector<1x32xf32>
    %cst_152 = arith.constant 1.000000e+00 : f32
    %423 = vector.broadcast %cst_152 : f32 to vector<1x32xf32>
    %424 = arith.addf %423, %422 : vector<1x32xf32>
    %425 = arith.divf %423, %424 : vector<1x32xf32>
    %426 = arith.mulf %420, %425 : vector<1x32xf32>
    %427 = arith.addf %409, %426 : vector<1x32xf32>
    %428 = arith.addf %419, %15 : vector<1x32xf32>
    %429 = arith.negf %428 : vector<1x32xf32>
    %430 = math.exp %429 : vector<1x32xf32>
    %cst_153 = arith.constant 1.000000e+00 : f32
    %431 = vector.broadcast %cst_153 : f32 to vector<1x32xf32>
    %432 = arith.addf %431, %430 : vector<1x32xf32>
    %433 = arith.divf %431, %432 : vector<1x32xf32>
    %434 = arith.mulf %428, %433 : vector<1x32xf32>
    %435 = arith.addf %417, %434 : vector<1x32xf32>
    %c10 = arith.constant 10 : index
    %c0_154 = arith.constant 0 : index
    %436 = vector.load %arg7[%c10, %c0_154] : memref<16x64xf32, #tpu.memory_space<vmem>>, vector<1x32xf32>
    tpu.vector_store %arg7[%c10, %c0_154], %427 {strides = array<i32>} : memref<16x64xf32, #tpu.memory_space<vmem>>, vector<1x32xf32>,
    %c10_155 = arith.constant 10 : index
    %c32_156 = arith.constant 32 : index
    %437 = vector.load %arg7[%c10_155, %c32_156] : memref<16x64xf32, #tpu.memory_space<vmem>>, vector<1x32xf32>
    tpu.vector_store %arg7[%c10_155, %c32_156], %435 {strides = array<i32>} : memref<16x64xf32, #tpu.memory_space<vmem>>, vector<1x32xf32>,
    %cst_157 = arith.constant dense<0.000000e+00> : vector<1x32xf32>
    %438 = tpu.matmul %427, %1, %cst_157 {dimension_numbers = #tpu.dot_dimension_numbers<[1], [0], [0], [1], [0, 0, 1, 1], [], []>} : vector<1x32xf32>, vector<32x32xf32>, vector<1x32xf32> -> vector<1x32xf32>
    %cst_158 = arith.constant dense<0.000000e+00> : vector<1x32xf32>
    %439 = tpu.matmul %435, %5, %cst_158 {dimension_numbers = #tpu.dot_dimension_numbers<[1], [0], [0], [1], [0, 0, 1, 1], [], []>} : vector<1x32xf32>, vector<32x32xf32>, vector<1x32xf32> -> vector<1x32xf32>
    %440 = arith.addf %438, %9 : vector<1x32xf32>
    %441 = arith.negf %440 : vector<1x32xf32>
    %442 = math.exp %441 : vector<1x32xf32>
    %cst_159 = arith.constant 1.000000e+00 : f32
    %443 = vector.broadcast %cst_159 : f32 to vector<1x32xf32>
    %444 = arith.addf %443, %442 : vector<1x32xf32>
    %445 = arith.divf %443, %444 : vector<1x32xf32>
    %446 = arith.mulf %440, %445 : vector<1x32xf32>
    %447 = arith.addf %427, %446 : vector<1x32xf32>
    %448 = arith.addf %439, %13 : vector<1x32xf32>
    %449 = arith.negf %448 : vector<1x32xf32>
    %450 = math.exp %449 : vector<1x32xf32>
    %cst_160 = arith.constant 1.000000e+00 : f32
    %451 = vector.broadcast %cst_160 : f32 to vector<1x32xf32>
    %452 = arith.addf %451, %450 : vector<1x32xf32>
    %453 = arith.divf %451, %452 : vector<1x32xf32>
    %454 = arith.mulf %448, %453 : vector<1x32xf32>
    %455 = arith.addf %435, %454 : vector<1x32xf32>
    %cst_161 = arith.constant dense<0.000000e+00> : vector<1x32xf32>
    %456 = tpu.matmul %447, %3, %cst_161 {dimension_numbers = #tpu.dot_dimension_numbers<[1], [0], [0], [1], [0, 0, 1, 1], [], []>} : vector<1x32xf32>, vector<32x32xf32>, vector<1x32xf32> -> vector<1x32xf32>
    %cst_162 = arith.constant dense<0.000000e+00> : vector<1x32xf32>
    %457 = tpu.matmul %455, %7, %cst_162 {dimension_numbers = #tpu.dot_dimension_numbers<[1], [0], [0], [1], [0, 0, 1, 1], [], []>} : vector<1x32xf32>, vector<32x32xf32>, vector<1x32xf32> -> vector<1x32xf32>
    %458 = arith.addf %456, %11 : vector<1x32xf32>
    %459 = arith.negf %458 : vector<1x32xf32>
    %460 = math.exp %459 : vector<1x32xf32>
    %cst_163 = arith.constant 1.000000e+00 : f32
    %461 = vector.broadcast %cst_163 : f32 to vector<1x32xf32>
    %462 = arith.addf %461, %460 : vector<1x32xf32>
    %463 = arith.divf %461, %462 : vector<1x32xf32>
    %464 = arith.mulf %458, %463 : vector<1x32xf32>
    %465 = arith.addf %447, %464 : vector<1x32xf32>
    %466 = arith.addf %457, %15 : vector<1x32xf32>
    %467 = arith.negf %466 : vector<1x32xf32>
    %468 = math.exp %467 : vector<1x32xf32>
    %cst_164 = arith.constant 1.000000e+00 : f32
    %469 = vector.broadcast %cst_164 : f32 to vector<1x32xf32>
    %470 = arith.addf %469, %468 : vector<1x32xf32>
    %471 = arith.divf %469, %470 : vector<1x32xf32>
    %472 = arith.mulf %466, %471 : vector<1x32xf32>
    %473 = arith.addf %455, %472 : vector<1x32xf32>
    %c11 = arith.constant 11 : index
    %c0_165 = arith.constant 0 : index
    %474 = vector.load %arg7[%c11, %c0_165] : memref<16x64xf32, #tpu.memory_space<vmem>>, vector<1x32xf32>
    tpu.vector_store %arg7[%c11, %c0_165], %465 {strides = array<i32>} : memref<16x64xf32, #tpu.memory_space<vmem>>, vector<1x32xf32>,
    %c11_166 = arith.constant 11 : index
    %c32_167 = arith.constant 32 : index
    %475 = vector.load %arg7[%c11_166, %c32_167] : memref<16x64xf32, #tpu.memory_space<vmem>>, vector<1x32xf32>
    tpu.vector_store %arg7[%c11_166, %c32_167], %473 {strides = array<i32>} : memref<16x64xf32, #tpu.memory_space<vmem>>, vector<1x32xf32>,
    %cst_168 = arith.constant dense<0.000000e+00> : vector<1x32xf32>
    %476 = tpu.matmul %465, %1, %cst_168 {dimension_numbers = #tpu.dot_dimension_numbers<[1], [0], [0], [1], [0, 0, 1, 1], [], []>} : vector<1x32xf32>, vector<32x32xf32>, vector<1x32xf32> -> vector<1x32xf32>
    %cst_169 = arith.constant dense<0.000000e+00> : vector<1x32xf32>
    %477 = tpu.matmul %473, %5, %cst_169 {dimension_numbers = #tpu.dot_dimension_numbers<[1], [0], [0], [1], [0, 0, 1, 1], [], []>} : vector<1x32xf32>, vector<32x32xf32>, vector<1x32xf32> -> vector<1x32xf32>
    %478 = arith.addf %476, %9 : vector<1x32xf32>
    %479 = arith.negf %478 : vector<1x32xf32>
    %480 = math.exp %479 : vector<1x32xf32>
    %cst_170 = arith.constant 1.000000e+00 : f32
    %481 = vector.broadcast %cst_170 : f32 to vector<1x32xf32>
    %482 = arith.addf %481, %480 : vector<1x32xf32>
    %483 = arith.divf %481, %482 : vector<1x32xf32>
    %484 = arith.mulf %478, %483 : vector<1x32xf32>
    %485 = arith.addf %465, %484 : vector<1x32xf32>
    %486 = arith.addf %477, %13 : vector<1x32xf32>
    %487 = arith.negf %486 : vector<1x32xf32>
    %488 = math.exp %487 : vector<1x32xf32>
    %cst_171 = arith.constant 1.000000e+00 : f32
    %489 = vector.broadcast %cst_171 : f32 to vector<1x32xf32>
    %490 = arith.addf %489, %488 : vector<1x32xf32>
    %491 = arith.divf %489, %490 : vector<1x32xf32>
    %492 = arith.mulf %486, %491 : vector<1x32xf32>
    %493 = arith.addf %473, %492 : vector<1x32xf32>
    %cst_172 = arith.constant dense<0.000000e+00> : vector<1x32xf32>
    %494 = tpu.matmul %485, %3, %cst_172 {dimension_numbers = #tpu.dot_dimension_numbers<[1], [0], [0], [1], [0, 0, 1, 1], [], []>} : vector<1x32xf32>, vector<32x32xf32>, vector<1x32xf32> -> vector<1x32xf32>
    %cst_173 = arith.constant dense<0.000000e+00> : vector<1x32xf32>
    %495 = tpu.matmul %493, %7, %cst_173 {dimension_numbers = #tpu.dot_dimension_numbers<[1], [0], [0], [1], [0, 0, 1, 1], [], []>} : vector<1x32xf32>, vector<32x32xf32>, vector<1x32xf32> -> vector<1x32xf32>
    %496 = arith.addf %494, %11 : vector<1x32xf32>
    %497 = arith.negf %496 : vector<1x32xf32>
    %498 = math.exp %497 : vector<1x32xf32>
    %cst_174 = arith.constant 1.000000e+00 : f32
    %499 = vector.broadcast %cst_174 : f32 to vector<1x32xf32>
    %500 = arith.addf %499, %498 : vector<1x32xf32>
    %501 = arith.divf %499, %500 : vector<1x32xf32>
    %502 = arith.mulf %496, %501 : vector<1x32xf32>
    %503 = arith.addf %485, %502 : vector<1x32xf32>
    %504 = arith.addf %495, %15 : vector<1x32xf32>
    %505 = arith.negf %504 : vector<1x32xf32>
    %506 = math.exp %505 : vector<1x32xf32>
    %cst_175 = arith.constant 1.000000e+00 : f32
    %507 = vector.broadcast %cst_175 : f32 to vector<1x32xf32>
    %508 = arith.addf %507, %506 : vector<1x32xf32>
    %509 = arith.divf %507, %508 : vector<1x32xf32>
    %510 = arith.mulf %504, %509 : vector<1x32xf32>
    %511 = arith.addf %493, %510 : vector<1x32xf32>
    %c12 = arith.constant 12 : index
    %c0_176 = arith.constant 0 : index
    %512 = vector.load %arg7[%c12, %c0_176] : memref<16x64xf32, #tpu.memory_space<vmem>>, vector<1x32xf32>
    tpu.vector_store %arg7[%c12, %c0_176], %503 {strides = array<i32>} : memref<16x64xf32, #tpu.memory_space<vmem>>, vector<1x32xf32>,
    %c12_177 = arith.constant 12 : index
    %c32_178 = arith.constant 32 : index
    %513 = vector.load %arg7[%c12_177, %c32_178] : memref<16x64xf32, #tpu.memory_space<vmem>>, vector<1x32xf32>
    tpu.vector_store %arg7[%c12_177, %c32_178], %511 {strides = array<i32>} : memref<16x64xf32, #tpu.memory_space<vmem>>, vector<1x32xf32>,
    %cst_179 = arith.constant dense<0.000000e+00> : vector<1x32xf32>
    %514 = tpu.matmul %503, %1, %cst_179 {dimension_numbers = #tpu.dot_dimension_numbers<[1], [0], [0], [1], [0, 0, 1, 1], [], []>} : vector<1x32xf32>, vector<32x32xf32>, vector<1x32xf32> -> vector<1x32xf32>
    %cst_180 = arith.constant dense<0.000000e+00> : vector<1x32xf32>
    %515 = tpu.matmul %511, %5, %cst_180 {dimension_numbers = #tpu.dot_dimension_numbers<[1], [0], [0], [1], [0, 0, 1, 1], [], []>} : vector<1x32xf32>, vector<32x32xf32>, vector<1x32xf32> -> vector<1x32xf32>
    %516 = arith.addf %514, %9 : vector<1x32xf32>
    %517 = arith.negf %516 : vector<1x32xf32>
    %518 = math.exp %517 : vector<1x32xf32>
    %cst_181 = arith.constant 1.000000e+00 : f32
    %519 = vector.broadcast %cst_181 : f32 to vector<1x32xf32>
    %520 = arith.addf %519, %518 : vector<1x32xf32>
    %521 = arith.divf %519, %520 : vector<1x32xf32>
    %522 = arith.mulf %516, %521 : vector<1x32xf32>
    %523 = arith.addf %503, %522 : vector<1x32xf32>
    %524 = arith.addf %515, %13 : vector<1x32xf32>
    %525 = arith.negf %524 : vector<1x32xf32>
    %526 = math.exp %525 : vector<1x32xf32>
    %cst_182 = arith.constant 1.000000e+00 : f32
    %527 = vector.broadcast %cst_182 : f32 to vector<1x32xf32>
    %528 = arith.addf %527, %526 : vector<1x32xf32>
    %529 = arith.divf %527, %528 : vector<1x32xf32>
    %530 = arith.mulf %524, %529 : vector<1x32xf32>
    %531 = arith.addf %511, %530 : vector<1x32xf32>
    %cst_183 = arith.constant dense<0.000000e+00> : vector<1x32xf32>
    %532 = tpu.matmul %523, %3, %cst_183 {dimension_numbers = #tpu.dot_dimension_numbers<[1], [0], [0], [1], [0, 0, 1, 1], [], []>} : vector<1x32xf32>, vector<32x32xf32>, vector<1x32xf32> -> vector<1x32xf32>
    %cst_184 = arith.constant dense<0.000000e+00> : vector<1x32xf32>
    %533 = tpu.matmul %531, %7, %cst_184 {dimension_numbers = #tpu.dot_dimension_numbers<[1], [0], [0], [1], [0, 0, 1, 1], [], []>} : vector<1x32xf32>, vector<32x32xf32>, vector<1x32xf32> -> vector<1x32xf32>
    %534 = arith.addf %532, %11 : vector<1x32xf32>
    %535 = arith.negf %534 : vector<1x32xf32>
    %536 = math.exp %535 : vector<1x32xf32>
    %cst_185 = arith.constant 1.000000e+00 : f32
    %537 = vector.broadcast %cst_185 : f32 to vector<1x32xf32>
    %538 = arith.addf %537, %536 : vector<1x32xf32>
    %539 = arith.divf %537, %538 : vector<1x32xf32>
    %540 = arith.mulf %534, %539 : vector<1x32xf32>
    %541 = arith.addf %523, %540 : vector<1x32xf32>
    %542 = arith.addf %533, %15 : vector<1x32xf32>
    %543 = arith.negf %542 : vector<1x32xf32>
    %544 = math.exp %543 : vector<1x32xf32>
    %cst_186 = arith.constant 1.000000e+00 : f32
    %545 = vector.broadcast %cst_186 : f32 to vector<1x32xf32>
    %546 = arith.addf %545, %544 : vector<1x32xf32>
    %547 = arith.divf %545, %546 : vector<1x32xf32>
    %548 = arith.mulf %542, %547 : vector<1x32xf32>
    %549 = arith.addf %531, %548 : vector<1x32xf32>
    %c13 = arith.constant 13 : index
    %c0_187 = arith.constant 0 : index
    %550 = vector.load %arg7[%c13, %c0_187] : memref<16x64xf32, #tpu.memory_space<vmem>>, vector<1x32xf32>
    tpu.vector_store %arg7[%c13, %c0_187], %541 {strides = array<i32>} : memref<16x64xf32, #tpu.memory_space<vmem>>, vector<1x32xf32>,
    %c13_188 = arith.constant 13 : index
    %c32_189 = arith.constant 32 : index
    %551 = vector.load %arg7[%c13_188, %c32_189] : memref<16x64xf32, #tpu.memory_space<vmem>>, vector<1x32xf32>
    tpu.vector_store %arg7[%c13_188, %c32_189], %549 {strides = array<i32>} : memref<16x64xf32, #tpu.memory_space<vmem>>, vector<1x32xf32>,
    %cst_190 = arith.constant dense<0.000000e+00> : vector<1x32xf32>
    %552 = tpu.matmul %541, %1, %cst_190 {dimension_numbers = #tpu.dot_dimension_numbers<[1], [0], [0], [1], [0, 0, 1, 1], [], []>} : vector<1x32xf32>, vector<32x32xf32>, vector<1x32xf32> -> vector<1x32xf32>
    %cst_191 = arith.constant dense<0.000000e+00> : vector<1x32xf32>
    %553 = tpu.matmul %549, %5, %cst_191 {dimension_numbers = #tpu.dot_dimension_numbers<[1], [0], [0], [1], [0, 0, 1, 1], [], []>} : vector<1x32xf32>, vector<32x32xf32>, vector<1x32xf32> -> vector<1x32xf32>
    %554 = arith.addf %552, %9 : vector<1x32xf32>
    %555 = arith.negf %554 : vector<1x32xf32>
    %556 = math.exp %555 : vector<1x32xf32>
    %cst_192 = arith.constant 1.000000e+00 : f32
    %557 = vector.broadcast %cst_192 : f32 to vector<1x32xf32>
    %558 = arith.addf %557, %556 : vector<1x32xf32>
    %559 = arith.divf %557, %558 : vector<1x32xf32>
    %560 = arith.mulf %554, %559 : vector<1x32xf32>
    %561 = arith.addf %541, %560 : vector<1x32xf32>
    %562 = arith.addf %553, %13 : vector<1x32xf32>
    %563 = arith.negf %562 : vector<1x32xf32>
    %564 = math.exp %563 : vector<1x32xf32>
    %cst_193 = arith.constant 1.000000e+00 : f32
    %565 = vector.broadcast %cst_193 : f32 to vector<1x32xf32>
    %566 = arith.addf %565, %564 : vector<1x32xf32>
    %567 = arith.divf %565, %566 : vector<1x32xf32>
    %568 = arith.mulf %562, %567 : vector<1x32xf32>
    %569 = arith.addf %549, %568 : vector<1x32xf32>
    %cst_194 = arith.constant dense<0.000000e+00> : vector<1x32xf32>
    %570 = tpu.matmul %561, %3, %cst_194 {dimension_numbers = #tpu.dot_dimension_numbers<[1], [0], [0], [1], [0, 0, 1, 1], [], []>} : vector<1x32xf32>, vector<32x32xf32>, vector<1x32xf32> -> vector<1x32xf32>
    %cst_195 = arith.constant dense<0.000000e+00> : vector<1x32xf32>
    %571 = tpu.matmul %569, %7, %cst_195 {dimension_numbers = #tpu.dot_dimension_numbers<[1], [0], [0], [1], [0, 0, 1, 1], [], []>} : vector<1x32xf32>, vector<32x32xf32>, vector<1x32xf32> -> vector<1x32xf32>
    %572 = arith.addf %570, %11 : vector<1x32xf32>
    %573 = arith.negf %572 : vector<1x32xf32>
    %574 = math.exp %573 : vector<1x32xf32>
    %cst_196 = arith.constant 1.000000e+00 : f32
    %575 = vector.broadcast %cst_196 : f32 to vector<1x32xf32>
    %576 = arith.addf %575, %574 : vector<1x32xf32>
    %577 = arith.divf %575, %576 : vector<1x32xf32>
    %578 = arith.mulf %572, %577 : vector<1x32xf32>
    %579 = arith.addf %561, %578 : vector<1x32xf32>
    %580 = arith.addf %571, %15 : vector<1x32xf32>
    %581 = arith.negf %580 : vector<1x32xf32>
    %582 = math.exp %581 : vector<1x32xf32>
    %cst_197 = arith.constant 1.000000e+00 : f32
    %583 = vector.broadcast %cst_197 : f32 to vector<1x32xf32>
    %584 = arith.addf %583, %582 : vector<1x32xf32>
    %585 = arith.divf %583, %584 : vector<1x32xf32>
    %586 = arith.mulf %580, %585 : vector<1x32xf32>
    %587 = arith.addf %569, %586 : vector<1x32xf32>
    %c14 = arith.constant 14 : index
    %c0_198 = arith.constant 0 : index
    %588 = vector.load %arg7[%c14, %c0_198] : memref<16x64xf32, #tpu.memory_space<vmem>>, vector<1x32xf32>
    tpu.vector_store %arg7[%c14, %c0_198], %579 {strides = array<i32>} : memref<16x64xf32, #tpu.memory_space<vmem>>, vector<1x32xf32>,
    %c14_199 = arith.constant 14 : index
    %c32_200 = arith.constant 32 : index
    %589 = vector.load %arg7[%c14_199, %c32_200] : memref<16x64xf32, #tpu.memory_space<vmem>>, vector<1x32xf32>
    tpu.vector_store %arg7[%c14_199, %c32_200], %587 {strides = array<i32>} : memref<16x64xf32, #tpu.memory_space<vmem>>, vector<1x32xf32>,
    %cst_201 = arith.constant dense<0.000000e+00> : vector<1x32xf32>
    %590 = tpu.matmul %579, %1, %cst_201 {dimension_numbers = #tpu.dot_dimension_numbers<[1], [0], [0], [1], [0, 0, 1, 1], [], []>} : vector<1x32xf32>, vector<32x32xf32>, vector<1x32xf32> -> vector<1x32xf32>
    %cst_202 = arith.constant dense<0.000000e+00> : vector<1x32xf32>
    %591 = tpu.matmul %587, %5, %cst_202 {dimension_numbers = #tpu.dot_dimension_numbers<[1], [0], [0], [1], [0, 0, 1, 1], [], []>} : vector<1x32xf32>, vector<32x32xf32>, vector<1x32xf32> -> vector<1x32xf32>
    %592 = arith.addf %590, %9 : vector<1x32xf32>
    %593 = arith.negf %592 : vector<1x32xf32>
    %594 = math.exp %593 : vector<1x32xf32>
    %cst_203 = arith.constant 1.000000e+00 : f32
    %595 = vector.broadcast %cst_203 : f32 to vector<1x32xf32>
    %596 = arith.addf %595, %594 : vector<1x32xf32>
    %597 = arith.divf %595, %596 : vector<1x32xf32>
    %598 = arith.mulf %592, %597 : vector<1x32xf32>
    %599 = arith.addf %579, %598 : vector<1x32xf32>
    %600 = arith.addf %591, %13 : vector<1x32xf32>
    %601 = arith.negf %600 : vector<1x32xf32>
    %602 = math.exp %601 : vector<1x32xf32>
    %cst_204 = arith.constant 1.000000e+00 : f32
    %603 = vector.broadcast %cst_204 : f32 to vector<1x32xf32>
    %604 = arith.addf %603, %602 : vector<1x32xf32>
    %605 = arith.divf %603, %604 : vector<1x32xf32>
    %606 = arith.mulf %600, %605 : vector<1x32xf32>
    %607 = arith.addf %587, %606 : vector<1x32xf32>
    %cst_205 = arith.constant dense<0.000000e+00> : vector<1x32xf32>
    %608 = tpu.matmul %599, %3, %cst_205 {dimension_numbers = #tpu.dot_dimension_numbers<[1], [0], [0], [1], [0, 0, 1, 1], [], []>} : vector<1x32xf32>, vector<32x32xf32>, vector<1x32xf32> -> vector<1x32xf32>
    %cst_206 = arith.constant dense<0.000000e+00> : vector<1x32xf32>
    %609 = tpu.matmul %607, %7, %cst_206 {dimension_numbers = #tpu.dot_dimension_numbers<[1], [0], [0], [1], [0, 0, 1, 1], [], []>} : vector<1x32xf32>, vector<32x32xf32>, vector<1x32xf32> -> vector<1x32xf32>
    %610 = arith.addf %608, %11 : vector<1x32xf32>
    %611 = arith.negf %610 : vector<1x32xf32>
    %612 = math.exp %611 : vector<1x32xf32>
    %cst_207 = arith.constant 1.000000e+00 : f32
    %613 = vector.broadcast %cst_207 : f32 to vector<1x32xf32>
    %614 = arith.addf %613, %612 : vector<1x32xf32>
    %615 = arith.divf %613, %614 : vector<1x32xf32>
    %616 = arith.mulf %610, %615 : vector<1x32xf32>
    %617 = arith.addf %599, %616 : vector<1x32xf32>
    %618 = arith.addf %609, %15 : vector<1x32xf32>
    %619 = arith.negf %618 : vector<1x32xf32>
    %620 = math.exp %619 : vector<1x32xf32>
    %cst_208 = arith.constant 1.000000e+00 : f32
    %621 = vector.broadcast %cst_208 : f32 to vector<1x32xf32>
    %622 = arith.addf %621, %620 : vector<1x32xf32>
    %623 = arith.divf %621, %622 : vector<1x32xf32>
    %624 = arith.mulf %618, %623 : vector<1x32xf32>
    %625 = arith.addf %607, %624 : vector<1x32xf32>
    %c15 = arith.constant 15 : index
    %c0_209 = arith.constant 0 : index
    %626 = vector.load %arg7[%c15, %c0_209] : memref<16x64xf32, #tpu.memory_space<vmem>>, vector<1x32xf32>
    tpu.vector_store %arg7[%c15, %c0_209], %617 {strides = array<i32>} : memref<16x64xf32, #tpu.memory_space<vmem>>, vector<1x32xf32>,
    %c15_210 = arith.constant 15 : index
    %c32_211 = arith.constant 32 : index
    %627 = vector.load %arg7[%c15_210, %c32_211] : memref<16x64xf32, #tpu.memory_space<vmem>>, vector<1x32xf32>
    tpu.vector_store %arg7[%c15_210, %c32_211], %625 {strides = array<i32>} : memref<16x64xf32, #tpu.memory_space<vmem>>, vector<1x32xf32>,
    %c0_212 = arith.constant 0 : index
    %c0_213 = arith.constant 0 : index
    %628 = vector.load %arg0[%c0_212, %c0_213] : memref<8x2xi32, #tpu.memory_space<vmem>>, vector<8x2xi32>
    %629 = tpu.iota {dimensions = array<i32: 1>} : vector<8x16xi32>
    %630 = vector.extract_strided_slice %628 {offsets = [0, 0], sizes = [8, 1], strides = [1, 1]} : vector<8x2xi32> to vector<8x1xi32>
    %631 = vector.broadcast %630 : vector<8x1xi32> to vector<8x16xi32>
    %632 = arith.cmpi eq, %629, %631 : vector<8x16xi32>
    %633 = arith.extui %632 : vector<8x16xi1> to vector<8x16xi32>
    %634 = arith.sitofp %633 : vector<8x16xi32> to vector<8x16xf32>
    %635 = vector.extract_strided_slice %628 {offsets = [0, 1], sizes = [8, 1], strides = [1, 1]} : vector<8x2xi32> to vector<8x1xi32>
    %636 = vector.broadcast %635 : vector<8x1xi32> to vector<8x16xi32>
    %637 = arith.cmpi eq, %629, %636 : vector<8x16xi32>
    %638 = arith.extui %637 : vector<8x16xi1> to vector<8x16xi32>
    %639 = arith.sitofp %638 : vector<8x16xi32> to vector<8x16xf32>
    %c0_214 = arith.constant 0 : index
    %c0_215 = arith.constant 0 : index
    %640 = vector.load %arg7[%c0_214, %c0_215] : memref<16x64xf32, #tpu.memory_space<vmem>>, vector<16x64xf32>
    %cst_216 = arith.constant dense<0.000000e+00> : vector<8x64xf32>
    %641 = tpu.matmul %634, %640, %cst_216 {dimension_numbers = #tpu.dot_dimension_numbers<[1], [0], [0], [1], [0, 0, 1, 1], [], []>} : vector<8x16xf32>, vector<16x64xf32>, vector<8x64xf32> -> vector<8x64xf32>
    %cst_217 = arith.constant dense<0.000000e+00> : vector<8x64xf32>
    %642 = tpu.matmul %639, %640, %cst_217 {dimension_numbers = #tpu.dot_dimension_numbers<[1], [0], [0], [1], [0, 0, 1, 1], [], []>} : vector<8x16xf32>, vector<16x64xf32>, vector<8x64xf32> -> vector<8x64xf32>
    %643 = tpu.iota {dimensions = array<i32: 1>} : vector<8x64xi32>
    %c32_i32 = arith.constant 32 : i32
    %644 = vector.broadcast %c32_i32 : i32 to vector<8x64xi32>
    %645 = arith.cmpi slt, %643, %644 : vector<8x64xi32>
    %646 = arith.select %645, %641, %642 : vector<8x64xi1>, vector<8x64xf32>
    %c0_218 = arith.constant 0 : index
    %c0_219 = arith.constant 0 : index
    %647 = vector.load %arg4[%c0_218, %c0_219] : memref<64x8xf32, #tpu.memory_space<vmem>>, vector<64x8xf32>
    %cst_220 = arith.constant dense<0.000000e+00> : vector<8x8xf32>
    %648 = tpu.matmul %646, %647, %cst_220 {dimension_numbers = #tpu.dot_dimension_numbers<[1], [0], [0], [1], [0, 0, 1, 1], [], []>} : vector<8x64xf32>, vector<64x8xf32>, vector<8x8xf32> -> vector<8x8xf32>
    %c0_221 = arith.constant 0 : index
    %c0_222 = arith.constant 0 : index
    %649 = vector.load %arg5[%c0_221, %c0_222] : memref<1x8xf32, #tpu.memory_space<vmem>>, vector<1x8xf32>
    %650 = vector.broadcast %649 : vector<1x8xf32> to vector<8x8xf32>
    %651 = arith.addf %648, %650 : vector<8x8xf32>
    %652 = arith.negf %651 : vector<8x8xf32>
    %653 = math.exp %652 : vector<8x8xf32>
    %cst_223 = arith.constant 1.000000e+00 : f32
    %654 = vector.broadcast %cst_223 : f32 to vector<8x8xf32>
    %655 = arith.addf %654, %653 : vector<8x8xf32>
    %656 = arith.divf %654, %655 : vector<8x8xf32>
    %c0_224 = arith.constant 0 : index
    %c0_225 = arith.constant 0 : index
    %657 = vector.load %arg6[%c0_224, %c0_225] : memref<8x8xf32, #tpu.memory_space<vmem>>, vector<8x8xf32>
    tpu.vector_store %arg6[%c0_224, %c0_225], %656 {strides = array<i32>} : memref<8x8xf32, #tpu.memory_space<vmem>>, vector<8x8xf32>,
    return
  }
}

</mosaic_0001>

<llo_original>
// kernel: rnn_forward.1
$region0: #{rnn_forward.1}
  #allocation0 [shape = 'u32[]', space=smem, size = 0x4, offset = 0x4, fixed_abs, tag = 'smem constant byte address 0x4 - core index']
  #allocation1 [shape = 'u32[144,128]{1,0:T(1,128)}', space=vmem, size = 0x12000, scoped, tag = 'internal scratch']
  #allocation2 [shape = 'f32[16,64]{1,0:T(8,128)}', space=vmem, size = 0x2000, scoped, tag = 'scratch operand']
  %s0 = inlined_call_operand.vmem [shape: s32[8,2], index: 0, kind: input, shape index: {}]
  %s1 = inlined_call_operand.vmem [shape: f32[2,1,32], index: 1, kind: input, shape index: {}]
  %s2 = inlined_call_operand.vmem [shape: f32[2,2,32,32], index: 2, kind: input, shape index: {}]
  %s3 = inlined_call_operand.vmem [shape: f32[2,2,1,32], index: 3, kind: input, shape index: {}]
  %s4 = inlined_call_operand.vmem [shape: f32[64,8], index: 4, kind: input, shape index: {}]
  %s5 = inlined_call_operand.vmem [shape: f32[1,8], index: 5, kind: input, shape index: {}]
  %s6 = inlined_call_operand.hbm [shape: f32[8,8], index: 6, kind: output, shape index: {}]
  %s7 = sld [smem:[#allocation0]]
  $region34: #{rnn_forward.1} parent=0
    _
  %s9 = ssub.s32 1, %s7
  %s10 = scalar_select 0, %s9, %s7
  $region1: #{rnn_forward.1} parent=0
    #allocation3 [shape = 'u8[4096]{0}', space=vmem, size = 0x1000, scoped, tag = 'output window, operand 0, single buffered']
    #allocation4 [shape = 's32[1]{0}', space=sflag, size = 0x4, scoped, tag = 'scoped memory for rnn_forward.1']
    %11 = vsyncpa [#allocation4], 0
    // Predicated region
    $region2: #{rnn_forward.1} parent=1 // pred_check
      _
    $region3: #{rnn_forward.1} parent=1 // pred_check_branch
      %13 = sbr.rel (0) target = $region5
    $region4: #{rnn_forward.1} parent=1 // pred_region
      _
    $region5: #{rnn_forward.1} parent=1 // pred_fallthru
      _
    // Predicated region
    $region6: #{rnn_forward.1} parent=1 // pred_check
      _
    $region7: #{rnn_forward.1} parent=1 // pred_check_branch
      %15 = sbr.rel (0) target = $region9
    $region8: #{rnn_forward.1} parent=1 // pred_region
      _
    $region9: #{rnn_forward.1} parent=1 // pred_fallthru
      _
    // Predicated region
    $region10: #{rnn_forward.1} parent=1 // pred_check
      _
    $region11: #{rnn_forward.1} parent=1 // pred_check_branch
      %17 = sbr.rel (0) target = $region13
    $region12: #{rnn_forward.1} parent=1 // pred_region
      _
    $region13: #{rnn_forward.1} parent=1 // pred_fallthru
      _
    // Predicated region
    $region14: #{rnn_forward.1} parent=1 // pred_check
      _
    $region15: #{rnn_forward.1} parent=1 // pred_check_branch
      %19 = sbr.rel (0) target = $region17
    $region16: #{rnn_forward.1} parent=1 // pred_region
      _
    $region17: #{rnn_forward.1} parent=1 // pred_fallthru
      _
    // Predicated region
    $region18: #{rnn_forward.1} parent=1 // pred_check
      _
    $region19: #{rnn_forward.1} parent=1 // pred_check_branch
      %21 = sbr.rel (0) target = $region21
    $region20: #{rnn_forward.1} parent=1 // pred_region
      _
    $region21: #{rnn_forward.1} parent=1 // pred_fallthru
      _
    // Predicated region
    $region22: #{rnn_forward.1} parent=1 // pred_check
      _
    $region23: #{rnn_forward.1} parent=1 // pred_check_branch
      %23 = sbr.rel (0) target = $region25
    $region24: #{rnn_forward.1} parent=1 // pred_region
      _
    $region25: #{rnn_forward.1} parent=1 // pred_fallthru
      _
    %v24 = vld [vmem:[%s2] sm:$0xff]
    %v25 = vld [vmem:[%s2 + $0x8] sm:$0xff]
    %v26 = vld [vmem:[%s2 + $0x10] sm:$0xff]
    %v27 = vld [vmem:[%s2 + $0x18] sm:$0xff]
    %s28 = scalar_lea.vmem %s2, 32
    %v29 = vld [vmem:[%s28] sm:$0xff]
    %v30 = vld [vmem:[%s28 + $0x8] sm:$0xff]
    %v31 = vld [vmem:[%s28 + $0x10] sm:$0xff]
    %v32 = vld [vmem:[%s28 + $0x18] sm:$0xff]
    %s33 = scalar_lea.vmem %s2, 64
    %v34 = vld [vmem:[%s33] sm:$0xff]
    %v35 = vld [vmem:[%s33 + $0x8] sm:$0xff]
    %v36 = vld [vmem:[%s33 + $0x10] sm:$0xff]
    %v37 = vld [vmem:[%s33 + $0x18] sm:$0xff]
    %s38 = scalar_lea.vmem %s2, 96
    %v39 = vld [vmem:[%s38] sm:$0xff]
    %v40 = vld [vmem:[%s38 + $0x8] sm:$0xff]
    %v41 = vld [vmem:[%s38 + $0x10] sm:$0xff]
    %v42 = vld [vmem:[%s38 + $0x18] sm:$0xff]
    %v43 = vld [vmem:[%s3] sm:$0x1]
    %s44 = scalar_lea.vmem %s3, 1
    %v45 = vld [vmem:[%s44] sm:$0x1]
    %s46 = scalar_lea.vmem %s3, 2
    %v47 = vld [vmem:[%s46] sm:$0x1]
    %s48 = scalar_lea.vmem %s3, 3
    %v49 = vld [vmem:[%s48] sm:$0x1]
    %v50 = vld [vmem:[%s1] sm:$0x1]
    %s51 = scalar_lea.vmem %s1, 1
    %v52 = vld [vmem:[%s51] sm:$0x1]
    %vm53 = vcmask 261120
    %v55 = vsel %vm53, %v50, 0
    %57 = vmatprep.subr.mxu0 0.0
    %58 = vmatpush1.msra.mxu0 %v24
    %59 = vmatprep.subr.mxu0 0.0
    %60 = vmatpush1.msra.mxu0 %v25
    %61 = vmatprep.subr.mxu0 0.0
    %62 = vmatpush1.msra.mxu0 %v26
    %63 = vmatprep.subr.mxu0 0.0
    %64 = vmatpush1.msra.mxu0 %v27
    %65 = vmatprep.subr.mxu0 0.0
    %66 = vmatpush1.msra.mxu0 0.0
    %67 = vmatprep.subr.mxu0 0.0
    %68 = vmatpush1.msra.mxu0 0.0
    %69 = vmatprep.subr.mxu0 0.0
    %70 = vmatpush1.msra.mxu0 0.0
    %71 = vmatprep.subr.mxu0 0.0
    %72 = vmatpush1.msra.mxu0 0.0
    %73 = vmatprep.subr.mxu0 0.0
    %74 = vmatpush1.msra.mxu0 0.0
    %75 = vmatprep.subr.mxu0 0.0
    %76 = vmatpush1.msra.mxu0 0.0
    %77 = vmatprep.subr.mxu0 0.0
    %78 = vmatpush1.msra.mxu0 0.0
    %79 = vmatprep.subr.mxu0 0.0
    %80 = vmatpush1.msra.mxu0 0.0
    %81 = vmatprep.subr.mxu0 0.0
    %82 = vmatpush1.msra.mxu0 0.0
    %83 = vmatprep.subr.mxu0 0.0
    %84 = vmatpush1.msra.mxu0 0.0
    %85 = vmatprep.subr.mxu0 0.0
    %86 = vmatpush1.msra.mxu0 0.0
    %87 = vmatprep.subr.mxu0 0.0
    %88 = vmatpush1.msra.mxu0 0.0
    %89 = vmatprep.subr.mxu0 0.0
    %90 = vmatpush1.msra.mxu0 0.0
    %91 = vmatprep.subr.mxu0 0.0
    %92 = vmatpush1.msra.mxu0 0.0
    %93 = vmatprep.subr.mxu0 0.0
    %94 = vmatpush1.msra.mxu0 0.0
    %95 = vmatprep.subr.mxu0 0.0
    %96 = vmatpush1.msra.mxu0 0.0
    %97 = vmatprep.subr.mxu0 0.0
    %98 = vmatpush1.msra.mxu0 0.0
    %99 = vmatprep.subr.mxu0 0.0
    %100 = vmatpush1.msra.mxu0 0.0
    %101 = vmatprep.subr.mxu0 0.0
    %102 = vmatpush1.msra.mxu0 0.0
    %103 = vmatprep.subr.mxu0 0.0
    %104 = vmatpush1.msra.mxu0 0.0
    %105 = vmatprep.subr.mxu0 0.0
    %106 = vmatpush1.msra.mxu0 0.0
    %107 = vmatprep.subr.mxu0 0.0
    %108 = vmatpush1.msra.mxu0 0.0
    %109 = vmatprep.subr.mxu0 0.0
    %110 = vmatpush1.msra.mxu0 0.0
    %111 = vmatprep.subr.mxu0 0.0
    %112 = vmatpush1.msra.mxu0 0.0
    %113 = vmatprep.subr.mxu0 0.0
    %114 = vmatpush1.msra.mxu0 0.0
    %115 = vmatprep.subr.mxu0 0.0
    %116 = vmatpush1.msra.mxu0 0.0
    %117 = vmatprep.subr.mxu0 0.0
    %118 = vmatpush1.msra.mxu0 0.0
    %119 = vmatprep.subr.mxu0 0.0
    %120 = vmatpush1.msra.mxu0 0.0
    %121 = vmatprep.mubr.f32.mxu0 0.0
    %122 = vmatmul.mubr.f32.gmra.mrb[0].mxu0 %v55
    %v123 = vpop.f32.mrb[0].mxu0
    %v124 = vadd.f32 %v43, %v123
    %v125 = vpop.f32.mrb[0].mxu0
    %126 = vdwg.mxu0
    %v127 = vxor.u32 %v124, 2147483648
    %v128 = vmul.f32 %v127, 1.442695
    %v129 = vpow.pop %v128
    %v130 = vadd.f32 %v129, 1.0
    %v131 = vrcp.pop %v130
    %v132 = vmul.f32 1.0, %v131
    %v133 = vmul.f32 %v124, %v132
    %v134 = vadd.f32 %v50, %v133
    %v136 = vsel %vm53, %v52, 0
    %138 = vmatprep.subr.mxu0 0.0
    %139 = vmatpush1.msra.mxu0 %v34
    %140 = vmatprep.subr.mxu0 0.0
    %141 = vmatpush1.msra.mxu0 %v35
    %142 = vmatprep.subr.mxu0 0.0
    %143 = vmatpush1.msra.mxu0 %v36
    %144 = vmatprep.subr.mxu0 0.0
    %145 = vmatpush1.msra.mxu0 %v37
    %146 = vmatprep.subr.mxu0 0.0
    %147 = vmatpush1.msra.mxu0 0.0
    %148 = vmatprep.subr.mxu0 0.0
    %149 = vmatpush1.msra.mxu0 0.0
    %150 = vmatprep.subr.mxu0 0.0
    %151 = vmatpush1.msra.mxu0 0.0
    %152 = vmatprep.subr.mxu0 0.0
    %153 = vmatpush1.msra.mxu0 0.0
    %154 = vmatprep.subr.mxu0 0.0
    %155 = vmatpush1.msra.mxu0 0.0
    %156 = vmatprep.subr.mxu0 0.0
    %157 = vmatpush1.msra.mxu0 0.0
    %158 = vmatprep.subr.mxu0 0.0
    %159 = vmatpush1.msra.mxu0 0.0
    %160 = vmatprep.subr.mxu0 0.0
    %161 = vmatpush1.msra.mxu0 0.0
    %162 = vmatprep.subr.mxu0 0.0
    %163 = vmatpush1.msra.mxu0 0.0
    %164 = vmatprep.subr.mxu0 0.0
    %165 = vmatpush1.msra.mxu0 0.0
    %166 = vmatprep.subr.mxu0 0.0
    %167 = vmatpush1.msra.mxu0 0.0
    %168 = vmatprep.subr.mxu0 0.0
    %169 = vmatpush1.msra.mxu0 0.0
    %170 = vmatprep.subr.mxu0 0.0
    %171 = vmatpush1.msra.mxu0 0.0
    %172 = vmatprep.subr.mxu0 0.0
    %173 = vmatpush1.msra.mxu0 0.0
    %174 = vmatprep.subr.mxu0 0.0
    %175 = vmatpush1.msra.mxu0 0.0
    %176 = vmatprep.subr.mxu0 0.0
    %177 = vmatpush1.msra.mxu0 0.0
    %178 = vmatprep.subr.mxu0 0.0
    %179 = vmatpush1.msra.mxu0 0.0
    %180 = vmatprep.subr.mxu0 0.0
    %181 = vmatpush1.msra.mxu0 0.0
    %182 = vmatprep.subr.mxu0 0.0
    %183 = vmatpush1.msra.mxu0 0.0
    %184 = vmatprep.subr.mxu0 0.0
    %185 = vmatpush1.msra.mxu0 0.0
    %186 = vmatprep.subr.mxu0 0.0
    %187 = vmatpush1.msra.mxu0 0.0
    %188 = vmatprep.subr.mxu0 0.0
    %189 = vmatpush1.msra.mxu0 0.0
    %190 = vmatprep.subr.mxu0 0.0
    %191 = vmatpush1.msra.mxu0 0.0
    %192 = vmatprep.subr.mxu0 0.0
    %193 = vmatpush1.msra.mxu0 0.0
    %194 = vmatprep.subr.mxu0 0.0
    %195 = vmatpush1.msra.mxu0 0.0
    %196 = vmatprep.subr.mxu0 0.0
    %197 = vmatpush1.msra.mxu0 0.0
    %198 = vmatprep.subr.mxu0 0.0
    %199 = vmatpush1.msra.mxu0 0.0
    %200 = vmatprep.subr.mxu0 0.0
    %201 = vmatpush1.msra.mxu0 0.0
    %202 = vmatprep.mubr.f32.mxu0 0.0
    %203 = vmatmul.mubr.f32.gmra.mrb[0].mxu0 %v136
    %v204 = vpop.f32.mrb[0].mxu0
    %v205 = vadd.f32 %v47, %v204
    %v206 = vpop.f32.mrb[0].mxu0
    %207 = vdwg.mxu0
    %v208 = vxor.u32 %v205, 2147483648
    %v209 = vmul.f32 %v208, 1.442695
    %v210 = vpow.pop %v209
    %v211 = vadd.f32 %v210, 1.0
    %v212 = vrcp.pop %v211
    %v213 = vmul.f32 1.0, %v212
    %v214 = vmul.f32 %v205, %v213
    %v215 = vadd.f32 %v52, %v214
    %v217 = vsel %vm53, %v134, 0
    %219 = vmatprep.subr.mxu0 0.0
    %220 = vmatpush1.msra.mxu0 %v29
    %221 = vmatprep.subr.mxu0 0.0
    %222 = vmatpush1.msra.mxu0 %v30
    %223 = vmatprep.subr.mxu0 0.0
    %224 = vmatpush1.msra.mxu0 %v31
    %225 = vmatprep.subr.mxu0 0.0
    %226 = vmatpush1.msra.mxu0 %v32
    %227 = vmatprep.subr.mxu0 0.0
    %228 = vmatpush1.msra.mxu0 0.0
    %229 = vmatprep.subr.mxu0 0.0
    %230 = vmatpush1.msra.mxu0 0.0
    %231 = vmatprep.subr.mxu0 0.0
    %232 = vmatpush1.msra.mxu0 0.0
    %233 = vmatprep.subr.mxu0 0.0
    %234 = vmatpush1.msra.mxu0 0.0
    %235 = vmatprep.subr.mxu0 0.0
    %236 = vmatpush1.msra.mxu0 0.0
    %237 = vmatprep.subr.mxu0 0.0
    %238 = vmatpush1.msra.mxu0 0.0
    %239 = vmatprep.subr.mxu0 0.0
    %240 = vmatpush1.msra.mxu0 0.0
    %241 = vmatprep.subr.mxu0 0.0
    %242 = vmatpush1.msra.mxu0 0.0
    %243 = vmatprep.subr.mxu0 0.0
    %244 = vmatpush1.msra.mxu0 0.0
    %245 = vmatprep.subr.mxu0 0.0
    %246 = vmatpush1.msra.mxu0 0.0
    %247 = vmatprep.subr.mxu0 0.0
    %248 = vmatpush1.msra.mxu0 0.0
    %249 = vmatprep.subr.mxu0 0.0
    %250 = vmatpush1.msra.mxu0 0.0
    %251 = vmatprep.subr.mxu0 0.0
    %252 = vmatpush1.msra.mxu0 0.0
    %253 = vmatprep.subr.mxu0 0.0
    %254 = vmatpush1.msra.mxu0 0.0
    %255 = vmatprep.subr.mxu0 0.0
    %256 = vmatpush1.msra.mxu0 0.0
    %257 = vmatprep.subr.mxu0 0.0
    %258 = vmatpush1.msra.mxu0 0.0
    %259 = vmatprep.subr.mxu0 0.0
    %260 = vmatpush1.msra.mxu0 0.0
    %261 = vmatprep.subr.mxu0 0.0
    %262 = vmatpush1.msra.mxu0 0.0
    %263 = vmatprep.subr.mxu0 0.0
    %264 = vmatpush1.msra.mxu0 0.0
    %265 = vmatprep.subr.mxu0 0.0
    %266 = vmatpush1.msra.mxu0 0.0
    %267 = vmatprep.subr.mxu0 0.0
    %268 = vmatpush1.msra.mxu0 0.0
    %269 = vmatprep.subr.mxu0 0.0
    %270 = vmatpush1.msra.mxu0 0.0
    %271 = vmatprep.subr.mxu0 0.0
    %272 = vmatpush1.msra.mxu0 0.0
    %273 = vmatprep.subr.mxu0 0.0
    %274 = vmatpush1.msra.mxu0 0.0
    %275 = vmatprep.subr.mxu0 0.0
    %276 = vmatpush1.msra.mxu0 0.0
    %277 = vmatprep.subr.mxu0 0.0
    %278 = vmatpush1.msra.mxu0 0.0
    %279 = vmatprep.subr.mxu0 0.0
    %280 = vmatpush1.msra.mxu0 0.0
    %281 = vmatprep.subr.mxu0 0.0
    %282 = vmatpush1.msra.mxu0 0.0
    %283 = vmatprep.mubr.f32.mxu0 0.0
    %284 = vmatmul.mubr.f32.gmra.mrb[0].mxu0 %v217
    %v285 = vpop.f32.mrb[0].mxu0
    %v286 = vadd.f32 %v45, %v285
    %v287 = vpop.f32.mrb[0].mxu0
    %288 = vdwg.mxu0
    %v289 = vxor.u32 %v286, 2147483648
    %v290 = vmul.f32 %v289, 1.442695
    %v291 = vpow.pop %v290
    %v292 = vadd.f32 %v291, 1.0
    %v293 = vrcp.pop %v292
    %v294 = vmul.f32 1.0, %v293
    %v295 = vmul.f32 %v286, %v294
    %v296 = vadd.f32 %v134, %v295
    %v298 = vsel %vm53, %v215, 0
    %300 = vmatprep.subr.mxu0 0.0
    %301 = vmatpush1.msra.mxu0 %v39
    %302 = vmatprep.subr.mxu0 0.0
    %303 = vmatpush1.msra.mxu0 %v40
    %304 = vmatprep.subr.mxu0 0.0
    %305 = vmatpush1.msra.mxu0 %v41
    %306 = vmatprep.subr.mxu0 0.0
    %307 = vmatpush1.msra.mxu0 %v42
    %308 = vmatprep.subr.mxu0 0.0
    %309 = vmatpush1.msra.mxu0 0.0
    %310 = vmatprep.subr.mxu0 0.0
    %311 = vmatpush1.msra.mxu0 0.0
    %312 = vmatprep.subr.mxu0 0.0
    %313 = vmatpush1.msra.mxu0 0.0
    %314 = vmatprep.subr.mxu0 0.0
    %315 = vmatpush1.msra.mxu0 0.0
    %316 = vmatprep.subr.mxu0 0.0
    %317 = vmatpush1.msra.mxu0 0.0
    %318 = vmatprep.subr.mxu0 0.0
    %319 = vmatpush1.msra.mxu0 0.0
    %320 = vmatprep.subr.mxu0 0.0
    %321 = vmatpush1.msra.mxu0 0.0
    %322 = vmatprep.subr.mxu0 0.0
    %323 = vmatpush1.msra.mxu0 0.0
    %324 = vmatprep.subr.mxu0 0.0
    %325 = vmatpush1.msra.mxu0 0.0
    %326 = vmatprep.subr.mxu0 0.0
    %327 = vmatpush1.msra.mxu0 0.0
    %328 = vmatprep.subr.mxu0 0.0
    %329 = vmatpush1.msra.mxu0 0.0
    %330 = vmatprep.subr.mxu0 0.0
    %331 = vmatpush1.msra.mxu0 0.0
    %332 = vmatprep.subr.mxu0 0.0
    %333 = vmatpush1.msra.mxu0 0.0
    %334 = vmatprep.subr.mxu0 0.0
    %335 = vmatpush1.msra.mxu0 0.0
    %336 = vmatprep.subr.mxu0 0.0
    %337 = vmatpush1.msra.mxu0 0.0
    %338 = vmatprep.subr.mxu0 0.0
    %339 = vmatpush1.msra.mxu0 0.0
    %340 = vmatprep.subr.mxu0 0.0
    %341 = vmatpush1.msra.mxu0 0.0
    %342 = vmatprep.subr.mxu0 0.0
    %343 = vmatpush1.msra.mxu0 0.0
    %344 = vmatprep.subr.mxu0 0.0
    %345 = vmatpush1.msra.mxu0 0.0
    %346 = vmatprep.subr.mxu0 0.0
    %347 = vmatpush1.msra.mxu0 0.0
    %348 = vmatprep.subr.mxu0 0.0
    %349 = vmatpush1.msra.mxu0 0.0
    %350 = vmatprep.subr.mxu0 0.0
    %351 = vmatpush1.msra.mxu0 0.0
    %352 = vmatprep.subr.mxu0 0.0
    %353 = vmatpush1.msra.mxu0 0.0
    %354 = vmatprep.subr.mxu0 0.0
    %355 = vmatpush1.msra.mxu0 0.0
    %356 = vmatprep.subr.mxu0 0.0
    %357 = vmatpush1.msra.mxu0 0.0
    %358 = vmatprep.subr.mxu0 0.0
    %359 = vmatpush1.msra.mxu0 0.0
    %360 = vmatprep.subr.mxu0 0.0
    %361 = vmatpush1.msra.mxu0 0.0
    %362 = vmatprep.subr.mxu0 0.0
    %363 = vmatpush1.msra.mxu0 0.0
    %364 = vmatprep.mubr.f32.mxu0 0.0
    %365 = vmatmul.mubr.f32.gmra.mrb[0].mxu0 %v298
    %v366 = vpop.f32.mrb[0].mxu0
    %v367 = vadd.f32 %v49, %v366
    %v368 = vpop.f32.mrb[0].mxu0
    %369 = vdwg.mxu0
    %v370 = vxor.u32 %v367, 2147483648
    %v371 = vmul.f32 %v370, 1.442695
    %v372 = vpow.pop %v371
    %v373 = vadd.f32 %v372, 1.0
    %v374 = vrcp.pop %v373
    %v375 = vmul.f32 1.0, %v374
    %v376 = vmul.f32 %v367, %v375
    %v377 = vadd.f32 %v215, %v376
    %vm378 = vcmask 253952
    %379 = vst.msk [vmem:[#allocation2] sm:$0x1] %vm378, %v296
    %v381 = vlaneseq
    %v382 = vshrl.u32 %v381, 7
    %v383 = vsub.s32 0, %v382
    %v384 = vrot.slane %v377, %v383
    %385 = vrot.lane.b32.xlu0 %v384, 32
    %v386 = vpop.permute.xlu0 %385
    %vm388 = vcmask 516352
    %389 = vst.msk [vmem:[#allocation2] sm:$0x1] %vm388, %v386
    %v391 = vsel %vm53, %v296, 0
    %393 = vmatprep.subr.mxu0 0.0
    %394 = vmatpush1.msra.mxu0 %v24
    %395 = vmatprep.subr.mxu0 0.0
    %396 = vmatpush1.msra.mxu0 %v25
    %397 = vmatprep.subr.mxu0 0.0
    %398 = vmatpush1.msra.mxu0 %v26
    %399 = vmatprep.subr.mxu0 0.0
    %400 = vmatpush1.msra.mxu0 %v27
    %401 = vmatprep.subr.mxu0 0.0
    %402 = vmatpush1.msra.mxu0 0.0
    %403 = vmatprep.subr.mxu0 0.0
    %404 = vmatpush1.msra.mxu0 0.0
    %405 = vmatprep.subr.mxu0 0.0
    %406 = vmatpush1.msra.mxu0 0.0
    %407 = vmatprep.subr.mxu0 0.0
    %408 = vmatpush1.msra.mxu0 0.0
    %409 = vmatprep.subr.mxu0 0.0
    %410 = vmatpush1.msra.mxu0 0.0
    %411 = vmatprep.subr.mxu0 0.0
    %412 = vmatpush1.msra.mxu0 0.0
    %413 = vmatprep.subr.mxu0 0.0
    %414 = vmatpush1.msra.mxu0 0.0
    %415 = vmatprep.subr.mxu0 0.0
    %416 = vmatpush1.msra.mxu0 0.0
    %417 = vmatprep.subr.mxu0 0.0
    %418 = vmatpush1.msra.mxu0 0.0
    %419 = vmatprep.subr.mxu0 0.0
    %420 = vmatpush1.msra.mxu0 0.0
    %421 = vmatprep.subr.mxu0 0.0
    %422 = vmatpush1.msra.mxu0 0.0
    %423 = vmatprep.subr.mxu0 0.0
    %424 = vmatpush1.msra.mxu0 0.0
    %425 = vmatprep.subr.mxu0 0.0
    %426 = vmatpush1.msra.mxu0 0.0
    %427 = vmatprep.subr.mxu0 0.0
    %428 = vmatpush1.msra.mxu0 0.0
    %429 = vmatprep.subr.mxu0 0.0
    %430 = vmatpush1.msra.mxu0 0.0
    %431 = vmatprep.subr.mxu0 0.0
    %432 = vmatpush1.msra.mxu0 0.0
    %433 = vmatprep.subr.mxu0 0.0
    %434 = vmatpush1.msra.mxu0 0.0
    %435 = vmatprep.subr.mxu0 0.0
    %436 = vmatpush1.msra.mxu0 0.0
    %437 = vmatprep.subr.mxu0 0.0
    %438 = vmatpush1.msra.mxu0 0.0
    %439 = vmatprep.subr.mxu0 0.0
    %440 = vmatpush1.msra.mxu0 0.0
    %441 = vmatprep.subr.mxu0 0.0
    %442 = vmatpush1.msra.mxu0 0.0
    %443 = vmatprep.subr.mxu0 0.0
    %444 = vmatpush1.msra.mxu0 0.0
    %445 = vmatprep.subr.mxu0 0.0
    %446 = vmatpush1.msra.mxu0 0.0
    %447 = vmatprep.subr.mxu0 0.0
    %448 = vmatpush1.msra.mxu0 0.0
    %449 = vmatprep.subr.mxu0 0.0
    %450 = vmatpush1.msra.mxu0 0.0
    %451 = vmatprep.subr.mxu0 0.0
    %452 = vmatpush1.msra.mxu0 0.0
    %453 = vmatprep.subr.mxu0 0.0
    %454 = vmatpush1.msra.mxu0 0.0
    %455 = vmatprep.subr.mxu0 0.0
    %456 = vmatpush1.msra.mxu0 0.0
    %457 = vmatprep.mubr.f32.mxu0 0.0
    %458 = vmatmul.mubr.f32.gmra.mrb[0].mxu0 %v391
    %v459 = vpop.f32.mrb[0].mxu0
    %v460 = vadd.f32 %v43, %v459
    %v461 = vpop.f32.mrb[0].mxu0
    %462 = vdwg.mxu0
    %v463 = vxor.u32 %v460, 2147483648
    %v464 = vmul.f32 %v463, 1.442695
    %v465 = vpow.pop %v464
    %v466 = vadd.f32 %v465, 1.0
    %v467 = vrcp.pop %v466
    %v468 = vmul.f32 1.0, %v467
    %v469 = vmul.f32 %v460, %v468
    %v470 = vadd.f32 %v296, %v469
    %v471 = vsel %vm53, %v377, 0
    %473 = vmatprep.subr.mxu0 0.0
    %474 = vmatpush1.msra.mxu0 %v34
    %475 = vmatprep.subr.mxu0 0.0
    %476 = vmatpush1.msra.mxu0 %v35
    %477 = vmatprep.subr.mxu0 0.0
    %478 = vmatpush1.msra.mxu0 %v36
    %479 = vmatprep.subr.mxu0 0.0
    %480 = vmatpush1.msra.mxu0 %v37
    %481 = vmatprep.subr.mxu0 0.0
    %482 = vmatpush1.msra.mxu0 0.0
    %483 = vmatprep.subr.mxu0 0.0
    %484 = vmatpush1.msra.mxu0 0.0
    %485 = vmatprep.subr.mxu0 0.0
    %486 = vmatpush1.msra.mxu0 0.0
    %487 = vmatprep.subr.mxu0 0.0
    %488 = vmatpush1.msra.mxu0 0.0
    %489 = vmatprep.subr.mxu0 0.0
    %490 = vmatpush1.msra.mxu0 0.0
    %491 = vmatprep.subr.mxu0 0.0
    %492 = vmatpush1.msra.mxu0 0.0
    %493 = vmatprep.subr.mxu0 0.0
    %494 = vmatpush1.msra.mxu0 0.0
    %495 = vmatprep.subr.mxu0 0.0
    %496 = vmatpush1.msra.mxu0 0.0
    %497 = vmatprep.subr.mxu0 0.0
    %498 = vmatpush1.msra.mxu0 0.0
    %499 = vmatprep.subr.mxu0 0.0
    %500 = vmatpush1.msra.mxu0 0.0
    %501 = vmatprep.subr.mxu0 0.0
    %502 = vmatpush1.msra.mxu0 0.0
    %503 = vmatprep.subr.mxu0 0.0
    %504 = vmatpush1.msra.mxu0 0.0
    %505 = vmatprep.subr.mxu0 0.0
    %506 = vmatpush1.msra.mxu0 0.0
    %507 = vmatprep.subr.mxu0 0.0
    %508 = vmatpush1.msra.mxu0 0.0
    %509 = vmatprep.subr.mxu0 0.0
    %510 = vmatpush1.msra.mxu0 0.0
    %511 = vmatprep.subr.mxu0 0.0
    %512 = vmatpush1.msra.mxu0 0.0
    %513 = vmatprep.subr.mxu0 0.0
    %514 = vmatpush1.msra.mxu0 0.0
    %515 = vmatprep.subr.mxu0 0.0
    %516 = vmatpush1.msra.mxu0 0.0
    %517 = vmatprep.subr.mxu0 0.0
    %518 = vmatpush1.msra.mxu0 0.0
    %519 = vmatprep.subr.mxu0 0.0
    %520 = vmatpush1.msra.mxu0 0.0
    %521 = vmatprep.subr.mxu0 0.0
    %522 = vmatpush1.msra.mxu0 0.0
    %523 = vmatprep.subr.mxu0 0.0
    %524 = vmatpush1.msra.mxu0 0.0
    %525 = vmatprep.subr.mxu0 0.0
    %526 = vmatpush1.msra.mxu0 0.0
    %527 = vmatprep.subr.mxu0 0.0
    %528 = vmatpush1.msra.mxu0 0.0
    %529 = vmatprep.subr.mxu0 0.0
    %530 = vmatpush1.msra.mxu0 0.0
    %531 = vmatprep.subr.mxu0 0.0
    %532 = vmatpush1.msra.mxu0 0.0
    %533 = vmatprep.subr.mxu0 0.0
    %534 = vmatpush1.msra.mxu0 0.0
    %535 = vmatprep.subr.mxu0 0.0
    %536 = vmatpush1.msra.mxu0 0.0
    %537 = vmatprep.mubr.f32.mxu0 0.0
    %538 = vmatmul.mubr.f32.gmra.mrb[0].mxu0 %v471
    %v539 = vpop.f32.mrb[0].mxu0
    %v540 = vadd.f32 %v47, %v539
    %v541 = vpop.f32.mrb[0].mxu0
    %542 = vdwg.mxu0
    %v543 = vxor.u32 %v540, 2147483648
    %v544 = vmul.f32 %v543, 1.442695
    %v545 = vpow.pop %v544
    %v546 = vadd.f32 %v545, 1.0
    %v547 = vrcp.pop %v546
    %v548 = vmul.f32 1.0, %v547
    %v549 = vmul.f32 %v540, %v548
    %v550 = vadd.f32 %v377, %v549
    %v552 = vsel %vm53, %v470, 0
    %554 = vmatprep.subr.mxu0 0.0
    %555 = vmatpush1.msra.mxu0 %v29
    %556 = vmatprep.subr.mxu0 0.0
    %557 = vmatpush1.msra.mxu0 %v30
    %558 = vmatprep.subr.mxu0 0.0
    %559 = vmatpush1.msra.mxu0 %v31
    %560 = vmatprep.subr.mxu0 0.0
    %561 = vmatpush1.msra.mxu0 %v32
    %562 = vmatprep.subr.mxu0 0.0
    %563 = vmatpush1.msra.mxu0 0.0
    %564 = vmatprep.subr.mxu0 0.0
    %565 = vmatpush1.msra.mxu0 0.0
    %566 = vmatprep.subr.mxu0 0.0
    %567 = vmatpush1.msra.mxu0 0.0
    %568 = vmatprep.subr.mxu0 0.0
    %569 = vmatpush1.msra.mxu0 0.0
    %570 = vmatprep.subr.mxu0 0.0
    %571 = vmatpush1.msra.mxu0 0.0
    %572 = vmatprep.subr.mxu0 0.0
    %573 = vmatpush1.msra.mxu0 0.0
    %574 = vmatprep.subr.mxu0 0.0
    %575 = vmatpush1.msra.mxu0 0.0
    %576 = vmatprep.subr.mxu0 0.0
    %577 = vmatpush1.msra.mxu0 0.0
    %578 = vmatprep.subr.mxu0 0.0
    %579 = vmatpush1.msra.mxu0 0.0
    %580 = vmatprep.subr.mxu0 0.0
    %581 = vmatpush1.msra.mxu0 0.0
    %582 = vmatprep.subr.mxu0 0.0
    %583 = vmatpush1.msra.mxu0 0.0
    %584 = vmatprep.subr.mxu0 0.0
    %585 = vmatpush1.msra.mxu0 0.0
    %586 = vmatprep.subr.mxu0 0.0
    %587 = vmatpush1.msra.mxu0 0.0
    %588 = vmatprep.subr.mxu0 0.0
    %589 = vmatpush1.msra.mxu0 0.0
    %590 = vmatprep.subr.mxu0 0.0
    %591 = vmatpush1.msra.mxu0 0.0
    %592 = vmatprep.subr.mxu0 0.0
    %593 = vmatpush1.msra.mxu0 0.0
    %594 = vmatprep.subr.mxu0 0.0
    %595 = vmatpush1.msra.mxu0 0.0
    %596 = vmatprep.subr.mxu0 0.0
    %597 = vmatpush1.msra.mxu0 0.0
    %598 = vmatprep.subr.mxu0 0.0
    %599 = vmatpush1.msra.mxu0 0.0
    %600 = vmatprep.subr.mxu0 0.0
    %601 = vmatpush1.msra.mxu0 0.0
    %602 = vmatprep.subr.mxu0 0.0
    %603 = vmatpush1.msra.mxu0 0.0
    %604 = vmatprep.subr.mxu0 0.0
    %605 = vmatpush1.msra.mxu0 0.0
    %606 = vmatprep.subr.mxu0 0.0
    %607 = vmatpush1.msra.mxu0 0.0
    %608 = vmatprep.subr.mxu0 0.0
    %609 = vmatpush1.msra.mxu0 0.0
    %610 = vmatprep.subr.mxu0 0.0
    %611 = vmatpush1.msra.mxu0 0.0
    %612 = vmatprep.subr.mxu0 0.0
    %613 = vmatpush1.msra.mxu0 0.0
    %614 = vmatprep.subr.mxu0 0.0
    %615 = vmatpush1.msra.mxu0 0.0
    %616 = vmatprep.subr.mxu0 0.0
    %617 = vmatpush1.msra.mxu0 0.0
    %618 = vmatprep.mubr.f32.mxu0 0.0
    %619 = vmatmul.mubr.f32.gmra.mrb[0].mxu0 %v552
    %v620 = vpop.f32.mrb[0].mxu0
    %v621 = vadd.f32 %v45, %v620
    %v622 = vpop.f32.mrb[0].mxu0
    %623 = vdwg.mxu0
    %v624 = vxor.u32 %v621, 2147483648
    %v625 = vmul.f32 %v624, 1.442695
    %v626 = vpow.pop %v625
    %v627 = vadd.f32 %v626, 1.0
    %v628 = vrcp.pop %v627
    %v629 = vmul.f32 1.0, %v628
    %v630 = vmul.f32 %v621, %v629
    %v631 = vadd.f32 %v470, %v630
    %v633 = vsel %vm53, %v550, 0
    %635 = vmatprep.subr.mxu0 0.0
    %636 = vmatpush1.msra.mxu0 %v39
    %637 = vmatprep.subr.mxu0 0.0
    %638 = vmatpush1.msra.mxu0 %v40
    %639 = vmatprep.subr.mxu0 0.0
    %640 = vmatpush1.msra.mxu0 %v41
    %641 = vmatprep.subr.mxu0 0.0
    %642 = vmatpush1.msra.mxu0 %v42
    %643 = vmatprep.subr.mxu0 0.0
    %644 = vmatpush1.msra.mxu0 0.0
    %645 = vmatprep.subr.mxu0 0.0
    %646 = vmatpush1.msra.mxu0 0.0
    %647 = vmatprep.subr.mxu0 0.0
    %648 = vmatpush1.msra.mxu0 0.0
    %649 = vmatprep.subr.mxu0 0.0
    %650 = vmatpush1.msra.mxu0 0.0
    %651 = vmatprep.subr.mxu0 0.0
    %652 = vmatpush1.msra.mxu0 0.0
    %653 = vmatprep.subr.mxu0 0.0
    %654 = vmatpush1.msra.mxu0 0.0
    %655 = vmatprep.subr.mxu0 0.0
    %656 = vmatpush1.msra.mxu0 0.0
    %657 = vmatprep.subr.mxu0 0.0
    %658 = vmatpush1.msra.mxu0 0.0
    %659 = vmatprep.subr.mxu0 0.0
    %660 = vmatpush1.msra.mxu0 0.0
    %661 = vmatprep.subr.mxu0 0.0
    %662 = vmatpush1.msra.mxu0 0.0
    %663 = vmatprep.subr.mxu0 0.0
    %664 = vmatpush1.msra.mxu0 0.0
    %665 = vmatprep.subr.mxu0 0.0
    %666 = vmatpush1.msra.mxu0 0.0
    %667 = vmatprep.subr.mxu0 0.0
    %668 = vmatpush1.msra.mxu0 0.0
    %669 = vmatprep.subr.mxu0 0.0
    %670 = vmatpush1.msra.mxu0 0.0
    %671 = vmatprep.subr.mxu0 0.0
    %672 = vmatpush1.msra.mxu0 0.0
    %673 = vmatprep.subr.mxu0 0.0
    %674 = vmatpush1.msra.mxu0 0.0
    %675 = vmatprep.subr.mxu0 0.0
    %676 = vmatpush1.msra.mxu0 0.0
    %677 = vmatprep.subr.mxu0 0.0
    %678 = vmatpush1.msra.mxu0 0.0
    %679 = vmatprep.subr.mxu0 0.0
    %680 = vmatpush1.msra.mxu0 0.0
    %681 = vmatprep.subr.mxu0 0.0
    %682 = vmatpush1.msra.mxu0 0.0
    %683 = vmatprep.subr.mxu0 0.0
    %684 = vmatpush1.msra.mxu0 0.0
    %685 = vmatprep.subr.mxu0 0.0
    %686 = vmatpush1.msra.mxu0 0.0
    %687 = vmatprep.subr.mxu0 0.0
    %688 = vmatpush1.msra.mxu0 0.0
    %689 = vmatprep.subr.mxu0 0.0
    %690 = vmatpush1.msra.mxu0 0.0
    %691 = vmatprep.subr.mxu0 0.0
    %692 = vmatpush1.msra.mxu0 0.0
    %693 = vmatprep.subr.mxu0 0.0
    %694 = vmatpush1.msra.mxu0 0.0
    %695 = vmatprep.subr.mxu0 0.0
    %696 = vmatpush1.msra.mxu0 0.0
    %697 = vmatprep.subr.mxu0 0.0
    %698 = vmatpush1.msra.mxu0 0.0
    %699 = vmatprep.mubr.f32.mxu0 0.0
    %700 = vmatmul.mubr.f32.gmra.mrb[0].mxu0 %v633
    %v701 = vpop.f32.mrb[0].mxu0
    %v702 = vadd.f32 %v49, %v701
    %v703 = vpop.f32.mrb[0].mxu0
    %704 = vdwg.mxu0
    %v705 = vxor.u32 %v702, 2147483648
    %v706 = vmul.f32 %v705, 1.442695
    %v707 = vpow.pop %v706
    %v708 = vadd.f32 %v707, 1.0
    %v709 = vrcp.pop %v708
    %v710 = vmul.f32 1.0, %v709
    %v711 = vmul.f32 %v702, %v710
    %v712 = vadd.f32 %v550, %v711
    %713 = vst.msk [vmem:[#allocation2 + $0x1] sm:$0x1] %vm378, %v631
    %v715 = vlaneseq
    %v716 = vshrl.u32 %v715, 7
    %v717 = vsub.s32 0, %v716
    %v718 = vrot.slane %v712, %v717
    %719 = vrot.lane.b32.xlu0 %v718, 32
    %v720 = vpop.permute.xlu0 %719
    %722 = vst.msk [vmem:[#allocation2 + $0x1] sm:$0x1] %vm388, %v720
    %v724 = vsel %vm53, %v631, 0
    %726 = vmatprep.subr.mxu0 0.0
    %727 = vmatpush1.msra.mxu0 %v24
    %728 = vmatprep.subr.mxu0 0.0
    %729 = vmatpush1.msra.mxu0 %v25
    %730 = vmatprep.subr.mxu0 0.0
    %731 = vmatpush1.msra.mxu0 %v26
    %732 = vmatprep.subr.mxu0 0.0
    %733 = vmatpush1.msra.mxu0 %v27
    %734 = vmatprep.subr.mxu0 0.0
    %735 = vmatpush1.msra.mxu0 0.0
    %736 = vmatprep.subr.mxu0 0.0
    %737 = vmatpush1.msra.mxu0 0.0
    %738 = vmatprep.subr.mxu0 0.0
    %739 = vmatpush1.msra.mxu0 0.0
    %740 = vmatprep.subr.mxu0 0.0
    %741 = vmatpush1.msra.mxu0 0.0
    %742 = vmatprep.subr.mxu0 0.0
    %743 = vmatpush1.msra.mxu0 0.0
    %744 = vmatprep.subr.mxu0 0.0
    %745 = vmatpush1.msra.mxu0 0.0
    %746 = vmatprep.subr.mxu0 0.0
    %747 = vmatpush1.msra.mxu0 0.0
    %748 = vmatprep.subr.mxu0 0.0
    %749 = vmatpush1.msra.mxu0 0.0
    %750 = vmatprep.subr.mxu0 0.0
    %751 = vmatpush1.msra.mxu0 0.0
    %752 = vmatprep.subr.mxu0 0.0
    %753 = vmatpush1.msra.mxu0 0.0
    %754 = vmatprep.subr.mxu0 0.0
    %755 = vmatpush1.msra.mxu0 0.0
    %756 = vmatprep.subr.mxu0 0.0
    %757 = vmatpush1.msra.mxu0 0.0
    %758 = vmatprep.subr.mxu0 0.0
    %759 = vmatpush1.msra.mxu0 0.0
    %760 = vmatprep.subr.mxu0 0.0
    %761 = vmatpush1.msra.mxu0 0.0
    %762 = vmatprep.subr.mxu0 0.0
    %763 = vmatpush1.msra.mxu0 0.0
    %764 = vmatprep.subr.mxu0 0.0
    %765 = vmatpush1.msra.mxu0 0.0
    %766 = vmatprep.subr.mxu0 0.0
    %767 = vmatpush1.msra.mxu0 0.0
    %768 = vmatprep.subr.mxu0 0.0
    %769 = vmatpush1.msra.mxu0 0.0
    %770 = vmatprep.subr.mxu0 0.0
    %771 = vmatpush1.msra.mxu0 0.0
    %772 = vmatprep.subr.mxu0 0.0
    %773 = vmatpush1.msra.mxu0 0.0
    %774 = vmatprep.subr.mxu0 0.0
    %775 = vmatpush1.msra.mxu0 0.0
    %776 = vmatprep.subr.mxu0 0.0
    %777 = vmatpush1.msra.mxu0 0.0
    %778 = vmatprep.subr.mxu0 0.0
    %779 = vmatpush1.msra.mxu0 0.0
    %780 = vmatprep.subr.mxu0 0.0
    %781 = vmatpush1.msra.mxu0 0.0
    %782 = vmatprep.subr.mxu0 0.0
    %783 = vmatpush1.msra.mxu0 0.0
    %784 = vmatprep.subr.mxu0 0.0
    %785 = vmatpush1.msra.mxu0 0.0
    %786 = vmatprep.subr.mxu0 0.0
    %787 = vmatpush1.msra.mxu0 0.0
    %788 = vmatprep.subr.mxu0 0.0
    %789 = vmatpush1.msra.mxu0 0.0
    %790 = vmatprep.mubr.f32.mxu0 0.0
    %791 = vmatmul.mubr.f32.gmra.mrb[0].mxu0 %v724
    %v792 = vpop.f32.mrb[0].mxu0
    %v793 = vadd.f32 %v43, %v792
    %v794 = vpop.f32.mrb[0].mxu0
    %795 = vdwg.mxu0
    %v796 = vxor.u32 %v793, 2147483648
    %v797 = vmul.f32 %v796, 1.442695
    %v798 = vpow.pop %v797
    %v799 = vadd.f32 %v798, 1.0
    %v800 = vrcp.pop %v799
    %v801 = vmul.f32 1.0, %v800
    %v802 = vmul.f32 %v793, %v801
    %v803 = vadd.f32 %v631, %v802
    %v804 = vsel %vm53, %v712, 0
    %806 = vmatprep.subr.mxu0 0.0
    %807 = vmatpush1.msra.mxu0 %v34
    %808 = vmatprep.subr.mxu0 0.0
    %809 = vmatpush1.msra.mxu0 %v35
    %810 = vmatprep.subr.mxu0 0.0
    %811 = vmatpush1.msra.mxu0 %v36
    %812 = vmatprep.subr.mxu0 0.0
    %813 = vmatpush1.msra.mxu0 %v37
    %814 = vmatprep.subr.mxu0 0.0
    %815 = vmatpush1.msra.mxu0 0.0
    %816 = vmatprep.subr.mxu0 0.0
    %817 = vmatpush1.msra.mxu0 0.0
    %818 = vmatprep.subr.mxu0 0.0
    %819 = vmatpush1.msra.mxu0 0.0
    %820 = vmatprep.subr.mxu0 0.0
    %821 = vmatpush1.msra.mxu0 0.0
    %822 = vmatprep.subr.mxu0 0.0
    %823 = vmatpush1.msra.mxu0 0.0
    %824 = vmatprep.subr.mxu0 0.0
    %825 = vmatpush1.msra.mxu0 0.0
    %826 = vmatprep.subr.mxu0 0.0
    %827 = vmatpush1.msra.mxu0 0.0
    %828 = vmatprep.subr.mxu0 0.0
    %829 = vmatpush1.msra.mxu0 0.0
    %830 = vmatprep.subr.mxu0 0.0
    %831 = vmatpush1.msra.mxu0 0.0
    %832 = vmatprep.subr.mxu0 0.0
    %833 = vmatpush1.msra.mxu0 0.0
    %834 = vmatprep.subr.mxu0 0.0
    %835 = vmatpush1.msra.mxu0 0.0
    %836 = vmatprep.subr.mxu0 0.0
    %837 = vmatpush1.msra.mxu0 0.0
    %838 = vmatprep.subr.mxu0 0.0
    %839 = vmatpush1.msra.mxu0 0.0
    %840 = vmatprep.subr.mxu0 0.0
    %841 = vmatpush1.msra.mxu0 0.0
    %842 = vmatprep.subr.mxu0 0.0
    %843 = vmatpush1.msra.mxu0 0.0
    %844 = vmatprep.subr.mxu0 0.0
    %845 = vmatpush1.msra.mxu0 0.0
    %846 = vmatprep.subr.mxu0 0.0
    %847 = vmatpush1.msra.mxu0 0.0
    %848 = vmatprep.subr.mxu0 0.0
    %849 = vmatpush1.msra.mxu0 0.0
    %850 = vmatprep.subr.mxu0 0.0
    %851 = vmatpush1.msra.mxu0 0.0
    %852 = vmatprep.subr.mxu0 0.0
    %853 = vmatpush1.msra.mxu0 0.0
    %854 = vmatprep.subr.mxu0 0.0
    %855 = vmatpush1.msra.mxu0 0.0
    %856 = vmatprep.subr.mxu0 0.0
    %857 = vmatpush1.msra.mxu0 0.0
    %858 = vmatprep.subr.mxu0 0.0
    %859 = vmatpush1.msra.mxu0 0.0
    %860 = vmatprep.subr.mxu0 0.0
    %861 = vmatpush1.msra.mxu0 0.0
    %862 = vmatprep.subr.mxu0 0.0
    %863 = vmatpush1.msra.mxu0 0.0
    %864 = vmatprep.subr.mxu0 0.0
    %865 = vmatpush1.msra.mxu0 0.0
    %866 = vmatprep.subr.mxu0 0.0
    %867 = vmatpush1.msra.mxu0 0.0
    %868 = vmatprep.subr.mxu0 0.0
    %869 = vmatpush1.msra.mxu0 0.0
    %870 = vmatprep.mubr.f32.mxu0 0.0
    %871 = vmatmul.mubr.f32.gmra.mrb[0].mxu0 %v804
    %v872 = vpop.f32.mrb[0].mxu0
    %v873 = vadd.f32 %v47, %v872
    %v874 = vpop.f32.mrb[0].mxu0
    %875 = vdwg.mxu0
    %v876 = vxor.u32 %v873, 2147483648
    %v877 = vmul.f32 %v876, 1.442695
    %v878 = vpow.pop %v877
    %v879 = vadd.f32 %v878, 1.0
    %v880 = vrcp.pop %v879
    %v881 = vmul.f32 1.0, %v880
    %v882 = vmul.f32 %v873, %v881
    %v883 = vadd.f32 %v712, %v882
    %v885 = vsel %vm53, %v803, 0
    %887 = vmatprep.subr.mxu0 0.0
    %888 = vmatpush1.msra.mxu0 %v29
    %889 = vmatprep.subr.mxu0 0.0
    %890 = vmatpush1.msra.mxu0 %v30
    %891 = vmatprep.subr.mxu0 0.0
    %892 = vmatpush1.msra.mxu0 %v31
    %893 = vmatprep.subr.mxu0 0.0
    %894 = vmatpush1.msra.mxu0 %v32
    %895 = vmatprep.subr.mxu0 0.0
    %896 = vmatpush1.msra.mxu0 0.0
    %897 = vmatprep.subr.mxu0 0.0
    %898 = vmatpush1.msra.mxu0 0.0
    %899 = vmatprep.subr.mxu0 0.0
    %900 = vmatpush1.msra.mxu0 0.0
    %901 = vmatprep.subr.mxu0 0.0
    %902 = vmatpush1.msra.mxu0 0.0
    %903 = vmatprep.subr.mxu0 0.0
    %904 = vmatpush1.msra.mxu0 0.0
    %905 = vmatprep.subr.mxu0 0.0
    %906 = vmatpush1.msra.mxu0 0.0
    %907 = vmatprep.subr.mxu0 0.0
    %908 = vmatpush1.msra.mxu0 0.0
    %909 = vmatprep.subr.mxu0 0.0
    %910 = vmatpush1.msra.mxu0 0.0
    %911 = vmatprep.subr.mxu0 0.0
    %912 = vmatpush1.msra.mxu0 0.0
    %913 = vmatprep.subr.mxu0 0.0
    %914 = vmatpush1.msra.mxu0 0.0
    %915 = vmatprep.subr.mxu0 0.0
    %916 = vmatpush1.msra.mxu0 0.0
    %917 = vmatprep.subr.mxu0 0.0
    %918 = vmatpush1.msra.mxu0 0.0
    %919 = vmatprep.subr.mxu0 0.0
    %920 = vmatpush1.msra.mxu0 0.0
    %921 = vmatprep.subr.mxu0 0.0
    %922 = vmatpush1.msra.mxu0 0.0
    %923 = vmatprep.subr.mxu0 0.0
    %924 = vmatpush1.msra.mxu0 0.0
    %925 = vmatprep.subr.mxu0 0.0
    %926 = vmatpush1.msra.mxu0 0.0
    %927 = vmatprep.subr.mxu0 0.0
    %928 = vmatpush1.msra.mxu0 0.0
    %929 = vmatprep.subr.mxu0 0.0
    %930 = vmatpush1.msra.mxu0 0.0
    %931 = vmatprep.subr.mxu0 0.0
    %932 = vmatpush1.msra.mxu0 0.0
    %933 = vmatprep.subr.mxu0 0.0
    %934 = vmatpush1.msra.mxu0 0.0
    %935 = vmatprep.subr.mxu0 0.0
    %936 = vmatpush1.msra.mxu0 0.0
    %937 = vmatprep.subr.mxu0 0.0
    %938 = vmatpush1.msra.mxu0 0.0
    %939 = vmatprep.subr.mxu0 0.0
    %940 = vmatpush1.msra.mxu0 0.0
    %941 = vmatprep.subr.mxu0 0.0
    %942 = vmatpush1.msra.mxu0 0.0
    %943 = vmatprep.subr.mxu0 0.0
    %944 = vmatpush1.msra.mxu0 0.0
    %945 = vmatprep.subr.mxu0 0.0
    %946 = vmatpush1.msra.mxu0 0.0
    %947 = vmatprep.subr.mxu0 0.0
    %948 = vmatpush1.msra.mxu0 0.0
    %949 = vmatprep.subr.mxu0 0.0
    %950 = vmatpush1.msra.mxu0 0.0
    %951 = vmatprep.mubr.f32.mxu0 0.0
    %952 = vmatmul.mubr.f32.gmra.mrb[0].mxu0 %v885
    %v953 = vpop.f32.mrb[0].mxu0
    %v954 = vadd.f32 %v45, %v953
    %v955 = vpop.f32.mrb[0].mxu0
    %956 = vdwg.mxu0
    %v957 = vxor.u32 %v954, 2147483648
    %v958 = vmul.f32 %v957, 1.442695
    %v959 = vpow.pop %v958
    %v960 = vadd.f32 %v959, 1.0
    %v961 = vrcp.pop %v960
    %v962 = vmul.f32 1.0, %v961
    %v963 = vmul.f32 %v954, %v962
    %v964 = vadd.f32 %v803, %v963
    %v966 = vsel %vm53, %v883, 0
    %968 = vmatprep.subr.mxu0 0.0
    %969 = vmatpush1.msra.mxu0 %v39
    %970 = vmatprep.subr.mxu0 0.0
    %971 = vmatpush1.msra.mxu0 %v40
    %972 = vmatprep.subr.mxu0 0.0
    %973 = vmatpush1.msra.mxu0 %v41
    %974 = vmatprep.subr.mxu0 0.0
    %975 = vmatpush1.msra.mxu0 %v42
    %976 = vmatprep.subr.mxu0 0.0
    %977 = vmatpush1.msra.mxu0 0.0
    %978 = vmatprep.subr.mxu0 0.0
    %979 = vmatpush1.msra.mxu0 0.0
    %980 = vmatprep.subr.mxu0 0.0
    %981 = vmatpush1.msra.mxu0 0.0
    %982 = vmatprep.subr.mxu0 0.0
    %983 = vmatpush1.msra.mxu0 0.0
    %984 = vmatprep.subr.mxu0 0.0
    %985 = vmatpush1.msra.mxu0 0.0
    %986 = vmatprep.subr.mxu0 0.0
    %987 = vmatpush1.msra.mxu0 0.0
    %988 = vmatprep.subr.mxu0 0.0
    %989 = vmatpush1.msra.mxu0 0.0
    %990 = vmatprep.subr.mxu0 0.0
    %991 = vmatpush1.msra.mxu0 0.0
    %992 = vmatprep.subr.mxu0 0.0
    %993 = vmatpush1.msra.mxu0 0.0
    %994 = vmatprep.subr.mxu0 0.0
    %995 = vmatpush1.msra.mxu0 0.0
    %996 = vmatprep.subr.mxu0 0.0
    %997 = vmatpush1.msra.mxu0 0.0
    %998 = vmatprep.subr.mxu0 0.0
    %999 = vmatpush1.msra.mxu0 0.0
    %1000 = vmatprep.subr.mxu0 0.0
    %1001 = vmatpush1.msra.mxu0 0.0
    %1002 = vmatprep.subr.mxu0 0.0
    %1003 = vmatpush1.msra.mxu0 0.0
    %1004 = vmatprep.subr.mxu0 0.0
    %1005 = vmatpush1.msra.mxu0 0.0
    %1006 = vmatprep.subr.mxu0 0.0
    %1007 = vmatpush1.msra.mxu0 0.0
    %1008 = vmatprep.subr.mxu0 0.0
    %1009 = vmatpush1.msra.mxu0 0.0
    %1010 = vmatprep.subr.mxu0 0.0
    %1011 = vmatpush1.msra.mxu0 0.0
    %1012 = vmatprep.subr.mxu0 0.0
    %1013 = vmatpush1.msra.mxu0 0.0
    %1014 = vmatprep.subr.mxu0 0.0
    %1015 = vmatpush1.msra.mxu0 0.0
    %1016 = vmatprep.subr.mxu0 0.0
    %1017 = vmatpush1.msra.mxu0 0.0
    %1018 = vmatprep.subr.mxu0 0.0
    %1019 = vmatpush1.msra.mxu0 0.0
    %1020 = vmatprep.subr.mxu0 0.0
    %1021 = vmatpush1.msra.mxu0 0.0
    %1022 = vmatprep.subr.mxu0 0.0
    %1023 = vmatpush1.msra.mxu0 0.0
    %1024 = vmatprep.subr.mxu0 0.0
    %1025 = vmatpush1.msra.mxu0 0.0
    %1026 = vmatprep.subr.mxu0 0.0
    %1027 = vmatpush1.msra.mxu0 0.0
    %1028 = vmatprep.subr.mxu0 0.0
    %1029 = vmatpush1.msra.mxu0 0.0
    %1030 = vmatprep.subr.mxu0 0.0
    %1031 = vmatpush1.msra.mxu0 0.0
    %1032 = vmatprep.mubr.f32.mxu0 0.0
    %1033 = vmatmul.mubr.f32.gmra.mrb[0].mxu0 %v966
    %v1034 = vpop.f32.mrb[0].mxu0
    %v1035 = vadd.f32 %v49, %v1034
    %v1036 = vpop.f32.mrb[0].mxu0
    %1037 = vdwg.mxu0
    %v1038 = vxor.u32 %v1035, 2147483648
    %v1039 = vmul.f32 %v1038, 1.442695
    %v1040 = vpow.pop %v1039
    %v1041 = vadd.f32 %v1040, 1.0
    %v1042 = vrcp.pop %v1041
    %v1043 = vmul.f32 1.0, %v1042
    %v1044 = vmul.f32 %v1035, %v1043
    %v1045 = vadd.f32 %v883, %v1044
    %1046 = vst.msk [vmem:[#allocation2 + $0x2] sm:$0x1] %vm378, %v964
    %v1048 = vlaneseq
    %v1049 = vshrl.u32 %v1048, 7
    %v1050 = vsub.s32 0, %v1049
    %v1051 = vrot.slane %v1045, %v1050
    %1052 = vrot.lane.b32.xlu0 %v1051, 32
    %v1053 = vpop.permute.xlu0 %1052
    %1055 = vst.msk [vmem:[#allocation2 + $0x2] sm:$0x1] %vm388, %v1053
    %v1057 = vsel %vm53, %v964, 0
    %1059 = vmatprep.subr.mxu0 0.0
    %1060 = vmatpush1.msra.mxu0 %v24
    %1061 = vmatprep.subr.mxu0 0.0
    %1062 = vmatpush1.msra.mxu0 %v25
    %1063 = vmatprep.subr.mxu0 0.0
    %1064 = vmatpush1.msra.mxu0 %v26
    %1065 = vmatprep.subr.mxu0 0.0
    %1066 = vmatpush1.msra.mxu0 %v27
    %1067 = vmatprep.subr.mxu0 0.0
    %1068 = vmatpush1.msra.mxu0 0.0
    %1069 = vmatprep.subr.mxu0 0.0
    %1070 = vmatpush1.msra.mxu0 0.0
    %1071 = vmatprep.subr.mxu0 0.0
    %1072 = vmatpush1.msra.mxu0 0.0
    %1073 = vmatprep.subr.mxu0 0.0
    %1074 = vmatpush1.msra.mxu0 0.0
    %1075 = vmatprep.subr.mxu0 0.0
    %1076 = vmatpush1.msra.mxu0 0.0
    %1077 = vmatprep.subr.mxu0 0.0
    %1078 = vmatpush1.msra.mxu0 0.0
    %1079 = vmatprep.subr.mxu0 0.0
    %1080 = vmatpush1.msra.mxu0 0.0
    %1081 = vmatprep.subr.mxu0 0.0
    %1082 = vmatpush1.msra.mxu0 0.0
    %1083 = vmatprep.subr.mxu0 0.0
    %1084 = vmatpush1.msra.mxu0 0.0
    %1085 = vmatprep.subr.mxu0 0.0
    %1086 = vmatpush1.msra.mxu0 0.0
    %1087 = vmatprep.subr.mxu0 0.0
    %1088 = vmatpush1.msra.mxu0 0.0
    %1089 = vmatprep.subr.mxu0 0.0
    %1090 = vmatpush1.msra.mxu0 0.0
    %1091 = vmatprep.subr.mxu0 0.0
    %1092 = vmatpush1.msra.mxu0 0.0
    %1093 = vmatprep.subr.mxu0 0.0
    %1094 = vmatpush1.msra.mxu0 0.0
    %1095 = vmatprep.subr.mxu0 0.0
    %1096 = vmatpush1.msra.mxu0 0.0
    %1097 = vmatprep.subr.mxu0 0.0
    %1098 = vmatpush1.msra.mxu0 0.0
    %1099 = vmatprep.subr.mxu0 0.0
    %1100 = vmatpush1.msra.mxu0 0.0
    %1101 = vmatprep.subr.mxu0 0.0
    %1102 = vmatpush1.msra.mxu0 0.0
    %1103 = vmatprep.subr.mxu0 0.0
    %1104 = vmatpush1.msra.mxu0 0.0
    %1105 = vmatprep.subr.mxu0 0.0
    %1106 = vmatpush1.msra.mxu0 0.0
    %1107 = vmatprep.subr.mxu0 0.0
    %1108 = vmatpush1.msra.mxu0 0.0
    %1109 = vmatprep.subr.mxu0 0.0
    %1110 = vmatpush1.msra.mxu0 0.0
    %1111 = vmatprep.subr.mxu0 0.0
    %1112 = vmatpush1.msra.mxu0 0.0
    %1113 = vmatprep.subr.mxu0 0.0
    %1114 = vmatpush1.msra.mxu0 0.0
    %1115 = vmatprep.subr.mxu0 0.0
    %1116 = vmatpush1.msra.mxu0 0.0
    %1117 = vmatprep.subr.mxu0 0.0
    %1118 = vmatpush1.msra.mxu0 0.0
    %1119 = vmatprep.subr.mxu0 0.0
    %1120 = vmatpush1.msra.mxu0 0.0
    %1121 = vmatprep.subr.mxu0 0.0
    %1122 = vmatpush1.msra.mxu0 0.0
    %1123 = vmatprep.mubr.f32.mxu0 0.0
    %1124 = vmatmul.mubr.f32.gmra.mrb[0].mxu0 %v1057
    %v1125 = vpop.f32.mrb[0].mxu0
    %v1126 = vadd.f32 %v43, %v1125
    %v1127 = vpop.f32.mrb[0].mxu0
    %1128 = vdwg.mxu0
    %v1129 = vxor.u32 %v1126, 2147483648
    %v1130 = vmul.f32 %v1129, 1.442695
    %v1131 = vpow.pop %v1130
    %v1132 = vadd.f32 %v1131, 1.0
    %v1133 = vrcp.pop %v1132
    %v1134 = vmul.f32 1.0, %v1133
    %v1135 = vmul.f32 %v1126, %v1134
    %v1136 = vadd.f32 %v964, %v1135
    %v1137 = vsel %vm53, %v1045, 0
    %1139 = vmatprep.subr.mxu0 0.0
    %1140 = vmatpush1.msra.mxu0 %v34
    %1141 = vmatprep.subr.mxu0 0.0
    %1142 = vmatpush1.msra.mxu0 %v35
    %1143 = vmatprep.subr.mxu0 0.0
    %1144 = vmatpush1.msra.mxu0 %v36
    %1145 = vmatprep.subr.mxu0 0.0
    %1146 = vmatpush1.msra.mxu0 %v37
    %1147 = vmatprep.subr.mxu0 0.0
    %1148 = vmatpush1.msra.mxu0 0.0
    %1149 = vmatprep.subr.mxu0 0.0
    %1150 = vmatpush1.msra.mxu0 0.0
    %1151 = vmatprep.subr.mxu0 0.0
    %1152 = vmatpush1.msra.mxu0 0.0
    %1153 = vmatprep.subr.mxu0 0.0
    %1154 = vmatpush1.msra.mxu0 0.0
    %1155 = vmatprep.subr.mxu0 0.0
    %1156 = vmatpush1.msra.mxu0 0.0
    %1157 = vmatprep.subr.mxu0 0.0
    %1158 = vmatpush1.msra.mxu0 0.0
    %1159 = vmatprep.subr.mxu0 0.0
    %1160 = vmatpush1.msra.mxu0 0.0
    %1161 = vmatprep.subr.mxu0 0.0
    %1162 = vmatpush1.msra.mxu0 0.0
    %1163 = vmatprep.subr.mxu0 0.0
    %1164 = vmatpush1.msra.mxu0 0.0
    %1165 = vmatprep.subr.mxu0 0.0
    %1166 = vmatpush1.msra.mxu0 0.0
    %1167 = vmatprep.subr.mxu0 0.0
    %1168 = vmatpush1.msra.mxu0 0.0
    %1169 = vmatprep.subr.mxu0 0.0
    %1170 = vmatpush1.msra.mxu0 0.0
    %1171 = vmatprep.subr.mxu0 0.0
    %1172 = vmatpush1.msra.mxu0 0.0
    %1173 = vmatprep.subr.mxu0 0.0
    %1174 = vmatpush1.msra.mxu0 0.0
    %1175 = vmatprep.subr.mxu0 0.0
    %1176 = vmatpush1.msra.mxu0 0.0
    %1177 = vmatprep.subr.mxu0 0.0
    %1178 = vmatpush1.msra.mxu0 0.0
    %1179 = vmatprep.subr.mxu0 0.0
    %1180 = vmatpush1.msra.mxu0 0.0
    %1181 = vmatprep.subr.mxu0 0.0
    %1182 = vmatpush1.msra.mxu0 0.0
    %1183 = vmatprep.subr.mxu0 0.0
    %1184 = vmatpush1.msra.mxu0 0.0
    %1185 = vmatprep.subr.mxu0 0.0
    %1186 = vmatpush1.msra.mxu0 0.0
    %1187 = vmatprep.subr.mxu0 0.0
    %1188 = vmatpush1.msra.mxu0 0.0
    %1189 = vmatprep.subr.mxu0 0.0
    %1190 = vmatpush1.msra.mxu0 0.0
    %1191 = vmatprep.subr.mxu0 0.0
    %1192 = vmatpush1.msra.mxu0 0.0
    %1193 = vmatprep.subr.mxu0 0.0
    %1194 = vmatpush1.msra.mxu0 0.0
    %1195 = vmatprep.subr.mxu0 0.0
    %1196 = vmatpush1.msra.mxu0 0.0
    %1197 = vmatprep.subr.mxu0 0.0
    %1198 = vmatpush1.msra.mxu0 0.0
    %1199 = vmatprep.subr.mxu0 0.0
    %1200 = vmatpush1.msra.mxu0 0.0
    %1201 = vmatprep.subr.mxu0 0.0
    %1202 = vmatpush1.msra.mxu0 0.0
    %1203 = vmatprep.mubr.f32.mxu0 0.0
    %1204 = vmatmul.mubr.f32.gmra.mrb[0].mxu0 %v1137
    %v1205 = vpop.f32.mrb[0].mxu0
    %v1206 = vadd.f32 %v47, %v1205
    %v1207 = vpop.f32.mrb[0].mxu0
    %1208 = vdwg.mxu0
    %v1209 = vxor.u32 %v1206, 2147483648
    %v1210 = vmul.f32 %v1209, 1.442695
    %v1211 = vpow.pop %v1210
    %v1212 = vadd.f32 %v1211, 1.0
    %v1213 = vrcp.pop %v1212
    %v1214 = vmul.f32 1.0, %v1213
    %v1215 = vmul.f32 %v1206, %v1214
    %v1216 = vadd.f32 %v1045, %v1215
    %v1218 = vsel %vm53, %v1136, 0
    %1220 = vmatprep.subr.mxu0 0.0
    %1221 = vmatpush1.msra.mxu0 %v29
    %1222 = vmatprep.subr.mxu0 0.0
    %1223 = vmatpush1.msra.mxu0 %v30
    %1224 = vmatprep.subr.mxu0 0.0
    %1225 = vmatpush1.msra.mxu0 %v31
    %1226 = vmatprep.subr.mxu0 0.0
    %1227 = vmatpush1.msra.mxu0 %v32
    %1228 = vmatprep.subr.mxu0 0.0
    %1229 = vmatpush1.msra.mxu0 0.0
    %1230 = vmatprep.subr.mxu0 0.0
    %1231 = vmatpush1.msra.mxu0 0.0
    %1232 = vmatprep.subr.mxu0 0.0
    %1233 = vmatpush1.msra.mxu0 0.0
    %1234 = vmatprep.subr.mxu0 0.0
    %1235 = vmatpush1.msra.mxu0 0.0
    %1236 = vmatprep.subr.mxu0 0.0
    %1237 = vmatpush1.msra.mxu0 0.0
    %1238 = vmatprep.subr.mxu0 0.0
    %1239 = vmatpush1.msra.mxu0 0.0
    %1240 = vmatprep.subr.mxu0 0.0
    %1241 = vmatpush1.msra.mxu0 0.0
    %1242 = vmatprep.subr.mxu0 0.0
    %1243 = vmatpush1.msra.mxu0 0.0
    %1244 = vmatprep.subr.mxu0 0.0
    %1245 = vmatpush1.msra.mxu0 0.0
    %1246 = vmatprep.subr.mxu0 0.0
    %1247 = vmatpush1.msra.mxu0 0.0
    %1248 = vmatprep.subr.mxu0 0.0
    %1249 = vmatpush1.msra.mxu0 0.0
    %1250 = vmatprep.subr.mxu0 0.0
    %1251 = vmatpush1.msra.mxu0 0.0
    %1252 = vmatprep.subr.mxu0 0.0
    %1253 = vmatpush1.msra.mxu0 0.0
    %1254 = vmatprep.subr.mxu0 0.0
    %1255 = vmatpush1.msra.mxu0 0.0
    %1256 = vmatprep.subr.mxu0 0.0
    %1257 = vmatpush1.msra.mxu0 0.0
    %1258 = vmatprep.subr.mxu0 0.0
    %1259 = vmatpush1.msra.mxu0 0.0
    %1260 = vmatprep.subr.mxu0 0.0
    %1261 = vmatpush1.msra.mxu0 0.0
    %1262 = vmatprep.subr.mxu0 0.0
    %1263 = vmatpush1.msra.mxu0 0.0
    %1264 = vmatprep.subr.mxu0 0.0
    %1265 = vmatpush1.msra.mxu0 0.0
    %1266 = vmatprep.subr.mxu0 0.0
    %1267 = vmatpush1.msra.mxu0 0.0
    %1268 = vmatprep.subr.mxu0 0.0
    %1269 = vmatpush1.msra.mxu0 0.0
    %1270 = vmatprep.subr.mxu0 0.0
    %1271 = vmatpush1.msra.mxu0 0.0
    %1272 = vmatprep.subr.mxu0 0.0
    %1273 = vmatpush1.msra.mxu0 0.0
    %1274 = vmatprep.subr.mxu0 0.0
    %1275 = vmatpush1.msra.mxu0 0.0
    %1276 = vmatprep.subr.mxu0 0.0
    %1277 = vmatpush1.msra.mxu0 0.0
    %1278 = vmatprep.subr.mxu0 0.0
    %1279 = vmatpush1.msra.mxu0 0.0
    %1280 = vmatprep.subr.mxu0 0.0
    %1281 = vmatpush1.msra.mxu0 0.0
    %1282 = vmatprep.subr.mxu0 0.0
    %1283 = vmatpush1.msra.mxu0 0.0
    %1284 = vmatprep.mubr.f32.mxu0 0.0
    %1285 = vmatmul.mubr.f32.gmra.mrb[0].mxu0 %v1218
    %v1286 = vpop.f32.mrb[0].mxu0
    %v1287 = vadd.f32 %v45, %v1286
    %v1288 = vpop.f32.mrb[0].mxu0
    %1289 = vdwg.mxu0
    %v1290 = vxor.u32 %v1287, 2147483648
    %v1291 = vmul.f32 %v1290, 1.442695
    %v1292 = vpow.pop %v1291
    %v1293 = vadd.f32 %v1292, 1.0
    %v1294 = vrcp.pop %v1293
    %v1295 = vmul.f32 1.0, %v1294
    %v1296 = vmul.f32 %v1287, %v1295
    %v1297 = vadd.f32 %v1136, %v1296
    %v1299 = vsel %vm53, %v1216, 0
    %1301 = vmatprep.subr.mxu0 0.0
    %1302 = vmatpush1.msra.mxu0 %v39
    %1303 = vmatprep.subr.mxu0 0.0
    %1304 = vmatpush1.msra.mxu0 %v40
    %1305 = vmatprep.subr.mxu0 0.0
    %1306 = vmatpush1.msra.mxu0 %v41
    %1307 = vmatprep.subr.mxu0 0.0
    %1308 = vmatpush1.msra.mxu0 %v42
    %1309 = vmatprep.subr.mxu0 0.0
    %1310 = vmatpush1.msra.mxu0 0.0
    %1311 = vmatprep.subr.mxu0 0.0
    %1312 = vmatpush1.msra.mxu0 0.0
    %1313 = vmatprep.subr.mxu0 0.0
    %1314 = vmatpush1.msra.mxu0 0.0
    %1315 = vmatprep.subr.mxu0 0.0
    %1316 = vmatpush1.msra.mxu0 0.0
    %1317 = vmatprep.subr.mxu0 0.0
    %1318 = vmatpush1.msra.mxu0 0.0
    %1319 = vmatprep.subr.mxu0 0.0
    %1320 = vmatpush1.msra.mxu0 0.0
    %1321 = vmatprep.subr.mxu0 0.0
    %1322 = vmatpush1.msra.mxu0 0.0
    %1323 = vmatprep.subr.mxu0 0.0
    %1324 = vmatpush1.msra.mxu0 0.0
    %1325 = vmatprep.subr.mxu0 0.0
    %1326 = vmatpush1.msra.mxu0 0.0
    %1327 = vmatprep.subr.mxu0 0.0
    %1328 = vmatpush1.msra.mxu0 0.0
    %1329 = vmatprep.subr.mxu0 0.0
    %1330 = vmatpush1.msra.mxu0 0.0
    %1331 = vmatprep.subr.mxu0 0.0
    %1332 = vmatpush1.msra.mxu0 0.0
    %1333 = vmatprep.subr.mxu0 0.0
    %1334 = vmatpush1.msra.mxu0 0.0
    %1335 = vmatprep.subr.mxu0 0.0
    %1336 = vmatpush1.msra.mxu0 0.0
    %1337 = vmatprep.subr.mxu0 0.0
    %1338 = vmatpush1.msra.mxu0 0.0
    %1339 = vmatprep.subr.mxu0 0.0
    %1340 = vmatpush1.msra.mxu0 0.0
    %1341 = vmatprep.subr.mxu0 0.0
    %1342 = vmatpush1.msra.mxu0 0.0
    %1343 = vmatprep.subr.mxu0 0.0
    %1344 = vmatpush1.msra.mxu0 0.0
    %1345 = vmatprep.subr.mxu0 0.0
    %1346 = vmatpush1.msra.mxu0 0.0
    %1347 = vmatprep.subr.mxu0 0.0
    %1348 = vmatpush1.msra.mxu0 0.0
    %1349 = vmatprep.subr.mxu0 0.0
    %1350 = vmatpush1.msra.mxu0 0.0
    %1351 = vmatprep.subr.mxu0 0.0
    %1352 = vmatpush1.msra.mxu0 0.0
    %1353 = vmatprep.subr.mxu0 0.0
    %1354 = vmatpush1.msra.mxu0 0.0
    %1355 = vmatprep.subr.mxu0 0.0
    %1356 = vmatpush1.msra.mxu0 0.0
    %1357 = vmatprep.subr.mxu0 0.0
    %1358 = vmatpush1.msra.mxu0 0.0
    %1359 = vmatprep.subr.mxu0 0.0
    %1360 = vmatpush1.msra.mxu0 0.0
    %1361 = vmatprep.subr.mxu0 0.0
    %1362 = vmatpush1.msra.mxu0 0.0
    %1363 = vmatprep.subr.mxu0 0.0
    %1364 = vmatpush1.msra.mxu0 0.0
    %1365 = vmatprep.mubr.f32.mxu0 0.0
    %1366 = vmatmul.mubr.f32.gmra.mrb[0].mxu0 %v1299
    %v1367 = vpop.f32.mrb[0].mxu0
    %v1368 = vadd.f32 %v49, %v1367
    %v1369 = vpop.f32.mrb[0].mxu0
    %1370 = vdwg.mxu0
    %v1371 = vxor.u32 %v1368, 2147483648
    %v1372 = vmul.f32 %v1371, 1.442695
    %v1373 = vpow.pop %v1372
    %v1374 = vadd.f32 %v1373, 1.0
    %v1375 = vrcp.pop %v1374
    %v1376 = vmul.f32 1.0, %v1375
    %v1377 = vmul.f32 %v1368, %v1376
    %v1378 = vadd.f32 %v1216, %v1377
    %1379 = vst.msk [vmem:[#allocation2 + $0x3] sm:$0x1] %vm378, %v1297
    %v1381 = vlaneseq
    %v1382 = vshrl.u32 %v1381, 7
    %v1383 = vsub.s32 0, %v1382
    %v1384 = vrot.slane %v1378, %v1383
    %1385 = vrot.lane.b32.xlu0 %v1384, 32
    %v1386 = vpop.permute.xlu0 %1385
    %1388 = vst.msk [vmem:[#allocation2 + $0x3] sm:$0x1] %vm388, %v1386
    %v1390 = vsel %vm53, %v1297, 0
    %1392 = vmatprep.subr.mxu0 0.0
    %1393 = vmatpush1.msra.mxu0 %v24
    %1394 = vmatprep.subr.mxu0 0.0
    %1395 = vmatpush1.msra.mxu0 %v25
    %1396 = vmatprep.subr.mxu0 0.0
    %1397 = vmatpush1.msra.mxu0 %v26
    %1398 = vmatprep.subr.mxu0 0.0
    %1399 = vmatpush1.msra.mxu0 %v27
    %1400 = vmatprep.subr.mxu0 0.0
    %1401 = vmatpush1.msra.mxu0 0.0
    %1402 = vmatprep.subr.mxu0 0.0
    %1403 = vmatpush1.msra.mxu0 0.0
    %1404 = vmatprep.subr.mxu0 0.0
    %1405 = vmatpush1.msra.mxu0 0.0
    %1406 = vmatprep.subr.mxu0 0.0
    %1407 = vmatpush1.msra.mxu0 0.0
    %1408 = vmatprep.subr.mxu0 0.0
    %1409 = vmatpush1.msra.mxu0 0.0
    %1410 = vmatprep.subr.mxu0 0.0
    %1411 = vmatpush1.msra.mxu0 0.0
    %1412 = vmatprep.subr.mxu0 0.0
    %1413 = vmatpush1.msra.mxu0 0.0
    %1414 = vmatprep.subr.mxu0 0.0
    %1415 = vmatpush1.msra.mxu0 0.0
    %1416 = vmatprep.subr.mxu0 0.0
    %1417 = vmatpush1.msra.mxu0 0.0
    %1418 = vmatprep.subr.mxu0 0.0
    %1419 = vmatpush1.msra.mxu0 0.0
    %1420 = vmatprep.subr.mxu0 0.0
    %1421 = vmatpush1.msra.mxu0 0.0
    %1422 = vmatprep.subr.mxu0 0.0
    %1423 = vmatpush1.msra.mxu0 0.0
    %1424 = vmatprep.subr.mxu0 0.0
    %1425 = vmatpush1.msra.mxu0 0.0
    %1426 = vmatprep.subr.mxu0 0.0
    %1427 = vmatpush1.msra.mxu0 0.0
    %1428 = vmatprep.subr.mxu0 0.0
    %1429 = vmatpush1.msra.mxu0 0.0
    %1430 = vmatprep.subr.mxu0 0.0
    %1431 = vmatpush1.msra.mxu0 0.0
    %1432 = vmatprep.subr.mxu0 0.0
    %1433 = vmatpush1.msra.mxu0 0.0
    %1434 = vmatprep.subr.mxu0 0.0
    %1435 = vmatpush1.msra.mxu0 0.0
    %1436 = vmatprep.subr.mxu0 0.0
    %1437 = vmatpush1.msra.mxu0 0.0
    %1438 = vmatprep.subr.mxu0 0.0
    %1439 = vmatpush1.msra.mxu0 0.0
    %1440 = vmatprep.subr.mxu0 0.0
    %1441 = vmatpush1.msra.mxu0 0.0
    %1442 = vmatprep.subr.mxu0 0.0
    %1443 = vmatpush1.msra.mxu0 0.0
    %1444 = vmatprep.subr.mxu0 0.0
    %1445 = vmatpush1.msra.mxu0 0.0
    %1446 = vmatprep.subr.mxu0 0.0
    %1447 = vmatpush1.msra.mxu0 0.0
    %1448 = vmatprep.subr.mxu0 0.0
    %1449 = vmatpush1.msra.mxu0 0.0
    %1450 = vmatprep.subr.mxu0 0.0
    %1451 = vmatpush1.msra.mxu0 0.0
    %1452 = vmatprep.subr.mxu0 0.0
    %1453 = vmatpush1.msra.mxu0 0.0
    %1454 = vmatprep.subr.mxu0 0.0
    %1455 = vmatpush1.msra.mxu0 0.0
    %1456 = vmatprep.mubr.f32.mxu0 0.0
    %1457 = vmatmul.mubr.f32.gmra.mrb[0].mxu0 %v1390
    %v1458 = vpop.f32.mrb[0].mxu0
    %v1459 = vadd.f32 %v43, %v1458
    %v1460 = vpop.f32.mrb[0].mxu0
    %1461 = vdwg.mxu0
    %v1462 = vxor.u32 %v1459, 2147483648
    %v1463 = vmul.f32 %v1462, 1.442695
    %v1464 = vpow.pop %v1463
    %v1465 = vadd.f32 %v1464, 1.0
    %v1466 = vrcp.pop %v1465
    %v1467 = vmul.f32 1.0, %v1466
    %v1468 = vmul.f32 %v1459, %v1467
    %v1469 = vadd.f32 %v1297, %v1468
    %v1470 = vsel %vm53, %v1378, 0
    %1472 = vmatprep.subr.mxu0 0.0
    %1473 = vmatpush1.msra.mxu0 %v34
    %1474 = vmatprep.subr.mxu0 0.0
    %1475 = vmatpush1.msra.mxu0 %v35
    %1476 = vmatprep.subr.mxu0 0.0
    %1477 = vmatpush1.msra.mxu0 %v36
    %1478 = vmatprep.subr.mxu0 0.0
    %1479 = vmatpush1.msra.mxu0 %v37
    %1480 = vmatprep.subr.mxu0 0.0
    %1481 = vmatpush1.msra.mxu0 0.0
    %1482 = vmatprep.subr.mxu0 0.0
    %1483 = vmatpush1.msra.mxu0 0.0
    %1484 = vmatprep.subr.mxu0 0.0
    %1485 = vmatpush1.msra.mxu0 0.0
    %1486 = vmatprep.subr.mxu0 0.0
    %1487 = vmatpush1.msra.mxu0 0.0
    %1488 = vmatprep.subr.mxu0 0.0
    %1489 = vmatpush1.msra.mxu0 0.0
    %1490 = vmatprep.subr.mxu0 0.0
    %1491 = vmatpush1.msra.mxu0 0.0
    %1492 = vmatprep.subr.mxu0 0.0
    %1493 = vmatpush1.msra.mxu0 0.0
    %1494 = vmatprep.subr.mxu0 0.0
    %1495 = vmatpush1.msra.mxu0 0.0
    %1496 = vmatprep.subr.mxu0 0.0
    %1497 = vmatpush1.msra.mxu0 0.0
    %1498 = vmatprep.subr.mxu0 0.0
    %1499 = vmatpush1.msra.mxu0 0.0
    %1500 = vmatprep.subr.mxu0 0.0
    %1501 = vmatpush1.msra.mxu0 0.0
    %1502 = vmatprep.subr.mxu0 0.0
    %1503 = vmatpush1.msra.mxu0 0.0
    %1504 = vmatprep.subr.mxu0 0.0
    %1505 = vmatpush1.msra.mxu0 0.0
    %1506 = vmatprep.subr.mxu0 0.0
    %1507 = vmatpush1.msra.mxu0 0.0
    %1508 = vmatprep.subr.mxu0 0.0
    %1509 = vmatpush1.msra.mxu0 0.0
    %1510 = vmatprep.subr.mxu0 0.0
    %1511 = vmatpush1.msra.mxu0 0.0
    %1512 = vmatprep.subr.mxu0 0.0
    %1513 = vmatpush1.msra.mxu0 0.0
    %1514 = vmatprep.subr.mxu0 0.0
    %1515 = vmatpush1.msra.mxu0 0.0
    %1516 = vmatprep.subr.mxu0 0.0
    %1517 = vmatpush1.msra.mxu0 0.0
    %1518 = vmatprep.subr.mxu0 0.0
    %1519 = vmatpush1.msra.mxu0 0.0
    %1520 = vmatprep.subr.mxu0 0.0
    %1521 = vmatpush1.msra.mxu0 0.0
    %1522 = vmatprep.subr.mxu0 0.0
    %1523 = vmatpush1.msra.mxu0 0.0
    %1524 = vmatprep.subr.mxu0 0.0
    %1525 = vmatpush1.msra.mxu0 0.0
    %1526 = vmatprep.subr.mxu0 0.0
    %1527 = vmatpush1.msra.mxu0 0.0
    %1528 = vmatprep.subr.mxu0 0.0
    %1529 = vmatpush1.msra.mxu0 0.0
    %1530 = vmatprep.subr.mxu0 0.0
    %1531 = vmatpush1.msra.mxu0 0.0
    %1532 = vmatprep.subr.mxu0 0.0
    %1533 = vmatpush1.msra.mxu0 0.0
    %1534 = vmatprep.subr.mxu0 0.0
    %1535 = vmatpush1.msra.mxu0 0.0
    %1536 = vmatprep.mubr.f32.mxu0 0.0
    %1537 = vmatmul.mubr.f32.gmra.mrb[0].mxu0 %v1470
    %v1538 = vpop.f32.mrb[0].mxu0
    %v1539 = vadd.f32 %v47, %v1538
    %v1540 = vpop.f32.mrb[0].mxu0
    %1541 = vdwg.mxu0
    %v1542 = vxor.u32 %v1539, 2147483648
    %v1543 = vmul.f32 %v1542, 1.442695
    %v1544 = vpow.pop %v1543
    %v1545 = vadd.f32 %v1544, 1.0
    %v1546 = vrcp.pop %v1545
    %v1547 = vmul.f32 1.0, %v1546
    %v1548 = vmul.f32 %v1539, %v1547
    %v1549 = vadd.f32 %v1378, %v1548
    %v1551 = vsel %vm53, %v1469, 0
    %1553 = vmatprep.subr.mxu0 0.0
    %1554 = vmatpush1.msra.mxu0 %v29
    %1555 = vmatprep.subr.mxu0 0.0
    %1556 = vmatpush1.msra.mxu0 %v30
    %1557 = vmatprep.subr.mxu0 0.0
    %1558 = vmatpush1.msra.mxu0 %v31
    %1559 = vmatprep.subr.mxu0 0.0
    %1560 = vmatpush1.msra.mxu0 %v32
    %1561 = vmatprep.subr.mxu0 0.0
    %1562 = vmatpush1.msra.mxu0 0.0
    %1563 = vmatprep.subr.mxu0 0.0
    %1564 = vmatpush1.msra.mxu0 0.0
    %1565 = vmatprep.subr.mxu0 0.0
    %1566 = vmatpush1.msra.mxu0 0.0
    %1567 = vmatprep.subr.mxu0 0.0
    %1568 = vmatpush1.msra.mxu0 0.0
    %1569 = vmatprep.subr.mxu0 0.0
    %1570 = vmatpush1.msra.mxu0 0.0
    %1571 = vmatprep.subr.mxu0 0.0
    %1572 = vmatpush1.msra.mxu0 0.0
    %1573 = vmatprep.subr.mxu0 0.0
    %1574 = vmatpush1.msra.mxu0 0.0
    %1575 = vmatprep.subr.mxu0 0.0
    %1576 = vmatpush1.msra.mxu0 0.0
    %1577 = vmatprep.subr.mxu0 0.0
    %1578 = vmatpush1.msra.mxu0 0.0
    %1579 = vmatprep.subr.mxu0 0.0
    %1580 = vmatpush1.msra.mxu0 0.0
    %1581 = vmatprep.subr.mxu0 0.0
    %1582 = vmatpush1.msra.mxu0 0.0
    %1583 = vmatprep.subr.mxu0 0.0
    %1584 = vmatpush1.msra.mxu0 0.0
    %1585 = vmatprep.subr.mxu0 0.0
    %1586 = vmatpush1.msra.mxu0 0.0
    %1587 = vmatprep.subr.mxu0 0.0
    %1588 = vmatpush1.msra.mxu0 0.0
    %1589 = vmatprep.subr.mxu0 0.0
    %1590 = vmatpush1.msra.mxu0 0.0
    %1591 = vmatprep.subr.mxu0 0.0
    %1592 = vmatpush1.msra.mxu0 0.0
    %1593 = vmatprep.subr.mxu0 0.0
    %1594 = vmatpush1.msra.mxu0 0.0
    %1595 = vmatprep.subr.mxu0 0.0
    %1596 = vmatpush1.msra.mxu0 0.0
    %1597 = vmatprep.subr.mxu0 0.0
    %1598 = vmatpush1.msra.mxu0 0.0
    %1599 = vmatprep.subr.mxu0 0.0
    %1600 = vmatpush1.msra.mxu0 0.0
    %1601 = vmatprep.subr.mxu0 0.0
    %1602 = vmatpush1.msra.mxu0 0.0
    %1603 = vmatprep.subr.mxu0 0.0
    %1604 = vmatpush1.msra.mxu0 0.0
    %1605 = vmatprep.subr.mxu0 0.0
    %1606 = vmatpush1.msra.mxu0 0.0
    %1607 = vmatprep.subr.mxu0 0.0
    %1608 = vmatpush1.msra.mxu0 0.0
    %1609 = vmatprep.subr.mxu0 0.0
    %1610 = vmatpush1.msra.mxu0 0.0
    %1611 = vmatprep.subr.mxu0 0.0
    %1612 = vmatpush1.msra.mxu0 0.0
    %1613 = vmatprep.subr.mxu0 0.0
    %1614 = vmatpush1.msra.mxu0 0.0
    %1615 = vmatprep.subr.mxu0 0.0
    %1616 = vmatpush1.msra.mxu0 0.0
    %1617 = vmatprep.mubr.f32.mxu0 0.0
    %1618 = vmatmul.mubr.f32.gmra.mrb[0].mxu0 %v1551
    %v1619 = vpop.f32.mrb[0].mxu0
    %v1620 = vadd.f32 %v45, %v1619
    %v1621 = vpop.f32.mrb[0].mxu0
    %1622 = vdwg.mxu0
    %v1623 = vxor.u32 %v1620, 2147483648
    %v1624 = vmul.f32 %v1623, 1.442695
    %v1625 = vpow.pop %v1624
    %v1626 = vadd.f32 %v1625, 1.0
    %v1627 = vrcp.pop %v1626
    %v1628 = vmul.f32 1.0, %v1627
    %v1629 = vmul.f32 %v1620, %v1628
    %v1630 = vadd.f32 %v1469, %v1629
    %v1632 = vsel %vm53, %v1549, 0
    %1634 = vmatprep.subr.mxu0 0.0
    %1635 = vmatpush1.msra.mxu0 %v39
    %1636 = vmatprep.subr.mxu0 0.0
    %1637 = vmatpush1.msra.mxu0 %v40
    %1638 = vmatprep.subr.mxu0 0.0
    %1639 = vmatpush1.msra.mxu0 %v41
    %1640 = vmatprep.subr.mxu0 0.0
    %1641 = vmatpush1.msra.mxu0 %v42
    %1642 = vmatprep.subr.mxu0 0.0
    %1643 = vmatpush1.msra.mxu0 0.0
    %1644 = vmatprep.subr.mxu0 0.0
    %1645 = vmatpush1.msra.mxu0 0.0
    %1646 = vmatprep.subr.mxu0 0.0
    %1647 = vmatpush1.msra.mxu0 0.0
    %1648 = vmatprep.subr.mxu0 0.0
    %1649 = vmatpush1.msra.mxu0 0.0
    %1650 = vmatprep.subr.mxu0 0.0
    %1651 = vmatpush1.msra.mxu0 0.0
    %1652 = vmatprep.subr.mxu0 0.0
    %1653 = vmatpush1.msra.mxu0 0.0
    %1654 = vmatprep.subr.mxu0 0.0
    %1655 = vmatpush1.msra.mxu0 0.0
    %1656 = vmatprep.subr.mxu0 0.0
    %1657 = vmatpush1.msra.mxu0 0.0
    %1658 = vmatprep.subr.mxu0 0.0
    %1659 = vmatpush1.msra.mxu0 0.0
    %1660 = vmatprep.subr.mxu0 0.0
    %1661 = vmatpush1.msra.mxu0 0.0
    %1662 = vmatprep.subr.mxu0 0.0
    %1663 = vmatpush1.msra.mxu0 0.0
    %1664 = vmatprep.subr.mxu0 0.0
    %1665 = vmatpush1.msra.mxu0 0.0
    %1666 = vmatprep.subr.mxu0 0.0
    %1667 = vmatpush1.msra.mxu0 0.0
    %1668 = vmatprep.subr.mxu0 0.0
    %1669 = vmatpush1.msra.mxu0 0.0
    %1670 = vmatprep.subr.mxu0 0.0
    %1671 = vmatpush1.msra.mxu0 0.0
    %1672 = vmatprep.subr.mxu0 0.0
    %1673 = vmatpush1.msra.mxu0 0.0
    %1674 = vmatprep.subr.mxu0 0.0
    %1675 = vmatpush1.msra.mxu0 0.0
    %1676 = vmatprep.subr.mxu0 0.0
    %1677 = vmatpush1.msra.mxu0 0.0
    %1678 = vmatprep.subr.mxu0 0.0
    %1679 = vmatpush1.msra.mxu0 0.0
    %1680 = vmatprep.subr.mxu0 0.0
    %1681 = vmatpush1.msra.mxu0 0.0
    %1682 = vmatprep.subr.mxu0 0.0
    %1683 = vmatpush1.msra.mxu0 0.0
    %1684 = vmatprep.subr.mxu0 0.0
    %1685 = vmatpush1.msra.mxu0 0.0
    %1686 = vmatprep.subr.mxu0 0.0
    %1687 = vmatpush1.msra.mxu0 0.0
    %1688 = vmatprep.subr.mxu0 0.0
    %1689 = vmatpush1.msra.mxu0 0.0
    %1690 = vmatprep.subr.mxu0 0.0
    %1691 = vmatpush1.msra.mxu0 0.0
    %1692 = vmatprep.subr.mxu0 0.0
    %1693 = vmatpush1.msra.mxu0 0.0
    %1694 = vmatprep.subr.mxu0 0.0
    %1695 = vmatpush1.msra.mxu0 0.0
    %1696 = vmatprep.subr.mxu0 0.0
    %1697 = vmatpush1.msra.mxu0 0.0
    %1698 = vmatprep.mubr.f32.mxu0 0.0
    %1699 = vmatmul.mubr.f32.gmra.mrb[0].mxu0 %v1632
    %v1700 = vpop.f32.mrb[0].mxu0
    %v1701 = vadd.f32 %v49, %v1700
    %v1702 = vpop.f32.mrb[0].mxu0
    %1703 = vdwg.mxu0
    %v1704 = vxor.u32 %v1701, 2147483648
    %v1705 = vmul.f32 %v1704, 1.442695
    %v1706 = vpow.pop %v1705
    %v1707 = vadd.f32 %v1706, 1.0
    %v1708 = vrcp.pop %v1707
    %v1709 = vmul.f32 1.0, %v1708
    %v1710 = vmul.f32 %v1701, %v1709
    %v1711 = vadd.f32 %v1549, %v1710
    %1712 = vst.msk [vmem:[#allocation2 + $0x4] sm:$0x1] %vm378, %v1630
    %v1714 = vlaneseq
    %v1715 = vshrl.u32 %v1714, 7
    %v1716 = vsub.s32 0, %v1715
    %v1717 = vrot.slane %v1711, %v1716
    %1718 = vrot.lane.b32.xlu0 %v1717, 32
    %v1719 = vpop.permute.xlu0 %1718
    %1721 = vst.msk [vmem:[#allocation2 + $0x4] sm:$0x1] %vm388, %v1719
    %v1723 = vsel %vm53, %v1630, 0
    %1725 = vmatprep.subr.mxu0 0.0
    %1726 = vmatpush1.msra.mxu0 %v24
    %1727 = vmatprep.subr.mxu0 0.0
    %1728 = vmatpush1.msra.mxu0 %v25
    %1729 = vmatprep.subr.mxu0 0.0
    %1730 = vmatpush1.msra.mxu0 %v26
    %1731 = vmatprep.subr.mxu0 0.0
    %1732 = vmatpush1.msra.mxu0 %v27
    %1733 = vmatprep.subr.mxu0 0.0
    %1734 = vmatpush1.msra.mxu0 0.0
    %1735 = vmatprep.subr.mxu0 0.0
    %1736 = vmatpush1.msra.mxu0 0.0
    %1737 = vmatprep.subr.mxu0 0.0
    %1738 = vmatpush1.msra.mxu0 0.0
    %1739 = vmatprep.subr.mxu0 0.0
    %1740 = vmatpush1.msra.mxu0 0.0
    %1741 = vmatprep.subr.mxu0 0.0
    %1742 = vmatpush1.msra.mxu0 0.0
    %1743 = vmatprep.subr.mxu0 0.0
    %1744 = vmatpush1.msra.mxu0 0.0
    %1745 = vmatprep.subr.mxu0 0.0
    %1746 = vmatpush1.msra.mxu0 0.0
    %1747 = vmatprep.subr.mxu0 0.0
    %1748 = vmatpush1.msra.mxu0 0.0
    %1749 = vmatprep.subr.mxu0 0.0
    %1750 = vmatpush1.msra.mxu0 0.0
    %1751 = vmatprep.subr.mxu0 0.0
    %1752 = vmatpush1.msra.mxu0 0.0
    %1753 = vmatprep.subr.mxu0 0.0
    %1754 = vmatpush1.msra.mxu0 0.0
    %1755 = vmatprep.subr.mxu0 0.0
    %1756 = vmatpush1.msra.mxu0 0.0
    %1757 = vmatprep.subr.mxu0 0.0
    %1758 = vmatpush1.msra.mxu0 0.0
    %1759 = vmatprep.subr.mxu0 0.0
    %1760 = vmatpush1.msra.mxu0 0.0
    %1761 = vmatprep.subr.mxu0 0.0
    %1762 = vmatpush1.msra.mxu0 0.0
    %1763 = vmatprep.subr.mxu0 0.0
    %1764 = vmatpush1.msra.mxu0 0.0
    %1765 = vmatprep.subr.mxu0 0.0
    %1766 = vmatpush1.msra.mxu0 0.0
    %1767 = vmatprep.subr.mxu0 0.0
    %1768 = vmatpush1.msra.mxu0 0.0
    %1769 = vmatprep.subr.mxu0 0.0
    %1770 = vmatpush1.msra.mxu0 0.0
    %1771 = vmatprep.subr.mxu0 0.0
    %1772 = vmatpush1.msra.mxu0 0.0
    %1773 = vmatprep.subr.mxu0 0.0
    %1774 = vmatpush1.msra.mxu0 0.0
    %1775 = vmatprep.subr.mxu0 0.0
    %1776 = vmatpush1.msra.mxu0 0.0
    %1777 = vmatprep.subr.mxu0 0.0
    %1778 = vmatpush1.msra.mxu0 0.0
    %1779 = vmatprep.subr.mxu0 0.0
    %1780 = vmatpush1.msra.mxu0 0.0
    %1781 = vmatprep.subr.mxu0 0.0
    %1782 = vmatpush1.msra.mxu0 0.0
    %1783 = vmatprep.subr.mxu0 0.0
    %1784 = vmatpush1.msra.mxu0 0.0
    %1785 = vmatprep.subr.mxu0 0.0
    %1786 = vmatpush1.msra.mxu0 0.0
    %1787 = vmatprep.subr.mxu0 0.0
    %1788 = vmatpush1.msra.mxu0 0.0
    %1789 = vmatprep.mubr.f32.mxu0 0.0
    %1790 = vmatmul.mubr.f32.gmra.mrb[0].mxu0 %v1723
    %v1791 = vpop.f32.mrb[0].mxu0
    %v1792 = vadd.f32 %v43, %v1791
    %v1793 = vpop.f32.mrb[0].mxu0
    %1794 = vdwg.mxu0
    %v1795 = vxor.u32 %v1792, 2147483648
    %v1796 = vmul.f32 %v1795, 1.442695
    %v1797 = vpow.pop %v1796
    %v1798 = vadd.f32 %v1797, 1.0
    %v1799 = vrcp.pop %v1798
    %v1800 = vmul.f32 1.0, %v1799
    %v1801 = vmul.f32 %v1792, %v1800
    %v1802 = vadd.f32 %v1630, %v1801
    %v1803 = vsel %vm53, %v1711, 0
    %1805 = vmatprep.subr.mxu0 0.0
    %1806 = vmatpush1.msra.mxu0 %v34
    %1807 = vmatprep.subr.mxu0 0.0
    %1808 = vmatpush1.msra.mxu0 %v35
    %1809 = vmatprep.subr.mxu0 0.0
    %1810 = vmatpush1.msra.mxu0 %v36
    %1811 = vmatprep.subr.mxu0 0.0
    %1812 = vmatpush1.msra.mxu0 %v37
    %1813 = vmatprep.subr.mxu0 0.0
    %1814 = vmatpush1.msra.mxu0 0.0
    %1815 = vmatprep.subr.mxu0 0.0
    %1816 = vmatpush1.msra.mxu0 0.0
    %1817 = vmatprep.subr.mxu0 0.0
    %1818 = vmatpush1.msra.mxu0 0.0
    %1819 = vmatprep.subr.mxu0 0.0
    %1820 = vmatpush1.msra.mxu0 0.0
    %1821 = vmatprep.subr.mxu0 0.0
    %1822 = vmatpush1.msra.mxu0 0.0
    %1823 = vmatprep.subr.mxu0 0.0
    %1824 = vmatpush1.msra.mxu0 0.0
    %1825 = vmatprep.subr.mxu0 0.0
    %1826 = vmatpush1.msra.mxu0 0.0
    %1827 = vmatprep.subr.mxu0 0.0
    %1828 = vmatpush1.msra.mxu0 0.0
    %1829 = vmatprep.subr.mxu0 0.0
    %1830 = vmatpush1.msra.mxu0 0.0
    %1831 = vmatprep.subr.mxu0 0.0
    %1832 = vmatpush1.msra.mxu0 0.0
    %1833 = vmatprep.subr.mxu0 0.0
    %1834 = vmatpush1.msra.mxu0 0.0
    %1835 = vmatprep.subr.mxu0 0.0
    %1836 = vmatpush1.msra.mxu0 0.0
    %1837 = vmatprep.subr.mxu0 0.0
    %1838 = vmatpush1.msra.mxu0 0.0
    %1839 = vmatprep.subr.mxu0 0.0
    %1840 = vmatpush1.msra.mxu0 0.0
    %1841 = vmatprep.subr.mxu0 0.0
    %1842 = vmatpush1.msra.mxu0 0.0
    %1843 = vmatprep.subr.mxu0 0.0
    %1844 = vmatpush1.msra.mxu0 0.0
    %1845 = vmatprep.subr.mxu0 0.0
    %1846 = vmatpush1.msra.mxu0 0.0
    %1847 = vmatprep.subr.mxu0 0.0
    %1848 = vmatpush1.msra.mxu0 0.0
    %1849 = vmatprep.subr.mxu0 0.0
    %1850 = vmatpush1.msra.mxu0 0.0
    %1851 = vmatprep.subr.mxu0 0.0
    %1852 = vmatpush1.msra.mxu0 0.0
    %1853 = vmatprep.subr.mxu0 0.0
    %1854 = vmatpush1.msra.mxu0 0.0
    %1855 = vmatprep.subr.mxu0 0.0
    %1856 = vmatpush1.msra.mxu0 0.0
    %1857 = vmatprep.subr.mxu0 0.0
    %1858 = vmatpush1.msra.mxu0 0.0
    %1859 = vmatprep.subr.mxu0 0.0
    %1860 = vmatpush1.msra.mxu0 0.0
    %1861 = vmatprep.subr.mxu0 0.0
    %1862 = vmatpush1.msra.mxu0 0.0
    %1863 = vmatprep.subr.mxu0 0.0
    %1864 = vmatpush1.msra.mxu0 0.0
    %1865 = vmatprep.subr.mxu0 0.0
    %1866 = vmatpush1.msra.mxu0 0.0
    %1867 = vmatprep.subr.mxu0 0.0
    %1868 = vmatpush1.msra.mxu0 0.0
    %1869 = vmatprep.mubr.f32.mxu0 0.0
    %1870 = vmatmul.mubr.f32.gmra.mrb[0].mxu0 %v1803
    %v1871 = vpop.f32.mrb[0].mxu0
    %v1872 = vadd.f32 %v47, %v1871
    %v1873 = vpop.f32.mrb[0].mxu0
    %1874 = vdwg.mxu0
    %v1875 = vxor.u32 %v1872, 2147483648
    %v1876 = vmul.f32 %v1875, 1.442695
    %v1877 = vpow.pop %v1876
    %v1878 = vadd.f32 %v1877, 1.0
    %v1879 = vrcp.pop %v1878
    %v1880 = vmul.f32 1.0, %v1879
    %v1881 = vmul.f32 %v1872, %v1880
    %v1882 = vadd.f32 %v1711, %v1881
    %v1884 = vsel %vm53, %v1802, 0
    %1886 = vmatprep.subr.mxu0 0.0
    %1887 = vmatpush1.msra.mxu0 %v29
    %1888 = vmatprep.subr.mxu0 0.0
    %1889 = vmatpush1.msra.mxu0 %v30
    %1890 = vmatprep.subr.mxu0 0.0
    %1891 = vmatpush1.msra.mxu0 %v31
    %1892 = vmatprep.subr.mxu0 0.0
    %1893 = vmatpush1.msra.mxu0 %v32
    %1894 = vmatprep.subr.mxu0 0.0
    %1895 = vmatpush1.msra.mxu0 0.0
    %1896 = vmatprep.subr.mxu0 0.0
    %1897 = vmatpush1.msra.mxu0 0.0
    %1898 = vmatprep.subr.mxu0 0.0
    %1899 = vmatpush1.msra.mxu0 0.0
    %1900 = vmatprep.subr.mxu0 0.0
    %1901 = vmatpush1.msra.mxu0 0.0
    %1902 = vmatprep.subr.mxu0 0.0
    %1903 = vmatpush1.msra.mxu0 0.0
    %1904 = vmatprep.subr.mxu0 0.0
    %1905 = vmatpush1.msra.mxu0 0.0
    %1906 = vmatprep.subr.mxu0 0.0
    %1907 = vmatpush1.msra.mxu0 0.0
    %1908 = vmatprep.subr.mxu0 0.0
    %1909 = vmatpush1.msra.mxu0 0.0
    %1910 = vmatprep.subr.mxu0 0.0
    %1911 = vmatpush1.msra.mxu0 0.0
    %1912 = vmatprep.subr.mxu0 0.0
    %1913 = vmatpush1.msra.mxu0 0.0
    %1914 = vmatprep.subr.mxu0 0.0
    %1915 = vmatpush1.msra.mxu0 0.0
    %1916 = vmatprep.subr.mxu0 0.0
    %1917 = vmatpush1.msra.mxu0 0.0
    %1918 = vmatprep.subr.mxu0 0.0
    %1919 = vmatpush1.msra.mxu0 0.0
    %1920 = vmatprep.subr.mxu0 0.0
    %1921 = vmatpush1.msra.mxu0 0.0
    %1922 = vmatprep.subr.mxu0 0.0
    %1923 = vmatpush1.msra.mxu0 0.0
    %1924 = vmatprep.subr.mxu0 0.0
    %1925 = vmatpush1.msra.mxu0 0.0
    %1926 = vmatprep.subr.mxu0 0.0
    %1927 = vmatpush1.msra.mxu0 0.0
    %1928 = vmatprep.subr.mxu0 0.0
    %1929 = vmatpush1.msra.mxu0 0.0
    %1930 = vmatprep.subr.mxu0 0.0
    %1931 = vmatpush1.msra.mxu0 0.0
    %1932 = vmatprep.subr.mxu0 0.0
    %1933 = vmatpush1.msra.mxu0 0.0
    %1934 = vmatprep.subr.mxu0 0.0
    %1935 = vmatpush1.msra.mxu0 0.0
    %1936 = vmatprep.subr.mxu0 0.0
    %1937 = vmatpush1.msra.mxu0 0.0
    %1938 = vmatprep.subr.mxu0 0.0
    %1939 = vmatpush1.msra.mxu0 0.0
    %1940 = vmatprep.subr.mxu0 0.0
    %1941 = vmatpush1.msra.mxu0 0.0
    %1942 = vmatprep.subr.mxu0 0.0
    %1943 = vmatpush1.msra.mxu0 0.0
    %1944 = vmatprep.subr.mxu0 0.0
    %1945 = vmatpush1.msra.mxu0 0.0
    %1946 = vmatprep.subr.mxu0 0.0
    %1947 = vmatpush1.msra.mxu0 0.0
    %1948 = vmatprep.subr.mxu0 0.0
    %1949 = vmatpush1.msra.mxu0 0.0
    %1950 = vmatprep.mubr.f32.mxu0 0.0
    %1951 = vmatmul.mubr.f32.gmra.mrb[0].mxu0 %v1884
    %v1952 = vpop.f32.mrb[0].mxu0
    %v1953 = vadd.f32 %v45, %v1952
    %v1954 = vpop.f32.mrb[0].mxu0
    %1955 = vdwg.mxu0
    %v1956 = vxor.u32 %v1953, 2147483648
    %v1957 = vmul.f32 %v1956, 1.442695
    %v1958 = vpow.pop %v1957
    %v1959 = vadd.f32 %v1958, 1.0
    %v1960 = vrcp.pop %v1959
    %v1961 = vmul.f32 1.0, %v1960
    %v1962 = vmul.f32 %v1953, %v1961
    %v1963 = vadd.f32 %v1802, %v1962
    %v1965 = vsel %vm53, %v1882, 0
    %1967 = vmatprep.subr.mxu0 0.0
    %1968 = vmatpush1.msra.mxu0 %v39
    %1969 = vmatprep.subr.mxu0 0.0
    %1970 = vmatpush1.msra.mxu0 %v40
    %1971 = vmatprep.subr.mxu0 0.0
    %1972 = vmatpush1.msra.mxu0 %v41
    %1973 = vmatprep.subr.mxu0 0.0
    %1974 = vmatpush1.msra.mxu0 %v42
    %1975 = vmatprep.subr.mxu0 0.0
    %1976 = vmatpush1.msra.mxu0 0.0
    %1977 = vmatprep.subr.mxu0 0.0
    %1978 = vmatpush1.msra.mxu0 0.0
    %1979 = vmatprep.subr.mxu0 0.0
    %1980 = vmatpush1.msra.mxu0 0.0
    %1981 = vmatprep.subr.mxu0 0.0
    %1982 = vmatpush1.msra.mxu0 0.0
    %1983 = vmatprep.subr.mxu0 0.0
    %1984 = vmatpush1.msra.mxu0 0.0
    %1985 = vmatprep.subr.mxu0 0.0
    %1986 = vmatpush1.msra.mxu0 0.0
    %1987 = vmatprep.subr.mxu0 0.0
    %1988 = vmatpush1.msra.mxu0 0.0
    %1989 = vmatprep.subr.mxu0 0.0
    %1990 = vmatpush1.msra.mxu0 0.0
    %1991 = vmatprep.subr.mxu0 0.0
    %1992 = vmatpush1.msra.mxu0 0.0
    %1993 = vmatprep.subr.mxu0 0.0
    %1994 = vmatpush1.msra.mxu0 0.0
    %1995 = vmatprep.subr.mxu0 0.0
    %1996 = vmatpush1.msra.mxu0 0.0
    %1997 = vmatprep.subr.mxu0 0.0
    %1998 = vmatpush1.msra.mxu0 0.0
    %1999 = vmatprep.subr.mxu0 0.0
    %2000 = vmatpush1.msra.mxu0 0.0
    %2001 = vmatprep.subr.mxu0 0.0
    %2002 = vmatpush1.msra.mxu0 0.0
    %2003 = vmatprep.subr.mxu0 0.0
    %2004 = vmatpush1.msra.mxu0 0.0
    %2005 = vmatprep.subr.mxu0 0.0
    %2006 = vmatpush1.msra.mxu0 0.0
    %2007 = vmatprep.subr.mxu0 0.0
    %2008 = vmatpush1.msra.mxu0 0.0
    %2009 = vmatprep.subr.mxu0 0.0
    %2010 = vmatpush1.msra.mxu0 0.0
    %2011 = vmatprep.subr.mxu0 0.0
    %2012 = vmatpush1.msra.mxu0 0.0
    %2013 = vmatprep.subr.mxu0 0.0
    %2014 = vmatpush1.msra.mxu0 0.0
    %2015 = vmatprep.subr.mxu0 0.0
    %2016 = vmatpush1.msra.mxu0 0.0
    %2017 = vmatprep.subr.mxu0 0.0
    %2018 = vmatpush1.msra.mxu0 0.0
    %2019 = vmatprep.subr.mxu0 0.0
    %2020 = vmatpush1.msra.mxu0 0.0
    %2021 = vmatprep.subr.mxu0 0.0
    %2022 = vmatpush1.msra.mxu0 0.0
    %2023 = vmatprep.subr.mxu0 0.0
    %2024 = vmatpush1.msra.mxu0 0.0
    %2025 = vmatprep.subr.mxu0 0.0
    %2026 = vmatpush1.msra.mxu0 0.0
    %2027 = vmatprep.subr.mxu0 0.0
    %2028 = vmatpush1.msra.mxu0 0.0
    %2029 = vmatprep.subr.mxu0 0.0
    %2030 = vmatpush1.msra.mxu0 0.0
    %2031 = vmatprep.mubr.f32.mxu0 0.0
    %2032 = vmatmul.mubr.f32.gmra.mrb[0].mxu0 %v1965
    %v2033 = vpop.f32.mrb[0].mxu0
    %v2034 = vadd.f32 %v49, %v2033
    %v2035 = vpop.f32.mrb[0].mxu0
    %2036 = vdwg.mxu0
    %v2037 = vxor.u32 %v2034, 2147483648
    %v2038 = vmul.f32 %v2037, 1.442695
    %v2039 = vpow.pop %v2038
    %v2040 = vadd.f32 %v2039, 1.0
    %v2041 = vrcp.pop %v2040
    %v2042 = vmul.f32 1.0, %v2041
    %v2043 = vmul.f32 %v2034, %v2042
    %v2044 = vadd.f32 %v1882, %v2043
    %2045 = vst.msk [vmem:[#allocation2 + $0x5] sm:$0x1] %vm378, %v1963
    %v2047 = vlaneseq
    %v2048 = vshrl.u32 %v2047, 7
    %v2049 = vsub.s32 0, %v2048
    %v2050 = vrot.slane %v2044, %v2049
    %2051 = vrot.lane.b32.xlu0 %v2050, 32
    %v2052 = vpop.permute.xlu0 %2051
    %2054 = vst.msk [vmem:[#allocation2 + $0x5] sm:$0x1] %vm388, %v2052
    %v2056 = vsel %vm53, %v1963, 0
    %2058 = vmatprep.subr.mxu0 0.0
    %2059 = vmatpush1.msra.mxu0 %v24
    %2060 = vmatprep.subr.mxu0 0.0
    %2061 = vmatpush1.msra.mxu0 %v25
    %2062 = vmatprep.subr.mxu0 0.0
    %2063 = vmatpush1.msra.mxu0 %v26
    %2064 = vmatprep.subr.mxu0 0.0
    %2065 = vmatpush1.msra.mxu0 %v27
    %2066 = vmatprep.subr.mxu0 0.0
    %2067 = vmatpush1.msra.mxu0 0.0
    %2068 = vmatprep.subr.mxu0 0.0
    %2069 = vmatpush1.msra.mxu0 0.0
    %2070 = vmatprep.subr.mxu0 0.0
    %2071 = vmatpush1.msra.mxu0 0.0
    %2072 = vmatprep.subr.mxu0 0.0
    %2073 = vmatpush1.msra.mxu0 0.0
    %2074 = vmatprep.subr.mxu0 0.0
    %2075 = vmatpush1.msra.mxu0 0.0
    %2076 = vmatprep.subr.mxu0 0.0
    %2077 = vmatpush1.msra.mxu0 0.0
    %2078 = vmatprep.subr.mxu0 0.0
    %2079 = vmatpush1.msra.mxu0 0.0
    %2080 = vmatprep.subr.mxu0 0.0
    %2081 = vmatpush1.msra.mxu0 0.0
    %2082 = vmatprep.subr.mxu0 0.0
    %2083 = vmatpush1.msra.mxu0 0.0
    %2084 = vmatprep.subr.mxu0 0.0
    %2085 = vmatpush1.msra.mxu0 0.0
    %2086 = vmatprep.subr.mxu0 0.0
    %2087 = vmatpush1.msra.mxu0 0.0
    %2088 = vmatprep.subr.mxu0 0.0
    %2089 = vmatpush1.msra.mxu0 0.0
    %2090 = vmatprep.subr.mxu0 0.0
    %2091 = vmatpush1.msra.mxu0 0.0
    %2092 = vmatprep.subr.mxu0 0.0
    %2093 = vmatpush1.msra.mxu0 0.0
    %2094 = vmatprep.subr.mxu0 0.0
    %2095 = vmatpush1.msra.mxu0 0.0
    %2096 = vmatprep.subr.mxu0 0.0
    %2097 = vmatpush1.msra.mxu0 0.0
    %2098 = vmatprep.subr.mxu0 0.0
    %2099 = vmatpush1.msra.mxu0 0.0
    %2100 = vmatprep.subr.mxu0 0.0
    %2101 = vmatpush1.msra.mxu0 0.0
    %2102 = vmatprep.subr.mxu0 0.0
    %2103 = vmatpush1.msra.mxu0 0.0
    %2104 = vmatprep.subr.mxu0 0.0
    %2105 = vmatpush1.msra.mxu0 0.0
    %2106 = vmatprep.subr.mxu0 0.0
    %2107 = vmatpush1.msra.mxu0 0.0
    %2108 = vmatprep.subr.mxu0 0.0
    %2109 = vmatpush1.msra.mxu0 0.0
    %2110 = vmatprep.subr.mxu0 0.0
    %2111 = vmatpush1.msra.mxu0 0.0
    %2112 = vmatprep.subr.mxu0 0.0
    %2113 = vmatpush1.msra.mxu0 0.0
    %2114 = vmatprep.subr.mxu0 0.0
    %2115 = vmatpush1.msra.mxu0 0.0
    %2116 = vmatprep.subr.mxu0 0.0
    %2117 = vmatpush1.msra.mxu0 0.0
    %2118 = vmatprep.subr.mxu0 0.0
    %2119 = vmatpush1.msra.mxu0 0.0
    %2120 = vmatprep.subr.mxu0 0.0
    %2121 = vmatpush1.msra.mxu0 0.0
    %2122 = vmatprep.mubr.f32.mxu0 0.0
    %2123 = vmatmul.mubr.f32.gmra.mrb[0].mxu0 %v2056
    %v2124 = vpop.f32.mrb[0].mxu0
    %v2125 = vadd.f32 %v43, %v2124
    %v2126 = vpop.f32.mrb[0].mxu0
    %2127 = vdwg.mxu0
    %v2128 = vxor.u32 %v2125, 2147483648
    %v2129 = vmul.f32 %v2128, 1.442695
    %v2130 = vpow.pop %v2129
    %v2131 = vadd.f32 %v2130, 1.0
    %v2132 = vrcp.pop %v2131
    %v2133 = vmul.f32 1.0, %v2132
    %v2134 = vmul.f32 %v2125, %v2133
    %v2135 = vadd.f32 %v1963, %v2134
    %v2136 = vsel %vm53, %v2044, 0
    %2138 = vmatprep.subr.mxu0 0.0
    %2139 = vmatpush1.msra.mxu0 %v34
    %2140 = vmatprep.subr.mxu0 0.0
    %2141 = vmatpush1.msra.mxu0 %v35
    %2142 = vmatprep.subr.mxu0 0.0
    %2143 = vmatpush1.msra.mxu0 %v36
    %2144 = vmatprep.subr.mxu0 0.0
    %2145 = vmatpush1.msra.mxu0 %v37
    %2146 = vmatprep.subr.mxu0 0.0
    %2147 = vmatpush1.msra.mxu0 0.0
    %2148 = vmatprep.subr.mxu0 0.0
    %2149 = vmatpush1.msra.mxu0 0.0
    %2150 = vmatprep.subr.mxu0 0.0
    %2151 = vmatpush1.msra.mxu0 0.0
    %2152 = vmatprep.subr.mxu0 0.0
    %2153 = vmatpush1.msra.mxu0 0.0
    %2154 = vmatprep.subr.mxu0 0.0
    %2155 = vmatpush1.msra.mxu0 0.0
    %2156 = vmatprep.subr.mxu0 0.0
    %2157 = vmatpush1.msra.mxu0 0.0
    %2158 = vmatprep.subr.mxu0 0.0
    %2159 = vmatpush1.msra.mxu0 0.0
    %2160 = vmatprep.subr.mxu0 0.0
    %2161 = vmatpush1.msra.mxu0 0.0
    %2162 = vmatprep.subr.mxu0 0.0
    %2163 = vmatpush1.msra.mxu0 0.0
    %2164 = vmatprep.subr.mxu0 0.0
    %2165 = vmatpush1.msra.mxu0 0.0
    %2166 = vmatprep.subr.mxu0 0.0
    %2167 = vmatpush1.msra.mxu0 0.0
    %2168 = vmatprep.subr.mxu0 0.0
    %2169 = vmatpush1.msra.mxu0 0.0
    %2170 = vmatprep.subr.mxu0 0.0
    %2171 = vmatpush1.msra.mxu0 0.0
    %2172 = vmatprep.subr.mxu0 0.0
    %2173 = vmatpush1.msra.mxu0 0.0
    %2174 = vmatprep.subr.mxu0 0.0
    %2175 = vmatpush1.msra.mxu0 0.0
    %2176 = vmatprep.subr.mxu0 0.0
    %2177 = vmatpush1.msra.mxu0 0.0
    %2178 = vmatprep.subr.mxu0 0.0
    %2179 = vmatpush1.msra.mxu0 0.0
    %2180 = vmatprep.subr.mxu0 0.0
    %2181 = vmatpush1.msra.mxu0 0.0
    %2182 = vmatprep.subr.mxu0 0.0
    %2183 = vmatpush1.msra.mxu0 0.0
    %2184 = vmatprep.subr.mxu0 0.0
    %2185 = vmatpush1.msra.mxu0 0.0
    %2186 = vmatprep.subr.mxu0 0.0
    %2187 = vmatpush1.msra.mxu0 0.0
    %2188 = vmatprep.subr.mxu0 0.0
    %2189 = vmatpush1.msra.mxu0 0.0
    %2190 = vmatprep.subr.mxu0 0.0
    %2191 = vmatpush1.msra.mxu0 0.0
    %2192 = vmatprep.subr.mxu0 0.0
    %2193 = vmatpush1.msra.mxu0 0.0
    %2194 = vmatprep.subr.mxu0 0.0
    %2195 = vmatpush1.msra.mxu0 0.0
    %2196 = vmatprep.subr.mxu0 0.0
    %2197 = vmatpush1.msra.mxu0 0.0
    %2198 = vmatprep.subr.mxu0 0.0
    %2199 = vmatpush1.msra.mxu0 0.0
    %2200 = vmatprep.subr.mxu0 0.0
    %2201 = vmatpush1.msra.mxu0 0.0
    %2202 = vmatprep.mubr.f32.mxu0 0.0
    %2203 = vmatmul.mubr.f32.gmra.mrb[0].mxu0 %v2136
    %v2204 = vpop.f32.mrb[0].mxu0
    %v2205 = vadd.f32 %v47, %v2204
    %v2206 = vpop.f32.mrb[0].mxu0
    %2207 = vdwg.mxu0
    %v2208 = vxor.u32 %v2205, 2147483648
    %v2209 = vmul.f32 %v2208, 1.442695
    %v2210 = vpow.pop %v2209
    %v2211 = vadd.f32 %v2210, 1.0
    %v2212 = vrcp.pop %v2211
    %v2213 = vmul.f32 1.0, %v2212
    %v2214 = vmul.f32 %v2205, %v2213
    %v2215 = vadd.f32 %v2044, %v2214
    %v2217 = vsel %vm53, %v2135, 0
    %2219 = vmatprep.subr.mxu0 0.0
    %2220 = vmatpush1.msra.mxu0 %v29
    %2221 = vmatprep.subr.mxu0 0.0
    %2222 = vmatpush1.msra.mxu0 %v30
    %2223 = vmatprep.subr.mxu0 0.0
    %2224 = vmatpush1.msra.mxu0 %v31
    %2225 = vmatprep.subr.mxu0 0.0
    %2226 = vmatpush1.msra.mxu0 %v32
    %2227 = vmatprep.subr.mxu0 0.0
    %2228 = vmatpush1.msra.mxu0 0.0
    %2229 = vmatprep.subr.mxu0 0.0
    %2230 = vmatpush1.msra.mxu0 0.0
    %2231 = vmatprep.subr.mxu0 0.0
    %2232 = vmatpush1.msra.mxu0 0.0
    %2233 = vmatprep.subr.mxu0 0.0
    %2234 = vmatpush1.msra.mxu0 0.0
    %2235 = vmatprep.subr.mxu0 0.0
    %2236 = vmatpush1.msra.mxu0 0.0
    %2237 = vmatprep.subr.mxu0 0.0
    %2238 = vmatpush1.msra.mxu0 0.0
    %2239 = vmatprep.subr.mxu0 0.0
    %2240 = vmatpush1.msra.mxu0 0.0
    %2241 = vmatprep.subr.mxu0 0.0
    %2242 = vmatpush1.msra.mxu0 0.0
    %2243 = vmatprep.subr.mxu0 0.0
    %2244 = vmatpush1.msra.mxu0 0.0
    %2245 = vmatprep.subr.mxu0 0.0
    %2246 = vmatpush1.msra.mxu0 0.0
    %2247 = vmatprep.subr.mxu0 0.0
    %2248 = vmatpush1.msra.mxu0 0.0
    %2249 = vmatprep.subr.mxu0 0.0
    %2250 = vmatpush1.msra.mxu0 0.0
    %2251 = vmatprep.subr.mxu0 0.0
    %2252 = vmatpush1.msra.mxu0 0.0
    %2253 = vmatprep.subr.mxu0 0.0
    %2254 = vmatpush1.msra.mxu0 0.0
    %2255 = vmatprep.subr.mxu0 0.0
    %2256 = vmatpush1.msra.mxu0 0.0
    %2257 = vmatprep.subr.mxu0 0.0
    %2258 = vmatpush1.msra.mxu0 0.0
    %2259 = vmatprep.subr.mxu0 0.0
    %2260 = vmatpush1.msra.mxu0 0.0
    %2261 = vmatprep.subr.mxu0 0.0
    %2262 = vmatpush1.msra.mxu0 0.0
    %2263 = vmatprep.subr.mxu0 0.0
    %2264 = vmatpush1.msra.mxu0 0.0
    %2265 = vmatprep.subr.mxu0 0.0
    %2266 = vmatpush1.msra.mxu0 0.0
    %2267 = vmatprep.subr.mxu0 0.0
    %2268 = vmatpush1.msra.mxu0 0.0
    %2269 = vmatprep.subr.mxu0 0.0
    %2270 = vmatpush1.msra.mxu0 0.0
    %2271 = vmatprep.subr.mxu0 0.0
    %2272 = vmatpush1.msra.mxu0 0.0
    %2273 = vmatprep.subr.mxu0 0.0
    %2274 = vmatpush1.msra.mxu0 0.0
    %2275 = vmatprep.subr.mxu0 0.0
    %2276 = vmatpush1.msra.mxu0 0.0
    %2277 = vmatprep.subr.mxu0 0.0
    %2278 = vmatpush1.msra.mxu0 0.0
    %2279 = vmatprep.subr.mxu0 0.0
    %2280 = vmatpush1.msra.mxu0 0.0
    %2281 = vmatprep.subr.mxu0 0.0
    %2282 = vmatpush1.msra.mxu0 0.0
    %2283 = vmatprep.mubr.f32.mxu0 0.0
    %2284 = vmatmul.mubr.f32.gmra.mrb[0].mxu0 %v2217
    %v2285 = vpop.f32.mrb[0].mxu0
    %v2286 = vadd.f32 %v45, %v2285
    %v2287 = vpop.f32.mrb[0].mxu0
    %2288 = vdwg.mxu0
    %v2289 = vxor.u32 %v2286, 2147483648
    %v2290 = vmul.f32 %v2289, 1.442695
    %v2291 = vpow.pop %v2290
    %v2292 = vadd.f32 %v2291, 1.0
    %v2293 = vrcp.pop %v2292
    %v2294 = vmul.f32 1.0, %v2293
    %v2295 = vmul.f32 %v2286, %v2294
    %v2296 = vadd.f32 %v2135, %v2295
    %v2298 = vsel %vm53, %v2215, 0
    %2300 = vmatprep.subr.mxu0 0.0
    %2301 = vmatpush1.msra.mxu0 %v39
    %2302 = vmatprep.subr.mxu0 0.0
    %2303 = vmatpush1.msra.mxu0 %v40
    %2304 = vmatprep.subr.mxu0 0.0
    %2305 = vmatpush1.msra.mxu0 %v41
    %2306 = vmatprep.subr.mxu0 0.0
    %2307 = vmatpush1.msra.mxu0 %v42
    %2308 = vmatprep.subr.mxu0 0.0
    %2309 = vmatpush1.msra.mxu0 0.0
    %2310 = vmatprep.subr.mxu0 0.0
    %2311 = vmatpush1.msra.mxu0 0.0
    %2312 = vmatprep.subr.mxu0 0.0
    %2313 = vmatpush1.msra.mxu0 0.0
    %2314 = vmatprep.subr.mxu0 0.0
    %2315 = vmatpush1.msra.mxu0 0.0
    %2316 = vmatprep.subr.mxu0 0.0
    %2317 = vmatpush1.msra.mxu0 0.0
    %2318 = vmatprep.subr.mxu0 0.0
    %2319 = vmatpush1.msra.mxu0 0.0
    %2320 = vmatprep.subr.mxu0 0.0
    %2321 = vmatpush1.msra.mxu0 0.0
    %2322 = vmatprep.subr.mxu0 0.0
    %2323 = vmatpush1.msra.mxu0 0.0
    %2324 = vmatprep.subr.mxu0 0.0
    %2325 = vmatpush1.msra.mxu0 0.0
    %2326 = vmatprep.subr.mxu0 0.0
    %2327 = vmatpush1.msra.mxu0 0.0
    %2328 = vmatprep.subr.mxu0 0.0
    %2329 = vmatpush1.msra.mxu0 0.0
    %2330 = vmatprep.subr.mxu0 0.0
    %2331 = vmatpush1.msra.mxu0 0.0
    %2332 = vmatprep.subr.mxu0 0.0
    %2333 = vmatpush1.msra.mxu0 0.0
    %2334 = vmatprep.subr.mxu0 0.0
    %2335 = vmatpush1.msra.mxu0 0.0
    %2336 = vmatprep.subr.mxu0 0.0
    %2337 = vmatpush1.msra.mxu0 0.0
    %2338 = vmatprep.subr.mxu0 0.0
    %2339 = vmatpush1.msra.mxu0 0.0
    %2340 = vmatprep.subr.mxu0 0.0
    %2341 = vmatpush1.msra.mxu0 0.0
    %2342 = vmatprep.subr.mxu0 0.0
    %2343 = vmatpush1.msra.mxu0 0.0
    %2344 = vmatprep.subr.mxu0 0.0
    %2345 = vmatpush1.msra.mxu0 0.0
    %2346 = vmatprep.subr.mxu0 0.0
    %2347 = vmatpush1.msra.mxu0 0.0
    %2348 = vmatprep.subr.mxu0 0.0
    %2349 = vmatpush1.msra.mxu0 0.0
    %2350 = vmatprep.subr.mxu0 0.0
    %2351 = vmatpush1.msra.mxu0 0.0
    %2352 = vmatprep.subr.mxu0 0.0
    %2353 = vmatpush1.msra.mxu0 0.0
    %2354 = vmatprep.subr.mxu0 0.0
    %2355 = vmatpush1.msra.mxu0 0.0
    %2356 = vmatprep.subr.mxu0 0.0
    %2357 = vmatpush1.msra.mxu0 0.0
    %2358 = vmatprep.subr.mxu0 0.0
    %2359 = vmatpush1.msra.mxu0 0.0
    %2360 = vmatprep.subr.mxu0 0.0
    %2361 = vmatpush1.msra.mxu0 0.0
    %2362 = vmatprep.subr.mxu0 0.0
    %2363 = vmatpush1.msra.mxu0 0.0
    %2364 = vmatprep.mubr.f32.mxu0 0.0
    %2365 = vmatmul.mubr.f32.gmra.mrb[0].mxu0 %v2298
    %v2366 = vpop.f32.mrb[0].mxu0
    %v2367 = vadd.f32 %v49, %v2366
    %v2368 = vpop.f32.mrb[0].mxu0
    %2369 = vdwg.mxu0
    %v2370 = vxor.u32 %v2367, 2147483648
    %v2371 = vmul.f32 %v2370, 1.442695
    %v2372 = vpow.pop %v2371
    %v2373 = vadd.f32 %v2372, 1.0
    %v2374 = vrcp.pop %v2373
    %v2375 = vmul.f32 1.0, %v2374
    %v2376 = vmul.f32 %v2367, %v2375
    %v2377 = vadd.f32 %v2215, %v2376
    %2378 = vst.msk [vmem:[#allocation2 + $0x6] sm:$0x1] %vm378, %v2296
    %v2380 = vlaneseq
    %v2381 = vshrl.u32 %v2380, 7
    %v2382 = vsub.s32 0, %v2381
    %v2383 = vrot.slane %v2377, %v2382
    %2384 = vrot.lane.b32.xlu0 %v2383, 32
    %v2385 = vpop.permute.xlu0 %2384
    %2387 = vst.msk [vmem:[#allocation2 + $0x6] sm:$0x1] %vm388, %v2385
    %v2389 = vsel %vm53, %v2296, 0
    %2391 = vmatprep.subr.mxu0 0.0
    %2392 = vmatpush1.msra.mxu0 %v24
    %2393 = vmatprep.subr.mxu0 0.0
    %2394 = vmatpush1.msra.mxu0 %v25
    %2395 = vmatprep.subr.mxu0 0.0
    %2396 = vmatpush1.msra.mxu0 %v26
    %2397 = vmatprep.subr.mxu0 0.0
    %2398 = vmatpush1.msra.mxu0 %v27
    %2399 = vmatprep.subr.mxu0 0.0
    %2400 = vmatpush1.msra.mxu0 0.0
    %2401 = vmatprep.subr.mxu0 0.0
    %2402 = vmatpush1.msra.mxu0 0.0
    %2403 = vmatprep.subr.mxu0 0.0
    %2404 = vmatpush1.msra.mxu0 0.0
    %2405 = vmatprep.subr.mxu0 0.0
    %2406 = vmatpush1.msra.mxu0 0.0
    %2407 = vmatprep.subr.mxu0 0.0
    %2408 = vmatpush1.msra.mxu0 0.0
    %2409 = vmatprep.subr.mxu0 0.0
    %2410 = vmatpush1.msra.mxu0 0.0
    %2411 = vmatprep.subr.mxu0 0.0
    %2412 = vmatpush1.msra.mxu0 0.0
    %2413 = vmatprep.subr.mxu0 0.0
    %2414 = vmatpush1.msra.mxu0 0.0
    %2415 = vmatprep.subr.mxu0 0.0
    %2416 = vmatpush1.msra.mxu0 0.0
    %2417 = vmatprep.subr.mxu0 0.0
    %2418 = vmatpush1.msra.mxu0 0.0
    %2419 = vmatprep.subr.mxu0 0.0
    %2420 = vmatpush1.msra.mxu0 0.0
    %2421 = vmatprep.subr.mxu0 0.0
    %2422 = vmatpush1.msra.mxu0 0.0
    %2423 = vmatprep.subr.mxu0 0.0
    %2424 = vmatpush1.msra.mxu0 0.0
    %2425 = vmatprep.subr.mxu0 0.0
    %2426 = vmatpush1.msra.mxu0 0.0
    %2427 = vmatprep.subr.mxu0 0.0
    %2428 = vmatpush1.msra.mxu0 0.0
    %2429 = vmatprep.subr.mxu0 0.0
    %2430 = vmatpush1.msra.mxu0 0.0
    %2431 = vmatprep.subr.mxu0 0.0
    %2432 = vmatpush1.msra.mxu0 0.0
    %2433 = vmatprep.subr.mxu0 0.0
    %2434 = vmatpush1.msra.mxu0 0.0
    %2435 = vmatprep.subr.mxu0 0.0
    %2436 = vmatpush1.msra.mxu0 0.0
    %2437 = vmatprep.subr.mxu0 0.0
    %2438 = vmatpush1.msra.mxu0 0.0
    %2439 = vmatprep.subr.mxu0 0.0
    %2440 = vmatpush1.msra.mxu0 0.0
    %2441 = vmatprep.subr.mxu0 0.0
    %2442 = vmatpush1.msra.mxu0 0.0
    %2443 = vmatprep.subr.mxu0 0.0
    %2444 = vmatpush1.msra.mxu0 0.0
    %2445 = vmatprep.subr.mxu0 0.0
    %2446 = vmatpush1.msra.mxu0 0.0
    %2447 = vmatprep.subr.mxu0 0.0
    %2448 = vmatpush1.msra.mxu0 0.0
    %2449 = vmatprep.subr.mxu0 0.0
    %2450 = vmatpush1.msra.mxu0 0.0
    %2451 = vmatprep.subr.mxu0 0.0
    %2452 = vmatpush1.msra.mxu0 0.0
    %2453 = vmatprep.subr.mxu0 0.0
    %2454 = vmatpush1.msra.mxu0 0.0
    %2455 = vmatprep.mubr.f32.mxu0 0.0
    %2456 = vmatmul.mubr.f32.gmra.mrb[0].mxu0 %v2389
    %v2457 = vpop.f32.mrb[0].mxu0
    %v2458 = vadd.f32 %v43, %v2457
    %v2459 = vpop.f32.mrb[0].mxu0
    %2460 = vdwg.mxu0
    %v2461 = vxor.u32 %v2458, 2147483648
    %v2462 = vmul.f32 %v2461, 1.442695
    %v2463 = vpow.pop %v2462
    %v2464 = vadd.f32 %v2463, 1.0
    %v2465 = vrcp.pop %v2464
    %v2466 = vmul.f32 1.0, %v2465
    %v2467 = vmul.f32 %v2458, %v2466
    %v2468 = vadd.f32 %v2296, %v2467
    %v2469 = vsel %vm53, %v2377, 0
    %2471 = vmatprep.subr.mxu0 0.0
    %2472 = vmatpush1.msra.mxu0 %v34
    %2473 = vmatprep.subr.mxu0 0.0
    %2474 = vmatpush1.msra.mxu0 %v35
    %2475 = vmatprep.subr.mxu0 0.0
    %2476 = vmatpush1.msra.mxu0 %v36
    %2477 = vmatprep.subr.mxu0 0.0
    %2478 = vmatpush1.msra.mxu0 %v37
    %2479 = vmatprep.subr.mxu0 0.0
    %2480 = vmatpush1.msra.mxu0 0.0
    %2481 = vmatprep.subr.mxu0 0.0
    %2482 = vmatpush1.msra.mxu0 0.0
    %2483 = vmatprep.subr.mxu0 0.0
    %2484 = vmatpush1.msra.mxu0 0.0
    %2485 = vmatprep.subr.mxu0 0.0
    %2486 = vmatpush1.msra.mxu0 0.0
    %2487 = vmatprep.subr.mxu0 0.0
    %2488 = vmatpush1.msra.mxu0 0.0
    %2489 = vmatprep.subr.mxu0 0.0
    %2490 = vmatpush1.msra.mxu0 0.0
    %2491 = vmatprep.subr.mxu0 0.0
    %2492 = vmatpush1.msra.mxu0 0.0
    %2493 = vmatprep.subr.mxu0 0.0
    %2494 = vmatpush1.msra.mxu0 0.0
    %2495 = vmatprep.subr.mxu0 0.0
    %2496 = vmatpush1.msra.mxu0 0.0
    %2497 = vmatprep.subr.mxu0 0.0
    %2498 = vmatpush1.msra.mxu0 0.0
    %2499 = vmatprep.subr.mxu0 0.0
    %2500 = vmatpush1.msra.mxu0 0.0
    %2501 = vmatprep.subr.mxu0 0.0
    %2502 = vmatpush1.msra.mxu0 0.0
    %2503 = vmatprep.subr.mxu0 0.0
    %2504 = vmatpush1.msra.mxu0 0.0
    %2505 = vmatprep.subr.mxu0 0.0
    %2506 = vmatpush1.msra.mxu0 0.0
    %2507 = vmatprep.subr.mxu0 0.0
    %2508 = vmatpush1.msra.mxu0 0.0
    %2509 = vmatprep.subr.mxu0 0.0
    %2510 = vmatpush1.msra.mxu0 0.0
    %2511 = vmatprep.subr.mxu0 0.0
    %2512 = vmatpush1.msra.mxu0 0.0
    %2513 = vmatprep.subr.mxu0 0.0
    %2514 = vmatpush1.msra.mxu0 0.0
    %2515 = vmatprep.subr.mxu0 0.0
    %2516 = vmatpush1.msra.mxu0 0.0
    %2517 = vmatprep.subr.mxu0 0.0
    %2518 = vmatpush1.msra.mxu0 0.0
    %2519 = vmatprep.subr.mxu0 0.0
    %2520 = vmatpush1.msra.mxu0 0.0
    %2521 = vmatprep.subr.mxu0 0.0
    %2522 = vmatpush1.msra.mxu0 0.0
    %2523 = vmatprep.subr.mxu0 0.0
    %2524 = vmatpush1.msra.mxu0 0.0
    %2525 = vmatprep.subr.mxu0 0.0
    %2526 = vmatpush1.msra.mxu0 0.0
    %2527 = vmatprep.subr.mxu0 0.0
    %2528 = vmatpush1.msra.mxu0 0.0
    %2529 = vmatprep.subr.mxu0 0.0
    %2530 = vmatpush1.msra.mxu0 0.0
    %2531 = vmatprep.subr.mxu0 0.0
    %2532 = vmatpush1.msra.mxu0 0.0
    %2533 = vmatprep.subr.mxu0 0.0
    %2534 = vmatpush1.msra.mxu0 0.0
    %2535 = vmatprep.mubr.f32.mxu0 0.0
    %2536 = vmatmul.mubr.f32.gmra.mrb[0].mxu0 %v2469
    %v2537 = vpop.f32.mrb[0].mxu0
    %v2538 = vadd.f32 %v47, %v2537
    %v2539 = vpop.f32.mrb[0].mxu0
    %2540 = vdwg.mxu0
    %v2541 = vxor.u32 %v2538, 2147483648
    %v2542 = vmul.f32 %v2541, 1.442695
    %v2543 = vpow.pop %v2542
    %v2544 = vadd.f32 %v2543, 1.0
    %v2545 = vrcp.pop %v2544
    %v2546 = vmul.f32 1.0, %v2545
    %v2547 = vmul.f32 %v2538, %v2546
    %v2548 = vadd.f32 %v2377, %v2547
    %v2550 = vsel %vm53, %v2468, 0
    %2552 = vmatprep.subr.mxu0 0.0
    %2553 = vmatpush1.msra.mxu0 %v29
    %2554 = vmatprep.subr.mxu0 0.0
    %2555 = vmatpush1.msra.mxu0 %v30
    %2556 = vmatprep.subr.mxu0 0.0
    %2557 = vmatpush1.msra.mxu0 %v31
    %2558 = vmatprep.subr.mxu0 0.0
    %2559 = vmatpush1.msra.mxu0 %v32
    %2560 = vmatprep.subr.mxu0 0.0
    %2561 = vmatpush1.msra.mxu0 0.0
    %2562 = vmatprep.subr.mxu0 0.0
    %2563 = vmatpush1.msra.mxu0 0.0
    %2564 = vmatprep.subr.mxu0 0.0
    %2565 = vmatpush1.msra.mxu0 0.0
    %2566 = vmatprep.subr.mxu0 0.0
    %2567 = vmatpush1.msra.mxu0 0.0
    %2568 = vmatprep.subr.mxu0 0.0
    %2569 = vmatpush1.msra.mxu0 0.0
    %2570 = vmatprep.subr.mxu0 0.0
    %2571 = vmatpush1.msra.mxu0 0.0
    %2572 = vmatprep.subr.mxu0 0.0
    %2573 = vmatpush1.msra.mxu0 0.0
    %2574 = vmatprep.subr.mxu0 0.0
    %2575 = vmatpush1.msra.mxu0 0.0
    %2576 = vmatprep.subr.mxu0 0.0
    %2577 = vmatpush1.msra.mxu0 0.0
    %2578 = vmatprep.subr.mxu0 0.0
    %2579 = vmatpush1.msra.mxu0 0.0
    %2580 = vmatprep.subr.mxu0 0.0
    %2581 = vmatpush1.msra.mxu0 0.0
    %2582 = vmatprep.subr.mxu0 0.0
    %2583 = vmatpush1.msra.mxu0 0.0
    %2584 = vmatprep.subr.mxu0 0.0
    %2585 = vmatpush1.msra.mxu0 0.0
    %2586 = vmatprep.subr.mxu0 0.0
    %2587 = vmatpush1.msra.mxu0 0.0
    %2588 = vmatprep.subr.mxu0 0.0
    %2589 = vmatpush1.msra.mxu0 0.0
    %2590 = vmatprep.subr.mxu0 0.0
    %2591 = vmatpush1.msra.mxu0 0.0
    %2592 = vmatprep.subr.mxu0 0.0
    %2593 = vmatpush1.msra.mxu0 0.0
    %2594 = vmatprep.subr.mxu0 0.0
    %2595 = vmatpush1.msra.mxu0 0.0
    %2596 = vmatprep.subr.mxu0 0.0
    %2597 = vmatpush1.msra.mxu0 0.0
    %2598 = vmatprep.subr.mxu0 0.0
    %2599 = vmatpush1.msra.mxu0 0.0
    %2600 = vmatprep.subr.mxu0 0.0
    %2601 = vmatpush1.msra.mxu0 0.0
    %2602 = vmatprep.subr.mxu0 0.0
    %2603 = vmatpush1.msra.mxu0 0.0
    %2604 = vmatprep.subr.mxu0 0.0
    %2605 = vmatpush1.msra.mxu0 0.0
    %2606 = vmatprep.subr.mxu0 0.0
    %2607 = vmatpush1.msra.mxu0 0.0
    %2608 = vmatprep.subr.mxu0 0.0
    %2609 = vmatpush1.msra.mxu0 0.0
    %2610 = vmatprep.subr.mxu0 0.0
    %2611 = vmatpush1.msra.mxu0 0.0
    %2612 = vmatprep.subr.mxu0 0.0
    %2613 = vmatpush1.msra.mxu0 0.0
    %2614 = vmatprep.subr.mxu0 0.0
    %2615 = vmatpush1.msra.mxu0 0.0
    %2616 = vmatprep.mubr.f32.mxu0 0.0
    %2617 = vmatmul.mubr.f32.gmra.mrb[0].mxu0 %v2550
    %v2618 = vpop.f32.mrb[0].mxu0
    %v2619 = vadd.f32 %v45, %v2618
    %v2620 = vpop.f32.mrb[0].mxu0
    %2621 = vdwg.mxu0
    %v2622 = vxor.u32 %v2619, 2147483648
    %v2623 = vmul.f32 %v2622, 1.442695
    %v2624 = vpow.pop %v2623
    %v2625 = vadd.f32 %v2624, 1.0
    %v2626 = vrcp.pop %v2625
    %v2627 = vmul.f32 1.0, %v2626
    %v2628 = vmul.f32 %v2619, %v2627
    %v2629 = vadd.f32 %v2468, %v2628
    %v2631 = vsel %vm53, %v2548, 0
    %2633 = vmatprep.subr.mxu0 0.0
    %2634 = vmatpush1.msra.mxu0 %v39
    %2635 = vmatprep.subr.mxu0 0.0
    %2636 = vmatpush1.msra.mxu0 %v40
    %2637 = vmatprep.subr.mxu0 0.0
    %2638 = vmatpush1.msra.mxu0 %v41
    %2639 = vmatprep.subr.mxu0 0.0
    %2640 = vmatpush1.msra.mxu0 %v42
    %2641 = vmatprep.subr.mxu0 0.0
    %2642 = vmatpush1.msra.mxu0 0.0
    %2643 = vmatprep.subr.mxu0 0.0
    %2644 = vmatpush1.msra.mxu0 0.0
    %2645 = vmatprep.subr.mxu0 0.0
    %2646 = vmatpush1.msra.mxu0 0.0
    %2647 = vmatprep.subr.mxu0 0.0
    %2648 = vmatpush1.msra.mxu0 0.0
    %2649 = vmatprep.subr.mxu0 0.0
    %2650 = vmatpush1.msra.mxu0 0.0
    %2651 = vmatprep.subr.mxu0 0.0
    %2652 = vmatpush1.msra.mxu0 0.0
    %2653 = vmatprep.subr.mxu0 0.0
    %2654 = vmatpush1.msra.mxu0 0.0
    %2655 = vmatprep.subr.mxu0 0.0
    %2656 = vmatpush1.msra.mxu0 0.0
    %2657 = vmatprep.subr.mxu0 0.0
    %2658 = vmatpush1.msra.mxu0 0.0
    %2659 = vmatprep.subr.mxu0 0.0
    %2660 = vmatpush1.msra.mxu0 0.0
    %2661 = vmatprep.subr.mxu0 0.0
    %2662 = vmatpush1.msra.mxu0 0.0
    %2663 = vmatprep.subr.mxu0 0.0
    %2664 = vmatpush1.msra.mxu0 0.0
    %2665 = vmatprep.subr.mxu0 0.0
    %2666 = vmatpush1.msra.mxu0 0.0
    %2667 = vmatprep.subr.mxu0 0.0
    %2668 = vmatpush1.msra.mxu0 0.0
    %2669 = vmatprep.subr.mxu0 0.0
    %2670 = vmatpush1.msra.mxu0 0.0
    %2671 = vmatprep.subr.mxu0 0.0
    %2672 = vmatpush1.msra.mxu0 0.0
    %2673 = vmatprep.subr.mxu0 0.0
    %2674 = vmatpush1.msra.mxu0 0.0
    %2675 = vmatprep.subr.mxu0 0.0
    %2676 = vmatpush1.msra.mxu0 0.0
    %2677 = vmatprep.subr.mxu0 0.0
    %2678 = vmatpush1.msra.mxu0 0.0
    %2679 = vmatprep.subr.mxu0 0.0
    %2680 = vmatpush1.msra.mxu0 0.0
    %2681 = vmatprep.subr.mxu0 0.0
    %2682 = vmatpush1.msra.mxu0 0.0
    %2683 = vmatprep.subr.mxu0 0.0
    %2684 = vmatpush1.msra.mxu0 0.0
    %2685 = vmatprep.subr.mxu0 0.0
    %2686 = vmatpush1.msra.mxu0 0.0
    %2687 = vmatprep.subr.mxu0 0.0
    %2688 = vmatpush1.msra.mxu0 0.0
    %2689 = vmatprep.subr.mxu0 0.0
    %2690 = vmatpush1.msra.mxu0 0.0
    %2691 = vmatprep.subr.mxu0 0.0
    %2692 = vmatpush1.msra.mxu0 0.0
    %2693 = vmatprep.subr.mxu0 0.0
    %2694 = vmatpush1.msra.mxu0 0.0
    %2695 = vmatprep.subr.mxu0 0.0
    %2696 = vmatpush1.msra.mxu0 0.0
    %2697 = vmatprep.mubr.f32.mxu0 0.0
    %2698 = vmatmul.mubr.f32.gmra.mrb[0].mxu0 %v2631
    %v2699 = vpop.f32.mrb[0].mxu0
    %v2700 = vadd.f32 %v49, %v2699
    %v2701 = vpop.f32.mrb[0].mxu0
    %2702 = vdwg.mxu0
    %v2703 = vxor.u32 %v2700, 2147483648
    %v2704 = vmul.f32 %v2703, 1.442695
    %v2705 = vpow.pop %v2704
    %v2706 = vadd.f32 %v2705, 1.0
    %v2707 = vrcp.pop %v2706
    %v2708 = vmul.f32 1.0, %v2707
    %v2709 = vmul.f32 %v2700, %v2708
    %v2710 = vadd.f32 %v2548, %v2709
    %2711 = vst.msk [vmem:[#allocation2 + $0x7] sm:$0x1] %vm378, %v2629
    %v2713 = vlaneseq
    %v2714 = vshrl.u32 %v2713, 7
    %v2715 = vsub.s32 0, %v2714
    %v2716 = vrot.slane %v2710, %v2715
    %2717 = vrot.lane.b32.xlu0 %v2716, 32
    %v2718 = vpop.permute.xlu0 %2717
    %2720 = vst.msk [vmem:[#allocation2 + $0x7] sm:$0x1] %vm388, %v2718
    %v2722 = vsel %vm53, %v2629, 0
    %2724 = vmatprep.subr.mxu0 0.0
    %2725 = vmatpush1.msra.mxu0 %v24
    %2726 = vmatprep.subr.mxu0 0.0
    %2727 = vmatpush1.msra.mxu0 %v25
    %2728 = vmatprep.subr.mxu0 0.0
    %2729 = vmatpush1.msra.mxu0 %v26
    %2730 = vmatprep.subr.mxu0 0.0
    %2731 = vmatpush1.msra.mxu0 %v27
    %2732 = vmatprep.subr.mxu0 0.0
    %2733 = vmatpush1.msra.mxu0 0.0
    %2734 = vmatprep.subr.mxu0 0.0
    %2735 = vmatpush1.msra.mxu0 0.0
    %2736 = vmatprep.subr.mxu0 0.0
    %2737 = vmatpush1.msra.mxu0 0.0
    %2738 = vmatprep.subr.mxu0 0.0
    %2739 = vmatpush1.msra.mxu0 0.0
    %2740 = vmatprep.subr.mxu0 0.0
    %2741 = vmatpush1.msra.mxu0 0.0
    %2742 = vmatprep.subr.mxu0 0.0
    %2743 = vmatpush1.msra.mxu0 0.0
    %2744 = vmatprep.subr.mxu0 0.0
    %2745 = vmatpush1.msra.mxu0 0.0
    %2746 = vmatprep.subr.mxu0 0.0
    %2747 = vmatpush1.msra.mxu0 0.0
    %2748 = vmatprep.subr.mxu0 0.0
    %2749 = vmatpush1.msra.mxu0 0.0
    %2750 = vmatprep.subr.mxu0 0.0
    %2751 = vmatpush1.msra.mxu0 0.0
    %2752 = vmatprep.subr.mxu0 0.0
    %2753 = vmatpush1.msra.mxu0 0.0
    %2754 = vmatprep.subr.mxu0 0.0
    %2755 = vmatpush1.msra.mxu0 0.0
    %2756 = vmatprep.subr.mxu0 0.0
    %2757 = vmatpush1.msra.mxu0 0.0
    %2758 = vmatprep.subr.mxu0 0.0
    %2759 = vmatpush1.msra.mxu0 0.0
    %2760 = vmatprep.subr.mxu0 0.0
    %2761 = vmatpush1.msra.mxu0 0.0
    %2762 = vmatprep.subr.mxu0 0.0
    %2763 = vmatpush1.msra.mxu0 0.0
    %2764 = vmatprep.subr.mxu0 0.0
    %2765 = vmatpush1.msra.mxu0 0.0
    %2766 = vmatprep.subr.mxu0 0.0
    %2767 = vmatpush1.msra.mxu0 0.0
    %2768 = vmatprep.subr.mxu0 0.0
    %2769 = vmatpush1.msra.mxu0 0.0
    %2770 = vmatprep.subr.mxu0 0.0
    %2771 = vmatpush1.msra.mxu0 0.0
    %2772 = vmatprep.subr.mxu0 0.0
    %2773 = vmatpush1.msra.mxu0 0.0
    %2774 = vmatprep.subr.mxu0 0.0
    %2775 = vmatpush1.msra.mxu0 0.0
    %2776 = vmatprep.subr.mxu0 0.0
    %2777 = vmatpush1.msra.mxu0 0.0
    %2778 = vmatprep.subr.mxu0 0.0
    %2779 = vmatpush1.msra.mxu0 0.0
    %2780 = vmatprep.subr.mxu0 0.0
    %2781 = vmatpush1.msra.mxu0 0.0
    %2782 = vmatprep.subr.mxu0 0.0
    %2783 = vmatpush1.msra.mxu0 0.0
    %2784 = vmatprep.subr.mxu0 0.0
    %2785 = vmatpush1.msra.mxu0 0.0
    %2786 = vmatprep.subr.mxu0 0.0
    %2787 = vmatpush1.msra.mxu0 0.0
    %2788 = vmatprep.mubr.f32.mxu0 0.0
    %2789 = vmatmul.mubr.f32.gmra.mrb[0].mxu0 %v2722
    %v2790 = vpop.f32.mrb[0].mxu0
    %v2791 = vadd.f32 %v43, %v2790
    %v2792 = vpop.f32.mrb[0].mxu0
    %2793 = vdwg.mxu0
    %v2794 = vxor.u32 %v2791, 2147483648
    %v2795 = vmul.f32 %v2794, 1.442695
    %v2796 = vpow.pop %v2795
    %v2797 = vadd.f32 %v2796, 1.0
    %v2798 = vrcp.pop %v2797
    %v2799 = vmul.f32 1.0, %v2798
    %v2800 = vmul.f32 %v2791, %v2799
    %v2801 = vadd.f32 %v2629, %v2800
    %v2802 = vsel %vm53, %v2710, 0
    %2804 = vmatprep.subr.mxu0 0.0
    %2805 = vmatpush1.msra.mxu0 %v34
    %2806 = vmatprep.subr.mxu0 0.0
    %2807 = vmatpush1.msra.mxu0 %v35
    %2808 = vmatprep.subr.mxu0 0.0
    %2809 = vmatpush1.msra.mxu0 %v36
    %2810 = vmatprep.subr.mxu0 0.0
    %2811 = vmatpush1.msra.mxu0 %v37
    %2812 = vmatprep.subr.mxu0 0.0
    %2813 = vmatpush1.msra.mxu0 0.0
    %2814 = vmatprep.subr.mxu0 0.0
    %2815 = vmatpush1.msra.mxu0 0.0
    %2816 = vmatprep.subr.mxu0 0.0
    %2817 = vmatpush1.msra.mxu0 0.0
    %2818 = vmatprep.subr.mxu0 0.0
    %2819 = vmatpush1.msra.mxu0 0.0
    %2820 = vmatprep.subr.mxu0 0.0
    %2821 = vmatpush1.msra.mxu0 0.0
    %2822 = vmatprep.subr.mxu0 0.0
    %2823 = vmatpush1.msra.mxu0 0.0
    %2824 = vmatprep.subr.mxu0 0.0
    %2825 = vmatpush1.msra.mxu0 0.0
    %2826 = vmatprep.subr.mxu0 0.0
    %2827 = vmatpush1.msra.mxu0 0.0
    %2828 = vmatprep.subr.mxu0 0.0
    %2829 = vmatpush1.msra.mxu0 0.0
    %2830 = vmatprep.subr.mxu0 0.0
    %2831 = vmatpush1.msra.mxu0 0.0
    %2832 = vmatprep.subr.mxu0 0.0
    %2833 = vmatpush1.msra.mxu0 0.0
    %2834 = vmatprep.subr.mxu0 0.0
    %2835 = vmatpush1.msra.mxu0 0.0
    %2836 = vmatprep.subr.mxu0 0.0
    %2837 = vmatpush1.msra.mxu0 0.0
    %2838 = vmatprep.subr.mxu0 0.0
    %2839 = vmatpush1.msra.mxu0 0.0
    %2840 = vmatprep.subr.mxu0 0.0
    %2841 = vmatpush1.msra.mxu0 0.0
    %2842 = vmatprep.subr.mxu0 0.0
    %2843 = vmatpush1.msra.mxu0 0.0
    %2844 = vmatprep.subr.mxu0 0.0
    %2845 = vmatpush1.msra.mxu0 0.0
    %2846 = vmatprep.subr.mxu0 0.0
    %2847 = vmatpush1.msra.mxu0 0.0
    %2848 = vmatprep.subr.mxu0 0.0
    %2849 = vmatpush1.msra.mxu0 0.0
    %2850 = vmatprep.subr.mxu0 0.0
    %2851 = vmatpush1.msra.mxu0 0.0
    %2852 = vmatprep.subr.mxu0 0.0
    %2853 = vmatpush1.msra.mxu0 0.0
    %2854 = vmatprep.subr.mxu0 0.0
    %2855 = vmatpush1.msra.mxu0 0.0
    %2856 = vmatprep.subr.mxu0 0.0
    %2857 = vmatpush1.msra.mxu0 0.0
    %2858 = vmatprep.subr.mxu0 0.0
    %2859 = vmatpush1.msra.mxu0 0.0
    %2860 = vmatprep.subr.mxu0 0.0
    %2861 = vmatpush1.msra.mxu0 0.0
    %2862 = vmatprep.subr.mxu0 0.0
    %2863 = vmatpush1.msra.mxu0 0.0
    %2864 = vmatprep.subr.mxu0 0.0
    %2865 = vmatpush1.msra.mxu0 0.0
    %2866 = vmatprep.subr.mxu0 0.0
    %2867 = vmatpush1.msra.mxu0 0.0
    %2868 = vmatprep.mubr.f32.mxu0 0.0
    %2869 = vmatmul.mubr.f32.gmra.mrb[0].mxu0 %v2802
    %v2870 = vpop.f32.mrb[0].mxu0
    %v2871 = vadd.f32 %v47, %v2870
    %v2872 = vpop.f32.mrb[0].mxu0
    %2873 = vdwg.mxu0
    %v2874 = vxor.u32 %v2871, 2147483648
    %v2875 = vmul.f32 %v2874, 1.442695
    %v2876 = vpow.pop %v2875
    %v2877 = vadd.f32 %v2876, 1.0
    %v2878 = vrcp.pop %v2877
    %v2879 = vmul.f32 1.0, %v2878
    %v2880 = vmul.f32 %v2871, %v2879
    %v2881 = vadd.f32 %v2710, %v2880
    %v2883 = vsel %vm53, %v2801, 0
    %2885 = vmatprep.subr.mxu0 0.0
    %2886 = vmatpush1.msra.mxu0 %v29
    %2887 = vmatprep.subr.mxu0 0.0
    %2888 = vmatpush1.msra.mxu0 %v30
    %2889 = vmatprep.subr.mxu0 0.0
    %2890 = vmatpush1.msra.mxu0 %v31
    %2891 = vmatprep.subr.mxu0 0.0
    %2892 = vmatpush1.msra.mxu0 %v32
    %2893 = vmatprep.subr.mxu0 0.0
    %2894 = vmatpush1.msra.mxu0 0.0
    %2895 = vmatprep.subr.mxu0 0.0
    %2896 = vmatpush1.msra.mxu0 0.0
    %2897 = vmatprep.subr.mxu0 0.0
    %2898 = vmatpush1.msra.mxu0 0.0
    %2899 = vmatprep.subr.mxu0 0.0
    %2900 = vmatpush1.msra.mxu0 0.0
    %2901 = vmatprep.subr.mxu0 0.0
    %2902 = vmatpush1.msra.mxu0 0.0
    %2903 = vmatprep.subr.mxu0 0.0
    %2904 = vmatpush1.msra.mxu0 0.0
    %2905 = vmatprep.subr.mxu0 0.0
    %2906 = vmatpush1.msra.mxu0 0.0
    %2907 = vmatprep.subr.mxu0 0.0
    %2908 = vmatpush1.msra.mxu0 0.0
    %2909 = vmatprep.subr.mxu0 0.0
    %2910 = vmatpush1.msra.mxu0 0.0
    %2911 = vmatprep.subr.mxu0 0.0
    %2912 = vmatpush1.msra.mxu0 0.0
    %2913 = vmatprep.subr.mxu0 0.0
    %2914 = vmatpush1.msra.mxu0 0.0
    %2915 = vmatprep.subr.mxu0 0.0
    %2916 = vmatpush1.msra.mxu0 0.0
    %2917 = vmatprep.subr.mxu0 0.0
    %2918 = vmatpush1.msra.mxu0 0.0
    %2919 = vmatprep.subr.mxu0 0.0
    %2920 = vmatpush1.msra.mxu0 0.0
    %2921 = vmatprep.subr.mxu0 0.0
    %2922 = vmatpush1.msra.mxu0 0.0
    %2923 = vmatprep.subr.mxu0 0.0
    %2924 = vmatpush1.msra.mxu0 0.0
    %2925 = vmatprep.subr.mxu0 0.0
    %2926 = vmatpush1.msra.mxu0 0.0
    %2927 = vmatprep.subr.mxu0 0.0
    %2928 = vmatpush1.msra.mxu0 0.0
    %2929 = vmatprep.subr.mxu0 0.0
    %2930 = vmatpush1.msra.mxu0 0.0
    %2931 = vmatprep.subr.mxu0 0.0
    %2932 = vmatpush1.msra.mxu0 0.0
    %2933 = vmatprep.subr.mxu0 0.0
    %2934 = vmatpush1.msra.mxu0 0.0
    %2935 = vmatprep.subr.mxu0 0.0
    %2936 = vmatpush1.msra.mxu0 0.0
    %2937 = vmatprep.subr.mxu0 0.0
    %2938 = vmatpush1.msra.mxu0 0.0
    %2939 = vmatprep.subr.mxu0 0.0
    %2940 = vmatpush1.msra.mxu0 0.0
    %2941 = vmatprep.subr.mxu0 0.0
    %2942 = vmatpush1.msra.mxu0 0.0
    %2943 = vmatprep.subr.mxu0 0.0
    %2944 = vmatpush1.msra.mxu0 0.0
    %2945 = vmatprep.subr.mxu0 0.0
    %2946 = vmatpush1.msra.mxu0 0.0
    %2947 = vmatprep.subr.mxu0 0.0
    %2948 = vmatpush1.msra.mxu0 0.0
    %2949 = vmatprep.mubr.f32.mxu0 0.0
    %2950 = vmatmul.mubr.f32.gmra.mrb[0].mxu0 %v2883
    %v2951 = vpop.f32.mrb[0].mxu0
    %v2952 = vadd.f32 %v45, %v2951
    %v2953 = vpop.f32.mrb[0].mxu0
    %2954 = vdwg.mxu0
    %v2955 = vxor.u32 %v2952, 2147483648
    %v2956 = vmul.f32 %v2955, 1.442695
    %v2957 = vpow.pop %v2956
    %v2958 = vadd.f32 %v2957, 1.0
    %v2959 = vrcp.pop %v2958
    %v2960 = vmul.f32 1.0, %v2959
    %v2961 = vmul.f32 %v2952, %v2960
    %v2962 = vadd.f32 %v2801, %v2961
    %v2964 = vsel %vm53, %v2881, 0
    %2966 = vmatprep.subr.mxu0 0.0
    %2967 = vmatpush1.msra.mxu0 %v39
    %2968 = vmatprep.subr.mxu0 0.0
    %2969 = vmatpush1.msra.mxu0 %v40
    %2970 = vmatprep.subr.mxu0 0.0
    %2971 = vmatpush1.msra.mxu0 %v41
    %2972 = vmatprep.subr.mxu0 0.0
    %2973 = vmatpush1.msra.mxu0 %v42
    %2974 = vmatprep.subr.mxu0 0.0
    %2975 = vmatpush1.msra.mxu0 0.0
    %2976 = vmatprep.subr.mxu0 0.0
    %2977 = vmatpush1.msra.mxu0 0.0
    %2978 = vmatprep.subr.mxu0 0.0
    %2979 = vmatpush1.msra.mxu0 0.0
    %2980 = vmatprep.subr.mxu0 0.0
    %2981 = vmatpush1.msra.mxu0 0.0
    %2982 = vmatprep.subr.mxu0 0.0
    %2983 = vmatpush1.msra.mxu0 0.0
    %2984 = vmatprep.subr.mxu0 0.0
    %2985 = vmatpush1.msra.mxu0 0.0
    %2986 = vmatprep.subr.mxu0 0.0
    %2987 = vmatpush1.msra.mxu0 0.0
    %2988 = vmatprep.subr.mxu0 0.0
    %2989 = vmatpush1.msra.mxu0 0.0
    %2990 = vmatprep.subr.mxu0 0.0
    %2991 = vmatpush1.msra.mxu0 0.0
    %2992 = vmatprep.subr.mxu0 0.0
    %2993 = vmatpush1.msra.mxu0 0.0
    %2994 = vmatprep.subr.mxu0 0.0
    %2995 = vmatpush1.msra.mxu0 0.0
    %2996 = vmatprep.subr.mxu0 0.0
    %2997 = vmatpush1.msra.mxu0 0.0
    %2998 = vmatprep.subr.mxu0 0.0
    %2999 = vmatpush1.msra.mxu0 0.0
    %3000 = vmatprep.subr.mxu0 0.0
    %3001 = vmatpush1.msra.mxu0 0.0
    %3002 = vmatprep.subr.mxu0 0.0
    %3003 = vmatpush1.msra.mxu0 0.0
    %3004 = vmatprep.subr.mxu0 0.0
    %3005 = vmatpush1.msra.mxu0 0.0
    %3006 = vmatprep.subr.mxu0 0.0
    %3007 = vmatpush1.msra.mxu0 0.0
    %3008 = vmatprep.subr.mxu0 0.0
    %3009 = vmatpush1.msra.mxu0 0.0
    %3010 = vmatprep.subr.mxu0 0.0
    %3011 = vmatpush1.msra.mxu0 0.0
    %3012 = vmatprep.subr.mxu0 0.0
    %3013 = vmatpush1.msra.mxu0 0.0
    %3014 = vmatprep.subr.mxu0 0.0
    %3015 = vmatpush1.msra.mxu0 0.0
    %3016 = vmatprep.subr.mxu0 0.0
    %3017 = vmatpush1.msra.mxu0 0.0
    %3018 = vmatprep.subr.mxu0 0.0
    %3019 = vmatpush1.msra.mxu0 0.0
    %3020 = vmatprep.subr.mxu0 0.0
    %3021 = vmatpush1.msra.mxu0 0.0
    %3022 = vmatprep.subr.mxu0 0.0
    %3023 = vmatpush1.msra.mxu0 0.0
    %3024 = vmatprep.subr.mxu0 0.0
    %3025 = vmatpush1.msra.mxu0 0.0
    %3026 = vmatprep.subr.mxu0 0.0
    %3027 = vmatpush1.msra.mxu0 0.0
    %3028 = vmatprep.subr.mxu0 0.0
    %3029 = vmatpush1.msra.mxu0 0.0
    %3030 = vmatprep.mubr.f32.mxu0 0.0
    %3031 = vmatmul.mubr.f32.gmra.mrb[0].mxu0 %v2964
    %v3032 = vpop.f32.mrb[0].mxu0
    %v3033 = vadd.f32 %v49, %v3032
    %v3034 = vpop.f32.mrb[0].mxu0
    %3035 = vdwg.mxu0
    %v3036 = vxor.u32 %v3033, 2147483648
    %v3037 = vmul.f32 %v3036, 1.442695
    %v3038 = vpow.pop %v3037
    %v3039 = vadd.f32 %v3038, 1.0
    %v3040 = vrcp.pop %v3039
    %v3041 = vmul.f32 1.0, %v3040
    %v3042 = vmul.f32 %v3033, %v3041
    %v3043 = vadd.f32 %v2881, %v3042
    %3044 = vst.msk [vmem:[#allocation2 + $0x8] sm:$0x1] %vm378, %v2962
    %v3046 = vlaneseq
    %v3047 = vshrl.u32 %v3046, 7
    %v3048 = vsub.s32 0, %v3047
    %v3049 = vrot.slane %v3043, %v3048
    %3050 = vrot.lane.b32.xlu0 %v3049, 32
    %v3051 = vpop.permute.xlu0 %3050
    %3053 = vst.msk [vmem:[#allocation2 + $0x8] sm:$0x1] %vm388, %v3051
    %v3055 = vsel %vm53, %v2962, 0
    %3057 = vmatprep.subr.mxu0 0.0
    %3058 = vmatpush1.msra.mxu0 %v24
    %3059 = vmatprep.subr.mxu0 0.0
    %3060 = vmatpush1.msra.mxu0 %v25
    %3061 = vmatprep.subr.mxu0 0.0
    %3062 = vmatpush1.msra.mxu0 %v26
    %3063 = vmatprep.subr.mxu0 0.0
    %3064 = vmatpush1.msra.mxu0 %v27
    %3065 = vmatprep.subr.mxu0 0.0
    %3066 = vmatpush1.msra.mxu0 0.0
    %3067 = vmatprep.subr.mxu0 0.0
    %3068 = vmatpush1.msra.mxu0 0.0
    %3069 = vmatprep.subr.mxu0 0.0
    %3070 = vmatpush1.msra.mxu0 0.0
    %3071 = vmatprep.subr.mxu0 0.0
    %3072 = vmatpush1.msra.mxu0 0.0
    %3073 = vmatprep.subr.mxu0 0.0
    %3074 = vmatpush1.msra.mxu0 0.0
    %3075 = vmatprep.subr.mxu0 0.0
    %3076 = vmatpush1.msra.mxu0 0.0
    %3077 = vmatprep.subr.mxu0 0.0
    %3078 = vmatpush1.msra.mxu0 0.0
    %3079 = vmatprep.subr.mxu0 0.0
    %3080 = vmatpush1.msra.mxu0 0.0
    %3081 = vmatprep.subr.mxu0 0.0
    %3082 = vmatpush1.msra.mxu0 0.0
    %3083 = vmatprep.subr.mxu0 0.0
    %3084 = vmatpush1.msra.mxu0 0.0
    %3085 = vmatprep.subr.mxu0 0.0
    %3086 = vmatpush1.msra.mxu0 0.0
    %3087 = vmatprep.subr.mxu0 0.0
    %3088 = vmatpush1.msra.mxu0 0.0
    %3089 = vmatprep.subr.mxu0 0.0
    %3090 = vmatpush1.msra.mxu0 0.0
    %3091 = vmatprep.subr.mxu0 0.0
    %3092 = vmatpush1.msra.mxu0 0.0
    %3093 = vmatprep.subr.mxu0 0.0
    %3094 = vmatpush1.msra.mxu0 0.0
    %3095 = vmatprep.subr.mxu0 0.0
    %3096 = vmatpush1.msra.mxu0 0.0
    %3097 = vmatprep.subr.mxu0 0.0
    %3098 = vmatpush1.msra.mxu0 0.0
    %3099 = vmatprep.subr.mxu0 0.0
    %3100 = vmatpush1.msra.mxu0 0.0
    %3101 = vmatprep.subr.mxu0 0.0
    %3102 = vmatpush1.msra.mxu0 0.0
    %3103 = vmatprep.subr.mxu0 0.0
    %3104 = vmatpush1.msra.mxu0 0.0
    %3105 = vmatprep.subr.mxu0 0.0
    %3106 = vmatpush1.msra.mxu0 0.0
    %3107 = vmatprep.subr.mxu0 0.0
    %3108 = vmatpush1.msra.mxu0 0.0
    %3109 = vmatprep.subr.mxu0 0.0
    %3110 = vmatpush1.msra.mxu0 0.0
    %3111 = vmatprep.subr.mxu0 0.0
    %3112 = vmatpush1.msra.mxu0 0.0
    %3113 = vmatprep.subr.mxu0 0.0
    %3114 = vmatpush1.msra.mxu0 0.0
    %3115 = vmatprep.subr.mxu0 0.0
    %3116 = vmatpush1.msra.mxu0 0.0
    %3117 = vmatprep.subr.mxu0 0.0
    %3118 = vmatpush1.msra.mxu0 0.0
    %3119 = vmatprep.subr.mxu0 0.0
    %3120 = vmatpush1.msra.mxu0 0.0
    %3121 = vmatprep.mubr.f32.mxu0 0.0
    %3122 = vmatmul.mubr.f32.gmra.mrb[0].mxu0 %v3055
    %v3123 = vpop.f32.mrb[0].mxu0
    %v3124 = vadd.f32 %v43, %v3123
    %v3125 = vpop.f32.mrb[0].mxu0
    %3126 = vdwg.mxu0
    %v3127 = vxor.u32 %v3124, 2147483648
    %v3128 = vmul.f32 %v3127, 1.442695
    %v3129 = vpow.pop %v3128
    %v3130 = vadd.f32 %v3129, 1.0
    %v3131 = vrcp.pop %v3130
    %v3132 = vmul.f32 1.0, %v3131
    %v3133 = vmul.f32 %v3124, %v3132
    %v3134 = vadd.f32 %v2962, %v3133
    %v3135 = vsel %vm53, %v3043, 0
    %3137 = vmatprep.subr.mxu0 0.0
    %3138 = vmatpush1.msra.mxu0 %v34
    %3139 = vmatprep.subr.mxu0 0.0
    %3140 = vmatpush1.msra.mxu0 %v35
    %3141 = vmatprep.subr.mxu0 0.0
    %3142 = vmatpush1.msra.mxu0 %v36
    %3143 = vmatprep.subr.mxu0 0.0
    %3144 = vmatpush1.msra.mxu0 %v37
    %3145 = vmatprep.subr.mxu0 0.0
    %3146 = vmatpush1.msra.mxu0 0.0
    %3147 = vmatprep.subr.mxu0 0.0
    %3148 = vmatpush1.msra.mxu0 0.0
    %3149 = vmatprep.subr.mxu0 0.0
    %3150 = vmatpush1.msra.mxu0 0.0
    %3151 = vmatprep.subr.mxu0 0.0
    %3152 = vmatpush1.msra.mxu0 0.0
    %3153 = vmatprep.subr.mxu0 0.0
    %3154 = vmatpush1.msra.mxu0 0.0
    %3155 = vmatprep.subr.mxu0 0.0
    %3156 = vmatpush1.msra.mxu0 0.0
    %3157 = vmatprep.subr.mxu0 0.0
    %3158 = vmatpush1.msra.mxu0 0.0
    %3159 = vmatprep.subr.mxu0 0.0
    %3160 = vmatpush1.msra.mxu0 0.0
    %3161 = vmatprep.subr.mxu0 0.0
    %3162 = vmatpush1.msra.mxu0 0.0
    %3163 = vmatprep.subr.mxu0 0.0
    %3164 = vmatpush1.msra.mxu0 0.0
    %3165 = vmatprep.subr.mxu0 0.0
    %3166 = vmatpush1.msra.mxu0 0.0
    %3167 = vmatprep.subr.mxu0 0.0
    %3168 = vmatpush1.msra.mxu0 0.0
    %3169 = vmatprep.subr.mxu0 0.0
    %3170 = vmatpush1.msra.mxu0 0.0
    %3171 = vmatprep.subr.mxu0 0.0
    %3172 = vmatpush1.msra.mxu0 0.0
    %3173 = vmatprep.subr.mxu0 0.0
    %3174 = vmatpush1.msra.mxu0 0.0
    %3175 = vmatprep.subr.mxu0 0.0
    %3176 = vmatpush1.msra.mxu0 0.0
    %3177 = vmatprep.subr.mxu0 0.0
    %3178 = vmatpush1.msra.mxu0 0.0
    %3179 = vmatprep.subr.mxu0 0.0
    %3180 = vmatpush1.msra.mxu0 0.0
    %3181 = vmatprep.subr.mxu0 0.0
    %3182 = vmatpush1.msra.mxu0 0.0
    %3183 = vmatprep.subr.mxu0 0.0
    %3184 = vmatpush1.msra.mxu0 0.0
    %3185 = vmatprep.subr.mxu0 0.0
    %3186 = vmatpush1.msra.mxu0 0.0
    %3187 = vmatprep.subr.mxu0 0.0
    %3188 = vmatpush1.msra.mxu0 0.0
    %3189 = vmatprep.subr.mxu0 0.0
    %3190 = vmatpush1.msra.mxu0 0.0
    %3191 = vmatprep.subr.mxu0 0.0
    %3192 = vmatpush1.msra.mxu0 0.0
    %3193 = vmatprep.subr.mxu0 0.0
    %3194 = vmatpush1.msra.mxu0 0.0
    %3195 = vmatprep.subr.mxu0 0.0
    %3196 = vmatpush1.msra.mxu0 0.0
    %3197 = vmatprep.subr.mxu0 0.0
    %3198 = vmatpush1.msra.mxu0 0.0
    %3199 = vmatprep.subr.mxu0 0.0
    %3200 = vmatpush1.msra.mxu0 0.0
    %3201 = vmatprep.mubr.f32.mxu0 0.0
    %3202 = vmatmul.mubr.f32.gmra.mrb[0].mxu0 %v3135
    %v3203 = vpop.f32.mrb[0].mxu0
    %v3204 = vadd.f32 %v47, %v3203
    %v3205 = vpop.f32.mrb[0].mxu0
    %3206 = vdwg.mxu0
    %v3207 = vxor.u32 %v3204, 2147483648
    %v3208 = vmul.f32 %v3207, 1.442695
    %v3209 = vpow.pop %v3208
    %v3210 = vadd.f32 %v3209, 1.0
    %v3211 = vrcp.pop %v3210
    %v3212 = vmul.f32 1.0, %v3211
    %v3213 = vmul.f32 %v3204, %v3212
    %v3214 = vadd.f32 %v3043, %v3213
    %v3216 = vsel %vm53, %v3134, 0
    %3218 = vmatprep.subr.mxu0 0.0
    %3219 = vmatpush1.msra.mxu0 %v29
    %3220 = vmatprep.subr.mxu0 0.0
    %3221 = vmatpush1.msra.mxu0 %v30
    %3222 = vmatprep.subr.mxu0 0.0
    %3223 = vmatpush1.msra.mxu0 %v31
    %3224 = vmatprep.subr.mxu0 0.0
    %3225 = vmatpush1.msra.mxu0 %v32
    %3226 = vmatprep.subr.mxu0 0.0
    %3227 = vmatpush1.msra.mxu0 0.0
    %3228 = vmatprep.subr.mxu0 0.0
    %3229 = vmatpush1.msra.mxu0 0.0
    %3230 = vmatprep.subr.mxu0 0.0
    %3231 = vmatpush1.msra.mxu0 0.0
    %3232 = vmatprep.subr.mxu0 0.0
    %3233 = vmatpush1.msra.mxu0 0.0
    %3234 = vmatprep.subr.mxu0 0.0
    %3235 = vmatpush1.msra.mxu0 0.0
    %3236 = vmatprep.subr.mxu0 0.0
    %3237 = vmatpush1.msra.mxu0 0.0
    %3238 = vmatprep.subr.mxu0 0.0
    %3239 = vmatpush1.msra.mxu0 0.0
    %3240 = vmatprep.subr.mxu0 0.0
    %3241 = vmatpush1.msra.mxu0 0.0
    %3242 = vmatprep.subr.mxu0 0.0
    %3243 = vmatpush1.msra.mxu0 0.0
    %3244 = vmatprep.subr.mxu0 0.0
    %3245 = vmatpush1.msra.mxu0 0.0
    %3246 = vmatprep.subr.mxu0 0.0
    %3247 = vmatpush1.msra.mxu0 0.0
    %3248 = vmatprep.subr.mxu0 0.0
    %3249 = vmatpush1.msra.mxu0 0.0
    %3250 = vmatprep.subr.mxu0 0.0
    %3251 = vmatpush1.msra.mxu0 0.0
    %3252 = vmatprep.subr.mxu0 0.0
    %3253 = vmatpush1.msra.mxu0 0.0
    %3254 = vmatprep.subr.mxu0 0.0
    %3255 = vmatpush1.msra.mxu0 0.0
    %3256 = vmatprep.subr.mxu0 0.0
    %3257 = vmatpush1.msra.mxu0 0.0
    %3258 = vmatprep.subr.mxu0 0.0
    %3259 = vmatpush1.msra.mxu0 0.0
    %3260 = vmatprep.subr.mxu0 0.0
    %3261 = vmatpush1.msra.mxu0 0.0
    %3262 = vmatprep.subr.mxu0 0.0
    %3263 = vmatpush1.msra.mxu0 0.0
    %3264 = vmatprep.subr.mxu0 0.0
    %3265 = vmatpush1.msra.mxu0 0.0
    %3266 = vmatprep.subr.mxu0 0.0
    %3267 = vmatpush1.msra.mxu0 0.0
    %3268 = vmatprep.subr.mxu0 0.0
    %3269 = vmatpush1.msra.mxu0 0.0
    %3270 = vmatprep.subr.mxu0 0.0
    %3271 = vmatpush1.msra.mxu0 0.0
    %3272 = vmatprep.subr.mxu0 0.0
    %3273 = vmatpush1.msra.mxu0 0.0
    %3274 = vmatprep.subr.mxu0 0.0
    %3275 = vmatpush1.msra.mxu0 0.0
    %3276 = vmatprep.subr.mxu0 0.0
    %3277 = vmatpush1.msra.mxu0 0.0
    %3278 = vmatprep.subr.mxu0 0.0
    %3279 = vmatpush1.msra.mxu0 0.0
    %3280 = vmatprep.subr.mxu0 0.0
    %3281 = vmatpush1.msra.mxu0 0.0
    %3282 = vmatprep.mubr.f32.mxu0 0.0
    %3283 = vmatmul.mubr.f32.gmra.mrb[0].mxu0 %v3216
    %v3284 = vpop.f32.mrb[0].mxu0
    %v3285 = vadd.f32 %v45, %v3284
    %v3286 = vpop.f32.mrb[0].mxu0
    %3287 = vdwg.mxu0
    %v3288 = vxor.u32 %v3285, 2147483648
    %v3289 = vmul.f32 %v3288, 1.442695
    %v3290 = vpow.pop %v3289
    %v3291 = vadd.f32 %v3290, 1.0
    %v3292 = vrcp.pop %v3291
    %v3293 = vmul.f32 1.0, %v3292
    %v3294 = vmul.f32 %v3285, %v3293
    %v3295 = vadd.f32 %v3134, %v3294
    %v3297 = vsel %vm53, %v3214, 0
    %3299 = vmatprep.subr.mxu0 0.0
    %3300 = vmatpush1.msra.mxu0 %v39
    %3301 = vmatprep.subr.mxu0 0.0
    %3302 = vmatpush1.msra.mxu0 %v40
    %3303 = vmatprep.subr.mxu0 0.0
    %3304 = vmatpush1.msra.mxu0 %v41
    %3305 = vmatprep.subr.mxu0 0.0
    %3306 = vmatpush1.msra.mxu0 %v42
    %3307 = vmatprep.subr.mxu0 0.0
    %3308 = vmatpush1.msra.mxu0 0.0
    %3309 = vmatprep.subr.mxu0 0.0
    %3310 = vmatpush1.msra.mxu0 0.0
    %3311 = vmatprep.subr.mxu0 0.0
    %3312 = vmatpush1.msra.mxu0 0.0
    %3313 = vmatprep.subr.mxu0 0.0
    %3314 = vmatpush1.msra.mxu0 0.0
    %3315 = vmatprep.subr.mxu0 0.0
    %3316 = vmatpush1.msra.mxu0 0.0
    %3317 = vmatprep.subr.mxu0 0.0
    %3318 = vmatpush1.msra.mxu0 0.0
    %3319 = vmatprep.subr.mxu0 0.0
    %3320 = vmatpush1.msra.mxu0 0.0
    %3321 = vmatprep.subr.mxu0 0.0
    %3322 = vmatpush1.msra.mxu0 0.0
    %3323 = vmatprep.subr.mxu0 0.0
    %3324 = vmatpush1.msra.mxu0 0.0
    %3325 = vmatprep.subr.mxu0 0.0
    %3326 = vmatpush1.msra.mxu0 0.0
    %3327 = vmatprep.subr.mxu0 0.0
    %3328 = vmatpush1.msra.mxu0 0.0
    %3329 = vmatprep.subr.mxu0 0.0
    %3330 = vmatpush1.msra.mxu0 0.0
    %3331 = vmatprep.subr.mxu0 0.0
    %3332 = vmatpush1.msra.mxu0 0.0
    %3333 = vmatprep.subr.mxu0 0.0
    %3334 = vmatpush1.msra.mxu0 0.0
    %3335 = vmatprep.subr.mxu0 0.0
    %3336 = vmatpush1.msra.mxu0 0.0
    %3337 = vmatprep.subr.mxu0 0.0
    %3338 = vmatpush1.msra.mxu0 0.0
    %3339 = vmatprep.subr.mxu0 0.0
    %3340 = vmatpush1.msra.mxu0 0.0
    %3341 = vmatprep.subr.mxu0 0.0
    %3342 = vmatpush1.msra.mxu0 0.0
    %3343 = vmatprep.subr.mxu0 0.0
    %3344 = vmatpush1.msra.mxu0 0.0
    %3345 = vmatprep.subr.mxu0 0.0
    %3346 = vmatpush1.msra.mxu0 0.0
    %3347 = vmatprep.subr.mxu0 0.0
    %3348 = vmatpush1.msra.mxu0 0.0
    %3349 = vmatprep.subr.mxu0 0.0
    %3350 = vmatpush1.msra.mxu0 0.0
    %3351 = vmatprep.subr.mxu0 0.0
    %3352 = vmatpush1.msra.mxu0 0.0
    %3353 = vmatprep.subr.mxu0 0.0
    %3354 = vmatpush1.msra.mxu0 0.0
    %3355 = vmatprep.subr.mxu0 0.0
    %3356 = vmatpush1.msra.mxu0 0.0
    %3357 = vmatprep.subr.mxu0 0.0
    %3358 = vmatpush1.msra.mxu0 0.0
    %3359 = vmatprep.subr.mxu0 0.0
    %3360 = vmatpush1.msra.mxu0 0.0
    %3361 = vmatprep.subr.mxu0 0.0
    %3362 = vmatpush1.msra.mxu0 0.0
    %3363 = vmatprep.mubr.f32.mxu0 0.0
    %3364 = vmatmul.mubr.f32.gmra.mrb[0].mxu0 %v3297
    %v3365 = vpop.f32.mrb[0].mxu0
    %v3366 = vadd.f32 %v49, %v3365
    %v3367 = vpop.f32.mrb[0].mxu0
    %3368 = vdwg.mxu0
    %v3369 = vxor.u32 %v3366, 2147483648
    %v3370 = vmul.f32 %v3369, 1.442695
    %v3371 = vpow.pop %v3370
    %v3372 = vadd.f32 %v3371, 1.0
    %v3373 = vrcp.pop %v3372
    %v3374 = vmul.f32 1.0, %v3373
    %v3375 = vmul.f32 %v3366, %v3374
    %v3376 = vadd.f32 %v3214, %v3375
    %3377 = vst.msk [vmem:[#allocation2 + $0x9] sm:$0x1] %vm378, %v3295
    %v3379 = vlaneseq
    %v3380 = vshrl.u32 %v3379, 7
    %v3381 = vsub.s32 0, %v3380
    %v3382 = vrot.slane %v3376, %v3381
    %3383 = vrot.lane.b32.xlu0 %v3382, 32
    %v3384 = vpop.permute.xlu0 %3383
    %3386 = vst.msk [vmem:[#allocation2 + $0x9] sm:$0x1] %vm388, %v3384
    %v3388 = vsel %vm53, %v3295, 0
    %3390 = vmatprep.subr.mxu0 0.0
    %3391 = vmatpush1.msra.mxu0 %v24
    %3392 = vmatprep.subr.mxu0 0.0
    %3393 = vmatpush1.msra.mxu0 %v25
    %3394 = vmatprep.subr.mxu0 0.0
    %3395 = vmatpush1.msra.mxu0 %v26
    %3396 = vmatprep.subr.mxu0 0.0
    %3397 = vmatpush1.msra.mxu0 %v27
    %3398 = vmatprep.subr.mxu0 0.0
    %3399 = vmatpush1.msra.mxu0 0.0
    %3400 = vmatprep.subr.mxu0 0.0
    %3401 = vmatpush1.msra.mxu0 0.0
    %3402 = vmatprep.subr.mxu0 0.0
    %3403 = vmatpush1.msra.mxu0 0.0
    %3404 = vmatprep.subr.mxu0 0.0
    %3405 = vmatpush1.msra.mxu0 0.0
    %3406 = vmatprep.subr.mxu0 0.0
    %3407 = vmatpush1.msra.mxu0 0.0
    %3408 = vmatprep.subr.mxu0 0.0
    %3409 = vmatpush1.msra.mxu0 0.0
    %3410 = vmatprep.subr.mxu0 0.0
    %3411 = vmatpush1.msra.mxu0 0.0
    %3412 = vmatprep.subr.mxu0 0.0
    %3413 = vmatpush1.msra.mxu0 0.0
    %3414 = vmatprep.subr.mxu0 0.0
    %3415 = vmatpush1.msra.mxu0 0.0
    %3416 = vmatprep.subr.mxu0 0.0
    %3417 = vmatpush1.msra.mxu0 0.0
    %3418 = vmatprep.subr.mxu0 0.0
    %3419 = vmatpush1.msra.mxu0 0.0
    %3420 = vmatprep.subr.mxu0 0.0
    %3421 = vmatpush1.msra.mxu0 0.0
    %3422 = vmatprep.subr.mxu0 0.0
    %3423 = vmatpush1.msra.mxu0 0.0
    %3424 = vmatprep.subr.mxu0 0.0
    %3425 = vmatpush1.msra.mxu0 0.0
    %3426 = vmatprep.subr.mxu0 0.0
    %3427 = vmatpush1.msra.mxu0 0.0
    %3428 = vmatprep.subr.mxu0 0.0
    %3429 = vmatpush1.msra.mxu0 0.0
    %3430 = vmatprep.subr.mxu0 0.0
    %3431 = vmatpush1.msra.mxu0 0.0
    %3432 = vmatprep.subr.mxu0 0.0
    %3433 = vmatpush1.msra.mxu0 0.0
    %3434 = vmatprep.subr.mxu0 0.0
    %3435 = vmatpush1.msra.mxu0 0.0
    %3436 = vmatprep.subr.mxu0 0.0
    %3437 = vmatpush1.msra.mxu0 0.0
    %3438 = vmatprep.subr.mxu0 0.0
    %3439 = vmatpush1.msra.mxu0 0.0
    %3440 = vmatprep.subr.mxu0 0.0
    %3441 = vmatpush1.msra.mxu0 0.0
    %3442 = vmatprep.subr.mxu0 0.0
    %3443 = vmatpush1.msra.mxu0 0.0
    %3444 = vmatprep.subr.mxu0 0.0
    %3445 = vmatpush1.msra.mxu0 0.0
    %3446 = vmatprep.subr.mxu0 0.0
    %3447 = vmatpush1.msra.mxu0 0.0
    %3448 = vmatprep.subr.mxu0 0.0
    %3449 = vmatpush1.msra.mxu0 0.0
    %3450 = vmatprep.subr.mxu0 0.0
    %3451 = vmatpush1.msra.mxu0 0.0
    %3452 = vmatprep.subr.mxu0 0.0
    %3453 = vmatpush1.msra.mxu0 0.0
    %3454 = vmatprep.mubr.f32.mxu0 0.0
    %3455 = vmatmul.mubr.f32.gmra.mrb[0].mxu0 %v3388
    %v3456 = vpop.f32.mrb[0].mxu0
    %v3457 = vadd.f32 %v43, %v3456
    %v3458 = vpop.f32.mrb[0].mxu0
    %3459 = vdwg.mxu0
    %v3460 = vxor.u32 %v3457, 2147483648
    %v3461 = vmul.f32 %v3460, 1.442695
    %v3462 = vpow.pop %v3461
    %v3463 = vadd.f32 %v3462, 1.0
    %v3464 = vrcp.pop %v3463
    %v3465 = vmul.f32 1.0, %v3464
    %v3466 = vmul.f32 %v3457, %v3465
    %v3467 = vadd.f32 %v3295, %v3466
    %v3468 = vsel %vm53, %v3376, 0
    %3470 = vmatprep.subr.mxu0 0.0
    %3471 = vmatpush1.msra.mxu0 %v34
    %3472 = vmatprep.subr.mxu0 0.0
    %3473 = vmatpush1.msra.mxu0 %v35
    %3474 = vmatprep.subr.mxu0 0.0
    %3475 = vmatpush1.msra.mxu0 %v36
    %3476 = vmatprep.subr.mxu0 0.0
    %3477 = vmatpush1.msra.mxu0 %v37
    %3478 = vmatprep.subr.mxu0 0.0
    %3479 = vmatpush1.msra.mxu0 0.0
    %3480 = vmatprep.subr.mxu0 0.0
    %3481 = vmatpush1.msra.mxu0 0.0
    %3482 = vmatprep.subr.mxu0 0.0
    %3483 = vmatpush1.msra.mxu0 0.0
    %3484 = vmatprep.subr.mxu0 0.0
    %3485 = vmatpush1.msra.mxu0 0.0
    %3486 = vmatprep.subr.mxu0 0.0
    %3487 = vmatpush1.msra.mxu0 0.0
    %3488 = vmatprep.subr.mxu0 0.0
    %3489 = vmatpush1.msra.mxu0 0.0
    %3490 = vmatprep.subr.mxu0 0.0
    %3491 = vmatpush1.msra.mxu0 0.0
    %3492 = vmatprep.subr.mxu0 0.0
    %3493 = vmatpush1.msra.mxu0 0.0
    %3494 = vmatprep.subr.mxu0 0.0
    %3495 = vmatpush1.msra.mxu0 0.0
    %3496 = vmatprep.subr.mxu0 0.0
    %3497 = vmatpush1.msra.mxu0 0.0
    %3498 = vmatprep.subr.mxu0 0.0
    %3499 = vmatpush1.msra.mxu0 0.0
    %3500 = vmatprep.subr.mxu0 0.0
    %3501 = vmatpush1.msra.mxu0 0.0
    %3502 = vmatprep.subr.mxu0 0.0
    %3503 = vmatpush1.msra.mxu0 0.0
    %3504 = vmatprep.subr.mxu0 0.0
    %3505 = vmatpush1.msra.mxu0 0.0
    %3506 = vmatprep.subr.mxu0 0.0
    %3507 = vmatpush1.msra.mxu0 0.0
    %3508 = vmatprep.subr.mxu0 0.0
    %3509 = vmatpush1.msra.mxu0 0.0
    %3510 = vmatprep.subr.mxu0 0.0
    %3511 = vmatpush1.msra.mxu0 0.0
    %3512 = vmatprep.subr.mxu0 0.0
    %3513 = vmatpush1.msra.mxu0 0.0
    %3514 = vmatprep.subr.mxu0 0.0
    %3515 = vmatpush1.msra.mxu0 0.0
    %3516 = vmatprep.subr.mxu0 0.0
    %3517 = vmatpush1.msra.mxu0 0.0
    %3518 = vmatprep.subr.mxu0 0.0
    %3519 = vmatpush1.msra.mxu0 0.0
    %3520 = vmatprep.subr.mxu0 0.0
    %3521 = vmatpush1.msra.mxu0 0.0
    %3522 = vmatprep.subr.mxu0 0.0
    %3523 = vmatpush1.msra.mxu0 0.0
    %3524 = vmatprep.subr.mxu0 0.0
    %3525 = vmatpush1.msra.mxu0 0.0
    %3526 = vmatprep.subr.mxu0 0.0
    %3527 = vmatpush1.msra.mxu0 0.0
    %3528 = vmatprep.subr.mxu0 0.0
    %3529 = vmatpush1.msra.mxu0 0.0
    %3530 = vmatprep.subr.mxu0 0.0
    %3531 = vmatpush1.msra.mxu0 0.0
    %3532 = vmatprep.subr.mxu0 0.0
    %3533 = vmatpush1.msra.mxu0 0.0
    %3534 = vmatprep.mubr.f32.mxu0 0.0
    %3535 = vmatmul.mubr.f32.gmra.mrb[0].mxu0 %v3468
    %v3536 = vpop.f32.mrb[0].mxu0
    %v3537 = vadd.f32 %v47, %v3536
    %v3538 = vpop.f32.mrb[0].mxu0
    %3539 = vdwg.mxu0
    %v3540 = vxor.u32 %v3537, 2147483648
    %v3541 = vmul.f32 %v3540, 1.442695
    %v3542 = vpow.pop %v3541
    %v3543 = vadd.f32 %v3542, 1.0
    %v3544 = vrcp.pop %v3543
    %v3545 = vmul.f32 1.0, %v3544
    %v3546 = vmul.f32 %v3537, %v3545
    %v3547 = vadd.f32 %v3376, %v3546
    %v3549 = vsel %vm53, %v3467, 0
    %3551 = vmatprep.subr.mxu0 0.0
    %3552 = vmatpush1.msra.mxu0 %v29
    %3553 = vmatprep.subr.mxu0 0.0
    %3554 = vmatpush1.msra.mxu0 %v30
    %3555 = vmatprep.subr.mxu0 0.0
    %3556 = vmatpush1.msra.mxu0 %v31
    %3557 = vmatprep.subr.mxu0 0.0
    %3558 = vmatpush1.msra.mxu0 %v32
    %3559 = vmatprep.subr.mxu0 0.0
    %3560 = vmatpush1.msra.mxu0 0.0
    %3561 = vmatprep.subr.mxu0 0.0
    %3562 = vmatpush1.msra.mxu0 0.0
    %3563 = vmatprep.subr.mxu0 0.0
    %3564 = vmatpush1.msra.mxu0 0.0
    %3565 = vmatprep.subr.mxu0 0.0
    %3566 = vmatpush1.msra.mxu0 0.0
    %3567 = vmatprep.subr.mxu0 0.0
    %3568 = vmatpush1.msra.mxu0 0.0
    %3569 = vmatprep.subr.mxu0 0.0
    %3570 = vmatpush1.msra.mxu0 0.0
    %3571 = vmatprep.subr.mxu0 0.0
    %3572 = vmatpush1.msra.mxu0 0.0
    %3573 = vmatprep.subr.mxu0 0.0
    %3574 = vmatpush1.msra.mxu0 0.0
    %3575 = vmatprep.subr.mxu0 0.0
    %3576 = vmatpush1.msra.mxu0 0.0
    %3577 = vmatprep.subr.mxu0 0.0
    %3578 = vmatpush1.msra.mxu0 0.0
    %3579 = vmatprep.subr.mxu0 0.0
    %3580 = vmatpush1.msra.mxu0 0.0
    %3581 = vmatprep.subr.mxu0 0.0
    %3582 = vmatpush1.msra.mxu0 0.0
    %3583 = vmatprep.subr.mxu0 0.0
    %3584 = vmatpush1.msra.mxu0 0.0
    %3585 = vmatprep.subr.mxu0 0.0
    %3586 = vmatpush1.msra.mxu0 0.0
    %3587 = vmatprep.subr.mxu0 0.0
    %3588 = vmatpush1.msra.mxu0 0.0
    %3589 = vmatprep.subr.mxu0 0.0
    %3590 = vmatpush1.msra.mxu0 0.0
    %3591 = vmatprep.subr.mxu0 0.0
    %3592 = vmatpush1.msra.mxu0 0.0
    %3593 = vmatprep.subr.mxu0 0.0
    %3594 = vmatpush1.msra.mxu0 0.0
    %3595 = vmatprep.subr.mxu0 0.0
    %3596 = vmatpush1.msra.mxu0 0.0
    %3597 = vmatprep.subr.mxu0 0.0
    %3598 = vmatpush1.msra.mxu0 0.0
    %3599 = vmatprep.subr.mxu0 0.0
    %3600 = vmatpush1.msra.mxu0 0.0
    %3601 = vmatprep.subr.mxu0 0.0
    %3602 = vmatpush1.msra.mxu0 0.0
    %3603 = vmatprep.subr.mxu0 0.0
    %3604 = vmatpush1.msra.mxu0 0.0
    %3605 = vmatprep.subr.mxu0 0.0
    %3606 = vmatpush1.msra.mxu0 0.0
    %3607 = vmatprep.subr.mxu0 0.0
    %3608 = vmatpush1.msra.mxu0 0.0
    %3609 = vmatprep.subr.mxu0 0.0
    %3610 = vmatpush1.msra.mxu0 0.0
    %3611 = vmatprep.subr.mxu0 0.0
    %3612 = vmatpush1.msra.mxu0 0.0
    %3613 = vmatprep.subr.mxu0 0.0
    %3614 = vmatpush1.msra.mxu0 0.0
    %3615 = vmatprep.mubr.f32.mxu0 0.0
    %3616 = vmatmul.mubr.f32.gmra.mrb[0].mxu0 %v3549
    %v3617 = vpop.f32.mrb[0].mxu0
    %v3618 = vadd.f32 %v45, %v3617
    %v3619 = vpop.f32.mrb[0].mxu0
    %3620 = vdwg.mxu0
    %v3621 = vxor.u32 %v3618, 2147483648
    %v3622 = vmul.f32 %v3621, 1.442695
    %v3623 = vpow.pop %v3622
    %v3624 = vadd.f32 %v3623, 1.0
    %v3625 = vrcp.pop %v3624
    %v3626 = vmul.f32 1.0, %v3625
    %v3627 = vmul.f32 %v3618, %v3626
    %v3628 = vadd.f32 %v3467, %v3627
    %v3630 = vsel %vm53, %v3547, 0
    %3632 = vmatprep.subr.mxu0 0.0
    %3633 = vmatpush1.msra.mxu0 %v39
    %3634 = vmatprep.subr.mxu0 0.0
    %3635 = vmatpush1.msra.mxu0 %v40
    %3636 = vmatprep.subr.mxu0 0.0
    %3637 = vmatpush1.msra.mxu0 %v41
    %3638 = vmatprep.subr.mxu0 0.0
    %3639 = vmatpush1.msra.mxu0 %v42
    %3640 = vmatprep.subr.mxu0 0.0
    %3641 = vmatpush1.msra.mxu0 0.0
    %3642 = vmatprep.subr.mxu0 0.0
    %3643 = vmatpush1.msra.mxu0 0.0
    %3644 = vmatprep.subr.mxu0 0.0
    %3645 = vmatpush1.msra.mxu0 0.0
    %3646 = vmatprep.subr.mxu0 0.0
    %3647 = vmatpush1.msra.mxu0 0.0
    %3648 = vmatprep.subr.mxu0 0.0
    %3649 = vmatpush1.msra.mxu0 0.0
    %3650 = vmatprep.subr.mxu0 0.0
    %3651 = vmatpush1.msra.mxu0 0.0
    %3652 = vmatprep.subr.mxu0 0.0
    %3653 = vmatpush1.msra.mxu0 0.0
    %3654 = vmatprep.subr.mxu0 0.0
    %3655 = vmatpush1.msra.mxu0 0.0
    %3656 = vmatprep.subr.mxu0 0.0
    %3657 = vmatpush1.msra.mxu0 0.0
    %3658 = vmatprep.subr.mxu0 0.0
    %3659 = vmatpush1.msra.mxu0 0.0
    %3660 = vmatprep.subr.mxu0 0.0
    %3661 = vmatpush1.msra.mxu0 0.0
    %3662 = vmatprep.subr.mxu0 0.0
    %3663 = vmatpush1.msra.mxu0 0.0
    %3664 = vmatprep.subr.mxu0 0.0
    %3665 = vmatpush1.msra.mxu0 0.0
    %3666 = vmatprep.subr.mxu0 0.0
    %3667 = vmatpush1.msra.mxu0 0.0
    %3668 = vmatprep.subr.mxu0 0.0
    %3669 = vmatpush1.msra.mxu0 0.0
    %3670 = vmatprep.subr.mxu0 0.0
    %3671 = vmatpush1.msra.mxu0 0.0
    %3672 = vmatprep.subr.mxu0 0.0
    %3673 = vmatpush1.msra.mxu0 0.0
    %3674 = vmatprep.subr.mxu0 0.0
    %3675 = vmatpush1.msra.mxu0 0.0
    %3676 = vmatprep.subr.mxu0 0.0
    %3677 = vmatpush1.msra.mxu0 0.0
    %3678 = vmatprep.subr.mxu0 0.0
    %3679 = vmatpush1.msra.mxu0 0.0
    %3680 = vmatprep.subr.mxu0 0.0
    %3681 = vmatpush1.msra.mxu0 0.0
    %3682 = vmatprep.subr.mxu0 0.0
    %3683 = vmatpush1.msra.mxu0 0.0
    %3684 = vmatprep.subr.mxu0 0.0
    %3685 = vmatpush1.msra.mxu0 0.0
    %3686 = vmatprep.subr.mxu0 0.0
    %3687 = vmatpush1.msra.mxu0 0.0
    %3688 = vmatprep.subr.mxu0 0.0
    %3689 = vmatpush1.msra.mxu0 0.0
    %3690 = vmatprep.subr.mxu0 0.0
    %3691 = vmatpush1.msra.mxu0 0.0
    %3692 = vmatprep.subr.mxu0 0.0
    %3693 = vmatpush1.msra.mxu0 0.0
    %3694 = vmatprep.subr.mxu0 0.0
    %3695 = vmatpush1.msra.mxu0 0.0
    %3696 = vmatprep.mubr.f32.mxu0 0.0
    %3697 = vmatmul.mubr.f32.gmra.mrb[0].mxu0 %v3630
    %v3698 = vpop.f32.mrb[0].mxu0
    %v3699 = vadd.f32 %v49, %v3698
    %v3700 = vpop.f32.mrb[0].mxu0
    %3701 = vdwg.mxu0
    %v3702 = vxor.u32 %v3699, 2147483648
    %v3703 = vmul.f32 %v3702, 1.442695
    %v3704 = vpow.pop %v3703
    %v3705 = vadd.f32 %v3704, 1.0
    %v3706 = vrcp.pop %v3705
    %v3707 = vmul.f32 1.0, %v3706
    %v3708 = vmul.f32 %v3699, %v3707
    %v3709 = vadd.f32 %v3547, %v3708
    %3710 = vst.msk [vmem:[#allocation2 + $0xa] sm:$0x1] %vm378, %v3628
    %v3712 = vlaneseq
    %v3713 = vshrl.u32 %v3712, 7
    %v3714 = vsub.s32 0, %v3713
    %v3715 = vrot.slane %v3709, %v3714
    %3716 = vrot.lane.b32.xlu0 %v3715, 32
    %v3717 = vpop.permute.xlu0 %3716
    %3719 = vst.msk [vmem:[#allocation2 + $0xa] sm:$0x1] %vm388, %v3717
    %v3721 = vsel %vm53, %v3628, 0
    %3723 = vmatprep.subr.mxu0 0.0
    %3724 = vmatpush1.msra.mxu0 %v24
    %3725 = vmatprep.subr.mxu0 0.0
    %3726 = vmatpush1.msra.mxu0 %v25
    %3727 = vmatprep.subr.mxu0 0.0
    %3728 = vmatpush1.msra.mxu0 %v26
    %3729 = vmatprep.subr.mxu0 0.0
    %3730 = vmatpush1.msra.mxu0 %v27
    %3731 = vmatprep.subr.mxu0 0.0
    %3732 = vmatpush1.msra.mxu0 0.0
    %3733 = vmatprep.subr.mxu0 0.0
    %3734 = vmatpush1.msra.mxu0 0.0
    %3735 = vmatprep.subr.mxu0 0.0
    %3736 = vmatpush1.msra.mxu0 0.0
    %3737 = vmatprep.subr.mxu0 0.0
    %3738 = vmatpush1.msra.mxu0 0.0
    %3739 = vmatprep.subr.mxu0 0.0
    %3740 = vmatpush1.msra.mxu0 0.0
    %3741 = vmatprep.subr.mxu0 0.0
    %3742 = vmatpush1.msra.mxu0 0.0
    %3743 = vmatprep.subr.mxu0 0.0
    %3744 = vmatpush1.msra.mxu0 0.0
    %3745 = vmatprep.subr.mxu0 0.0
    %3746 = vmatpush1.msra.mxu0 0.0
    %3747 = vmatprep.subr.mxu0 0.0
    %3748 = vmatpush1.msra.mxu0 0.0
    %3749 = vmatprep.subr.mxu0 0.0
    %3750 = vmatpush1.msra.mxu0 0.0
    %3751 = vmatprep.subr.mxu0 0.0
    %3752 = vmatpush1.msra.mxu0 0.0
    %3753 = vmatprep.subr.mxu0 0.0
    %3754 = vmatpush1.msra.mxu0 0.0
    %3755 = vmatprep.subr.mxu0 0.0
    %3756 = vmatpush1.msra.mxu0 0.0
    %3757 = vmatprep.subr.mxu0 0.0
    %3758 = vmatpush1.msra.mxu0 0.0
    %3759 = vmatprep.subr.mxu0 0.0
    %3760 = vmatpush1.msra.mxu0 0.0
    %3761 = vmatprep.subr.mxu0 0.0
    %3762 = vmatpush1.msra.mxu0 0.0
    %3763 = vmatprep.subr.mxu0 0.0
    %3764 = vmatpush1.msra.mxu0 0.0
    %3765 = vmatprep.subr.mxu0 0.0
    %3766 = vmatpush1.msra.mxu0 0.0
    %3767 = vmatprep.subr.mxu0 0.0
    %3768 = vmatpush1.msra.mxu0 0.0
    %3769 = vmatprep.subr.mxu0 0.0
    %3770 = vmatpush1.msra.mxu0 0.0
    %3771 = vmatprep.subr.mxu0 0.0
    %3772 = vmatpush1.msra.mxu0 0.0
    %3773 = vmatprep.subr.mxu0 0.0
    %3774 = vmatpush1.msra.mxu0 0.0
    %3775 = vmatprep.subr.mxu0 0.0
    %3776 = vmatpush1.msra.mxu0 0.0
    %3777 = vmatprep.subr.mxu0 0.0
    %3778 = vmatpush1.msra.mxu0 0.0
    %3779 = vmatprep.subr.mxu0 0.0
    %3780 = vmatpush1.msra.mxu0 0.0
    %3781 = vmatprep.subr.mxu0 0.0
    %3782 = vmatpush1.msra.mxu0 0.0
    %3783 = vmatprep.subr.mxu0 0.0
    %3784 = vmatpush1.msra.mxu0 0.0
    %3785 = vmatprep.subr.mxu0 0.0
    %3786 = vmatpush1.msra.mxu0 0.0
    %3787 = vmatprep.mubr.f32.mxu0 0.0
    %3788 = vmatmul.mubr.f32.gmra.mrb[0].mxu0 %v3721
    %v3789 = vpop.f32.mrb[0].mxu0
    %v3790 = vadd.f32 %v43, %v3789
    %v3791 = vpop.f32.mrb[0].mxu0
    %3792 = vdwg.mxu0
    %v3793 = vxor.u32 %v3790, 2147483648
    %v3794 = vmul.f32 %v3793, 1.442695
    %v3795 = vpow.pop %v3794
    %v3796 = vadd.f32 %v3795, 1.0
    %v3797 = vrcp.pop %v3796
    %v3798 = vmul.f32 1.0, %v3797
    %v3799 = vmul.f32 %v3790, %v3798
    %v3800 = vadd.f32 %v3628, %v3799
    %v3801 = vsel %vm53, %v3709, 0
    %3803 = vmatprep.subr.mxu0 0.0
    %3804 = vmatpush1.msra.mxu0 %v34
    %3805 = vmatprep.subr.mxu0 0.0
    %3806 = vmatpush1.msra.mxu0 %v35
    %3807 = vmatprep.subr.mxu0 0.0
    %3808 = vmatpush1.msra.mxu0 %v36
    %3809 = vmatprep.subr.mxu0 0.0
    %3810 = vmatpush1.msra.mxu0 %v37
    %3811 = vmatprep.subr.mxu0 0.0
    %3812 = vmatpush1.msra.mxu0 0.0
    %3813 = vmatprep.subr.mxu0 0.0
    %3814 = vmatpush1.msra.mxu0 0.0
    %3815 = vmatprep.subr.mxu0 0.0
    %3816 = vmatpush1.msra.mxu0 0.0
    %3817 = vmatprep.subr.mxu0 0.0
    %3818 = vmatpush1.msra.mxu0 0.0
    %3819 = vmatprep.subr.mxu0 0.0
    %3820 = vmatpush1.msra.mxu0 0.0
    %3821 = vmatprep.subr.mxu0 0.0
    %3822 = vmatpush1.msra.mxu0 0.0
    %3823 = vmatprep.subr.mxu0 0.0
    %3824 = vmatpush1.msra.mxu0 0.0
    %3825 = vmatprep.subr.mxu0 0.0
    %3826 = vmatpush1.msra.mxu0 0.0
    %3827 = vmatprep.subr.mxu0 0.0
    %3828 = vmatpush1.msra.mxu0 0.0
    %3829 = vmatprep.subr.mxu0 0.0
    %3830 = vmatpush1.msra.mxu0 0.0
    %3831 = vmatprep.subr.mxu0 0.0
    %3832 = vmatpush1.msra.mxu0 0.0
    %3833 = vmatprep.subr.mxu0 0.0
    %3834 = vmatpush1.msra.mxu0 0.0
    %3835 = vmatprep.subr.mxu0 0.0
    %3836 = vmatpush1.msra.mxu0 0.0
    %3837 = vmatprep.subr.mxu0 0.0
    %3838 = vmatpush1.msra.mxu0 0.0
    %3839 = vmatprep.subr.mxu0 0.0
    %3840 = vmatpush1.msra.mxu0 0.0
    %3841 = vmatprep.subr.mxu0 0.0
    %3842 = vmatpush1.msra.mxu0 0.0
    %3843 = vmatprep.subr.mxu0 0.0
    %3844 = vmatpush1.msra.mxu0 0.0
    %3845 = vmatprep.subr.mxu0 0.0
    %3846 = vmatpush1.msra.mxu0 0.0
    %3847 = vmatprep.subr.mxu0 0.0
    %3848 = vmatpush1.msra.mxu0 0.0
    %3849 = vmatprep.subr.mxu0 0.0
    %3850 = vmatpush1.msra.mxu0 0.0
    %3851 = vmatprep.subr.mxu0 0.0
    %3852 = vmatpush1.msra.mxu0 0.0
    %3853 = vmatprep.subr.mxu0 0.0
    %3854 = vmatpush1.msra.mxu0 0.0
    %3855 = vmatprep.subr.mxu0 0.0
    %3856 = vmatpush1.msra.mxu0 0.0
    %3857 = vmatprep.subr.mxu0 0.0
    %3858 = vmatpush1.msra.mxu0 0.0
    %3859 = vmatprep.subr.mxu0 0.0
    %3860 = vmatpush1.msra.mxu0 0.0
    %3861 = vmatprep.subr.mxu0 0.0
    %3862 = vmatpush1.msra.mxu0 0.0
    %3863 = vmatprep.subr.mxu0 0.0
    %3864 = vmatpush1.msra.mxu0 0.0
    %3865 = vmatprep.subr.mxu0 0.0
    %3866 = vmatpush1.msra.mxu0 0.0
    %3867 = vmatprep.mubr.f32.mxu0 0.0
    %3868 = vmatmul.mubr.f32.gmra.mrb[0].mxu0 %v3801
    %v3869 = vpop.f32.mrb[0].mxu0
    %v3870 = vadd.f32 %v47, %v3869
    %v3871 = vpop.f32.mrb[0].mxu0
    %3872 = vdwg.mxu0
    %v3873 = vxor.u32 %v3870, 2147483648
    %v3874 = vmul.f32 %v3873, 1.442695
    %v3875 = vpow.pop %v3874
    %v3876 = vadd.f32 %v3875, 1.0
    %v3877 = vrcp.pop %v3876
    %v3878 = vmul.f32 1.0, %v3877
    %v3879 = vmul.f32 %v3870, %v3878
    %v3880 = vadd.f32 %v3709, %v3879
    %v3882 = vsel %vm53, %v3800, 0
    %3884 = vmatprep.subr.mxu0 0.0
    %3885 = vmatpush1.msra.mxu0 %v29
    %3886 = vmatprep.subr.mxu0 0.0
    %3887 = vmatpush1.msra.mxu0 %v30
    %3888 = vmatprep.subr.mxu0 0.0
    %3889 = vmatpush1.msra.mxu0 %v31
    %3890 = vmatprep.subr.mxu0 0.0
    %3891 = vmatpush1.msra.mxu0 %v32
    %3892 = vmatprep.subr.mxu0 0.0
    %3893 = vmatpush1.msra.mxu0 0.0
    %3894 = vmatprep.subr.mxu0 0.0
    %3895 = vmatpush1.msra.mxu0 0.0
    %3896 = vmatprep.subr.mxu0 0.0
    %3897 = vmatpush1.msra.mxu0 0.0
    %3898 = vmatprep.subr.mxu0 0.0
    %3899 = vmatpush1.msra.mxu0 0.0
    %3900 = vmatprep.subr.mxu0 0.0
    %3901 = vmatpush1.msra.mxu0 0.0
    %3902 = vmatprep.subr.mxu0 0.0
    %3903 = vmatpush1.msra.mxu0 0.0
    %3904 = vmatprep.subr.mxu0 0.0
    %3905 = vmatpush1.msra.mxu0 0.0
    %3906 = vmatprep.subr.mxu0 0.0
    %3907 = vmatpush1.msra.mxu0 0.0
    %3908 = vmatprep.subr.mxu0 0.0
    %3909 = vmatpush1.msra.mxu0 0.0
    %3910 = vmatprep.subr.mxu0 0.0
    %3911 = vmatpush1.msra.mxu0 0.0
    %3912 = vmatprep.subr.mxu0 0.0
    %3913 = vmatpush1.msra.mxu0 0.0
    %3914 = vmatprep.subr.mxu0 0.0
    %3915 = vmatpush1.msra.mxu0 0.0
    %3916 = vmatprep.subr.mxu0 0.0
    %3917 = vmatpush1.msra.mxu0 0.0
    %3918 = vmatprep.subr.mxu0 0.0
    %3919 = vmatpush1.msra.mxu0 0.0
    %3920 = vmatprep.subr.mxu0 0.0
    %3921 = vmatpush1.msra.mxu0 0.0
    %3922 = vmatprep.subr.mxu0 0.0
    %3923 = vmatpush1.msra.mxu0 0.0
    %3924 = vmatprep.subr.mxu0 0.0
    %3925 = vmatpush1.msra.mxu0 0.0
    %3926 = vmatprep.subr.mxu0 0.0
    %3927 = vmatpush1.msra.mxu0 0.0
    %3928 = vmatprep.subr.mxu0 0.0
    %3929 = vmatpush1.msra.mxu0 0.0
    %3930 = vmatprep.subr.mxu0 0.0
    %3931 = vmatpush1.msra.mxu0 0.0
    %3932 = vmatprep.subr.mxu0 0.0
    %3933 = vmatpush1.msra.mxu0 0.0
    %3934 = vmatprep.subr.mxu0 0.0
    %3935 = vmatpush1.msra.mxu0 0.0
    %3936 = vmatprep.subr.mxu0 0.0
    %3937 = vmatpush1.msra.mxu0 0.0
    %3938 = vmatprep.subr.mxu0 0.0
    %3939 = vmatpush1.msra.mxu0 0.0
    %3940 = vmatprep.subr.mxu0 0.0
    %3941 = vmatpush1.msra.mxu0 0.0
    %3942 = vmatprep.subr.mxu0 0.0
    %3943 = vmatpush1.msra.mxu0 0.0
    %3944 = vmatprep.subr.mxu0 0.0
    %3945 = vmatpush1.msra.mxu0 0.0
    %3946 = vmatprep.subr.mxu0 0.0
    %3947 = vmatpush1.msra.mxu0 0.0
    %3948 = vmatprep.mubr.f32.mxu0 0.0
    %3949 = vmatmul.mubr.f32.gmra.mrb[0].mxu0 %v3882
    %v3950 = vpop.f32.mrb[0].mxu0
    %v3951 = vadd.f32 %v45, %v3950
    %v3952 = vpop.f32.mrb[0].mxu0
    %3953 = vdwg.mxu0
    %v3954 = vxor.u32 %v3951, 2147483648
    %v3955 = vmul.f32 %v3954, 1.442695
    %v3956 = vpow.pop %v3955
    %v3957 = vadd.f32 %v3956, 1.0
    %v3958 = vrcp.pop %v3957
    %v3959 = vmul.f32 1.0, %v3958
    %v3960 = vmul.f32 %v3951, %v3959
    %v3961 = vadd.f32 %v3800, %v3960
    %v3963 = vsel %vm53, %v3880, 0
    %3965 = vmatprep.subr.mxu0 0.0
    %3966 = vmatpush1.msra.mxu0 %v39
    %3967 = vmatprep.subr.mxu0 0.0
    %3968 = vmatpush1.msra.mxu0 %v40
    %3969 = vmatprep.subr.mxu0 0.0
    %3970 = vmatpush1.msra.mxu0 %v41
    %3971 = vmatprep.subr.mxu0 0.0
    %3972 = vmatpush1.msra.mxu0 %v42
    %3973 = vmatprep.subr.mxu0 0.0
    %3974 = vmatpush1.msra.mxu0 0.0
    %3975 = vmatprep.subr.mxu0 0.0
    %3976 = vmatpush1.msra.mxu0 0.0
    %3977 = vmatprep.subr.mxu0 0.0
    %3978 = vmatpush1.msra.mxu0 0.0
    %3979 = vmatprep.subr.mxu0 0.0
    %3980 = vmatpush1.msra.mxu0 0.0
    %3981 = vmatprep.subr.mxu0 0.0
    %3982 = vmatpush1.msra.mxu0 0.0
    %3983 = vmatprep.subr.mxu0 0.0
    %3984 = vmatpush1.msra.mxu0 0.0
    %3985 = vmatprep.subr.mxu0 0.0
    %3986 = vmatpush1.msra.mxu0 0.0
    %3987 = vmatprep.subr.mxu0 0.0
    %3988 = vmatpush1.msra.mxu0 0.0
    %3989 = vmatprep.subr.mxu0 0.0
    %3990 = vmatpush1.msra.mxu0 0.0
    %3991 = vmatprep.subr.mxu0 0.0
    %3992 = vmatpush1.msra.mxu0 0.0
    %3993 = vmatprep.subr.mxu0 0.0
    %3994 = vmatpush1.msra.mxu0 0.0
    %3995 = vmatprep.subr.mxu0 0.0
    %3996 = vmatpush1.msra.mxu0 0.0
    %3997 = vmatprep.subr.mxu0 0.0
    %3998 = vmatpush1.msra.mxu0 0.0
    %3999 = vmatprep.subr.mxu0 0.0
    %4000 = vmatpush1.msra.mxu0 0.0
    %4001 = vmatprep.subr.mxu0 0.0
    %4002 = vmatpush1.msra.mxu0 0.0
    %4003 = vmatprep.subr.mxu0 0.0
    %4004 = vmatpush1.msra.mxu0 0.0
    %4005 = vmatprep.subr.mxu0 0.0
    %4006 = vmatpush1.msra.mxu0 0.0
    %4007 = vmatprep.subr.mxu0 0.0
    %4008 = vmatpush1.msra.mxu0 0.0
    %4009 = vmatprep.subr.mxu0 0.0
    %4010 = vmatpush1.msra.mxu0 0.0
    %4011 = vmatprep.subr.mxu0 0.0
    %4012 = vmatpush1.msra.mxu0 0.0
    %4013 = vmatprep.subr.mxu0 0.0
    %4014 = vmatpush1.msra.mxu0 0.0
    %4015 = vmatprep.subr.mxu0 0.0
    %4016 = vmatpush1.msra.mxu0 0.0
    %4017 = vmatprep.subr.mxu0 0.0
    %4018 = vmatpush1.msra.mxu0 0.0
    %4019 = vmatprep.subr.mxu0 0.0
    %4020 = vmatpush1.msra.mxu0 0.0
    %4021 = vmatprep.subr.mxu0 0.0
    %4022 = vmatpush1.msra.mxu0 0.0
    %4023 = vmatprep.subr.mxu0 0.0
    %4024 = vmatpush1.msra.mxu0 0.0
    %4025 = vmatprep.subr.mxu0 0.0
    %4026 = vmatpush1.msra.mxu0 0.0
    %4027 = vmatprep.subr.mxu0 0.0
    %4028 = vmatpush1.msra.mxu0 0.0
    %4029 = vmatprep.mubr.f32.mxu0 0.0
    %4030 = vmatmul.mubr.f32.gmra.mrb[0].mxu0 %v3963
    %v4031 = vpop.f32.mrb[0].mxu0
    %v4032 = vadd.f32 %v49, %v4031
    %v4033 = vpop.f32.mrb[0].mxu0
    %4034 = vdwg.mxu0
    %v4035 = vxor.u32 %v4032, 2147483648
    %v4036 = vmul.f32 %v4035, 1.442695
    %v4037 = vpow.pop %v4036
    %v4038 = vadd.f32 %v4037, 1.0
    %v4039 = vrcp.pop %v4038
    %v4040 = vmul.f32 1.0, %v4039
    %v4041 = vmul.f32 %v4032, %v4040
    %v4042 = vadd.f32 %v3880, %v4041
    %4043 = vst.msk [vmem:[#allocation2 + $0xb] sm:$0x1] %vm378, %v3961
    %v4045 = vlaneseq
    %v4046 = vshrl.u32 %v4045, 7
    %v4047 = vsub.s32 0, %v4046
    %v4048 = vrot.slane %v4042, %v4047
    %4049 = vrot.lane.b32.xlu0 %v4048, 32
    %v4050 = vpop.permute.xlu0 %4049
    %4052 = vst.msk [vmem:[#allocation2 + $0xb] sm:$0x1] %vm388, %v4050
    %v4054 = vsel %vm53, %v3961, 0
    %4056 = vmatprep.subr.mxu0 0.0
    %4057 = vmatpush1.msra.mxu0 %v24
    %4058 = vmatprep.subr.mxu0 0.0
    %4059 = vmatpush1.msra.mxu0 %v25
    %4060 = vmatprep.subr.mxu0 0.0
    %4061 = vmatpush1.msra.mxu0 %v26
    %4062 = vmatprep.subr.mxu0 0.0
    %4063 = vmatpush1.msra.mxu0 %v27
    %4064 = vmatprep.subr.mxu0 0.0
    %4065 = vmatpush1.msra.mxu0 0.0
    %4066 = vmatprep.subr.mxu0 0.0
    %4067 = vmatpush1.msra.mxu0 0.0
    %4068 = vmatprep.subr.mxu0 0.0
    %4069 = vmatpush1.msra.mxu0 0.0
    %4070 = vmatprep.subr.mxu0 0.0
    %4071 = vmatpush1.msra.mxu0 0.0
    %4072 = vmatprep.subr.mxu0 0.0
    %4073 = vmatpush1.msra.mxu0 0.0
    %4074 = vmatprep.subr.mxu0 0.0
    %4075 = vmatpush1.msra.mxu0 0.0
    %4076 = vmatprep.subr.mxu0 0.0
    %4077 = vmatpush1.msra.mxu0 0.0
    %4078 = vmatprep.subr.mxu0 0.0
    %4079 = vmatpush1.msra.mxu0 0.0
    %4080 = vmatprep.subr.mxu0 0.0
    %4081 = vmatpush1.msra.mxu0 0.0
    %4082 = vmatprep.subr.mxu0 0.0
    %4083 = vmatpush1.msra.mxu0 0.0
    %4084 = vmatprep.subr.mxu0 0.0
    %4085 = vmatpush1.msra.mxu0 0.0
    %4086 = vmatprep.subr.mxu0 0.0
    %4087 = vmatpush1.msra.mxu0 0.0
    %4088 = vmatprep.subr.mxu0 0.0
    %4089 = vmatpush1.msra.mxu0 0.0
    %4090 = vmatprep.subr.mxu0 0.0
    %4091 = vmatpush1.msra.mxu0 0.0
    %4092 = vmatprep.subr.mxu0 0.0
    %4093 = vmatpush1.msra.mxu0 0.0
    %4094 = vmatprep.subr.mxu0 0.0
    %4095 = vmatpush1.msra.mxu0 0.0
    %4096 = vmatprep.subr.mxu0 0.0
    %4097 = vmatpush1.msra.mxu0 0.0
    %4098 = vmatprep.subr.mxu0 0.0
    %4099 = vmatpush1.msra.mxu0 0.0
    %4100 = vmatprep.subr.mxu0 0.0
    %4101 = vmatpush1.msra.mxu0 0.0
    %4102 = vmatprep.subr.mxu0 0.0
    %4103 = vmatpush1.msra.mxu0 0.0
    %4104 = vmatprep.subr.mxu0 0.0
    %4105 = vmatpush1.msra.mxu0 0.0
    %4106 = vmatprep.subr.mxu0 0.0
    %4107 = vmatpush1.msra.mxu0 0.0
    %4108 = vmatprep.subr.mxu0 0.0
    %4109 = vmatpush1.msra.mxu0 0.0
    %4110 = vmatprep.subr.mxu0 0.0
    %4111 = vmatpush1.msra.mxu0 0.0
    %4112 = vmatprep.subr.mxu0 0.0
    %4113 = vmatpush1.msra.mxu0 0.0
    %4114 = vmatprep.subr.mxu0 0.0
    %4115 = vmatpush1.msra.mxu0 0.0
    %4116 = vmatprep.subr.mxu0 0.0
    %4117 = vmatpush1.msra.mxu0 0.0
    %4118 = vmatprep.subr.mxu0 0.0
    %4119 = vmatpush1.msra.mxu0 0.0
    %4120 = vmatprep.mubr.f32.mxu0 0.0
    %4121 = vmatmul.mubr.f32.gmra.mrb[0].mxu0 %v4054
    %v4122 = vpop.f32.mrb[0].mxu0
    %v4123 = vadd.f32 %v43, %v4122
    %v4124 = vpop.f32.mrb[0].mxu0
    %4125 = vdwg.mxu0
    %v4126 = vxor.u32 %v4123, 2147483648
    %v4127 = vmul.f32 %v4126, 1.442695
    %v4128 = vpow.pop %v4127
    %v4129 = vadd.f32 %v4128, 1.0
    %v4130 = vrcp.pop %v4129
    %v4131 = vmul.f32 1.0, %v4130
    %v4132 = vmul.f32 %v4123, %v4131
    %v4133 = vadd.f32 %v3961, %v4132
    %v4134 = vsel %vm53, %v4042, 0
    %4136 = vmatprep.subr.mxu0 0.0
    %4137 = vmatpush1.msra.mxu0 %v34
    %4138 = vmatprep.subr.mxu0 0.0
    %4139 = vmatpush1.msra.mxu0 %v35
    %4140 = vmatprep.subr.mxu0 0.0
    %4141 = vmatpush1.msra.mxu0 %v36
    %4142 = vmatprep.subr.mxu0 0.0
    %4143 = vmatpush1.msra.mxu0 %v37
    %4144 = vmatprep.subr.mxu0 0.0
    %4145 = vmatpush1.msra.mxu0 0.0
    %4146 = vmatprep.subr.mxu0 0.0
    %4147 = vmatpush1.msra.mxu0 0.0
    %4148 = vmatprep.subr.mxu0 0.0
    %4149 = vmatpush1.msra.mxu0 0.0
    %4150 = vmatprep.subr.mxu0 0.0
    %4151 = vmatpush1.msra.mxu0 0.0
    %4152 = vmatprep.subr.mxu0 0.0
    %4153 = vmatpush1.msra.mxu0 0.0
    %4154 = vmatprep.subr.mxu0 0.0
    %4155 = vmatpush1.msra.mxu0 0.0
    %4156 = vmatprep.subr.mxu0 0.0
    %4157 = vmatpush1.msra.mxu0 0.0
    %4158 = vmatprep.subr.mxu0 0.0
    %4159 = vmatpush1.msra.mxu0 0.0
    %4160 = vmatprep.subr.mxu0 0.0
    %4161 = vmatpush1.msra.mxu0 0.0
    %4162 = vmatprep.subr.mxu0 0.0
    %4163 = vmatpush1.msra.mxu0 0.0
    %4164 = vmatprep.subr.mxu0 0.0
    %4165 = vmatpush1.msra.mxu0 0.0
    %4166 = vmatprep.subr.mxu0 0.0
    %4167 = vmatpush1.msra.mxu0 0.0
    %4168 = vmatprep.subr.mxu0 0.0
    %4169 = vmatpush1.msra.mxu0 0.0
    %4170 = vmatprep.subr.mxu0 0.0
    %4171 = vmatpush1.msra.mxu0 0.0
    %4172 = vmatprep.subr.mxu0 0.0
    %4173 = vmatpush1.msra.mxu0 0.0
    %4174 = vmatprep.subr.mxu0 0.0
    %4175 = vmatpush1.msra.mxu0 0.0
    %4176 = vmatprep.subr.mxu0 0.0
    %4177 = vmatpush1.msra.mxu0 0.0
    %4178 = vmatprep.subr.mxu0 0.0
    %4179 = vmatpush1.msra.mxu0 0.0
    %4180 = vmatprep.subr.mxu0 0.0
    %4181 = vmatpush1.msra.mxu0 0.0
    %4182 = vmatprep.subr.mxu0 0.0
    %4183 = vmatpush1.msra.mxu0 0.0
    %4184 = vmatprep.subr.mxu0 0.0
    %4185 = vmatpush1.msra.mxu0 0.0
    %4186 = vmatprep.subr.mxu0 0.0
    %4187 = vmatpush1.msra.mxu0 0.0
    %4188 = vmatprep.subr.mxu0 0.0
    %4189 = vmatpush1.msra.mxu0 0.0
    %4190 = vmatprep.subr.mxu0 0.0
    %4191 = vmatpush1.msra.mxu0 0.0
    %4192 = vmatprep.subr.mxu0 0.0
    %4193 = vmatpush1.msra.mxu0 0.0
    %4194 = vmatprep.subr.mxu0 0.0
    %4195 = vmatpush1.msra.mxu0 0.0
    %4196 = vmatprep.subr.mxu0 0.0
    %4197 = vmatpush1.msra.mxu0 0.0
    %4198 = vmatprep.subr.mxu0 0.0
    %4199 = vmatpush1.msra.mxu0 0.0
    %4200 = vmatprep.mubr.f32.mxu0 0.0
    %4201 = vmatmul.mubr.f32.gmra.mrb[0].mxu0 %v4134
    %v4202 = vpop.f32.mrb[0].mxu0
    %v4203 = vadd.f32 %v47, %v4202
    %v4204 = vpop.f32.mrb[0].mxu0
    %4205 = vdwg.mxu0
    %v4206 = vxor.u32 %v4203, 2147483648
    %v4207 = vmul.f32 %v4206, 1.442695
    %v4208 = vpow.pop %v4207
    %v4209 = vadd.f32 %v4208, 1.0
    %v4210 = vrcp.pop %v4209
    %v4211 = vmul.f32 1.0, %v4210
    %v4212 = vmul.f32 %v4203, %v4211
    %v4213 = vadd.f32 %v4042, %v4212
    %v4215 = vsel %vm53, %v4133, 0
    %4217 = vmatprep.subr.mxu0 0.0
    %4218 = vmatpush1.msra.mxu0 %v29
    %4219 = vmatprep.subr.mxu0 0.0
    %4220 = vmatpush1.msra.mxu0 %v30
    %4221 = vmatprep.subr.mxu0 0.0
    %4222 = vmatpush1.msra.mxu0 %v31
    %4223 = vmatprep.subr.mxu0 0.0
    %4224 = vmatpush1.msra.mxu0 %v32
    %4225 = vmatprep.subr.mxu0 0.0
    %4226 = vmatpush1.msra.mxu0 0.0
    %4227 = vmatprep.subr.mxu0 0.0
    %4228 = vmatpush1.msra.mxu0 0.0
    %4229 = vmatprep.subr.mxu0 0.0
    %4230 = vmatpush1.msra.mxu0 0.0
    %4231 = vmatprep.subr.mxu0 0.0
    %4232 = vmatpush1.msra.mxu0 0.0
    %4233 = vmatprep.subr.mxu0 0.0
    %4234 = vmatpush1.msra.mxu0 0.0
    %4235 = vmatprep.subr.mxu0 0.0
    %4236 = vmatpush1.msra.mxu0 0.0
    %4237 = vmatprep.subr.mxu0 0.0
    %4238 = vmatpush1.msra.mxu0 0.0
    %4239 = vmatprep.subr.mxu0 0.0
    %4240 = vmatpush1.msra.mxu0 0.0
    %4241 = vmatprep.subr.mxu0 0.0
    %4242 = vmatpush1.msra.mxu0 0.0
    %4243 = vmatprep.subr.mxu0 0.0
    %4244 = vmatpush1.msra.mxu0 0.0
    %4245 = vmatprep.subr.mxu0 0.0
    %4246 = vmatpush1.msra.mxu0 0.0
    %4247 = vmatprep.subr.mxu0 0.0
    %4248 = vmatpush1.msra.mxu0 0.0
    %4249 = vmatprep.subr.mxu0 0.0
    %4250 = vmatpush1.msra.mxu0 0.0
    %4251 = vmatprep.subr.mxu0 0.0
    %4252 = vmatpush1.msra.mxu0 0.0
    %4253 = vmatprep.subr.mxu0 0.0
    %4254 = vmatpush1.msra.mxu0 0.0
    %4255 = vmatprep.subr.mxu0 0.0
    %4256 = vmatpush1.msra.mxu0 0.0
    %4257 = vmatprep.subr.mxu0 0.0
    %4258 = vmatpush1.msra.mxu0 0.0
    %4259 = vmatprep.subr.mxu0 0.0
    %4260 = vmatpush1.msra.mxu0 0.0
    %4261 = vmatprep.subr.mxu0 0.0
    %4262 = vmatpush1.msra.mxu0 0.0
    %4263 = vmatprep.subr.mxu0 0.0
    %4264 = vmatpush1.msra.mxu0 0.0
    %4265 = vmatprep.subr.mxu0 0.0
    %4266 = vmatpush1.msra.mxu0 0.0
    %4267 = vmatprep.subr.mxu0 0.0
    %4268 = vmatpush1.msra.mxu0 0.0
    %4269 = vmatprep.subr.mxu0 0.0
    %4270 = vmatpush1.msra.mxu0 0.0
    %4271 = vmatprep.subr.mxu0 0.0
    %4272 = vmatpush1.msra.mxu0 0.0
    %4273 = vmatprep.subr.mxu0 0.0
    %4274 = vmatpush1.msra.mxu0 0.0
    %4275 = vmatprep.subr.mxu0 0.0
    %4276 = vmatpush1.msra.mxu0 0.0
    %4277 = vmatprep.subr.mxu0 0.0
    %4278 = vmatpush1.msra.mxu0 0.0
    %4279 = vmatprep.subr.mxu0 0.0
    %4280 = vmatpush1.msra.mxu0 0.0
    %4281 = vmatprep.mubr.f32.mxu0 0.0
    %4282 = vmatmul.mubr.f32.gmra.mrb[0].mxu0 %v4215
    %v4283 = vpop.f32.mrb[0].mxu0
    %v4284 = vadd.f32 %v45, %v4283
    %v4285 = vpop.f32.mrb[0].mxu0
    %4286 = vdwg.mxu0
    %v4287 = vxor.u32 %v4284, 2147483648
    %v4288 = vmul.f32 %v4287, 1.442695
    %v4289 = vpow.pop %v4288
    %v4290 = vadd.f32 %v4289, 1.0
    %v4291 = vrcp.pop %v4290
    %v4292 = vmul.f32 1.0, %v4291
    %v4293 = vmul.f32 %v4284, %v4292
    %v4294 = vadd.f32 %v4133, %v4293
    %v4296 = vsel %vm53, %v4213, 0
    %4298 = vmatprep.subr.mxu0 0.0
    %4299 = vmatpush1.msra.mxu0 %v39
    %4300 = vmatprep.subr.mxu0 0.0
    %4301 = vmatpush1.msra.mxu0 %v40
    %4302 = vmatprep.subr.mxu0 0.0
    %4303 = vmatpush1.msra.mxu0 %v41
    %4304 = vmatprep.subr.mxu0 0.0
    %4305 = vmatpush1.msra.mxu0 %v42
    %4306 = vmatprep.subr.mxu0 0.0
    %4307 = vmatpush1.msra.mxu0 0.0
    %4308 = vmatprep.subr.mxu0 0.0
    %4309 = vmatpush1.msra.mxu0 0.0
    %4310 = vmatprep.subr.mxu0 0.0
    %4311 = vmatpush1.msra.mxu0 0.0
    %4312 = vmatprep.subr.mxu0 0.0
    %4313 = vmatpush1.msra.mxu0 0.0
    %4314 = vmatprep.subr.mxu0 0.0
    %4315 = vmatpush1.msra.mxu0 0.0
    %4316 = vmatprep.subr.mxu0 0.0
    %4317 = vmatpush1.msra.mxu0 0.0
    %4318 = vmatprep.subr.mxu0 0.0
    %4319 = vmatpush1.msra.mxu0 0.0
    %4320 = vmatprep.subr.mxu0 0.0
    %4321 = vmatpush1.msra.mxu0 0.0
    %4322 = vmatprep.subr.mxu0 0.0
    %4323 = vmatpush1.msra.mxu0 0.0
    %4324 = vmatprep.subr.mxu0 0.0
    %4325 = vmatpush1.msra.mxu0 0.0
    %4326 = vmatprep.subr.mxu0 0.0
    %4327 = vmatpush1.msra.mxu0 0.0
    %4328 = vmatprep.subr.mxu0 0.0
    %4329 = vmatpush1.msra.mxu0 0.0
    %4330 = vmatprep.subr.mxu0 0.0
    %4331 = vmatpush1.msra.mxu0 0.0
    %4332 = vmatprep.subr.mxu0 0.0
    %4333 = vmatpush1.msra.mxu0 0.0
    %4334 = vmatprep.subr.mxu0 0.0
    %4335 = vmatpush1.msra.mxu0 0.0
    %4336 = vmatprep.subr.mxu0 0.0
    %4337 = vmatpush1.msra.mxu0 0.0
    %4338 = vmatprep.subr.mxu0 0.0
    %4339 = vmatpush1.msra.mxu0 0.0
    %4340 = vmatprep.subr.mxu0 0.0
    %4341 = vmatpush1.msra.mxu0 0.0
    %4342 = vmatprep.subr.mxu0 0.0
    %4343 = vmatpush1.msra.mxu0 0.0
    %4344 = vmatprep.subr.mxu0 0.0
    %4345 = vmatpush1.msra.mxu0 0.0
    %4346 = vmatprep.subr.mxu0 0.0
    %4347 = vmatpush1.msra.mxu0 0.0
    %4348 = vmatprep.subr.mxu0 0.0
    %4349 = vmatpush1.msra.mxu0 0.0
    %4350 = vmatprep.subr.mxu0 0.0
    %4351 = vmatpush1.msra.mxu0 0.0
    %4352 = vmatprep.subr.mxu0 0.0
    %4353 = vmatpush1.msra.mxu0 0.0
    %4354 = vmatprep.subr.mxu0 0.0
    %4355 = vmatpush1.msra.mxu0 0.0
    %4356 = vmatprep.subr.mxu0 0.0
    %4357 = vmatpush1.msra.mxu0 0.0
    %4358 = vmatprep.subr.mxu0 0.0
    %4359 = vmatpush1.msra.mxu0 0.0
    %4360 = vmatprep.subr.mxu0 0.0
    %4361 = vmatpush1.msra.mxu0 0.0
    %4362 = vmatprep.mubr.f32.mxu0 0.0
    %4363 = vmatmul.mubr.f32.gmra.mrb[0].mxu0 %v4296
    %v4364 = vpop.f32.mrb[0].mxu0
    %v4365 = vadd.f32 %v49, %v4364
    %v4366 = vpop.f32.mrb[0].mxu0
    %4367 = vdwg.mxu0
    %v4368 = vxor.u32 %v4365, 2147483648
    %v4369 = vmul.f32 %v4368, 1.442695
    %v4370 = vpow.pop %v4369
    %v4371 = vadd.f32 %v4370, 1.0
    %v4372 = vrcp.pop %v4371
    %v4373 = vmul.f32 1.0, %v4372
    %v4374 = vmul.f32 %v4365, %v4373
    %v4375 = vadd.f32 %v4213, %v4374
    %4376 = vst.msk [vmem:[#allocation2 + $0xc] sm:$0x1] %vm378, %v4294
    %v4378 = vlaneseq
    %v4379 = vshrl.u32 %v4378, 7
    %v4380 = vsub.s32 0, %v4379
    %v4381 = vrot.slane %v4375, %v4380
    %4382 = vrot.lane.b32.xlu0 %v4381, 32
    %v4383 = vpop.permute.xlu0 %4382
    %4385 = vst.msk [vmem:[#allocation2 + $0xc] sm:$0x1] %vm388, %v4383
    %v4387 = vsel %vm53, %v4294, 0
    %4389 = vmatprep.subr.mxu0 0.0
    %4390 = vmatpush1.msra.mxu0 %v24
    %4391 = vmatprep.subr.mxu0 0.0
    %4392 = vmatpush1.msra.mxu0 %v25
    %4393 = vmatprep.subr.mxu0 0.0
    %4394 = vmatpush1.msra.mxu0 %v26
    %4395 = vmatprep.subr.mxu0 0.0
    %4396 = vmatpush1.msra.mxu0 %v27
    %4397 = vmatprep.subr.mxu0 0.0
    %4398 = vmatpush1.msra.mxu0 0.0
    %4399 = vmatprep.subr.mxu0 0.0
    %4400 = vmatpush1.msra.mxu0 0.0
    %4401 = vmatprep.subr.mxu0 0.0
    %4402 = vmatpush1.msra.mxu0 0.0
    %4403 = vmatprep.subr.mxu0 0.0
    %4404 = vmatpush1.msra.mxu0 0.0
    %4405 = vmatprep.subr.mxu0 0.0
    %4406 = vmatpush1.msra.mxu0 0.0
    %4407 = vmatprep.subr.mxu0 0.0
    %4408 = vmatpush1.msra.mxu0 0.0
    %4409 = vmatprep.subr.mxu0 0.0
    %4410 = vmatpush1.msra.mxu0 0.0
    %4411 = vmatprep.subr.mxu0 0.0
    %4412 = vmatpush1.msra.mxu0 0.0
    %4413 = vmatprep.subr.mxu0 0.0
    %4414 = vmatpush1.msra.mxu0 0.0
    %4415 = vmatprep.subr.mxu0 0.0
    %4416 = vmatpush1.msra.mxu0 0.0
    %4417 = vmatprep.subr.mxu0 0.0
    %4418 = vmatpush1.msra.mxu0 0.0
    %4419 = vmatprep.subr.mxu0 0.0
    %4420 = vmatpush1.msra.mxu0 0.0
    %4421 = vmatprep.subr.mxu0 0.0
    %4422 = vmatpush1.msra.mxu0 0.0
    %4423 = vmatprep.subr.mxu0 0.0
    %4424 = vmatpush1.msra.mxu0 0.0
    %4425 = vmatprep.subr.mxu0 0.0
    %4426 = vmatpush1.msra.mxu0 0.0
    %4427 = vmatprep.subr.mxu0 0.0
    %4428 = vmatpush1.msra.mxu0 0.0
    %4429 = vmatprep.subr.mxu0 0.0
    %4430 = vmatpush1.msra.mxu0 0.0
    %4431 = vmatprep.subr.mxu0 0.0
    %4432 = vmatpush1.msra.mxu0 0.0
    %4433 = vmatprep.subr.mxu0 0.0
    %4434 = vmatpush1.msra.mxu0 0.0
    %4435 = vmatprep.subr.mxu0 0.0
    %4436 = vmatpush1.msra.mxu0 0.0
    %4437 = vmatprep.subr.mxu0 0.0
    %4438 = vmatpush1.msra.mxu0 0.0
    %4439 = vmatprep.subr.mxu0 0.0
    %4440 = vmatpush1.msra.mxu0 0.0
    %4441 = vmatprep.subr.mxu0 0.0
    %4442 = vmatpush1.msra.mxu0 0.0
    %4443 = vmatprep.subr.mxu0 0.0
    %4444 = vmatpush1.msra.mxu0 0.0
    %4445 = vmatprep.subr.mxu0 0.0
    %4446 = vmatpush1.msra.mxu0 0.0
    %4447 = vmatprep.subr.mxu0 0.0
    %4448 = vmatpush1.msra.mxu0 0.0
    %4449 = vmatprep.subr.mxu0 0.0
    %4450 = vmatpush1.msra.mxu0 0.0
    %4451 = vmatprep.subr.mxu0 0.0
    %4452 = vmatpush1.msra.mxu0 0.0
    %4453 = vmatprep.mubr.f32.mxu0 0.0
    %4454 = vmatmul.mubr.f32.gmra.mrb[0].mxu0 %v4387
    %v4455 = vpop.f32.mrb[0].mxu0
    %v4456 = vadd.f32 %v43, %v4455
    %v4457 = vpop.f32.mrb[0].mxu0
    %4458 = vdwg.mxu0
    %v4459 = vxor.u32 %v4456, 2147483648
    %v4460 = vmul.f32 %v4459, 1.442695
    %v4461 = vpow.pop %v4460
    %v4462 = vadd.f32 %v4461, 1.0
    %v4463 = vrcp.pop %v4462
    %v4464 = vmul.f32 1.0, %v4463
    %v4465 = vmul.f32 %v4456, %v4464
    %v4466 = vadd.f32 %v4294, %v4465
    %v4467 = vsel %vm53, %v4375, 0
    %4469 = vmatprep.subr.mxu0 0.0
    %4470 = vmatpush1.msra.mxu0 %v34
    %4471 = vmatprep.subr.mxu0 0.0
    %4472 = vmatpush1.msra.mxu0 %v35
    %4473 = vmatprep.subr.mxu0 0.0
    %4474 = vmatpush1.msra.mxu0 %v36
    %4475 = vmatprep.subr.mxu0 0.0
    %4476 = vmatpush1.msra.mxu0 %v37
    %4477 = vmatprep.subr.mxu0 0.0
    %4478 = vmatpush1.msra.mxu0 0.0
    %4479 = vmatprep.subr.mxu0 0.0
    %4480 = vmatpush1.msra.mxu0 0.0
    %4481 = vmatprep.subr.mxu0 0.0
    %4482 = vmatpush1.msra.mxu0 0.0
    %4483 = vmatprep.subr.mxu0 0.0
    %4484 = vmatpush1.msra.mxu0 0.0
    %4485 = vmatprep.subr.mxu0 0.0
    %4486 = vmatpush1.msra.mxu0 0.0
    %4487 = vmatprep.subr.mxu0 0.0
    %4488 = vmatpush1.msra.mxu0 0.0
    %4489 = vmatprep.subr.mxu0 0.0
    %4490 = vmatpush1.msra.mxu0 0.0
    %4491 = vmatprep.subr.mxu0 0.0
    %4492 = vmatpush1.msra.mxu0 0.0
    %4493 = vmatprep.subr.mxu0 0.0
    %4494 = vmatpush1.msra.mxu0 0.0
    %4495 = vmatprep.subr.mxu0 0.0
    %4496 = vmatpush1.msra.mxu0 0.0
    %4497 = vmatprep.subr.mxu0 0.0
    %4498 = vmatpush1.msra.mxu0 0.0
    %4499 = vmatprep.subr.mxu0 0.0
    %4500 = vmatpush1.msra.mxu0 0.0
    %4501 = vmatprep.subr.mxu0 0.0
    %4502 = vmatpush1.msra.mxu0 0.0
    %4503 = vmatprep.subr.mxu0 0.0
    %4504 = vmatpush1.msra.mxu0 0.0
    %4505 = vmatprep.subr.mxu0 0.0
    %4506 = vmatpush1.msra.mxu0 0.0
    %4507 = vmatprep.subr.mxu0 0.0
    %4508 = vmatpush1.msra.mxu0 0.0
    %4509 = vmatprep.subr.mxu0 0.0
    %4510 = vmatpush1.msra.mxu0 0.0
    %4511 = vmatprep.subr.mxu0 0.0
    %4512 = vmatpush1.msra.mxu0 0.0
    %4513 = vmatprep.subr.mxu0 0.0
    %4514 = vmatpush1.msra.mxu0 0.0
    %4515 = vmatprep.subr.mxu0 0.0
    %4516 = vmatpush1.msra.mxu0 0.0
    %4517 = vmatprep.subr.mxu0 0.0
    %4518 = vmatpush1.msra.mxu0 0.0
    %4519 = vmatprep.subr.mxu0 0.0
    %4520 = vmatpush1.msra.mxu0 0.0
    %4521 = vmatprep.subr.mxu0 0.0
    %4522 = vmatpush1.msra.mxu0 0.0
    %4523 = vmatprep.subr.mxu0 0.0
    %4524 = vmatpush1.msra.mxu0 0.0
    %4525 = vmatprep.subr.mxu0 0.0
    %4526 = vmatpush1.msra.mxu0 0.0
    %4527 = vmatprep.subr.mxu0 0.0
    %4528 = vmatpush1.msra.mxu0 0.0
    %4529 = vmatprep.subr.mxu0 0.0
    %4530 = vmatpush1.msra.mxu0 0.0
    %4531 = vmatprep.subr.mxu0 0.0
    %4532 = vmatpush1.msra.mxu0 0.0
    %4533 = vmatprep.mubr.f32.mxu0 0.0
    %4534 = vmatmul.mubr.f32.gmra.mrb[0].mxu0 %v4467
    %v4535 = vpop.f32.mrb[0].mxu0
    %v4536 = vadd.f32 %v47, %v4535
    %v4537 = vpop.f32.mrb[0].mxu0
    %4538 = vdwg.mxu0
    %v4539 = vxor.u32 %v4536, 2147483648
    %v4540 = vmul.f32 %v4539, 1.442695
    %v4541 = vpow.pop %v4540
    %v4542 = vadd.f32 %v4541, 1.0
    %v4543 = vrcp.pop %v4542
    %v4544 = vmul.f32 1.0, %v4543
    %v4545 = vmul.f32 %v4536, %v4544
    %v4546 = vadd.f32 %v4375, %v4545
    %v4548 = vsel %vm53, %v4466, 0
    %4550 = vmatprep.subr.mxu0 0.0
    %4551 = vmatpush1.msra.mxu0 %v29
    %4552 = vmatprep.subr.mxu0 0.0
    %4553 = vmatpush1.msra.mxu0 %v30
    %4554 = vmatprep.subr.mxu0 0.0
    %4555 = vmatpush1.msra.mxu0 %v31
    %4556 = vmatprep.subr.mxu0 0.0
    %4557 = vmatpush1.msra.mxu0 %v32
    %4558 = vmatprep.subr.mxu0 0.0
    %4559 = vmatpush1.msra.mxu0 0.0
    %4560 = vmatprep.subr.mxu0 0.0
    %4561 = vmatpush1.msra.mxu0 0.0
    %4562 = vmatprep.subr.mxu0 0.0
    %4563 = vmatpush1.msra.mxu0 0.0
    %4564 = vmatprep.subr.mxu0 0.0
    %4565 = vmatpush1.msra.mxu0 0.0
    %4566 = vmatprep.subr.mxu0 0.0
    %4567 = vmatpush1.msra.mxu0 0.0
    %4568 = vmatprep.subr.mxu0 0.0
    %4569 = vmatpush1.msra.mxu0 0.0
    %4570 = vmatprep.subr.mxu0 0.0
    %4571 = vmatpush1.msra.mxu0 0.0
    %4572 = vmatprep.subr.mxu0 0.0
    %4573 = vmatpush1.msra.mxu0 0.0
    %4574 = vmatprep.subr.mxu0 0.0
    %4575 = vmatpush1.msra.mxu0 0.0
    %4576 = vmatprep.subr.mxu0 0.0
    %4577 = vmatpush1.msra.mxu0 0.0
    %4578 = vmatprep.subr.mxu0 0.0
    %4579 = vmatpush1.msra.mxu0 0.0
    %4580 = vmatprep.subr.mxu0 0.0
    %4581 = vmatpush1.msra.mxu0 0.0
    %4582 = vmatprep.subr.mxu0 0.0
    %4583 = vmatpush1.msra.mxu0 0.0
    %4584 = vmatprep.subr.mxu0 0.0
    %4585 = vmatpush1.msra.mxu0 0.0
    %4586 = vmatprep.subr.mxu0 0.0
    %4587 = vmatpush1.msra.mxu0 0.0
    %4588 = vmatprep.subr.mxu0 0.0
    %4589 = vmatpush1.msra.mxu0 0.0
    %4590 = vmatprep.subr.mxu0 0.0
    %4591 = vmatpush1.msra.mxu0 0.0
    %4592 = vmatprep.subr.mxu0 0.0
    %4593 = vmatpush1.msra.mxu0 0.0
    %4594 = vmatprep.subr.mxu0 0.0
    %4595 = vmatpush1.msra.mxu0 0.0
    %4596 = vmatprep.subr.mxu0 0.0
    %4597 = vmatpush1.msra.mxu0 0.0
    %4598 = vmatprep.subr.mxu0 0.0
    %4599 = vmatpush1.msra.mxu0 0.0
    %4600 = vmatprep.subr.mxu0 0.0
    %4601 = vmatpush1.msra.mxu0 0.0
    %4602 = vmatprep.subr.mxu0 0.0
    %4603 = vmatpush1.msra.mxu0 0.0
    %4604 = vmatprep.subr.mxu0 0.0
    %4605 = vmatpush1.msra.mxu0 0.0
    %4606 = vmatprep.subr.mxu0 0.0
    %4607 = vmatpush1.msra.mxu0 0.0
    %4608 = vmatprep.subr.mxu0 0.0
    %4609 = vmatpush1.msra.mxu0 0.0
    %4610 = vmatprep.subr.mxu0 0.0
    %4611 = vmatpush1.msra.mxu0 0.0
    %4612 = vmatprep.subr.mxu0 0.0
    %4613 = vmatpush1.msra.mxu0 0.0
    %4614 = vmatprep.mubr.f32.mxu0 0.0
    %4615 = vmatmul.mubr.f32.gmra.mrb[0].mxu0 %v4548
    %v4616 = vpop.f32.mrb[0].mxu0
    %v4617 = vadd.f32 %v45, %v4616
    %v4618 = vpop.f32.mrb[0].mxu0
    %4619 = vdwg.mxu0
    %v4620 = vxor.u32 %v4617, 2147483648
    %v4621 = vmul.f32 %v4620, 1.442695
    %v4622 = vpow.pop %v4621
    %v4623 = vadd.f32 %v4622, 1.0
    %v4624 = vrcp.pop %v4623
    %v4625 = vmul.f32 1.0, %v4624
    %v4626 = vmul.f32 %v4617, %v4625
    %v4627 = vadd.f32 %v4466, %v4626
    %v4629 = vsel %vm53, %v4546, 0
    %4631 = vmatprep.subr.mxu0 0.0
    %4632 = vmatpush1.msra.mxu0 %v39
    %4633 = vmatprep.subr.mxu0 0.0
    %4634 = vmatpush1.msra.mxu0 %v40
    %4635 = vmatprep.subr.mxu0 0.0
    %4636 = vmatpush1.msra.mxu0 %v41
    %4637 = vmatprep.subr.mxu0 0.0
    %4638 = vmatpush1.msra.mxu0 %v42
    %4639 = vmatprep.subr.mxu0 0.0
    %4640 = vmatpush1.msra.mxu0 0.0
    %4641 = vmatprep.subr.mxu0 0.0
    %4642 = vmatpush1.msra.mxu0 0.0
    %4643 = vmatprep.subr.mxu0 0.0
    %4644 = vmatpush1.msra.mxu0 0.0
    %4645 = vmatprep.subr.mxu0 0.0
    %4646 = vmatpush1.msra.mxu0 0.0
    %4647 = vmatprep.subr.mxu0 0.0
    %4648 = vmatpush1.msra.mxu0 0.0
    %4649 = vmatprep.subr.mxu0 0.0
    %4650 = vmatpush1.msra.mxu0 0.0
    %4651 = vmatprep.subr.mxu0 0.0
    %4652 = vmatpush1.msra.mxu0 0.0
    %4653 = vmatprep.subr.mxu0 0.0
    %4654 = vmatpush1.msra.mxu0 0.0
    %4655 = vmatprep.subr.mxu0 0.0
    %4656 = vmatpush1.msra.mxu0 0.0
    %4657 = vmatprep.subr.mxu0 0.0
    %4658 = vmatpush1.msra.mxu0 0.0
    %4659 = vmatprep.subr.mxu0 0.0
    %4660 = vmatpush1.msra.mxu0 0.0
    %4661 = vmatprep.subr.mxu0 0.0
    %4662 = vmatpush1.msra.mxu0 0.0
    %4663 = vmatprep.subr.mxu0 0.0
    %4664 = vmatpush1.msra.mxu0 0.0
    %4665 = vmatprep.subr.mxu0 0.0
    %4666 = vmatpush1.msra.mxu0 0.0
    %4667 = vmatprep.subr.mxu0 0.0
    %4668 = vmatpush1.msra.mxu0 0.0
    %4669 = vmatprep.subr.mxu0 0.0
    %4670 = vmatpush1.msra.mxu0 0.0
    %4671 = vmatprep.subr.mxu0 0.0
    %4672 = vmatpush1.msra.mxu0 0.0
    %4673 = vmatprep.subr.mxu0 0.0
    %4674 = vmatpush1.msra.mxu0 0.0
    %4675 = vmatprep.subr.mxu0 0.0
    %4676 = vmatpush1.msra.mxu0 0.0
    %4677 = vmatprep.subr.mxu0 0.0
    %4678 = vmatpush1.msra.mxu0 0.0
    %4679 = vmatprep.subr.mxu0 0.0
    %4680 = vmatpush1.msra.mxu0 0.0
    %4681 = vmatprep.subr.mxu0 0.0
    %4682 = vmatpush1.msra.mxu0 0.0
    %4683 = vmatprep.subr.mxu0 0.0
    %4684 = vmatpush1.msra.mxu0 0.0
    %4685 = vmatprep.subr.mxu0 0.0
    %4686 = vmatpush1.msra.mxu0 0.0
    %4687 = vmatprep.subr.mxu0 0.0
    %4688 = vmatpush1.msra.mxu0 0.0
    %4689 = vmatprep.subr.mxu0 0.0
    %4690 = vmatpush1.msra.mxu0 0.0
    %4691 = vmatprep.subr.mxu0 0.0
    %4692 = vmatpush1.msra.mxu0 0.0
    %4693 = vmatprep.subr.mxu0 0.0
    %4694 = vmatpush1.msra.mxu0 0.0
    %4695 = vmatprep.mubr.f32.mxu0 0.0
    %4696 = vmatmul.mubr.f32.gmra.mrb[0].mxu0 %v4629
    %v4697 = vpop.f32.mrb[0].mxu0
    %v4698 = vadd.f32 %v49, %v4697
    %v4699 = vpop.f32.mrb[0].mxu0
    %4700 = vdwg.mxu0
    %v4701 = vxor.u32 %v4698, 2147483648
    %v4702 = vmul.f32 %v4701, 1.442695
    %v4703 = vpow.pop %v4702
    %v4704 = vadd.f32 %v4703, 1.0
    %v4705 = vrcp.pop %v4704
    %v4706 = vmul.f32 1.0, %v4705
    %v4707 = vmul.f32 %v4698, %v4706
    %v4708 = vadd.f32 %v4546, %v4707
    %4709 = vst.msk [vmem:[#allocation2 + $0xd] sm:$0x1] %vm378, %v4627
    %v4711 = vlaneseq
    %v4712 = vshrl.u32 %v4711, 7
    %v4713 = vsub.s32 0, %v4712
    %v4714 = vrot.slane %v4708, %v4713
    %4715 = vrot.lane.b32.xlu0 %v4714, 32
    %v4716 = vpop.permute.xlu0 %4715
    %4718 = vst.msk [vmem:[#allocation2 + $0xd] sm:$0x1] %vm388, %v4716
    %v4720 = vsel %vm53, %v4627, 0
    %4722 = vmatprep.subr.mxu0 0.0
    %4723 = vmatpush1.msra.mxu0 %v24
    %4724 = vmatprep.subr.mxu0 0.0
    %4725 = vmatpush1.msra.mxu0 %v25
    %4726 = vmatprep.subr.mxu0 0.0
    %4727 = vmatpush1.msra.mxu0 %v26
    %4728 = vmatprep.subr.mxu0 0.0
    %4729 = vmatpush1.msra.mxu0 %v27
    %4730 = vmatprep.subr.mxu0 0.0
    %4731 = vmatpush1.msra.mxu0 0.0
    %4732 = vmatprep.subr.mxu0 0.0
    %4733 = vmatpush1.msra.mxu0 0.0
    %4734 = vmatprep.subr.mxu0 0.0
    %4735 = vmatpush1.msra.mxu0 0.0
    %4736 = vmatprep.subr.mxu0 0.0
    %4737 = vmatpush1.msra.mxu0 0.0
    %4738 = vmatprep.subr.mxu0 0.0
    %4739 = vmatpush1.msra.mxu0 0.0
    %4740 = vmatprep.subr.mxu0 0.0
    %4741 = vmatpush1.msra.mxu0 0.0
    %4742 = vmatprep.subr.mxu0 0.0
    %4743 = vmatpush1.msra.mxu0 0.0
    %4744 = vmatprep.subr.mxu0 0.0
    %4745 = vmatpush1.msra.mxu0 0.0
    %4746 = vmatprep.subr.mxu0 0.0
    %4747 = vmatpush1.msra.mxu0 0.0
    %4748 = vmatprep.subr.mxu0 0.0
    %4749 = vmatpush1.msra.mxu0 0.0
    %4750 = vmatprep.subr.mxu0 0.0
    %4751 = vmatpush1.msra.mxu0 0.0
    %4752 = vmatprep.subr.mxu0 0.0
    %4753 = vmatpush1.msra.mxu0 0.0
    %4754 = vmatprep.subr.mxu0 0.0
    %4755 = vmatpush1.msra.mxu0 0.0
    %4756 = vmatprep.subr.mxu0 0.0
    %4757 = vmatpush1.msra.mxu0 0.0
    %4758 = vmatprep.subr.mxu0 0.0
    %4759 = vmatpush1.msra.mxu0 0.0
    %4760 = vmatprep.subr.mxu0 0.0
    %4761 = vmatpush1.msra.mxu0 0.0
    %4762 = vmatprep.subr.mxu0 0.0
    %4763 = vmatpush1.msra.mxu0 0.0
    %4764 = vmatprep.subr.mxu0 0.0
    %4765 = vmatpush1.msra.mxu0 0.0
    %4766 = vmatprep.subr.mxu0 0.0
    %4767 = vmatpush1.msra.mxu0 0.0
    %4768 = vmatprep.subr.mxu0 0.0
    %4769 = vmatpush1.msra.mxu0 0.0
    %4770 = vmatprep.subr.mxu0 0.0
    %4771 = vmatpush1.msra.mxu0 0.0
    %4772 = vmatprep.subr.mxu0 0.0
    %4773 = vmatpush1.msra.mxu0 0.0
    %4774 = vmatprep.subr.mxu0 0.0
    %4775 = vmatpush1.msra.mxu0 0.0
    %4776 = vmatprep.subr.mxu0 0.0
    %4777 = vmatpush1.msra.mxu0 0.0
    %4778 = vmatprep.subr.mxu0 0.0
    %4779 = vmatpush1.msra.mxu0 0.0
    %4780 = vmatprep.subr.mxu0 0.0
    %4781 = vmatpush1.msra.mxu0 0.0
    %4782 = vmatprep.subr.mxu0 0.0
    %4783 = vmatpush1.msra.mxu0 0.0
    %4784 = vmatprep.subr.mxu0 0.0
    %4785 = vmatpush1.msra.mxu0 0.0
    %4786 = vmatprep.mubr.f32.mxu0 0.0
    %4787 = vmatmul.mubr.f32.gmra.mrb[0].mxu0 %v4720
    %v4788 = vpop.f32.mrb[0].mxu0
    %v4789 = vadd.f32 %v43, %v4788
    %v4790 = vpop.f32.mrb[0].mxu0
    %4791 = vdwg.mxu0
    %v4792 = vxor.u32 %v4789, 2147483648
    %v4793 = vmul.f32 %v4792, 1.442695
    %v4794 = vpow.pop %v4793
    %v4795 = vadd.f32 %v4794, 1.0
    %v4796 = vrcp.pop %v4795
    %v4797 = vmul.f32 1.0, %v4796
    %v4798 = vmul.f32 %v4789, %v4797
    %v4799 = vadd.f32 %v4627, %v4798
    %v4800 = vsel %vm53, %v4708, 0
    %4802 = vmatprep.subr.mxu0 0.0
    %4803 = vmatpush1.msra.mxu0 %v34
    %4804 = vmatprep.subr.mxu0 0.0
    %4805 = vmatpush1.msra.mxu0 %v35
    %4806 = vmatprep.subr.mxu0 0.0
    %4807 = vmatpush1.msra.mxu0 %v36
    %4808 = vmatprep.subr.mxu0 0.0
    %4809 = vmatpush1.msra.mxu0 %v37
    %4810 = vmatprep.subr.mxu0 0.0
    %4811 = vmatpush1.msra.mxu0 0.0
    %4812 = vmatprep.subr.mxu0 0.0
    %4813 = vmatpush1.msra.mxu0 0.0
    %4814 = vmatprep.subr.mxu0 0.0
    %4815 = vmatpush1.msra.mxu0 0.0
    %4816 = vmatprep.subr.mxu0 0.0
    %4817 = vmatpush1.msra.mxu0 0.0
    %4818 = vmatprep.subr.mxu0 0.0
    %4819 = vmatpush1.msra.mxu0 0.0
    %4820 = vmatprep.subr.mxu0 0.0
    %4821 = vmatpush1.msra.mxu0 0.0
    %4822 = vmatprep.subr.mxu0 0.0
    %4823 = vmatpush1.msra.mxu0 0.0
    %4824 = vmatprep.subr.mxu0 0.0
    %4825 = vmatpush1.msra.mxu0 0.0
    %4826 = vmatprep.subr.mxu0 0.0
    %4827 = vmatpush1.msra.mxu0 0.0
    %4828 = vmatprep.subr.mxu0 0.0
    %4829 = vmatpush1.msra.mxu0 0.0
    %4830 = vmatprep.subr.mxu0 0.0
    %4831 = vmatpush1.msra.mxu0 0.0
    %4832 = vmatprep.subr.mxu0 0.0
    %4833 = vmatpush1.msra.mxu0 0.0
    %4834 = vmatprep.subr.mxu0 0.0
    %4835 = vmatpush1.msra.mxu0 0.0
    %4836 = vmatprep.subr.mxu0 0.0
    %4837 = vmatpush1.msra.mxu0 0.0
    %4838 = vmatprep.subr.mxu0 0.0
    %4839 = vmatpush1.msra.mxu0 0.0
    %4840 = vmatprep.subr.mxu0 0.0
    %4841 = vmatpush1.msra.mxu0 0.0
    %4842 = vmatprep.subr.mxu0 0.0
    %4843 = vmatpush1.msra.mxu0 0.0
    %4844 = vmatprep.subr.mxu0 0.0
    %4845 = vmatpush1.msra.mxu0 0.0
    %4846 = vmatprep.subr.mxu0 0.0
    %4847 = vmatpush1.msra.mxu0 0.0
    %4848 = vmatprep.subr.mxu0 0.0
    %4849 = vmatpush1.msra.mxu0 0.0
    %4850 = vmatprep.subr.mxu0 0.0
    %4851 = vmatpush1.msra.mxu0 0.0
    %4852 = vmatprep.subr.mxu0 0.0
    %4853 = vmatpush1.msra.mxu0 0.0
    %4854 = vmatprep.subr.mxu0 0.0
    %4855 = vmatpush1.msra.mxu0 0.0
    %4856 = vmatprep.subr.mxu0 0.0
    %4857 = vmatpush1.msra.mxu0 0.0
    %4858 = vmatprep.subr.mxu0 0.0
    %4859 = vmatpush1.msra.mxu0 0.0
    %4860 = vmatprep.subr.mxu0 0.0
    %4861 = vmatpush1.msra.mxu0 0.0
    %4862 = vmatprep.subr.mxu0 0.0
    %4863 = vmatpush1.msra.mxu0 0.0
    %4864 = vmatprep.subr.mxu0 0.0
    %4865 = vmatpush1.msra.mxu0 0.0
    %4866 = vmatprep.mubr.f32.mxu0 0.0
    %4867 = vmatmul.mubr.f32.gmra.mrb[0].mxu0 %v4800
    %v4868 = vpop.f32.mrb[0].mxu0
    %v4869 = vadd.f32 %v47, %v4868
    %v4870 = vpop.f32.mrb[0].mxu0
    %4871 = vdwg.mxu0
    %v4872 = vxor.u32 %v4869, 2147483648
    %v4873 = vmul.f32 %v4872, 1.442695
    %v4874 = vpow.pop %v4873
    %v4875 = vadd.f32 %v4874, 1.0
    %v4876 = vrcp.pop %v4875
    %v4877 = vmul.f32 1.0, %v4876
    %v4878 = vmul.f32 %v4869, %v4877
    %v4879 = vadd.f32 %v4708, %v4878
    %v4881 = vsel %vm53, %v4799, 0
    %4883 = vmatprep.subr.mxu0 0.0
    %4884 = vmatpush1.msra.mxu0 %v29
    %4885 = vmatprep.subr.mxu0 0.0
    %4886 = vmatpush1.msra.mxu0 %v30
    %4887 = vmatprep.subr.mxu0 0.0
    %4888 = vmatpush1.msra.mxu0 %v31
    %4889 = vmatprep.subr.mxu0 0.0
    %4890 = vmatpush1.msra.mxu0 %v32
    %4891 = vmatprep.subr.mxu0 0.0
    %4892 = vmatpush1.msra.mxu0 0.0
    %4893 = vmatprep.subr.mxu0 0.0
    %4894 = vmatpush1.msra.mxu0 0.0
    %4895 = vmatprep.subr.mxu0 0.0
    %4896 = vmatpush1.msra.mxu0 0.0
    %4897 = vmatprep.subr.mxu0 0.0
    %4898 = vmatpush1.msra.mxu0 0.0
    %4899 = vmatprep.subr.mxu0 0.0
    %4900 = vmatpush1.msra.mxu0 0.0
    %4901 = vmatprep.subr.mxu0 0.0
    %4902 = vmatpush1.msra.mxu0 0.0
    %4903 = vmatprep.subr.mxu0 0.0
    %4904 = vmatpush1.msra.mxu0 0.0
    %4905 = vmatprep.subr.mxu0 0.0
    %4906 = vmatpush1.msra.mxu0 0.0
    %4907 = vmatprep.subr.mxu0 0.0
    %4908 = vmatpush1.msra.mxu0 0.0
    %4909 = vmatprep.subr.mxu0 0.0
    %4910 = vmatpush1.msra.mxu0 0.0
    %4911 = vmatprep.subr.mxu0 0.0
    %4912 = vmatpush1.msra.mxu0 0.0
    %4913 = vmatprep.subr.mxu0 0.0
    %4914 = vmatpush1.msra.mxu0 0.0
    %4915 = vmatprep.subr.mxu0 0.0
    %4916 = vmatpush1.msra.mxu0 0.0
    %4917 = vmatprep.subr.mxu0 0.0
    %4918 = vmatpush1.msra.mxu0 0.0
    %4919 = vmatprep.subr.mxu0 0.0
    %4920 = vmatpush1.msra.mxu0 0.0
    %4921 = vmatprep.subr.mxu0 0.0
    %4922 = vmatpush1.msra.mxu0 0.0
    %4923 = vmatprep.subr.mxu0 0.0
    %4924 = vmatpush1.msra.mxu0 0.0
    %4925 = vmatprep.subr.mxu0 0.0
    %4926 = vmatpush1.msra.mxu0 0.0
    %4927 = vmatprep.subr.mxu0 0.0
    %4928 = vmatpush1.msra.mxu0 0.0
    %4929 = vmatprep.subr.mxu0 0.0
    %4930 = vmatpush1.msra.mxu0 0.0
    %4931 = vmatprep.subr.mxu0 0.0
    %4932 = vmatpush1.msra.mxu0 0.0
    %4933 = vmatprep.subr.mxu0 0.0
    %4934 = vmatpush1.msra.mxu0 0.0
    %4935 = vmatprep.subr.mxu0 0.0
    %4936 = vmatpush1.msra.mxu0 0.0
    %4937 = vmatprep.subr.mxu0 0.0
    %4938 = vmatpush1.msra.mxu0 0.0
    %4939 = vmatprep.subr.mxu0 0.0
    %4940 = vmatpush1.msra.mxu0 0.0
    %4941 = vmatprep.subr.mxu0 0.0
    %4942 = vmatpush1.msra.mxu0 0.0
    %4943 = vmatprep.subr.mxu0 0.0
    %4944 = vmatpush1.msra.mxu0 0.0
    %4945 = vmatprep.subr.mxu0 0.0
    %4946 = vmatpush1.msra.mxu0 0.0
    %4947 = vmatprep.mubr.f32.mxu0 0.0
    %4948 = vmatmul.mubr.f32.gmra.mrb[0].mxu0 %v4881
    %v4949 = vpop.f32.mrb[0].mxu0
    %v4950 = vadd.f32 %v45, %v4949
    %v4951 = vpop.f32.mrb[0].mxu0
    %4952 = vdwg.mxu0
    %v4953 = vxor.u32 %v4950, 2147483648
    %v4954 = vmul.f32 %v4953, 1.442695
    %v4955 = vpow.pop %v4954
    %v4956 = vadd.f32 %v4955, 1.0
    %v4957 = vrcp.pop %v4956
    %v4958 = vmul.f32 1.0, %v4957
    %v4959 = vmul.f32 %v4950, %v4958
    %v4960 = vadd.f32 %v4799, %v4959
    %v4962 = vsel %vm53, %v4879, 0
    %4964 = vmatprep.subr.mxu0 0.0
    %4965 = vmatpush1.msra.mxu0 %v39
    %4966 = vmatprep.subr.mxu0 0.0
    %4967 = vmatpush1.msra.mxu0 %v40
    %4968 = vmatprep.subr.mxu0 0.0
    %4969 = vmatpush1.msra.mxu0 %v41
    %4970 = vmatprep.subr.mxu0 0.0
    %4971 = vmatpush1.msra.mxu0 %v42
    %4972 = vmatprep.subr.mxu0 0.0
    %4973 = vmatpush1.msra.mxu0 0.0
    %4974 = vmatprep.subr.mxu0 0.0
    %4975 = vmatpush1.msra.mxu0 0.0
    %4976 = vmatprep.subr.mxu0 0.0
    %4977 = vmatpush1.msra.mxu0 0.0
    %4978 = vmatprep.subr.mxu0 0.0
    %4979 = vmatpush1.msra.mxu0 0.0
    %4980 = vmatprep.subr.mxu0 0.0
    %4981 = vmatpush1.msra.mxu0 0.0
    %4982 = vmatprep.subr.mxu0 0.0
    %4983 = vmatpush1.msra.mxu0 0.0
    %4984 = vmatprep.subr.mxu0 0.0
    %4985 = vmatpush1.msra.mxu0 0.0
    %4986 = vmatprep.subr.mxu0 0.0
    %4987 = vmatpush1.msra.mxu0 0.0
    %4988 = vmatprep.subr.mxu0 0.0
    %4989 = vmatpush1.msra.mxu0 0.0
    %4990 = vmatprep.subr.mxu0 0.0
    %4991 = vmatpush1.msra.mxu0 0.0
    %4992 = vmatprep.subr.mxu0 0.0
    %4993 = vmatpush1.msra.mxu0 0.0
    %4994 = vmatprep.subr.mxu0 0.0
    %4995 = vmatpush1.msra.mxu0 0.0
    %4996 = vmatprep.subr.mxu0 0.0
    %4997 = vmatpush1.msra.mxu0 0.0
    %4998 = vmatprep.subr.mxu0 0.0
    %4999 = vmatpush1.msra.mxu0 0.0
    %5000 = vmatprep.subr.mxu0 0.0
    %5001 = vmatpush1.msra.mxu0 0.0
    %5002 = vmatprep.subr.mxu0 0.0
    %5003 = vmatpush1.msra.mxu0 0.0
    %5004 = vmatprep.subr.mxu0 0.0
    %5005 = vmatpush1.msra.mxu0 0.0
    %5006 = vmatprep.subr.mxu0 0.0
    %5007 = vmatpush1.msra.mxu0 0.0
    %5008 = vmatprep.subr.mxu0 0.0
    %5009 = vmatpush1.msra.mxu0 0.0
    %5010 = vmatprep.subr.mxu0 0.0
    %5011 = vmatpush1.msra.mxu0 0.0
    %5012 = vmatprep.subr.mxu0 0.0
    %5013 = vmatpush1.msra.mxu0 0.0
    %5014 = vmatprep.subr.mxu0 0.0
    %5015 = vmatpush1.msra.mxu0 0.0
    %5016 = vmatprep.subr.mxu0 0.0
    %5017 = vmatpush1.msra.mxu0 0.0
    %5018 = vmatprep.subr.mxu0 0.0
    %5019 = vmatpush1.msra.mxu0 0.0
    %5020 = vmatprep.subr.mxu0 0.0
    %5021 = vmatpush1.msra.mxu0 0.0
    %5022 = vmatprep.subr.mxu0 0.0
    %5023 = vmatpush1.msra.mxu0 0.0
    %5024 = vmatprep.subr.mxu0 0.0
    %5025 = vmatpush1.msra.mxu0 0.0
    %5026 = vmatprep.subr.mxu0 0.0
    %5027 = vmatpush1.msra.mxu0 0.0
    %5028 = vmatprep.mubr.f32.mxu0 0.0
    %5029 = vmatmul.mubr.f32.gmra.mrb[0].mxu0 %v4962
    %v5030 = vpop.f32.mrb[0].mxu0
    %v5031 = vadd.f32 %v49, %v5030
    %v5032 = vpop.f32.mrb[0].mxu0
    %5033 = vdwg.mxu0
    %v5034 = vxor.u32 %v5031, 2147483648
    %v5035 = vmul.f32 %v5034, 1.442695
    %v5036 = vpow.pop %v5035
    %v5037 = vadd.f32 %v5036, 1.0
    %v5038 = vrcp.pop %v5037
    %v5039 = vmul.f32 1.0, %v5038
    %v5040 = vmul.f32 %v5031, %v5039
    %v5041 = vadd.f32 %v4879, %v5040
    %5042 = vst.msk [vmem:[#allocation2 + $0xe] sm:$0x1] %vm378, %v4960
    %v5044 = vlaneseq
    %v5045 = vshrl.u32 %v5044, 7
    %v5046 = vsub.s32 0, %v5045
    %v5047 = vrot.slane %v5041, %v5046
    %5048 = vrot.lane.b32.xlu0 %v5047, 32
    %v5049 = vpop.permute.xlu0 %5048
    %5051 = vst.msk [vmem:[#allocation2 + $0xe] sm:$0x1] %vm388, %v5049
    %v5053 = vsel %vm53, %v4960, 0
    %5055 = vmatprep.subr.mxu0 0.0
    %5056 = vmatpush1.msra.mxu0 %v24
    %5057 = vmatprep.subr.mxu0 0.0
    %5058 = vmatpush1.msra.mxu0 %v25
    %5059 = vmatprep.subr.mxu0 0.0
    %5060 = vmatpush1.msra.mxu0 %v26
    %5061 = vmatprep.subr.mxu0 0.0
    %5062 = vmatpush1.msra.mxu0 %v27
    %5063 = vmatprep.subr.mxu0 0.0
    %5064 = vmatpush1.msra.mxu0 0.0
    %5065 = vmatprep.subr.mxu0 0.0
    %5066 = vmatpush1.msra.mxu0 0.0
    %5067 = vmatprep.subr.mxu0 0.0
    %5068 = vmatpush1.msra.mxu0 0.0
    %5069 = vmatprep.subr.mxu0 0.0
    %5070 = vmatpush1.msra.mxu0 0.0
    %5071 = vmatprep.subr.mxu0 0.0
    %5072 = vmatpush1.msra.mxu0 0.0
    %5073 = vmatprep.subr.mxu0 0.0
    %5074 = vmatpush1.msra.mxu0 0.0
    %5075 = vmatprep.subr.mxu0 0.0
    %5076 = vmatpush1.msra.mxu0 0.0
    %5077 = vmatprep.subr.mxu0 0.0
    %5078 = vmatpush1.msra.mxu0 0.0
    %5079 = vmatprep.subr.mxu0 0.0
    %5080 = vmatpush1.msra.mxu0 0.0
    %5081 = vmatprep.subr.mxu0 0.0
    %5082 = vmatpush1.msra.mxu0 0.0
    %5083 = vmatprep.subr.mxu0 0.0
    %5084 = vmatpush1.msra.mxu0 0.0
    %5085 = vmatprep.subr.mxu0 0.0
    %5086 = vmatpush1.msra.mxu0 0.0
    %5087 = vmatprep.subr.mxu0 0.0
    %5088 = vmatpush1.msra.mxu0 0.0
    %5089 = vmatprep.subr.mxu0 0.0
    %5090 = vmatpush1.msra.mxu0 0.0
    %5091 = vmatprep.subr.mxu0 0.0
    %5092 = vmatpush1.msra.mxu0 0.0
    %5093 = vmatprep.subr.mxu0 0.0
    %5094 = vmatpush1.msra.mxu0 0.0
    %5095 = vmatprep.subr.mxu0 0.0
    %5096 = vmatpush1.msra.mxu0 0.0
    %5097 = vmatprep.subr.mxu0 0.0
    %5098 = vmatpush1.msra.mxu0 0.0
    %5099 = vmatprep.subr.mxu0 0.0
    %5100 = vmatpush1.msra.mxu0 0.0
    %5101 = vmatprep.subr.mxu0 0.0
    %5102 = vmatpush1.msra.mxu0 0.0
    %5103 = vmatprep.subr.mxu0 0.0
    %5104 = vmatpush1.msra.mxu0 0.0
    %5105 = vmatprep.subr.mxu0 0.0
    %5106 = vmatpush1.msra.mxu0 0.0
    %5107 = vmatprep.subr.mxu0 0.0
    %5108 = vmatpush1.msra.mxu0 0.0
    %5109 = vmatprep.subr.mxu0 0.0
    %5110 = vmatpush1.msra.mxu0 0.0
    %5111 = vmatprep.subr.mxu0 0.0
    %5112 = vmatpush1.msra.mxu0 0.0
    %5113 = vmatprep.subr.mxu0 0.0
    %5114 = vmatpush1.msra.mxu0 0.0
    %5115 = vmatprep.subr.mxu0 0.0
    %5116 = vmatpush1.msra.mxu0 0.0
    %5117 = vmatprep.subr.mxu0 0.0
    %5118 = vmatpush1.msra.mxu0 0.0
    %5119 = vmatprep.mubr.f32.mxu0 0.0
    %5120 = vmatmul.mubr.f32.gmra.mrb[0].mxu0 %v5053
    %v5121 = vpop.f32.mrb[0].mxu0
    %v5122 = vadd.f32 %v43, %v5121
    %v5123 = vpop.f32.mrb[0].mxu0
    %5124 = vdwg.mxu0
    %v5125 = vxor.u32 %v5122, 2147483648
    %v5126 = vmul.f32 %v5125, 1.442695
    %v5127 = vpow.pop %v5126
    %v5128 = vadd.f32 %v5127, 1.0
    %v5129 = vrcp.pop %v5128
    %v5130 = vmul.f32 1.0, %v5129
    %v5131 = vmul.f32 %v5122, %v5130
    %v5132 = vadd.f32 %v4960, %v5131
    %v5133 = vsel %vm53, %v5041, 0
    %5135 = vmatprep.subr.mxu0 0.0
    %5136 = vmatpush1.msra.mxu0 %v34
    %5137 = vmatprep.subr.mxu0 0.0
    %5138 = vmatpush1.msra.mxu0 %v35
    %5139 = vmatprep.subr.mxu0 0.0
    %5140 = vmatpush1.msra.mxu0 %v36
    %5141 = vmatprep.subr.mxu0 0.0
    %5142 = vmatpush1.msra.mxu0 %v37
    %5143 = vmatprep.subr.mxu0 0.0
    %5144 = vmatpush1.msra.mxu0 0.0
    %5145 = vmatprep.subr.mxu0 0.0
    %5146 = vmatpush1.msra.mxu0 0.0
    %5147 = vmatprep.subr.mxu0 0.0
    %5148 = vmatpush1.msra.mxu0 0.0
    %5149 = vmatprep.subr.mxu0 0.0
    %5150 = vmatpush1.msra.mxu0 0.0
    %5151 = vmatprep.subr.mxu0 0.0
    %5152 = vmatpush1.msra.mxu0 0.0
    %5153 = vmatprep.subr.mxu0 0.0
    %5154 = vmatpush1.msra.mxu0 0.0
    %5155 = vmatprep.subr.mxu0 0.0
    %5156 = vmatpush1.msra.mxu0 0.0
    %5157 = vmatprep.subr.mxu0 0.0
    %5158 = vmatpush1.msra.mxu0 0.0
    %5159 = vmatprep.subr.mxu0 0.0
    %5160 = vmatpush1.msra.mxu0 0.0
    %5161 = vmatprep.subr.mxu0 0.0
    %5162 = vmatpush1.msra.mxu0 0.0
    %5163 = vmatprep.subr.mxu0 0.0
    %5164 = vmatpush1.msra.mxu0 0.0
    %5165 = vmatprep.subr.mxu0 0.0
    %5166 = vmatpush1.msra.mxu0 0.0
    %5167 = vmatprep.subr.mxu0 0.0
    %5168 = vmatpush1.msra.mxu0 0.0
    %5169 = vmatprep.subr.mxu0 0.0
    %5170 = vmatpush1.msra.mxu0 0.0
    %5171 = vmatprep.subr.mxu0 0.0
    %5172 = vmatpush1.msra.mxu0 0.0
    %5173 = vmatprep.subr.mxu0 0.0
    %5174 = vmatpush1.msra.mxu0 0.0
    %5175 = vmatprep.subr.mxu0 0.0
    %5176 = vmatpush1.msra.mxu0 0.0
    %5177 = vmatprep.subr.mxu0 0.0
    %5178 = vmatpush1.msra.mxu0 0.0
    %5179 = vmatprep.subr.mxu0 0.0
    %5180 = vmatpush1.msra.mxu0 0.0
    %5181 = vmatprep.subr.mxu0 0.0
    %5182 = vmatpush1.msra.mxu0 0.0
    %5183 = vmatprep.subr.mxu0 0.0
    %5184 = vmatpush1.msra.mxu0 0.0
    %5185 = vmatprep.subr.mxu0 0.0
    %5186 = vmatpush1.msra.mxu0 0.0
    %5187 = vmatprep.subr.mxu0 0.0
    %5188 = vmatpush1.msra.mxu0 0.0
    %5189 = vmatprep.subr.mxu0 0.0
    %5190 = vmatpush1.msra.mxu0 0.0
    %5191 = vmatprep.subr.mxu0 0.0
    %5192 = vmatpush1.msra.mxu0 0.0
    %5193 = vmatprep.subr.mxu0 0.0
    %5194 = vmatpush1.msra.mxu0 0.0
    %5195 = vmatprep.subr.mxu0 0.0
    %5196 = vmatpush1.msra.mxu0 0.0
    %5197 = vmatprep.subr.mxu0 0.0
    %5198 = vmatpush1.msra.mxu0 0.0
    %5199 = vmatprep.mubr.f32.mxu0 0.0
    %5200 = vmatmul.mubr.f32.gmra.mrb[0].mxu0 %v5133
    %v5201 = vpop.f32.mrb[0].mxu0
    %v5202 = vadd.f32 %v47, %v5201
    %v5203 = vpop.f32.mrb[0].mxu0
    %5204 = vdwg.mxu0
    %v5205 = vxor.u32 %v5202, 2147483648
    %v5206 = vmul.f32 %v5205, 1.442695
    %v5207 = vpow.pop %v5206
    %v5208 = vadd.f32 %v5207, 1.0
    %v5209 = vrcp.pop %v5208
    %v5210 = vmul.f32 1.0, %v5209
    %v5211 = vmul.f32 %v5202, %v5210
    %v5212 = vadd.f32 %v5041, %v5211
    %v5214 = vsel %vm53, %v5132, 0
    %5216 = vmatprep.subr.mxu0 0.0
    %5217 = vmatpush1.msra.mxu0 %v29
    %5218 = vmatprep.subr.mxu0 0.0
    %5219 = vmatpush1.msra.mxu0 %v30
    %5220 = vmatprep.subr.mxu0 0.0
    %5221 = vmatpush1.msra.mxu0 %v31
    %5222 = vmatprep.subr.mxu0 0.0
    %5223 = vmatpush1.msra.mxu0 %v32
    %5224 = vmatprep.subr.mxu0 0.0
    %5225 = vmatpush1.msra.mxu0 0.0
    %5226 = vmatprep.subr.mxu0 0.0
    %5227 = vmatpush1.msra.mxu0 0.0
    %5228 = vmatprep.subr.mxu0 0.0
    %5229 = vmatpush1.msra.mxu0 0.0
    %5230 = vmatprep.subr.mxu0 0.0
    %5231 = vmatpush1.msra.mxu0 0.0
    %5232 = vmatprep.subr.mxu0 0.0
    %5233 = vmatpush1.msra.mxu0 0.0
    %5234 = vmatprep.subr.mxu0 0.0
    %5235 = vmatpush1.msra.mxu0 0.0
    %5236 = vmatprep.subr.mxu0 0.0
    %5237 = vmatpush1.msra.mxu0 0.0
    %5238 = vmatprep.subr.mxu0 0.0
    %5239 = vmatpush1.msra.mxu0 0.0
    %5240 = vmatprep.subr.mxu0 0.0
    %5241 = vmatpush1.msra.mxu0 0.0
    %5242 = vmatprep.subr.mxu0 0.0
    %5243 = vmatpush1.msra.mxu0 0.0
    %5244 = vmatprep.subr.mxu0 0.0
    %5245 = vmatpush1.msra.mxu0 0.0
    %5246 = vmatprep.subr.mxu0 0.0
    %5247 = vmatpush1.msra.mxu0 0.0
    %5248 = vmatprep.subr.mxu0 0.0
    %5249 = vmatpush1.msra.mxu0 0.0
    %5250 = vmatprep.subr.mxu0 0.0
    %5251 = vmatpush1.msra.mxu0 0.0
    %5252 = vmatprep.subr.mxu0 0.0
    %5253 = vmatpush1.msra.mxu0 0.0
    %5254 = vmatprep.subr.mxu0 0.0
    %5255 = vmatpush1.msra.mxu0 0.0
    %5256 = vmatprep.subr.mxu0 0.0
    %5257 = vmatpush1.msra.mxu0 0.0
    %5258 = vmatprep.subr.mxu0 0.0
    %5259 = vmatpush1.msra.mxu0 0.0
    %5260 = vmatprep.subr.mxu0 0.0
    %5261 = vmatpush1.msra.mxu0 0.0
    %5262 = vmatprep.subr.mxu0 0.0
    %5263 = vmatpush1.msra.mxu0 0.0
    %5264 = vmatprep.subr.mxu0 0.0
    %5265 = vmatpush1.msra.mxu0 0.0
    %5266 = vmatprep.subr.mxu0 0.0
    %5267 = vmatpush1.msra.mxu0 0.0
    %5268 = vmatprep.subr.mxu0 0.0
    %5269 = vmatpush1.msra.mxu0 0.0
    %5270 = vmatprep.subr.mxu0 0.0
    %5271 = vmatpush1.msra.mxu0 0.0
    %5272 = vmatprep.subr.mxu0 0.0
    %5273 = vmatpush1.msra.mxu0 0.0
    %5274 = vmatprep.subr.mxu0 0.0
    %5275 = vmatpush1.msra.mxu0 0.0
    %5276 = vmatprep.subr.mxu0 0.0
    %5277 = vmatpush1.msra.mxu0 0.0
    %5278 = vmatprep.subr.mxu0 0.0
    %5279 = vmatpush1.msra.mxu0 0.0
    %5280 = vmatprep.mubr.f32.mxu0 0.0
    %5281 = vmatmul.mubr.f32.gmra.mrb[0].mxu0 %v5214
    %v5282 = vpop.f32.mrb[0].mxu0
    %v5283 = vadd.f32 %v45, %v5282
    %v5284 = vpop.f32.mrb[0].mxu0
    %5285 = vdwg.mxu0
    %v5286 = vxor.u32 %v5283, 2147483648
    %v5287 = vmul.f32 %v5286, 1.442695
    %v5288 = vpow.pop %v5287
    %v5289 = vadd.f32 %v5288, 1.0
    %v5290 = vrcp.pop %v5289
    %v5291 = vmul.f32 1.0, %v5290
    %v5292 = vmul.f32 %v5283, %v5291
    %v5293 = vadd.f32 %v5132, %v5292
    %v5295 = vsel %vm53, %v5212, 0
    %5297 = vmatprep.subr.mxu0 0.0
    %5298 = vmatpush1.msra.mxu0 %v39
    %5299 = vmatprep.subr.mxu0 0.0
    %5300 = vmatpush1.msra.mxu0 %v40
    %5301 = vmatprep.subr.mxu0 0.0
    %5302 = vmatpush1.msra.mxu0 %v41
    %5303 = vmatprep.subr.mxu0 0.0
    %5304 = vmatpush1.msra.mxu0 %v42
    %5305 = vmatprep.subr.mxu0 0.0
    %5306 = vmatpush1.msra.mxu0 0.0
    %5307 = vmatprep.subr.mxu0 0.0
    %5308 = vmatpush1.msra.mxu0 0.0
    %5309 = vmatprep.subr.mxu0 0.0
    %5310 = vmatpush1.msra.mxu0 0.0
    %5311 = vmatprep.subr.mxu0 0.0
    %5312 = vmatpush1.msra.mxu0 0.0
    %5313 = vmatprep.subr.mxu0 0.0
    %5314 = vmatpush1.msra.mxu0 0.0
    %5315 = vmatprep.subr.mxu0 0.0
    %5316 = vmatpush1.msra.mxu0 0.0
    %5317 = vmatprep.subr.mxu0 0.0
    %5318 = vmatpush1.msra.mxu0 0.0
    %5319 = vmatprep.subr.mxu0 0.0
    %5320 = vmatpush1.msra.mxu0 0.0
    %5321 = vmatprep.subr.mxu0 0.0
    %5322 = vmatpush1.msra.mxu0 0.0
    %5323 = vmatprep.subr.mxu0 0.0
    %5324 = vmatpush1.msra.mxu0 0.0
    %5325 = vmatprep.subr.mxu0 0.0
    %5326 = vmatpush1.msra.mxu0 0.0
    %5327 = vmatprep.subr.mxu0 0.0
    %5328 = vmatpush1.msra.mxu0 0.0
    %5329 = vmatprep.subr.mxu0 0.0
    %5330 = vmatpush1.msra.mxu0 0.0
    %5331 = vmatprep.subr.mxu0 0.0
    %5332 = vmatpush1.msra.mxu0 0.0
    %5333 = vmatprep.subr.mxu0 0.0
    %5334 = vmatpush1.msra.mxu0 0.0
    %5335 = vmatprep.subr.mxu0 0.0
    %5336 = vmatpush1.msra.mxu0 0.0
    %5337 = vmatprep.subr.mxu0 0.0
    %5338 = vmatpush1.msra.mxu0 0.0
    %5339 = vmatprep.subr.mxu0 0.0
    %5340 = vmatpush1.msra.mxu0 0.0
    %5341 = vmatprep.subr.mxu0 0.0
    %5342 = vmatpush1.msra.mxu0 0.0
    %5343 = vmatprep.subr.mxu0 0.0
    %5344 = vmatpush1.msra.mxu0 0.0
    %5345 = vmatprep.subr.mxu0 0.0
    %5346 = vmatpush1.msra.mxu0 0.0
    %5347 = vmatprep.subr.mxu0 0.0
    %5348 = vmatpush1.msra.mxu0 0.0
    %5349 = vmatprep.subr.mxu0 0.0
    %5350 = vmatpush1.msra.mxu0 0.0
    %5351 = vmatprep.subr.mxu0 0.0
    %5352 = vmatpush1.msra.mxu0 0.0
    %5353 = vmatprep.subr.mxu0 0.0
    %5354 = vmatpush1.msra.mxu0 0.0
    %5355 = vmatprep.subr.mxu0 0.0
    %5356 = vmatpush1.msra.mxu0 0.0
    %5357 = vmatprep.subr.mxu0 0.0
    %5358 = vmatpush1.msra.mxu0 0.0
    %5359 = vmatprep.subr.mxu0 0.0
    %5360 = vmatpush1.msra.mxu0 0.0
    %5361 = vmatprep.mubr.f32.mxu0 0.0
    %5362 = vmatmul.mubr.f32.gmra.mrb[0].mxu0 %v5295
    %v5363 = vpop.f32.mrb[0].mxu0
    %v5364 = vadd.f32 %v49, %v5363
    %v5365 = vpop.f32.mrb[0].mxu0
    %5366 = vdwg.mxu0
    %v5367 = vxor.u32 %v5364, 2147483648
    %v5368 = vmul.f32 %v5367, 1.442695
    %v5369 = vpow.pop %v5368
    %v5370 = vadd.f32 %v5369, 1.0
    %v5371 = vrcp.pop %v5370
    %v5372 = vmul.f32 1.0, %v5371
    %v5373 = vmul.f32 %v5364, %v5372
    %v5374 = vadd.f32 %v5212, %v5373
    %5375 = vst.msk [vmem:[#allocation2 + $0xf] sm:$0x1] %vm378, %v5293
    %v5377 = vlaneseq
    %v5378 = vshrl.u32 %v5377, 7
    %v5379 = vsub.s32 0, %v5378
    %v5380 = vrot.slane %v5374, %v5379
    %5381 = vrot.lane.b32.xlu0 %v5380, 32
    %v5382 = vpop.permute.xlu0 %5381
    %5384 = vst.msk [vmem:[#allocation2 + $0xf] sm:$0x1] %vm388, %v5382
    %v5385 = vld [vmem:[%s0] sm:$0xff]
    %v5386 = vlaneseq
    %v5387 = vand.u32 %v5386, 127
    %5388 = vset.pattern.permute.xlu0 0
    %5389 = vperm.xlu0 %5388, %v5385
    %v5390 = vpop.permute.xlu0 %5389
    %vm5391 = vcmp.eq.s32.totalorder %v5387, %v5390
    %v5392 = vsel %vm5391, 1, 0
    %v5393 = vcvt.s32.f32 %v5392
    %5394 = vset.pattern.permute.xlu0 1
    %5395 = vperm.xlu0 %5394, %v5385
    %v5396 = vpop.permute.xlu0 %5395
    %vm5397 = vcmp.eq.s32.totalorder %v5387, %v5396
    %v5398 = vsel %vm5397, 1, 0
    %v5399 = vcvt.s32.f32 %v5398
    %v5400 = vld [vmem:[#allocation2] sm:$0xff]
    %v5401 = vld [vmem:[#allocation2 + $0x8] sm:$0xff]
    %vm5402 = vcmask 130048
    %v5404 = vsel %vm5402, %v5393, 0
    %5406 = vmatprep.subr.mxu0 0.0
    %5407 = vmatpush1.msra.mxu0 %v5400
    %5408 = vmatprep.subr.mxu0 0.0
    %5409 = vmatpush1.msra.mxu0 %v5401
    %5410 = vmatprep.subr.mxu0 0.0
    %5411 = vmatpush1.msra.mxu0 0.0
    %5412 = vmatprep.subr.mxu0 0.0
    %5413 = vmatpush1.msra.mxu0 0.0
    %5414 = vmatprep.subr.mxu0 0.0
    %5415 = vmatpush1.msra.mxu0 0.0
    %5416 = vmatprep.subr.mxu0 0.0
    %5417 = vmatpush1.msra.mxu0 0.0
    %5418 = vmatprep.subr.mxu0 0.0
    %5419 = vmatpush1.msra.mxu0 0.0
    %5420 = vmatprep.subr.mxu0 0.0
    %5421 = vmatpush1.msra.mxu0 0.0
    %5422 = vmatprep.subr.mxu0 0.0
    %5423 = vmatpush1.msra.mxu0 0.0
    %5424 = vmatprep.subr.mxu0 0.0
    %5425 = vmatpush1.msra.mxu0 0.0
    %5426 = vmatprep.subr.mxu0 0.0
    %5427 = vmatpush1.msra.mxu0 0.0
    %5428 = vmatprep.subr.mxu0 0.0
    %5429 = vmatpush1.msra.mxu0 0.0
    %5430 = vmatprep.subr.mxu0 0.0
    %5431 = vmatpush1.msra.mxu0 0.0
    %5432 = vmatprep.subr.mxu0 0.0
    %5433 = vmatpush1.msra.mxu0 0.0
    %5434 = vmatprep.subr.mxu0 0.0
    %5435 = vmatpush1.msra.mxu0 0.0
    %5436 = vmatprep.subr.mxu0 0.0
    %5437 = vmatpush1.msra.mxu0 0.0
    %5438 = vmatprep.subr.mxu0 0.0
    %5439 = vmatpush1.msra.mxu0 0.0
    %5440 = vmatprep.subr.mxu0 0.0
    %5441 = vmatpush1.msra.mxu0 0.0
    %5442 = vmatprep.subr.mxu0 0.0
    %5443 = vmatpush1.msra.mxu0 0.0
    %5444 = vmatprep.subr.mxu0 0.0
    %5445 = vmatpush1.msra.mxu0 0.0
    %5446 = vmatprep.subr.mxu0 0.0
    %5447 = vmatpush1.msra.mxu0 0.0
    %5448 = vmatprep.subr.mxu0 0.0
    %5449 = vmatpush1.msra.mxu0 0.0
    %5450 = vmatprep.subr.mxu0 0.0
    %5451 = vmatpush1.msra.mxu0 0.0
    %5452 = vmatprep.subr.mxu0 0.0
    %5453 = vmatpush1.msra.mxu0 0.0
    %5454 = vmatprep.subr.mxu0 0.0
    %5455 = vmatpush1.msra.mxu0 0.0
    %5456 = vmatprep.subr.mxu0 0.0
    %5457 = vmatpush1.msra.mxu0 0.0
    %5458 = vmatprep.subr.mxu0 0.0
    %5459 = vmatpush1.msra.mxu0 0.0
    %5460 = vmatprep.subr.mxu0 0.0
    %5461 = vmatpush1.msra.mxu0 0.0
    %5462 = vmatprep.subr.mxu0 0.0
    %5463 = vmatpush1.msra.mxu0 0.0
    %5464 = vmatprep.subr.mxu0 0.0
    %5465 = vmatpush1.msra.mxu0 0.0
    %5466 = vmatprep.subr.mxu0 0.0
    %5467 = vmatpush1.msra.mxu0 0.0
    %5468 = vmatprep.subr.mxu0 0.0
    %5469 = vmatpush1.msra.mxu0 0.0
    %5470 = vmatprep.mubr.f32.mxu0 0.0
    %5471 = vmatmul.mubr.f32.gmra.mrb[0].mxu0 %v5404
    %v5472 = vpop.f32.mrb[0].mxu0
    %v5473 = vadd.f32 0.0, %v5472
    %v5474 = vpop.f32.mrb[0].mxu0
    %5475 = vdwg.mxu0
    %v5477 = vsel %vm5402, %v5399, 0
    %5479 = vmatprep.subr.mxu0 0.0
    %5480 = vmatpush1.msra.mxu0 %v5400
    %5481 = vmatprep.subr.mxu0 0.0
    %5482 = vmatpush1.msra.mxu0 %v5401
    %5483 = vmatprep.subr.mxu0 0.0
    %5484 = vmatpush1.msra.mxu0 0.0
    %5485 = vmatprep.subr.mxu0 0.0
    %5486 = vmatpush1.msra.mxu0 0.0
    %5487 = vmatprep.subr.mxu0 0.0
    %5488 = vmatpush1.msra.mxu0 0.0
    %5489 = vmatprep.subr.mxu0 0.0
    %5490 = vmatpush1.msra.mxu0 0.0
    %5491 = vmatprep.subr.mxu0 0.0
    %5492 = vmatpush1.msra.mxu0 0.0
    %5493 = vmatprep.subr.mxu0 0.0
    %5494 = vmatpush1.msra.mxu0 0.0
    %5495 = vmatprep.subr.mxu0 0.0
    %5496 = vmatpush1.msra.mxu0 0.0
    %5497 = vmatprep.subr.mxu0 0.0
    %5498 = vmatpush1.msra.mxu0 0.0
    %5499 = vmatprep.subr.mxu0 0.0
    %5500 = vmatpush1.msra.mxu0 0.0
    %5501 = vmatprep.subr.mxu0 0.0
    %5502 = vmatpush1.msra.mxu0 0.0
    %5503 = vmatprep.subr.mxu0 0.0
    %5504 = vmatpush1.msra.mxu0 0.0
    %5505 = vmatprep.subr.mxu0 0.0
    %5506 = vmatpush1.msra.mxu0 0.0
    %5507 = vmatprep.subr.mxu0 0.0
    %5508 = vmatpush1.msra.mxu0 0.0
    %5509 = vmatprep.subr.mxu0 0.0
    %5510 = vmatpush1.msra.mxu0 0.0
    %5511 = vmatprep.subr.mxu0 0.0
    %5512 = vmatpush1.msra.mxu0 0.0
    %5513 = vmatprep.subr.mxu0 0.0
    %5514 = vmatpush1.msra.mxu0 0.0
    %5515 = vmatprep.subr.mxu0 0.0
    %5516 = vmatpush1.msra.mxu0 0.0
    %5517 = vmatprep.subr.mxu0 0.0
    %5518 = vmatpush1.msra.mxu0 0.0
    %5519 = vmatprep.subr.mxu0 0.0
    %5520 = vmatpush1.msra.mxu0 0.0
    %5521 = vmatprep.subr.mxu0 0.0
    %5522 = vmatpush1.msra.mxu0 0.0
    %5523 = vmatprep.subr.mxu0 0.0
    %5524 = vmatpush1.msra.mxu0 0.0
    %5525 = vmatprep.subr.mxu0 0.0
    %5526 = vmatpush1.msra.mxu0 0.0
    %5527 = vmatprep.subr.mxu0 0.0
    %5528 = vmatpush1.msra.mxu0 0.0
    %5529 = vmatprep.subr.mxu0 0.0
    %5530 = vmatpush1.msra.mxu0 0.0
    %5531 = vmatprep.subr.mxu0 0.0
    %5532 = vmatpush1.msra.mxu0 0.0
    %5533 = vmatprep.subr.mxu0 0.0
    %5534 = vmatpush1.msra.mxu0 0.0
    %5535 = vmatprep.subr.mxu0 0.0
    %5536 = vmatpush1.msra.mxu0 0.0
    %5537 = vmatprep.subr.mxu0 0.0
    %5538 = vmatpush1.msra.mxu0 0.0
    %5539 = vmatprep.subr.mxu0 0.0
    %5540 = vmatpush1.msra.mxu0 0.0
    %5541 = vmatprep.subr.mxu0 0.0
    %5542 = vmatpush1.msra.mxu0 0.0
    %5543 = vmatprep.mubr.f32.mxu0 0.0
    %5544 = vmatmul.mubr.f32.gmra.mrb[0].mxu0 %v5477
    %v5545 = vpop.f32.mrb[0].mxu0
    %v5546 = vadd.f32 0.0, %v5545
    %v5547 = vpop.f32.mrb[0].mxu0
    %5548 = vdwg.mxu0
    %vm5549 = vcmp.lt.s32.totalorder %v5387, 32
    %v5550 = vsel %vm5549, %v5473, %v5546
    %v5551 = vld [vmem:[%s4] sm:$0xff]
    %v5552 = vld [vmem:[%s4 + $0x8] sm:$0xff]
    %v5553 = vld [vmem:[%s4 + $0x10] sm:$0xff]
    %v5554 = vld [vmem:[%s4 + $0x18] sm:$0xff]
    %v5555 = vld [vmem:[%s4 + $0x20] sm:$0xff]
    %v5556 = vld [vmem:[%s4 + $0x28] sm:$0xff]
    %v5557 = vld [vmem:[%s4 + $0x30] sm:$0xff]
    %v5558 = vld [vmem:[%s4 + $0x38] sm:$0xff]
    %v5559 = vld [vmem:[%s5] sm:$0x1]
    %v5561 = vlaneseq
    %v5562 = vshrl.u32 %v5561, 7
    %v5563 = vsub.s32 0, %v5562
    %v5564 = vrot.slane %v5559, %v5563
    %vm5566 = vcmask 523264
    %v5568 = vsel %vm5566, %v5550, 0
    %5570 = vmatprep.subr.mxu0 0.0
    %5571 = vmatpush1.msra.mxu0 %v5551
    %5572 = vmatprep.subr.mxu0 0.0
    %5573 = vmatpush1.msra.mxu0 %v5552
    %5574 = vmatprep.subr.mxu0 0.0
    %5575 = vmatpush1.msra.mxu0 %v5553
    %5576 = vmatprep.subr.mxu0 0.0
    %5577 = vmatpush1.msra.mxu0 %v5554
    %5578 = vmatprep.subr.mxu0 0.0
    %5579 = vmatpush1.msra.mxu0 %v5555
    %5580 = vmatprep.subr.mxu0 0.0
    %5581 = vmatpush1.msra.mxu0 %v5556
    %5582 = vmatprep.subr.mxu0 0.0
    %5583 = vmatpush1.msra.mxu0 %v5557
    %5584 = vmatprep.subr.mxu0 0.0
    %5585 = vmatpush1.msra.mxu0 %v5558
    %5586 = vmatprep.subr.mxu0 0.0
    %5587 = vmatpush1.msra.mxu0 0.0
    %5588 = vmatprep.subr.mxu0 0.0
    %5589 = vmatpush1.msra.mxu0 0.0
    %5590 = vmatprep.subr.mxu0 0.0
    %5591 = vmatpush1.msra.mxu0 0.0
    %5592 = vmatprep.subr.mxu0 0.0
    %5593 = vmatpush1.msra.mxu0 0.0
    %5594 = vmatprep.subr.mxu0 0.0
    %5595 = vmatpush1.msra.mxu0 0.0
    %5596 = vmatprep.subr.mxu0 0.0
    %5597 = vmatpush1.msra.mxu0 0.0
    %5598 = vmatprep.subr.mxu0 0.0
    %5599 = vmatpush1.msra.mxu0 0.0
    %5600 = vmatprep.subr.mxu0 0.0
    %5601 = vmatpush1.msra.mxu0 0.0
    %5602 = vmatprep.subr.mxu0 0.0
    %5603 = vmatpush1.msra.mxu0 0.0
    %5604 = vmatprep.subr.mxu0 0.0
    %5605 = vmatpush1.msra.mxu0 0.0
    %5606 = vmatprep.subr.mxu0 0.0
    %5607 = vmatpush1.msra.mxu0 0.0
    %5608 = vmatprep.subr.mxu0 0.0
    %5609 = vmatpush1.msra.mxu0 0.0
    %5610 = vmatprep.subr.mxu0 0.0
    %5611 = vmatpush1.msra.mxu0 0.0
    %5612 = vmatprep.subr.mxu0 0.0
    %5613 = vmatpush1.msra.mxu0 0.0
    %5614 = vmatprep.subr.mxu0 0.0
    %5615 = vmatpush1.msra.mxu0 0.0
    %5616 = vmatprep.subr.mxu0 0.0
    %5617 = vmatpush1.msra.mxu0 0.0
    %5618 = vmatprep.subr.mxu0 0.0
    %5619 = vmatpush1.msra.mxu0 0.0
    %5620 = vmatprep.subr.mxu0 0.0
    %5621 = vmatpush1.msra.mxu0 0.0
    %5622 = vmatprep.subr.mxu0 0.0
    %5623 = vmatpush1.msra.mxu0 0.0
    %5624 = vmatprep.subr.mxu0 0.0
    %5625 = vmatpush1.msra.mxu0 0.0
    %5626 = vmatprep.subr.mxu0 0.0
    %5627 = vmatpush1.msra.mxu0 0.0
    %5628 = vmatprep.subr.mxu0 0.0
    %5629 = vmatpush1.msra.mxu0 0.0
    %5630 = vmatprep.subr.mxu0 0.0
    %5631 = vmatpush1.msra.mxu0 0.0
    %5632 = vmatprep.subr.mxu0 0.0
    %5633 = vmatpush1.msra.mxu0 0.0
    %5634 = vmatprep.mubr.f32.mxu0 0.0
    %5635 = vmatmul.mubr.f32.gmra.mrb[0].mxu0 %v5568
    %v5636 = vpop.f32.mrb[0].mxu0
    %v5637 = vadd.f32 %v5564, %v5636
    %v5638 = vpop.f32.mrb[0].mxu0
    %5639 = vdwg.mxu0
    %v5640 = vxor.u32 %v5637, 2147483648
    %v5641 = vmul.f32 %v5640, 1.442695
    %v5642 = vpow.pop %v5641
    %v5643 = vadd.f32 %v5642, 1.0
    %v5644 = vrcp.pop %v5643
    %v5645 = vmul.f32 1.0, %v5644
    %vm5646 = vcmask 64512
    %5647 = vst.msk [vmem:[#allocation3] sm:$0xff] %vm5646, %v5645
    // Predicated region
    $region26: #{rnn_forward.1} parent=1 // pred_check
      _
    $region27: #{rnn_forward.1} parent=1 // pred_check_branch
      %5649 = sbr.rel (0) target = $region29
    $region28: #{rnn_forward.1} parent=1 // pred_region
      %s5651 = ssub.s32 128, 128
      %5652 = vsyncadd [#allocation4], %s5651
      %s5654 = sshll.u32 [#allocation3], 4
      %s5655 = int_to_ptr.vmem [resolvable:$true] %s5654
      %5657 = dma.vmem_to_hbm [thread:$0]  %s5655, 128, %s6, [#allocation4]
    $region29: #{rnn_forward.1} parent=1 // pred_fallthru
      _
    // Predicated region
    $region30: #{rnn_forward.1} parent=1 // pred_check
      _
    $region31: #{rnn_forward.1} parent=1 // pred_check_branch
      %5659 = sbr.rel (0) target = $region33
    $region32: #{rnn_forward.1} parent=1 // pred_region
      %5660 = dma.done [#allocation4], 128
    $region33: #{rnn_forward.1} parent=1 // pred_fallthru
      _
    %5661 = vsyncpa [#allocation4], 1

</llo_original>
